<compile_context>
chip_gen: v5e
topology: v5e:2x2
jax: 0.10.0
libtpu: 0.0.40
codegen_flags: <defaults>
</compile_context>

<pallas_src>
import functools

import jax
import jax.numpy as jnp
from jax.experimental import pallas as pl
from jax.experimental.pallas import tpu as pltpu

VMEM_LIMIT = 32 * 1024 * 1024


def _round_up(x, m):
    return (x + m - 1) // m * m


def _cpad(c):
    return _round_up(c, 128)


# ---------------------------------------------------------------------------
# Dense 3x3 conv (+folded-BN bias, activation, optional fused residual)
# ---------------------------------------------------------------------------

def _conv3x3_kernel(x_ref, w_ref, b_ref, *rest, TH, Wc, Cp, stride, act, use_res):
    """x_ref: (1, Hp, Wp, Cp) padded image; w_ref: (3, 3*Cp, Coutp); b: (1, Coutp).

    stride 1: one (TH*Wc, 3*Cp) @ (3*Cp, Coutp) dot per dy (3 dots total).
    stride 2: per-output-row dots (rows picked in-kernel; columns dense,
              wrapper subsamples).
    """
    if use_res:
        res_ref, o_ref = rest
    else:
        (o_ref,) = rest
    hb = pl.program_id(1)
    Coutp = o_ref.shape[-1]

    if stride == 1:
        acc = jnp.zeros((TH * Wc, Coutp), jnp.float32)
        for dy in range(3):
            win = x_ref[0, pl.ds(hb * TH + dy, TH), :, :]          # (TH, Wp, Cp)
            lhs = jnp.concatenate(
                [win[:, dx:dx + Wc, :] for dx in range(3)], axis=-1)
            acc += jnp.dot(lhs.reshape(TH * Wc, 3 * Cp), w_ref[dy],
                           preferred_element_type=jnp.float32)
        y = acc + b_ref[...]
        if act == "silu":
            y = y * jax.nn.sigmoid(y)
        if use_res:
            y = y + res_ref[0].reshape(TH * Wc, Coutp).astype(jnp.float32)
        o_ref[0] = y.reshape(TH, Wc, Coutp).astype(o_ref.dtype)
    else:
        for t in range(TH):
            acc = jnp.zeros((Wc, Coutp), jnp.float32)
            for dy in range(3):
                row = x_ref[0, pl.ds(2 * (hb * TH + t) + dy, 1), :, :][0]
                lhs = jnp.concatenate(
                    [row[dx:dx + Wc, :] for dx in range(3)], axis=-1)
                acc += jnp.dot(lhs, w_ref[dy],
                               preferred_element_type=jnp.float32)
            y = acc + b_ref[...]
            if act == "silu":
                y = y * jax.nn.sigmoid(y)
            o_ref[0, t] = y.astype(o_ref.dtype)


def conv3x3_bn_act(x, w, b, stride, act, residual=None):
    """x: (N,H,W,Cp) bf16 -> (N,Ho,Wo,Coutp) bf16.  Direct (no im2col) conv."""
    N, H, W, Cp = x.shape
    Coutp = w.shape[-1]
    Ho = H if stride == 1 else (H - 1) // 2 + 1
    Wc = _round_up(W, 8)                 # dense compute width (lane-friendly M)
    TH = Ho if Ho < 8 else 8
    assert Ho % TH == 0
    Hp, Wp = H + 2, Wc + 2
    xp = jnp.pad(x, ((0, 0), (1, 1), (1, Wp - W - 1), (0, 0)))

    use_res = residual is not None
    if use_res:
        assert stride == 1 and Wc == W, "residual fusion needs aligned width"

    in_specs = [
        pl.BlockSpec((1, Hp, Wp, Cp), lambda n, hb: (n, 0, 0, 0)),
        pl.BlockSpec((3, 3 * Cp, Coutp), lambda n, hb: (0, 0, 0)),
        pl.BlockSpec((1, Coutp), lambda n, hb: (0, 0)),
    ]
    inputs = [xp, w, b.reshape(1, Coutp)]
    if use_res:
        in_specs.append(pl.BlockSpec((1, TH, Wc, Coutp),
                                     lambda n, hb: (n, hb, 0, 0)))
        inputs.append(residual)

    out = pl.pallas_call(
        functools.partial(_conv3x3_kernel, TH=TH, Wc=Wc, Cp=Cp, stride=stride,
                          act=act, use_res=use_res),
        out_shape=jax.ShapeDtypeStruct((N, Ho, Wc, Coutp), jnp.bfloat16),
        grid=(N, Ho // TH),
        in_specs=in_specs,
        out_specs=pl.BlockSpec((1, TH, Wc, Coutp), lambda n, hb: (n, hb, 0, 0)),
        compiler_params=pltpu.CompilerParams(
            dimension_semantics=("parallel", "arbitrary"),
            vmem_limit_bytes=VMEM_LIMIT),
    )(*inputs)

    y = out
    if Wc != W:
        y = y[:, :, :W, :]
    if stride == 2:
        # TODO(synk): still computes every column then subsamples; an even/odd
        # column pre-split would halve MXU work on the 5 downsampling layers.
        y = y[:, :, ::2, :]
    return y


# ---------------------------------------------------------------------------
# Depthwise 3x3 conv (+folded BN + SiLU)  -- pure VPU
# ---------------------------------------------------------------------------

def _dw3x3_kernel(x_ref, w_ref, b_ref, o_ref, *, TH, Wo, stride):
    hb = pl.program_id(1)
    if stride == 1:
        Cp = o_ref.shape[-1]
        acc = jnp.zeros((TH, Wo, Cp), jnp.float32)
        for dy in range(3):
            win = x_ref[0, pl.ds(hb * TH + dy, TH), :, :]
            for dx in range(3):
                k = dy * 3 + dx
                acc += win[:, dx:dx + Wo, :].astype(jnp.float32) * w_ref[k:k + 1, :]
        y = acc + b_ref[...]
        y = y * jax.nn.sigmoid(y)
        o_ref[0] = y.astype(o_ref.dtype)
    else:
        Cp = o_ref.shape[-1]
        for t in range(TH):
            acc = jnp.zeros((Wo, Cp), jnp.float32)
            for dy in range(3):
                row = x_ref[0, pl.ds(2 * (hb * TH + t) + dy, 1), :, :][0]
                for dx in range(3):
                    k = dy * 3 + dx
                    acc += row[dx:dx + Wo, :].astype(jnp.float32) * w_ref[k:k + 1, :]
            y = acc + b_ref[...]
            y = y * jax.nn.sigmoid(y)
            o_ref[0, t] = y.astype(o_ref.dtype)


def dwconv3x3_bn_silu(x, w, b, stride):
    """x: (N,H,W,Cp) bf16, w: (9,Cp) f32 (scale folded), b: (Cp,) f32."""
    N, H, W, Cp = x.shape
    Ho = H if stride == 1 else (H - 1) // 2 + 1
    Wo = W                               # dense columns; wrapper subsamples s=2
    TH = Ho if Ho < 8 else 8
    assert Ho % TH == 0
    Hp, Wp = H + 2, W + 2
    xp = jnp.pad(x, ((0, 0), (1, 1), (1, 1), (0, 0)))

    out = pl.pallas_call(
        functools.partial(_dw3x3_kernel, TH=TH, Wo=Wo, stride=stride),
        out_shape=jax.ShapeDtypeStruct((N, Ho, Wo, Cp), jnp.bfloat16),
        grid=(N, Ho // TH),
        in_specs=[pl.BlockSpec((1, Hp, Wp, Cp), lambda n, hb: (n, 0, 0, 0)),
                  pl.BlockSpec((9, Cp), lambda n, hb: (0, 0)),
                  pl.BlockSpec((1, Cp), lambda n, hb: (0, 0))],
        out_specs=pl.BlockSpec((1, TH, Wo, Cp), lambda n, hb: (n, hb, 0, 0)),
        compiler_params=pltpu.CompilerParams(
            dimension_semantics=("parallel", "arbitrary"),
            vmem_limit_bytes=VMEM_LIMIT),
    )(xp, w, b.reshape(1, Cp))

    y = out
    if stride == 2:
        y = y[:, :, ::2, :]
    return y


# ---------------------------------------------------------------------------
# 1x1 conv / matmul with fused SE-gate (input scale) and residual (output add)
# ---------------------------------------------------------------------------

def _conv1x1_kernel(*refs, act, use_gate, use_res):
    i = 0
    x_ref = refs[i]; i += 1
    w_ref = refs[i]; i += 1
    b_ref = refs[i]; i += 1
    gate_ref = None
    res_ref = None
    if use_gate:
        gate_ref = refs[i]; i += 1
    if use_res:
        res_ref = refs[i]; i += 1
    o_ref = refs[i]

    lhs = x_ref[0]                                   # (Mp, Cp) bf16
    if use_gate:
        lhs = lhs * gate_ref[0]                      # per-channel SE gate
    y = jnp.dot(lhs, w_ref[...], preferred_element_type=jnp.float32) + b_ref[...]
    if act == "silu":
        y = y * jax.nn.sigmoid(y)
    if use_res:
        y = y + res_ref[0].astype(jnp.float32)
    o_ref[0] = y.astype(o_ref.dtype)


def conv1x1_bn_act(x, w, b, act, gate=None, residual=None):
    """x: (N, M, Cp) bf16 (flattened spatial) -> (N, M, Coutp) bf16.

    gate:     optional (N, 1, Cp)  bf16, multiplies the input channels.
    residual: optional (N, M, Coutp) bf16, added to the output.
    Grid = (Cout_tiles, N): weight tile resident across the batch axis.
    """
    N, M, Cp = x.shape
    Coutp = w.shape[1]
    Mp = _round_up(M, 8)
    xp = jnp.pad(x, ((0, 0), (0, Mp - M), (0, 0))) if Mp != M else x
    use_gate = gate is not None
    use_res = residual is not None
    if use_res and Mp != M:
        residual = jnp.pad(residual, ((0, 0), (0, Mp - M), (0, 0)))
    tn = 256 if Coutp % 256 == 0 else 128
    nj = Coutp // tn

    in_specs = [
        pl.BlockSpec((1, Mp, Cp), lambda j, n: (n, 0, 0)),
        pl.BlockSpec((Cp, tn), lambda j, n: (0, j)),
        pl.BlockSpec((1, tn), lambda j, n: (0, j)),
    ]
    inputs = [xp, w, b.reshape(1, Coutp)]
    if use_gate:
        in_specs.append(pl.BlockSpec((1, 1, Cp), lambda j, n: (n, 0, 0)))
        inputs.append(gate)
    if use_res:
        in_specs.append(pl.BlockSpec((1, Mp, tn), lambda j, n: (n, 0, j)))
        inputs.append(residual)

    out = pl.pallas_call(
        functools.partial(_conv1x1_kernel, act=act, use_gate=use_gate,
                          use_res=use_res),
        out_shape=jax.ShapeDtypeStruct((N, Mp, Coutp), jnp.bfloat16),
        grid=(nj, N),
        in_specs=in_specs,
        out_specs=pl.BlockSpec((1, Mp, tn), lambda j, n: (n, 0, j)),
        compiler_params=pltpu.CompilerParams(
            dimension_semantics=("parallel", "arbitrary"),
            vmem_limit_bytes=VMEM_LIMIT),
    )(*inputs)
    return out[:, :M, :] if Mp != M else out


# ---------------------------------------------------------------------------
# Squeeze-excite (pool -> FC1 -> SiLU -> FC2 -> sigmoid) fused in one kernel
# ---------------------------------------------------------------------------

def _se_kernel(x_ref, w1_ref, b1_ref, w2_ref, b2_ref, o_ref):
    pooled = jnp.mean(x_ref[...].astype(jnp.float32), axis=1)       # (Nb, C)
    h = jnp.dot(pooled.astype(jnp.bfloat16), w1_ref[...],
                preferred_element_type=jnp.float32) + b1_ref[...]
    h = h * jax.nn.sigmoid(h)
    g = jnp.dot(h.astype(jnp.bfloat16), w2_ref[...],
                preferred_element_type=jnp.float32) + b2_ref[...]
    o_ref[...] = jax.nn.sigmoid(g).astype(o_ref.dtype)


def se_gate(x_flat, w1, b1, w2, b2):
    """x_flat: (N, HW, Cp) bf16 -> gate (N, 1, Cp) bf16 (consumed by project 1x1)."""
    N, M, Cp = x_flat.shape
    Nb = _round_up(N, 8)
    xq = jnp.pad(x_flat, ((0, Nb - N), (0, 0), (0, 0))) if Nb != N else x_flat
    gate = pl.pallas_call(
        _se_kernel,
        out_shape=jax.ShapeDtypeStruct((Nb, Cp), jnp.bfloat16),
    )(xq, w1, b1.reshape(1, -1), w2, b2.reshape(1, -1))
    return gate[:N].reshape(N, 1, Cp)


# ---------------------------------------------------------------------------
# Head: global average pool + classifier FC fused in one kernel
# ---------------------------------------------------------------------------

def _head_kernel(x_ref, w_ref, b_ref, o_ref):
    pooled = jnp.mean(x_ref[...].astype(jnp.float32), axis=1)
    y = jnp.dot(pooled.astype(jnp.bfloat16), w_ref[...],
                preferred_element_type=jnp.float32) + b_ref[...]
    o_ref[...] = y


def head_pool_fc(y_flat, w, b, num_classes):
    N, M, Cp = y_flat.shape
    Nb = _round_up(N, 8)
    xq = jnp.pad(y_flat, ((0, Nb - N), (0, 0), (0, 0))) if Nb != N else y_flat
    out = pl.pallas_call(
        _head_kernel,
        out_shape=jax.ShapeDtypeStruct((Nb, w.shape[1]), jnp.float32),
    )(xq, w, b.reshape(1, -1))
    return out[:N, :num_classes]


# ---------------------------------------------------------------------------
# Deterministic parameter construction (EfficientNetV2-S shapes, padded, bf16)
# ---------------------------------------------------------------------------

class ParamGen:
    def __init__(self, key):
        self.key = key

    def next(self):
        self.key, k = jax.random.split(self.key)
        return k

    def conv(self, fan_in, shape):
        return jax.random.normal(self.next(), shape, jnp.float32) / jnp.sqrt(
            jnp.float32(fan_in))

    def bias(self, n):
        return 0.01 * jax.random.normal(self.next(), (n,), jnp.float32)

    def bn(self, c, eps=1e-3):
        gamma = 1.0 + 0.1 * jax.random.normal(self.next(), (c,), jnp.float32)
        beta = 0.1 * jax.random.normal(self.next(), (c,), jnp.float32)
        mean = 0.1 * jax.random.normal(self.next(), (c,), jnp.float32)
        var = jnp.abs(jax.random.normal(self.next(), (c,), jnp.float32)) + 0.5
        scale = gamma / jnp.sqrt(var + eps)
        bias = beta - mean * scale
        return scale, bias


def make_conv3x3(pg, cin, cout):
    cin_p, cout_p = _cpad(cin), _cpad(cout)
    w = pg.conv(9 * cin, (3, 3, cin, cout))                 # (dy, dx, cin, cout)
    scale, bias = pg.bn(cout)
    wf = w * scale[None, None, None, :]                     # fold BN scale into W
    wp = jnp.zeros((3, 3, cin_p, cout_p), jnp.float32).at[:, :, :cin, :cout].set(wf)
    bp = jnp.zeros((cout_p,), jnp.float32).at[:cout].set(bias)
    return {"w": wp.reshape(3, 3 * cin_p, cout_p).astype(jnp.bfloat16), "b": bp}


def make_conv1x1(pg, cin, cout):
    cin_p, cout_p = _cpad(cin), _cpad(cout)
    w = pg.conv(cin, (cin, cout))
    scale, bias = pg.bn(cout)
    wf = w * scale[None, :]
    wp = jnp.zeros((cin_p, cout_p), jnp.float32).at[:cin, :cout].set(wf)
    bp = jnp.zeros((cout_p,), jnp.float32).at[:cout].set(bias)
    return {"w": wp.astype(jnp.bfloat16), "b": bp}


def make_fused_mbconv(pg, cin, cout, expand, stride):
    expanded = cin * expand
    p = {"use_res": stride == 1 and cin == cout,
         "stride": stride,
         "has_expand": expanded != cin}
    if p["has_expand"]:
        p["expand"] = make_conv3x3(pg, cin, expanded)
        p["project"] = make_conv1x1(pg, expanded, cout)
    else:
        p["conv"] = make_conv3x3(pg, cin, cout)
    return p


def make_mbconv(pg, cin, cout, expand, stride):
    expanded = cin * expand
    squeeze = max(1, cin // 4)
    ep, sp = _cpad(expanded), _cpad(squeeze)
    dw = pg.conv(9, (9, expanded))
    dws, dwb = pg.bn(expanded)
    dw_w = jnp.zeros((9, ep), jnp.float32).at[:, :expanded].set(dw * dws[None, :])
    dw_b = jnp.zeros((ep,), jnp.float32).at[:expanded].set(dwb)
    se_w1 = jnp.zeros((ep, sp), jnp.float32).at[:expanded, :squeeze].set(
        pg.conv(expanded, (expanded, squeeze)))
    se_b1 = jnp.zeros((sp,), jnp.float32).at[:squeeze].set(pg.bias(squeeze))
    se_w2 = jnp.zeros((sp, ep), jnp.float32).at[:squeeze, :expanded].set(
        pg.conv(squeeze, (squeeze, expanded)))
    se_b2 = jnp.zeros((ep,), jnp.float32).at[:expanded].set(pg.bias(expanded))
    return {
        "use_res": stride == 1 and cin == cout,
        "stride": stride,
        "expand": make_conv1x1(pg, cin, expanded),
        "dw_w": dw_w, "dw_b": dw_b,
        "se_w1": se_w1.astype(jnp.bfloat16), "se_b1": se_b1,
        "se_w2": se_w2.astype(jnp.bfloat16), "se_b2": se_b2,
        "project": make_conv1x1(pg, expanded, cout),
    }


def apply_fused_mbconv(p, x):
    N, H, W, Cp = x.shape
    if p["has_expand"]:
        y = conv3x3_bn_act(x, p["expand"]["w"], p["expand"]["b"], p["stride"], "silu")
        _, Ho, Wo, Ep = y.shape
        y_flat = y.reshape(N, Ho * Wo, Ep)
        res_flat = x.reshape(N, H * W, Cp) if p["use_res"] else None
        out = conv1x1_bn_act(y_flat, p["project"]["w"], p["project"]["b"], "none",
                             residual=res_flat)
        return out.reshape(N, Ho, Wo, out.shape[-1])
    # expand ratio 1: single 3x3 conv; residual fused in-kernel when the output
    # width is sublane-aligned (true for stage 1 at these resolutions).
    fuse = p["use_res"] and p["stride"] == 1 and (W % 8 == 0)
    y = conv3x3_bn_act(x, p["conv"]["w"], p["conv"]["b"], p["stride"], "silu",
                       residual=x if fuse else None)
    if p["use_res"] and not fuse:
        y = y + x
    return y


def apply_mbconv(p, x):
    N, H, W, Cin_p = x.shape
    x_flat = x.reshape(N, H * W, Cin_p)
    y = conv1x1_bn_act(x_flat, p["expand"]["w"], p["expand"]["b"], "silu")
    Ep = y.shape[-1]
    y = y.reshape(N, H, W, Ep)
    y = dwconv3x3_bn_silu(y, p["dw_w"], p["dw_b"], p["stride"])
    _, Ho, Wo, _ = y.shape
    y_flat = y.reshape(N, Ho * Wo, Ep)
    gate = se_gate(y_flat, p["se_w1"], p["se_b1"], p["se_w2"], p["se_b2"])
    res_flat = x_flat if p["use_res"] else None
    out = conv1x1_bn_act(y_flat, p["project"]["w"], p["project"]["b"], "none",
                         gate=gate, residual=res_flat)
    return out.reshape(N, Ho, Wo, out.shape[-1])


# (block_type, expand_ratio, kernel, stride, cin, cout, num_layers)
EFFNET_V2_S_CONFIG = [
    ("fused", 1, 3, 1, 24, 24, 2),
    ("fused", 4, 3, 2, 24, 48, 4),
    ("fused", 4, 3, 2, 48, 64, 4),
    ("mb",    4, 3, 2, 64, 128, 6),
    ("mb",    6, 3, 1, 128, 160, 9),
    ("mb",    6, 3, 2, 160, 256, 15),
]


def make_params(key, num_classes=12):
    pg = ParamGen(key)
    params = {"stem": make_conv3x3(pg, 3, 24), "blocks": []}
    for (btype, expand, _k, stride, cin, cout, nl) in EFFNET_V2_S_CONFIG:
        for i in range(nl):
            ci = cin if i == 0 else cout
            s = stride if i == 0 else 1
            if btype == "fused":
                params["blocks"].append(
                    ("fused", make_fused_mbconv(pg, ci, cout, expand, s)))
            else:
                params["blocks"].append(
                    ("mb", make_mbconv(pg, ci, cout, expand, s)))
    params["head"] = make_conv1x1(pg, 256, 1280)
    ncp = _cpad(num_classes)
    fc_w = pg.conv(1280, (1280, num_classes))
    fc_b = pg.bias(num_classes)
    params["fc_w"] = jnp.zeros((1280, ncp), jnp.float32).at[:, :num_classes].set(
        fc_w).astype(jnp.bfloat16)
    params["fc_b"] = jnp.zeros((ncp,), jnp.float32).at[:num_classes].set(fc_b)
    return params


def efficientnet_forward(params, x_nchw, num_classes=12):
    x = jnp.transpose(x_nchw, (0, 2, 3, 1)).astype(jnp.float32)     # NCHW -> NHWC
    N, H, W, C = x.shape
    x = jnp.pad(x, ((0, 0), (0, 0), (0, 0), (0, _cpad(C) - C)))     # pad channels
    x = x.astype(jnp.bfloat16)
    y = conv3x3_bn_act(x, params["stem"]["w"], params["stem"]["b"], 2, "silu")
    for btype, bp in params["blocks"]:
        y = apply_fused_mbconv(bp, y) if btype == "fused" else apply_mbconv(bp, y)
    Nn, Hh, Ww, Cp = y.shape
    y_flat = y.reshape(Nn, Hh * Ww, Cp)
    y_flat = conv1x1_bn_act(y_flat, params["head"]["w"], params["head"]["b"], "silu")
    # Dropout(p=0.2) is identity at inference; global pool + FC fused in one kernel.
    return head_pool_fc(y_flat, params["fc_w"], params["fc_b"], num_classes)


if __name__ == "__main__":
    key = jax.random.PRNGKey(0)
    pkey, xkey = jax.random.split(key)
    params = make_params(pkey, num_classes=12)
    x = jax.random.normal(xkey, (2, 3, 32, 32), jnp.float32)        # NCHW input
    out = efficientnet_forward(params, x, num_classes=12)
    out = jax.block_until_ready(out)
    assert out.shape == (2, 12), out.shape
    assert bool(jnp.all(jnp.isfinite(out)))
    print("KERNEL_OK")
</pallas_src>

<mosaic_0001>
module attributes {stable_mosaic.version = 11 : i64} {
  func.func @_conv3x3_kernel(%arg0: i32, %arg1: i32, %arg2: memref<1x34x34x128xbf16, #tpu.memory_space<vmem>>, %arg3: memref<3x384x128xbf16, #tpu.memory_space<vmem>>, %arg4: memref<1x128xf32, #tpu.memory_space<vmem>>, %arg5: memref<1x8x32x128xbf16, #tpu.memory_space<vmem>>) attributes {dimension_semantics = [#tpu.dimension_semantics<parallel>, #tpu.dimension_semantics<arbitrary>], iteration_bounds = array<i64: 2, 2>, scalar_prefetch = 0 : i64, scratch_operands = 0 : i64, tpu.core_type = #tpu.core_type<tc>, window_params = [{transform_indices = @transform_0, window_bounds = array<i64: 1, 34, 34, 128>}, {pipeline_mode = #tpu.pipeline_mode<synchronous>, transform_indices = @transform_1, window_bounds = array<i64: 3, 384, 128>}, {pipeline_mode = #tpu.pipeline_mode<synchronous>, transform_indices = @transform_2, window_bounds = array<i64: 1, 128>}, {transform_indices = @transform_3, window_bounds = array<i64: 1, 8, 32, 128>}]} {
    %cst = arith.constant 0.000000e+00 : f32
    %0 = vector.broadcast %cst : f32 to vector<32x128xf32>
    %c8_i32 = arith.constant 8 : i32
    %1 = arith.muli %arg1, %c8_i32 : i32
    %c0_i32 = arith.constant 0 : i32
    %2 = arith.addi %1, %c0_i32 : i32
    %c2_i32 = arith.constant 2 : i32
    %3 = arith.muli %c2_i32, %2 : i32
    %c0_i32_0 = arith.constant 0 : i32
    %4 = arith.addi %3, %c0_i32_0 : i32
    %c0 = arith.constant 0 : index
    %5 = arith.index_cast %4 : i32 to index
    %c0_1 = arith.constant 0 : index
    %c0_2 = arith.constant 0 : index
    %6 = vector.load %arg2[%c0, %5, %c0_1, %c0_2] : memref<1x34x34x128xbf16, #tpu.memory_space<vmem>>, vector<1x1x34x128xbf16>
    %7 = vector.shape_cast %6 : vector<1x1x34x128xbf16> to vector<1x34x128xbf16>
    %8 = vector.shape_cast %7 : vector<1x34x128xbf16> to vector<34x128xbf16>
    %9 = vector.extract_strided_slice %8 {offsets = [0, 0], sizes = [32, 128], strides = [1, 1]} : vector<34x128xbf16> to vector<32x128xbf16>
    %10 = vector.extract_strided_slice %8 {offsets = [1, 0], sizes = [32, 128], strides = [1, 1]} : vector<34x128xbf16> to vector<32x128xbf16>
    %11 = vector.extract_strided_slice %8 {offsets = [2, 0], sizes = [32, 128], strides = [1, 1]} : vector<34x128xbf16> to vector<32x128xbf16>
    %12 = tpu.concatenate %9, %10, %11 in 1 : vector<32x128xbf16>, vector<32x128xbf16>, vector<32x128xbf16> -> vector<32x384xbf16>
    %c0_3 = arith.constant 0 : index
    %c0_4 = arith.constant 0 : index
    %c0_5 = arith.constant 0 : index
    %13 = vector.load %arg3[%c0_3, %c0_4, %c0_5] : memref<3x384x128xbf16, #tpu.memory_space<vmem>>, vector<1x384x128xbf16>
    %14 = vector.shape_cast %13 : vector<1x384x128xbf16> to vector<384x128xbf16>
    %cst_6 = arith.constant dense<0.000000e+00> : vector<32x128xf32>
    %15 = tpu.matmul %12, %14, %cst_6 {dimension_numbers = #tpu.dot_dimension_numbers<[1], [0], [0], [1], [0, 0, 1, 1], [], []>} : vector<32x384xbf16>, vector<384x128xbf16>, vector<32x128xf32> -> vector<32x128xf32>
    %16 = arith.addf %0, %15 : vector<32x128xf32>
    %c8_i32_7 = arith.constant 8 : i32
    %17 = arith.muli %arg1, %c8_i32_7 : i32
    %c0_i32_8 = arith.constant 0 : i32
    %18 = arith.addi %17, %c0_i32_8 : i32
    %c2_i32_9 = arith.constant 2 : i32
    %19 = arith.muli %c2_i32_9, %18 : i32
    %c1_i32 = arith.constant 1 : i32
    %20 = arith.addi %19, %c1_i32 : i32
    %c0_10 = arith.constant 0 : index
    %21 = arith.index_cast %20 : i32 to index
    %c0_11 = arith.constant 0 : index
    %c0_12 = arith.constant 0 : index
    %22 = vector.load %arg2[%c0_10, %21, %c0_11, %c0_12] : memref<1x34x34x128xbf16, #tpu.memory_space<vmem>>, vector<1x1x34x128xbf16>
    %23 = vector.shape_cast %22 : vector<1x1x34x128xbf16> to vector<1x34x128xbf16>
    %24 = vector.shape_cast %23 : vector<1x34x128xbf16> to vector<34x128xbf16>
    %25 = vector.extract_strided_slice %24 {offsets = [0, 0], sizes = [32, 128], strides = [1, 1]} : vector<34x128xbf16> to vector<32x128xbf16>
    %26 = vector.extract_strided_slice %24 {offsets = [1, 0], sizes = [32, 128], strides = [1, 1]} : vector<34x128xbf16> to vector<32x128xbf16>
    %27 = vector.extract_strided_slice %24 {offsets = [2, 0], sizes = [32, 128], strides = [1, 1]} : vector<34x128xbf16> to vector<32x128xbf16>
    %28 = tpu.concatenate %25, %26, %27 in 1 : vector<32x128xbf16>, vector<32x128xbf16>, vector<32x128xbf16> -> vector<32x384xbf16>
    %c1 = arith.constant 1 : index
    %c0_13 = arith.constant 0 : index
    %c0_14 = arith.constant 0 : index
    %29 = vector.load %arg3[%c1, %c0_13, %c0_14] : memref<3x384x128xbf16, #tpu.memory_space<vmem>>, vector<1x384x128xbf16>
    %30 = vector.shape_cast %29 : vector<1x384x128xbf16> to vector<384x128xbf16>
    %cst_15 = arith.constant dense<0.000000e+00> : vector<32x128xf32>
    %31 = tpu.matmul %28, %30, %cst_15 {dimension_numbers = #tpu.dot_dimension_numbers<[1], [0], [0], [1], [0, 0, 1, 1], [], []>} : vector<32x384xbf16>, vector<384x128xbf16>, vector<32x128xf32> -> vector<32x128xf32>
    %32 = arith.addf %16, %31 : vector<32x128xf32>
    %c8_i32_16 = arith.constant 8 : i32
    %33 = arith.muli %arg1, %c8_i32_16 : i32
    %c0_i32_17 = arith.constant 0 : i32
    %34 = arith.addi %33, %c0_i32_17 : i32
    %c2_i32_18 = arith.constant 2 : i32
    %35 = arith.muli %c2_i32_18, %34 : i32
    %c2_i32_19 = arith.constant 2 : i32
    %36 = arith.addi %35, %c2_i32_19 : i32
    %c0_20 = arith.constant 0 : index
    %37 = arith.index_cast %36 : i32 to index
    %c0_21 = arith.constant 0 : index
    %c0_22 = arith.constant 0 : index
    %38 = vector.load %arg2[%c0_20, %37, %c0_21, %c0_22] : memref<1x34x34x128xbf16, #tpu.memory_space<vmem>>, vector<1x1x34x128xbf16>
    %39 = vector.shape_cast %38 : vector<1x1x34x128xbf16> to vector<1x34x128xbf16>
    %40 = vector.shape_cast %39 : vector<1x34x128xbf16> to vector<34x128xbf16>
    %41 = vector.extract_strided_slice %40 {offsets = [0, 0], sizes = [32, 128], strides = [1, 1]} : vector<34x128xbf16> to vector<32x128xbf16>
    %42 = vector.extract_strided_slice %40 {offsets = [1, 0], sizes = [32, 128], strides = [1, 1]} : vector<34x128xbf16> to vector<32x128xbf16>
    %43 = vector.extract_strided_slice %40 {offsets = [2, 0], sizes = [32, 128], strides = [1, 1]} : vector<34x128xbf16> to vector<32x128xbf16>
    %44 = tpu.concatenate %41, %42, %43 in 1 : vector<32x128xbf16>, vector<32x128xbf16>, vector<32x128xbf16> -> vector<32x384xbf16>
    %c2 = arith.constant 2 : index
    %c0_23 = arith.constant 0 : index
    %c0_24 = arith.constant 0 : index
    %45 = vector.load %arg3[%c2, %c0_23, %c0_24] : memref<3x384x128xbf16, #tpu.memory_space<vmem>>, vector<1x384x128xbf16>
    %46 = vector.shape_cast %45 : vector<1x384x128xbf16> to vector<384x128xbf16>
    %cst_25 = arith.constant dense<0.000000e+00> : vector<32x128xf32>
    %47 = tpu.matmul %44, %46, %cst_25 {dimension_numbers = #tpu.dot_dimension_numbers<[1], [0], [0], [1], [0, 0, 1, 1], [], []>} : vector<32x384xbf16>, vector<384x128xbf16>, vector<32x128xf32> -> vector<32x128xf32>
    %48 = arith.addf %32, %47 : vector<32x128xf32>
    %c0_26 = arith.constant 0 : index
    %c0_27 = arith.constant 0 : index
    %49 = vector.load %arg4[%c0_26, %c0_27] : memref<1x128xf32, #tpu.memory_space<vmem>>, vector<1x128xf32>
    %50 = vector.broadcast %49 : vector<1x128xf32> to vector<32x128xf32>
    %51 = arith.addf %48, %50 : vector<32x128xf32>
    %52 = arith.negf %51 : vector<32x128xf32>
    %53 = math.exp %52 : vector<32x128xf32>
    %cst_28 = arith.constant 1.000000e+00 : f32
    %54 = vector.broadcast %cst_28 : f32 to vector<32x128xf32>
    %55 = arith.addf %54, %53 : vector<32x128xf32>
    %56 = arith.divf %54, %55 : vector<32x128xf32>
    %57 = arith.mulf %51, %56 : vector<32x128xf32>
    %58 = arith.truncf %57 : vector<32x128xf32> to vector<32x128xbf16>
    %c0_29 = arith.constant 0 : index
    %c0_30 = arith.constant 0 : index
    %c0_31 = arith.constant 0 : index
    %c0_32 = arith.constant 0 : index
    %59 = vector.load %arg5[%c0_29, %c0_30, %c0_31, %c0_32] : memref<1x8x32x128xbf16, #tpu.memory_space<vmem>>, vector<1x1x32x128xbf16>
    %60 = vector.shape_cast %59 : vector<1x1x32x128xbf16> to vector<32x128xbf16>
    %61 = vector.shape_cast %58 : vector<32x128xbf16> to vector<1x1x32x128xbf16>
    tpu.vector_store %arg5[%c0_29, %c0_30, %c0_31, %c0_32], %61 {strides = array<i32>} : memref<1x8x32x128xbf16, #tpu.memory_space<vmem>>, vector<1x1x32x128xbf16>,
    %cst_33 = arith.constant 0.000000e+00 : f32
    %62 = vector.broadcast %cst_33 : f32 to vector<32x128xf32>
    %c8_i32_34 = arith.constant 8 : i32
    %63 = arith.muli %arg1, %c8_i32_34 : i32
    %c1_i32_35 = arith.constant 1 : i32
    %64 = arith.addi %63, %c1_i32_35 : i32
    %c2_i32_36 = arith.constant 2 : i32
    %65 = arith.muli %c2_i32_36, %64 : i32
    %c0_i32_37 = arith.constant 0 : i32
    %66 = arith.addi %65, %c0_i32_37 : i32
    %c0_38 = arith.constant 0 : index
    %67 = arith.index_cast %66 : i32 to index
    %c0_39 = arith.constant 0 : index
    %c0_40 = arith.constant 0 : index
    %68 = vector.load %arg2[%c0_38, %67, %c0_39, %c0_40] : memref<1x34x34x128xbf16, #tpu.memory_space<vmem>>, vector<1x1x34x128xbf16>
    %69 = vector.shape_cast %68 : vector<1x1x34x128xbf16> to vector<1x34x128xbf16>
    %70 = vector.shape_cast %69 : vector<1x34x128xbf16> to vector<34x128xbf16>
    %71 = vector.extract_strided_slice %70 {offsets = [0, 0], sizes = [32, 128], strides = [1, 1]} : vector<34x128xbf16> to vector<32x128xbf16>
    %72 = vector.extract_strided_slice %70 {offsets = [1, 0], sizes = [32, 128], strides = [1, 1]} : vector<34x128xbf16> to vector<32x128xbf16>
    %73 = vector.extract_strided_slice %70 {offsets = [2, 0], sizes = [32, 128], strides = [1, 1]} : vector<34x128xbf16> to vector<32x128xbf16>
    %74 = tpu.concatenate %71, %72, %73 in 1 : vector<32x128xbf16>, vector<32x128xbf16>, vector<32x128xbf16> -> vector<32x384xbf16>
    %c0_41 = arith.constant 0 : index
    %c0_42 = arith.constant 0 : index
    %c0_43 = arith.constant 0 : index
    %75 = vector.load %arg3[%c0_41, %c0_42, %c0_43] : memref<3x384x128xbf16, #tpu.memory_space<vmem>>, vector<1x384x128xbf16>
    %76 = vector.shape_cast %75 : vector<1x384x128xbf16> to vector<384x128xbf16>
    %cst_44 = arith.constant dense<0.000000e+00> : vector<32x128xf32>
    %77 = tpu.matmul %74, %76, %cst_44 {dimension_numbers = #tpu.dot_dimension_numbers<[1], [0], [0], [1], [0, 0, 1, 1], [], []>} : vector<32x384xbf16>, vector<384x128xbf16>, vector<32x128xf32> -> vector<32x128xf32>
    %78 = arith.addf %62, %77 : vector<32x128xf32>
    %c8_i32_45 = arith.constant 8 : i32
    %79 = arith.muli %arg1, %c8_i32_45 : i32
    %c1_i32_46 = arith.constant 1 : i32
    %80 = arith.addi %79, %c1_i32_46 : i32
    %c2_i32_47 = arith.constant 2 : i32
    %81 = arith.muli %c2_i32_47, %80 : i32
    %c1_i32_48 = arith.constant 1 : i32
    %82 = arith.addi %81, %c1_i32_48 : i32
    %c0_49 = arith.constant 0 : index
    %83 = arith.index_cast %82 : i32 to index
    %c0_50 = arith.constant 0 : index
    %c0_51 = arith.constant 0 : index
    %84 = vector.load %arg2[%c0_49, %83, %c0_50, %c0_51] : memref<1x34x34x128xbf16, #tpu.memory_space<vmem>>, vector<1x1x34x128xbf16>
    %85 = vector.shape_cast %84 : vector<1x1x34x128xbf16> to vector<1x34x128xbf16>
    %86 = vector.shape_cast %85 : vector<1x34x128xbf16> to vector<34x128xbf16>
    %87 = vector.extract_strided_slice %86 {offsets = [0, 0], sizes = [32, 128], strides = [1, 1]} : vector<34x128xbf16> to vector<32x128xbf16>
    %88 = vector.extract_strided_slice %86 {offsets = [1, 0], sizes = [32, 128], strides = [1, 1]} : vector<34x128xbf16> to vector<32x128xbf16>
    %89 = vector.extract_strided_slice %86 {offsets = [2, 0], sizes = [32, 128], strides = [1, 1]} : vector<34x128xbf16> to vector<32x128xbf16>
    %90 = tpu.concatenate %87, %88, %89 in 1 : vector<32x128xbf16>, vector<32x128xbf16>, vector<32x128xbf16> -> vector<32x384xbf16>
    %c1_52 = arith.constant 1 : index
    %c0_53 = arith.constant 0 : index
    %c0_54 = arith.constant 0 : index
    %91 = vector.load %arg3[%c1_52, %c0_53, %c0_54] : memref<3x384x128xbf16, #tpu.memory_space<vmem>>, vector<1x384x128xbf16>
    %92 = vector.shape_cast %91 : vector<1x384x128xbf16> to vector<384x128xbf16>
    %cst_55 = arith.constant dense<0.000000e+00> : vector<32x128xf32>
    %93 = tpu.matmul %90, %92, %cst_55 {dimension_numbers = #tpu.dot_dimension_numbers<[1], [0], [0], [1], [0, 0, 1, 1], [], []>} : vector<32x384xbf16>, vector<384x128xbf16>, vector<32x128xf32> -> vector<32x128xf32>
    %94 = arith.addf %78, %93 : vector<32x128xf32>
    %c8_i32_56 = arith.constant 8 : i32
    %95 = arith.muli %arg1, %c8_i32_56 : i32
    %c1_i32_57 = arith.constant 1 : i32
    %96 = arith.addi %95, %c1_i32_57 : i32
    %c2_i32_58 = arith.constant 2 : i32
    %97 = arith.muli %c2_i32_58, %96 : i32
    %c2_i32_59 = arith.constant 2 : i32
    %98 = arith.addi %97, %c2_i32_59 : i32
    %c0_60 = arith.constant 0 : index
    %99 = arith.index_cast %98 : i32 to index
    %c0_61 = arith.constant 0 : index
    %c0_62 = arith.constant 0 : index
    %100 = vector.load %arg2[%c0_60, %99, %c0_61, %c0_62] : memref<1x34x34x128xbf16, #tpu.memory_space<vmem>>, vector<1x1x34x128xbf16>
    %101 = vector.shape_cast %100 : vector<1x1x34x128xbf16> to vector<1x34x128xbf16>
    %102 = vector.shape_cast %101 : vector<1x34x128xbf16> to vector<34x128xbf16>
    %103 = vector.extract_strided_slice %102 {offsets = [0, 0], sizes = [32, 128], strides = [1, 1]} : vector<34x128xbf16> to vector<32x128xbf16>
    %104 = vector.extract_strided_slice %102 {offsets = [1, 0], sizes = [32, 128], strides = [1, 1]} : vector<34x128xbf16> to vector<32x128xbf16>
    %105 = vector.extract_strided_slice %102 {offsets = [2, 0], sizes = [32, 128], strides = [1, 1]} : vector<34x128xbf16> to vector<32x128xbf16>
    %106 = tpu.concatenate %103, %104, %105 in 1 : vector<32x128xbf16>, vector<32x128xbf16>, vector<32x128xbf16> -> vector<32x384xbf16>
    %c2_63 = arith.constant 2 : index
    %c0_64 = arith.constant 0 : index
    %c0_65 = arith.constant 0 : index
    %107 = vector.load %arg3[%c2_63, %c0_64, %c0_65] : memref<3x384x128xbf16, #tpu.memory_space<vmem>>, vector<1x384x128xbf16>
    %108 = vector.shape_cast %107 : vector<1x384x128xbf16> to vector<384x128xbf16>
    %cst_66 = arith.constant dense<0.000000e+00> : vector<32x128xf32>
    %109 = tpu.matmul %106, %108, %cst_66 {dimension_numbers = #tpu.dot_dimension_numbers<[1], [0], [0], [1], [0, 0, 1, 1], [], []>} : vector<32x384xbf16>, vector<384x128xbf16>, vector<32x128xf32> -> vector<32x128xf32>
    %110 = arith.addf %94, %109 : vector<32x128xf32>
    %c0_67 = arith.constant 0 : index
    %c0_68 = arith.constant 0 : index
    %111 = vector.load %arg4[%c0_67, %c0_68] : memref<1x128xf32, #tpu.memory_space<vmem>>, vector<1x128xf32>
    %112 = vector.broadcast %111 : vector<1x128xf32> to vector<32x128xf32>
    %113 = arith.addf %110, %112 : vector<32x128xf32>
    %114 = arith.negf %113 : vector<32x128xf32>
    %115 = math.exp %114 : vector<32x128xf32>
    %cst_69 = arith.constant 1.000000e+00 : f32
    %116 = vector.broadcast %cst_69 : f32 to vector<32x128xf32>
    %117 = arith.addf %116, %115 : vector<32x128xf32>
    %118 = arith.divf %116, %117 : vector<32x128xf32>
    %119 = arith.mulf %113, %118 : vector<32x128xf32>
    %120 = arith.truncf %119 : vector<32x128xf32> to vector<32x128xbf16>
    %c0_70 = arith.constant 0 : index
    %c1_71 = arith.constant 1 : index
    %c0_72 = arith.constant 0 : index
    %c0_73 = arith.constant 0 : index
    %121 = vector.load %arg5[%c0_70, %c1_71, %c0_72, %c0_73] : memref<1x8x32x128xbf16, #tpu.memory_space<vmem>>, vector<1x1x32x128xbf16>
    %122 = vector.shape_cast %121 : vector<1x1x32x128xbf16> to vector<32x128xbf16>
    %123 = vector.shape_cast %120 : vector<32x128xbf16> to vector<1x1x32x128xbf16>
    tpu.vector_store %arg5[%c0_70, %c1_71, %c0_72, %c0_73], %123 {strides = array<i32>} : memref<1x8x32x128xbf16, #tpu.memory_space<vmem>>, vector<1x1x32x128xbf16>,
    %cst_74 = arith.constant 0.000000e+00 : f32
    %124 = vector.broadcast %cst_74 : f32 to vector<32x128xf32>
    %c8_i32_75 = arith.constant 8 : i32
    %125 = arith.muli %arg1, %c8_i32_75 : i32
    %c2_i32_76 = arith.constant 2 : i32
    %126 = arith.addi %125, %c2_i32_76 : i32
    %c2_i32_77 = arith.constant 2 : i32
    %127 = arith.muli %c2_i32_77, %126 : i32
    %c0_i32_78 = arith.constant 0 : i32
    %128 = arith.addi %127, %c0_i32_78 : i32
    %c0_79 = arith.constant 0 : index
    %129 = arith.index_cast %128 : i32 to index
    %c0_80 = arith.constant 0 : index
    %c0_81 = arith.constant 0 : index
    %130 = vector.load %arg2[%c0_79, %129, %c0_80, %c0_81] : memref<1x34x34x128xbf16, #tpu.memory_space<vmem>>, vector<1x1x34x128xbf16>
    %131 = vector.shape_cast %130 : vector<1x1x34x128xbf16> to vector<1x34x128xbf16>
    %132 = vector.shape_cast %131 : vector<1x34x128xbf16> to vector<34x128xbf16>
    %133 = vector.extract_strided_slice %132 {offsets = [0, 0], sizes = [32, 128], strides = [1, 1]} : vector<34x128xbf16> to vector<32x128xbf16>
    %134 = vector.extract_strided_slice %132 {offsets = [1, 0], sizes = [32, 128], strides = [1, 1]} : vector<34x128xbf16> to vector<32x128xbf16>
    %135 = vector.extract_strided_slice %132 {offsets = [2, 0], sizes = [32, 128], strides = [1, 1]} : vector<34x128xbf16> to vector<32x128xbf16>
    %136 = tpu.concatenate %133, %134, %135 in 1 : vector<32x128xbf16>, vector<32x128xbf16>, vector<32x128xbf16> -> vector<32x384xbf16>
    %c0_82 = arith.constant 0 : index
    %c0_83 = arith.constant 0 : index
    %c0_84 = arith.constant 0 : index
    %137 = vector.load %arg3[%c0_82, %c0_83, %c0_84] : memref<3x384x128xbf16, #tpu.memory_space<vmem>>, vector<1x384x128xbf16>
    %138 = vector.shape_cast %137 : vector<1x384x128xbf16> to vector<384x128xbf16>
    %cst_85 = arith.constant dense<0.000000e+00> : vector<32x128xf32>
    %139 = tpu.matmul %136, %138, %cst_85 {dimension_numbers = #tpu.dot_dimension_numbers<[1], [0], [0], [1], [0, 0, 1, 1], [], []>} : vector<32x384xbf16>, vector<384x128xbf16>, vector<32x128xf32> -> vector<32x128xf32>
    %140 = arith.addf %124, %139 : vector<32x128xf32>
    %c8_i32_86 = arith.constant 8 : i32
    %141 = arith.muli %arg1, %c8_i32_86 : i32
    %c2_i32_87 = arith.constant 2 : i32
    %142 = arith.addi %141, %c2_i32_87 : i32
    %c2_i32_88 = arith.constant 2 : i32
    %143 = arith.muli %c2_i32_88, %142 : i32
    %c1_i32_89 = arith.constant 1 : i32
    %144 = arith.addi %143, %c1_i32_89 : i32
    %c0_90 = arith.constant 0 : index
    %145 = arith.index_cast %144 : i32 to index
    %c0_91 = arith.constant 0 : index
    %c0_92 = arith.constant 0 : index
    %146 = vector.load %arg2[%c0_90, %145, %c0_91, %c0_92] : memref<1x34x34x128xbf16, #tpu.memory_space<vmem>>, vector<1x1x34x128xbf16>
    %147 = vector.shape_cast %146 : vector<1x1x34x128xbf16> to vector<1x34x128xbf16>
    %148 = vector.shape_cast %147 : vector<1x34x128xbf16> to vector<34x128xbf16>
    %149 = vector.extract_strided_slice %148 {offsets = [0, 0], sizes = [32, 128], strides = [1, 1]} : vector<34x128xbf16> to vector<32x128xbf16>
    %150 = vector.extract_strided_slice %148 {offsets = [1, 0], sizes = [32, 128], strides = [1, 1]} : vector<34x128xbf16> to vector<32x128xbf16>
    %151 = vector.extract_strided_slice %148 {offsets = [2, 0], sizes = [32, 128], strides = [1, 1]} : vector<34x128xbf16> to vector<32x128xbf16>
    %152 = tpu.concatenate %149, %150, %151 in 1 : vector<32x128xbf16>, vector<32x128xbf16>, vector<32x128xbf16> -> vector<32x384xbf16>
    %c1_93 = arith.constant 1 : index
    %c0_94 = arith.constant 0 : index
    %c0_95 = arith.constant 0 : index
    %153 = vector.load %arg3[%c1_93, %c0_94, %c0_95] : memref<3x384x128xbf16, #tpu.memory_space<vmem>>, vector<1x384x128xbf16>
    %154 = vector.shape_cast %153 : vector<1x384x128xbf16> to vector<384x128xbf16>
    %cst_96 = arith.constant dense<0.000000e+00> : vector<32x128xf32>
    %155 = tpu.matmul %152, %154, %cst_96 {dimension_numbers = #tpu.dot_dimension_numbers<[1], [0], [0], [1], [0, 0, 1, 1], [], []>} : vector<32x384xbf16>, vector<384x128xbf16>, vector<32x128xf32> -> vector<32x128xf32>
    %156 = arith.addf %140, %155 : vector<32x128xf32>
    %c8_i32_97 = arith.constant 8 : i32
    %157 = arith.muli %arg1, %c8_i32_97 : i32
    %c2_i32_98 = arith.constant 2 : i32
    %158 = arith.addi %157, %c2_i32_98 : i32
    %c2_i32_99 = arith.constant 2 : i32
    %159 = arith.muli %c2_i32_99, %158 : i32
    %c2_i32_100 = arith.constant 2 : i32
    %160 = arith.addi %159, %c2_i32_100 : i32
    %c0_101 = arith.constant 0 : index
    %161 = arith.index_cast %160 : i32 to index
    %c0_102 = arith.constant 0 : index
    %c0_103 = arith.constant 0 : index
    %162 = vector.load %arg2[%c0_101, %161, %c0_102, %c0_103] : memref<1x34x34x128xbf16, #tpu.memory_space<vmem>>, vector<1x1x34x128xbf16>
    %163 = vector.shape_cast %162 : vector<1x1x34x128xbf16> to vector<1x34x128xbf16>
    %164 = vector.shape_cast %163 : vector<1x34x128xbf16> to vector<34x128xbf16>
    %165 = vector.extract_strided_slice %164 {offsets = [0, 0], sizes = [32, 128], strides = [1, 1]} : vector<34x128xbf16> to vector<32x128xbf16>
    %166 = vector.extract_strided_slice %164 {offsets = [1, 0], sizes = [32, 128], strides = [1, 1]} : vector<34x128xbf16> to vector<32x128xbf16>
    %167 = vector.extract_strided_slice %164 {offsets = [2, 0], sizes = [32, 128], strides = [1, 1]} : vector<34x128xbf16> to vector<32x128xbf16>
    %168 = tpu.concatenate %165, %166, %167 in 1 : vector<32x128xbf16>, vector<32x128xbf16>, vector<32x128xbf16> -> vector<32x384xbf16>
    %c2_104 = arith.constant 2 : index
    %c0_105 = arith.constant 0 : index
    %c0_106 = arith.constant 0 : index
    %169 = vector.load %arg3[%c2_104, %c0_105, %c0_106] : memref<3x384x128xbf16, #tpu.memory_space<vmem>>, vector<1x384x128xbf16>
    %170 = vector.shape_cast %169 : vector<1x384x128xbf16> to vector<384x128xbf16>
    %cst_107 = arith.constant dense<0.000000e+00> : vector<32x128xf32>
    %171 = tpu.matmul %168, %170, %cst_107 {dimension_numbers = #tpu.dot_dimension_numbers<[1], [0], [0], [1], [0, 0, 1, 1], [], []>} : vector<32x384xbf16>, vector<384x128xbf16>, vector<32x128xf32> -> vector<32x128xf32>
    %172 = arith.addf %156, %171 : vector<32x128xf32>
    %c0_108 = arith.constant 0 : index
    %c0_109 = arith.constant 0 : index
    %173 = vector.load %arg4[%c0_108, %c0_109] : memref<1x128xf32, #tpu.memory_space<vmem>>, vector<1x128xf32>
    %174 = vector.broadcast %173 : vector<1x128xf32> to vector<32x128xf32>
    %175 = arith.addf %172, %174 : vector<32x128xf32>
    %176 = arith.negf %175 : vector<32x128xf32>
    %177 = math.exp %176 : vector<32x128xf32>
    %cst_110 = arith.constant 1.000000e+00 : f32
    %178 = vector.broadcast %cst_110 : f32 to vector<32x128xf32>
    %179 = arith.addf %178, %177 : vector<32x128xf32>
    %180 = arith.divf %178, %179 : vector<32x128xf32>
    %181 = arith.mulf %175, %180 : vector<32x128xf32>
    %182 = arith.truncf %181 : vector<32x128xf32> to vector<32x128xbf16>
    %c0_111 = arith.constant 0 : index
    %c2_112 = arith.constant 2 : index
    %c0_113 = arith.constant 0 : index
    %c0_114 = arith.constant 0 : index
    %183 = vector.load %arg5[%c0_111, %c2_112, %c0_113, %c0_114] : memref<1x8x32x128xbf16, #tpu.memory_space<vmem>>, vector<1x1x32x128xbf16>
    %184 = vector.shape_cast %183 : vector<1x1x32x128xbf16> to vector<32x128xbf16>
    %185 = vector.shape_cast %182 : vector<32x128xbf16> to vector<1x1x32x128xbf16>
    tpu.vector_store %arg5[%c0_111, %c2_112, %c0_113, %c0_114], %185 {strides = array<i32>} : memref<1x8x32x128xbf16, #tpu.memory_space<vmem>>, vector<1x1x32x128xbf16>,
    %cst_115 = arith.constant 0.000000e+00 : f32
    %186 = vector.broadcast %cst_115 : f32 to vector<32x128xf32>
    %c8_i32_116 = arith.constant 8 : i32
    %187 = arith.muli %arg1, %c8_i32_116 : i32
    %c3_i32 = arith.constant 3 : i32
    %188 = arith.addi %187, %c3_i32 : i32
    %c2_i32_117 = arith.constant 2 : i32
    %189 = arith.muli %c2_i32_117, %188 : i32
    %c0_i32_118 = arith.constant 0 : i32
    %190 = arith.addi %189, %c0_i32_118 : i32
    %c0_119 = arith.constant 0 : index
    %191 = arith.index_cast %190 : i32 to index
    %c0_120 = arith.constant 0 : index
    %c0_121 = arith.constant 0 : index
    %192 = vector.load %arg2[%c0_119, %191, %c0_120, %c0_121] : memref<1x34x34x128xbf16, #tpu.memory_space<vmem>>, vector<1x1x34x128xbf16>
    %193 = vector.shape_cast %192 : vector<1x1x34x128xbf16> to vector<1x34x128xbf16>
    %194 = vector.shape_cast %193 : vector<1x34x128xbf16> to vector<34x128xbf16>
    %195 = vector.extract_strided_slice %194 {offsets = [0, 0], sizes = [32, 128], strides = [1, 1]} : vector<34x128xbf16> to vector<32x128xbf16>
    %196 = vector.extract_strided_slice %194 {offsets = [1, 0], sizes = [32, 128], strides = [1, 1]} : vector<34x128xbf16> to vector<32x128xbf16>
    %197 = vector.extract_strided_slice %194 {offsets = [2, 0], sizes = [32, 128], strides = [1, 1]} : vector<34x128xbf16> to vector<32x128xbf16>
    %198 = tpu.concatenate %195, %196, %197 in 1 : vector<32x128xbf16>, vector<32x128xbf16>, vector<32x128xbf16> -> vector<32x384xbf16>
    %c0_122 = arith.constant 0 : index
    %c0_123 = arith.constant 0 : index
    %c0_124 = arith.constant 0 : index
    %199 = vector.load %arg3[%c0_122, %c0_123, %c0_124] : memref<3x384x128xbf16, #tpu.memory_space<vmem>>, vector<1x384x128xbf16>
    %200 = vector.shape_cast %199 : vector<1x384x128xbf16> to vector<384x128xbf16>
    %cst_125 = arith.constant dense<0.000000e+00> : vector<32x128xf32>
    %201 = tpu.matmul %198, %200, %cst_125 {dimension_numbers = #tpu.dot_dimension_numbers<[1], [0], [0], [1], [0, 0, 1, 1], [], []>} : vector<32x384xbf16>, vector<384x128xbf16>, vector<32x128xf32> -> vector<32x128xf32>
    %202 = arith.addf %186, %201 : vector<32x128xf32>
    %c8_i32_126 = arith.constant 8 : i32
    %203 = arith.muli %arg1, %c8_i32_126 : i32
    %c3_i32_127 = arith.constant 3 : i32
    %204 = arith.addi %203, %c3_i32_127 : i32
    %c2_i32_128 = arith.constant 2 : i32
    %205 = arith.muli %c2_i32_128, %204 : i32
    %c1_i32_129 = arith.constant 1 : i32
    %206 = arith.addi %205, %c1_i32_129 : i32
    %c0_130 = arith.constant 0 : index
    %207 = arith.index_cast %206 : i32 to index
    %c0_131 = arith.constant 0 : index
    %c0_132 = arith.constant 0 : index
    %208 = vector.load %arg2[%c0_130, %207, %c0_131, %c0_132] : memref<1x34x34x128xbf16, #tpu.memory_space<vmem>>, vector<1x1x34x128xbf16>
    %209 = vector.shape_cast %208 : vector<1x1x34x128xbf16> to vector<1x34x128xbf16>
    %210 = vector.shape_cast %209 : vector<1x34x128xbf16> to vector<34x128xbf16>
    %211 = vector.extract_strided_slice %210 {offsets = [0, 0], sizes = [32, 128], strides = [1, 1]} : vector<34x128xbf16> to vector<32x128xbf16>
    %212 = vector.extract_strided_slice %210 {offsets = [1, 0], sizes = [32, 128], strides = [1, 1]} : vector<34x128xbf16> to vector<32x128xbf16>
    %213 = vector.extract_strided_slice %210 {offsets = [2, 0], sizes = [32, 128], strides = [1, 1]} : vector<34x128xbf16> to vector<32x128xbf16>
    %214 = tpu.concatenate %211, %212, %213 in 1 : vector<32x128xbf16>, vector<32x128xbf16>, vector<32x128xbf16> -> vector<32x384xbf16>
    %c1_133 = arith.constant 1 : index
    %c0_134 = arith.constant 0 : index
    %c0_135 = arith.constant 0 : index
    %215 = vector.load %arg3[%c1_133, %c0_134, %c0_135] : memref<3x384x128xbf16, #tpu.memory_space<vmem>>, vector<1x384x128xbf16>
    %216 = vector.shape_cast %215 : vector<1x384x128xbf16> to vector<384x128xbf16>
    %cst_136 = arith.constant dense<0.000000e+00> : vector<32x128xf32>
    %217 = tpu.matmul %214, %216, %cst_136 {dimension_numbers = #tpu.dot_dimension_numbers<[1], [0], [0], [1], [0, 0, 1, 1], [], []>} : vector<32x384xbf16>, vector<384x128xbf16>, vector<32x128xf32> -> vector<32x128xf32>
    %218 = arith.addf %202, %217 : vector<32x128xf32>
    %c8_i32_137 = arith.constant 8 : i32
    %219 = arith.muli %arg1, %c8_i32_137 : i32
    %c3_i32_138 = arith.constant 3 : i32
    %220 = arith.addi %219, %c3_i32_138 : i32
    %c2_i32_139 = arith.constant 2 : i32
    %221 = arith.muli %c2_i32_139, %220 : i32
    %c2_i32_140 = arith.constant 2 : i32
    %222 = arith.addi %221, %c2_i32_140 : i32
    %c0_141 = arith.constant 0 : index
    %223 = arith.index_cast %222 : i32 to index
    %c0_142 = arith.constant 0 : index
    %c0_143 = arith.constant 0 : index
    %224 = vector.load %arg2[%c0_141, %223, %c0_142, %c0_143] : memref<1x34x34x128xbf16, #tpu.memory_space<vmem>>, vector<1x1x34x128xbf16>
    %225 = vector.shape_cast %224 : vector<1x1x34x128xbf16> to vector<1x34x128xbf16>
    %226 = vector.shape_cast %225 : vector<1x34x128xbf16> to vector<34x128xbf16>
    %227 = vector.extract_strided_slice %226 {offsets = [0, 0], sizes = [32, 128], strides = [1, 1]} : vector<34x128xbf16> to vector<32x128xbf16>
    %228 = vector.extract_strided_slice %226 {offsets = [1, 0], sizes = [32, 128], strides = [1, 1]} : vector<34x128xbf16> to vector<32x128xbf16>
    %229 = vector.extract_strided_slice %226 {offsets = [2, 0], sizes = [32, 128], strides = [1, 1]} : vector<34x128xbf16> to vector<32x128xbf16>
    %230 = tpu.concatenate %227, %228, %229 in 1 : vector<32x128xbf16>, vector<32x128xbf16>, vector<32x128xbf16> -> vector<32x384xbf16>
    %c2_144 = arith.constant 2 : index
    %c0_145 = arith.constant 0 : index
    %c0_146 = arith.constant 0 : index
    %231 = vector.load %arg3[%c2_144, %c0_145, %c0_146] : memref<3x384x128xbf16, #tpu.memory_space<vmem>>, vector<1x384x128xbf16>
    %232 = vector.shape_cast %231 : vector<1x384x128xbf16> to vector<384x128xbf16>
    %cst_147 = arith.constant dense<0.000000e+00> : vector<32x128xf32>
    %233 = tpu.matmul %230, %232, %cst_147 {dimension_numbers = #tpu.dot_dimension_numbers<[1], [0], [0], [1], [0, 0, 1, 1], [], []>} : vector<32x384xbf16>, vector<384x128xbf16>, vector<32x128xf32> -> vector<32x128xf32>
    %234 = arith.addf %218, %233 : vector<32x128xf32>
    %c0_148 = arith.constant 0 : index
    %c0_149 = arith.constant 0 : index
    %235 = vector.load %arg4[%c0_148, %c0_149] : memref<1x128xf32, #tpu.memory_space<vmem>>, vector<1x128xf32>
    %236 = vector.broadcast %235 : vector<1x128xf32> to vector<32x128xf32>
    %237 = arith.addf %234, %236 : vector<32x128xf32>
    %238 = arith.negf %237 : vector<32x128xf32>
    %239 = math.exp %238 : vector<32x128xf32>
    %cst_150 = arith.constant 1.000000e+00 : f32
    %240 = vector.broadcast %cst_150 : f32 to vector<32x128xf32>
    %241 = arith.addf %240, %239 : vector<32x128xf32>
    %242 = arith.divf %240, %241 : vector<32x128xf32>
    %243 = arith.mulf %237, %242 : vector<32x128xf32>
    %244 = arith.truncf %243 : vector<32x128xf32> to vector<32x128xbf16>
    %c0_151 = arith.constant 0 : index
    %c3 = arith.constant 3 : index
    %c0_152 = arith.constant 0 : index
    %c0_153 = arith.constant 0 : index
    %245 = vector.load %arg5[%c0_151, %c3, %c0_152, %c0_153] : memref<1x8x32x128xbf16, #tpu.memory_space<vmem>>, vector<1x1x32x128xbf16>
    %246 = vector.shape_cast %245 : vector<1x1x32x128xbf16> to vector<32x128xbf16>
    %247 = vector.shape_cast %244 : vector<32x128xbf16> to vector<1x1x32x128xbf16>
    tpu.vector_store %arg5[%c0_151, %c3, %c0_152, %c0_153], %247 {strides = array<i32>} : memref<1x8x32x128xbf16, #tpu.memory_space<vmem>>, vector<1x1x32x128xbf16>,
    %cst_154 = arith.constant 0.000000e+00 : f32
    %248 = vector.broadcast %cst_154 : f32 to vector<32x128xf32>
    %c8_i32_155 = arith.constant 8 : i32
    %249 = arith.muli %arg1, %c8_i32_155 : i32
    %c4_i32 = arith.constant 4 : i32
    %250 = arith.addi %249, %c4_i32 : i32
    %c2_i32_156 = arith.constant 2 : i32
    %251 = arith.muli %c2_i32_156, %250 : i32
    %c0_i32_157 = arith.constant 0 : i32
    %252 = arith.addi %251, %c0_i32_157 : i32
    %c0_158 = arith.constant 0 : index
    %253 = arith.index_cast %252 : i32 to index
    %c0_159 = arith.constant 0 : index
    %c0_160 = arith.constant 0 : index
    %254 = vector.load %arg2[%c0_158, %253, %c0_159, %c0_160] : memref<1x34x34x128xbf16, #tpu.memory_space<vmem>>, vector<1x1x34x128xbf16>
    %255 = vector.shape_cast %254 : vector<1x1x34x128xbf16> to vector<1x34x128xbf16>
    %256 = vector.shape_cast %255 : vector<1x34x128xbf16> to vector<34x128xbf16>
    %257 = vector.extract_strided_slice %256 {offsets = [0, 0], sizes = [32, 128], strides = [1, 1]} : vector<34x128xbf16> to vector<32x128xbf16>
    %258 = vector.extract_strided_slice %256 {offsets = [1, 0], sizes = [32, 128], strides = [1, 1]} : vector<34x128xbf16> to vector<32x128xbf16>
    %259 = vector.extract_strided_slice %256 {offsets = [2, 0], sizes = [32, 128], strides = [1, 1]} : vector<34x128xbf16> to vector<32x128xbf16>
    %260 = tpu.concatenate %257, %258, %259 in 1 : vector<32x128xbf16>, vector<32x128xbf16>, vector<32x128xbf16> -> vector<32x384xbf16>
    %c0_161 = arith.constant 0 : index
    %c0_162 = arith.constant 0 : index
    %c0_163 = arith.constant 0 : index
    %261 = vector.load %arg3[%c0_161, %c0_162, %c0_163] : memref<3x384x128xbf16, #tpu.memory_space<vmem>>, vector<1x384x128xbf16>
    %262 = vector.shape_cast %261 : vector<1x384x128xbf16> to vector<384x128xbf16>
    %cst_164 = arith.constant dense<0.000000e+00> : vector<32x128xf32>
    %263 = tpu.matmul %260, %262, %cst_164 {dimension_numbers = #tpu.dot_dimension_numbers<[1], [0], [0], [1], [0, 0, 1, 1], [], []>} : vector<32x384xbf16>, vector<384x128xbf16>, vector<32x128xf32> -> vector<32x128xf32>
    %264 = arith.addf %248, %263 : vector<32x128xf32>
    %c8_i32_165 = arith.constant 8 : i32
    %265 = arith.muli %arg1, %c8_i32_165 : i32
    %c4_i32_166 = arith.constant 4 : i32
    %266 = arith.addi %265, %c4_i32_166 : i32
    %c2_i32_167 = arith.constant 2 : i32
    %267 = arith.muli %c2_i32_167, %266 : i32
    %c1_i32_168 = arith.constant 1 : i32
    %268 = arith.addi %267, %c1_i32_168 : i32
    %c0_169 = arith.constant 0 : index
    %269 = arith.index_cast %268 : i32 to index
    %c0_170 = arith.constant 0 : index
    %c0_171 = arith.constant 0 : index
    %270 = vector.load %arg2[%c0_169, %269, %c0_170, %c0_171] : memref<1x34x34x128xbf16, #tpu.memory_space<vmem>>, vector<1x1x34x128xbf16>
    %271 = vector.shape_cast %270 : vector<1x1x34x128xbf16> to vector<1x34x128xbf16>
    %272 = vector.shape_cast %271 : vector<1x34x128xbf16> to vector<34x128xbf16>
    %273 = vector.extract_strided_slice %272 {offsets = [0, 0], sizes = [32, 128], strides = [1, 1]} : vector<34x128xbf16> to vector<32x128xbf16>
    %274 = vector.extract_strided_slice %272 {offsets = [1, 0], sizes = [32, 128], strides = [1, 1]} : vector<34x128xbf16> to vector<32x128xbf16>
    %275 = vector.extract_strided_slice %272 {offsets = [2, 0], sizes = [32, 128], strides = [1, 1]} : vector<34x128xbf16> to vector<32x128xbf16>
    %276 = tpu.concatenate %273, %274, %275 in 1 : vector<32x128xbf16>, vector<32x128xbf16>, vector<32x128xbf16> -> vector<32x384xbf16>
    %c1_172 = arith.constant 1 : index
    %c0_173 = arith.constant 0 : index
    %c0_174 = arith.constant 0 : index
    %277 = vector.load %arg3[%c1_172, %c0_173, %c0_174] : memref<3x384x128xbf16, #tpu.memory_space<vmem>>, vector<1x384x128xbf16>
    %278 = vector.shape_cast %277 : vector<1x384x128xbf16> to vector<384x128xbf16>
    %cst_175 = arith.constant dense<0.000000e+00> : vector<32x128xf32>
    %279 = tpu.matmul %276, %278, %cst_175 {dimension_numbers = #tpu.dot_dimension_numbers<[1], [0], [0], [1], [0, 0, 1, 1], [], []>} : vector<32x384xbf16>, vector<384x128xbf16>, vector<32x128xf32> -> vector<32x128xf32>
    %280 = arith.addf %264, %279 : vector<32x128xf32>
    %c8_i32_176 = arith.constant 8 : i32
    %281 = arith.muli %arg1, %c8_i32_176 : i32
    %c4_i32_177 = arith.constant 4 : i32
    %282 = arith.addi %281, %c4_i32_177 : i32
    %c2_i32_178 = arith.constant 2 : i32
    %283 = arith.muli %c2_i32_178, %282 : i32
    %c2_i32_179 = arith.constant 2 : i32
    %284 = arith.addi %283, %c2_i32_179 : i32
    %c0_180 = arith.constant 0 : index
    %285 = arith.index_cast %284 : i32 to index
    %c0_181 = arith.constant 0 : index
    %c0_182 = arith.constant 0 : index
    %286 = vector.load %arg2[%c0_180, %285, %c0_181, %c0_182] : memref<1x34x34x128xbf16, #tpu.memory_space<vmem>>, vector<1x1x34x128xbf16>
    %287 = vector.shape_cast %286 : vector<1x1x34x128xbf16> to vector<1x34x128xbf16>
    %288 = vector.shape_cast %287 : vector<1x34x128xbf16> to vector<34x128xbf16>
    %289 = vector.extract_strided_slice %288 {offsets = [0, 0], sizes = [32, 128], strides = [1, 1]} : vector<34x128xbf16> to vector<32x128xbf16>
    %290 = vector.extract_strided_slice %288 {offsets = [1, 0], sizes = [32, 128], strides = [1, 1]} : vector<34x128xbf16> to vector<32x128xbf16>
    %291 = vector.extract_strided_slice %288 {offsets = [2, 0], sizes = [32, 128], strides = [1, 1]} : vector<34x128xbf16> to vector<32x128xbf16>
    %292 = tpu.concatenate %289, %290, %291 in 1 : vector<32x128xbf16>, vector<32x128xbf16>, vector<32x128xbf16> -> vector<32x384xbf16>
    %c2_183 = arith.constant 2 : index
    %c0_184 = arith.constant 0 : index
    %c0_185 = arith.constant 0 : index
    %293 = vector.load %arg3[%c2_183, %c0_184, %c0_185] : memref<3x384x128xbf16, #tpu.memory_space<vmem>>, vector<1x384x128xbf16>
    %294 = vector.shape_cast %293 : vector<1x384x128xbf16> to vector<384x128xbf16>
    %cst_186 = arith.constant dense<0.000000e+00> : vector<32x128xf32>
    %295 = tpu.matmul %292, %294, %cst_186 {dimension_numbers = #tpu.dot_dimension_numbers<[1], [0], [0], [1], [0, 0, 1, 1], [], []>} : vector<32x384xbf16>, vector<384x128xbf16>, vector<32x128xf32> -> vector<32x128xf32>
    %296 = arith.addf %280, %295 : vector<32x128xf32>
    %c0_187 = arith.constant 0 : index
    %c0_188 = arith.constant 0 : index
    %297 = vector.load %arg4[%c0_187, %c0_188] : memref<1x128xf32, #tpu.memory_space<vmem>>, vector<1x128xf32>
    %298 = vector.broadcast %297 : vector<1x128xf32> to vector<32x128xf32>
    %299 = arith.addf %296, %298 : vector<32x128xf32>
    %300 = arith.negf %299 : vector<32x128xf32>
    %301 = math.exp %300 : vector<32x128xf32>
    %cst_189 = arith.constant 1.000000e+00 : f32
    %302 = vector.broadcast %cst_189 : f32 to vector<32x128xf32>
    %303 = arith.addf %302, %301 : vector<32x128xf32>
    %304 = arith.divf %302, %303 : vector<32x128xf32>
    %305 = arith.mulf %299, %304 : vector<32x128xf32>
    %306 = arith.truncf %305 : vector<32x128xf32> to vector<32x128xbf16>
    %c0_190 = arith.constant 0 : index
    %c4 = arith.constant 4 : index
    %c0_191 = arith.constant 0 : index
    %c0_192 = arith.constant 0 : index
    %307 = vector.load %arg5[%c0_190, %c4, %c0_191, %c0_192] : memref<1x8x32x128xbf16, #tpu.memory_space<vmem>>, vector<1x1x32x128xbf16>
    %308 = vector.shape_cast %307 : vector<1x1x32x128xbf16> to vector<32x128xbf16>
    %309 = vector.shape_cast %306 : vector<32x128xbf16> to vector<1x1x32x128xbf16>
    tpu.vector_store %arg5[%c0_190, %c4, %c0_191, %c0_192], %309 {strides = array<i32>} : memref<1x8x32x128xbf16, #tpu.memory_space<vmem>>, vector<1x1x32x128xbf16>,
    %cst_193 = arith.constant 0.000000e+00 : f32
    %310 = vector.broadcast %cst_193 : f32 to vector<32x128xf32>
    %c8_i32_194 = arith.constant 8 : i32
    %311 = arith.muli %arg1, %c8_i32_194 : i32
    %c5_i32 = arith.constant 5 : i32
    %312 = arith.addi %311, %c5_i32 : i32
    %c2_i32_195 = arith.constant 2 : i32
    %313 = arith.muli %c2_i32_195, %312 : i32
    %c0_i32_196 = arith.constant 0 : i32
    %314 = arith.addi %313, %c0_i32_196 : i32
    %c0_197 = arith.constant 0 : index
    %315 = arith.index_cast %314 : i32 to index
    %c0_198 = arith.constant 0 : index
    %c0_199 = arith.constant 0 : index
    %316 = vector.load %arg2[%c0_197, %315, %c0_198, %c0_199] : memref<1x34x34x128xbf16, #tpu.memory_space<vmem>>, vector<1x1x34x128xbf16>
    %317 = vector.shape_cast %316 : vector<1x1x34x128xbf16> to vector<1x34x128xbf16>
    %318 = vector.shape_cast %317 : vector<1x34x128xbf16> to vector<34x128xbf16>
    %319 = vector.extract_strided_slice %318 {offsets = [0, 0], sizes = [32, 128], strides = [1, 1]} : vector<34x128xbf16> to vector<32x128xbf16>
    %320 = vector.extract_strided_slice %318 {offsets = [1, 0], sizes = [32, 128], strides = [1, 1]} : vector<34x128xbf16> to vector<32x128xbf16>
    %321 = vector.extract_strided_slice %318 {offsets = [2, 0], sizes = [32, 128], strides = [1, 1]} : vector<34x128xbf16> to vector<32x128xbf16>
    %322 = tpu.concatenate %319, %320, %321 in 1 : vector<32x128xbf16>, vector<32x128xbf16>, vector<32x128xbf16> -> vector<32x384xbf16>
    %c0_200 = arith.constant 0 : index
    %c0_201 = arith.constant 0 : index
    %c0_202 = arith.constant 0 : index
    %323 = vector.load %arg3[%c0_200, %c0_201, %c0_202] : memref<3x384x128xbf16, #tpu.memory_space<vmem>>, vector<1x384x128xbf16>
    %324 = vector.shape_cast %323 : vector<1x384x128xbf16> to vector<384x128xbf16>
    %cst_203 = arith.constant dense<0.000000e+00> : vector<32x128xf32>
    %325 = tpu.matmul %322, %324, %cst_203 {dimension_numbers = #tpu.dot_dimension_numbers<[1], [0], [0], [1], [0, 0, 1, 1], [], []>} : vector<32x384xbf16>, vector<384x128xbf16>, vector<32x128xf32> -> vector<32x128xf32>
    %326 = arith.addf %310, %325 : vector<32x128xf32>
    %c8_i32_204 = arith.constant 8 : i32
    %327 = arith.muli %arg1, %c8_i32_204 : i32
    %c5_i32_205 = arith.constant 5 : i32
    %328 = arith.addi %327, %c5_i32_205 : i32
    %c2_i32_206 = arith.constant 2 : i32
    %329 = arith.muli %c2_i32_206, %328 : i32
    %c1_i32_207 = arith.constant 1 : i32
    %330 = arith.addi %329, %c1_i32_207 : i32
    %c0_208 = arith.constant 0 : index
    %331 = arith.index_cast %330 : i32 to index
    %c0_209 = arith.constant 0 : index
    %c0_210 = arith.constant 0 : index
    %332 = vector.load %arg2[%c0_208, %331, %c0_209, %c0_210] : memref<1x34x34x128xbf16, #tpu.memory_space<vmem>>, vector<1x1x34x128xbf16>
    %333 = vector.shape_cast %332 : vector<1x1x34x128xbf16> to vector<1x34x128xbf16>
    %334 = vector.shape_cast %333 : vector<1x34x128xbf16> to vector<34x128xbf16>
    %335 = vector.extract_strided_slice %334 {offsets = [0, 0], sizes = [32, 128], strides = [1, 1]} : vector<34x128xbf16> to vector<32x128xbf16>
    %336 = vector.extract_strided_slice %334 {offsets = [1, 0], sizes = [32, 128], strides = [1, 1]} : vector<34x128xbf16> to vector<32x128xbf16>
    %337 = vector.extract_strided_slice %334 {offsets = [2, 0], sizes = [32, 128], strides = [1, 1]} : vector<34x128xbf16> to vector<32x128xbf16>
    %338 = tpu.concatenate %335, %336, %337 in 1 : vector<32x128xbf16>, vector<32x128xbf16>, vector<32x128xbf16> -> vector<32x384xbf16>
    %c1_211 = arith.constant 1 : index
    %c0_212 = arith.constant 0 : index
    %c0_213 = arith.constant 0 : index
    %339 = vector.load %arg3[%c1_211, %c0_212, %c0_213] : memref<3x384x128xbf16, #tpu.memory_space<vmem>>, vector<1x384x128xbf16>
    %340 = vector.shape_cast %339 : vector<1x384x128xbf16> to vector<384x128xbf16>
    %cst_214 = arith.constant dense<0.000000e+00> : vector<32x128xf32>
    %341 = tpu.matmul %338, %340, %cst_214 {dimension_numbers = #tpu.dot_dimension_numbers<[1], [0], [0], [1], [0, 0, 1, 1], [], []>} : vector<32x384xbf16>, vector<384x128xbf16>, vector<32x128xf32> -> vector<32x128xf32>
    %342 = arith.addf %326, %341 : vector<32x128xf32>
    %c8_i32_215 = arith.constant 8 : i32
    %343 = arith.muli %arg1, %c8_i32_215 : i32
    %c5_i32_216 = arith.constant 5 : i32
    %344 = arith.addi %343, %c5_i32_216 : i32
    %c2_i32_217 = arith.constant 2 : i32
    %345 = arith.muli %c2_i32_217, %344 : i32
    %c2_i32_218 = arith.constant 2 : i32
    %346 = arith.addi %345, %c2_i32_218 : i32
    %c0_219 = arith.constant 0 : index
    %347 = arith.index_cast %346 : i32 to index
    %c0_220 = arith.constant 0 : index
    %c0_221 = arith.constant 0 : index
    %348 = vector.load %arg2[%c0_219, %347, %c0_220, %c0_221] : memref<1x34x34x128xbf16, #tpu.memory_space<vmem>>, vector<1x1x34x128xbf16>
    %349 = vector.shape_cast %348 : vector<1x1x34x128xbf16> to vector<1x34x128xbf16>
    %350 = vector.shape_cast %349 : vector<1x34x128xbf16> to vector<34x128xbf16>
    %351 = vector.extract_strided_slice %350 {offsets = [0, 0], sizes = [32, 128], strides = [1, 1]} : vector<34x128xbf16> to vector<32x128xbf16>
    %352 = vector.extract_strided_slice %350 {offsets = [1, 0], sizes = [32, 128], strides = [1, 1]} : vector<34x128xbf16> to vector<32x128xbf16>
    %353 = vector.extract_strided_slice %350 {offsets = [2, 0], sizes = [32, 128], strides = [1, 1]} : vector<34x128xbf16> to vector<32x128xbf16>
    %354 = tpu.concatenate %351, %352, %353 in 1 : vector<32x128xbf16>, vector<32x128xbf16>, vector<32x128xbf16> -> vector<32x384xbf16>
    %c2_222 = arith.constant 2 : index
    %c0_223 = arith.constant 0 : index
    %c0_224 = arith.constant 0 : index
    %355 = vector.load %arg3[%c2_222, %c0_223, %c0_224] : memref<3x384x128xbf16, #tpu.memory_space<vmem>>, vector<1x384x128xbf16>
    %356 = vector.shape_cast %355 : vector<1x384x128xbf16> to vector<384x128xbf16>
    %cst_225 = arith.constant dense<0.000000e+00> : vector<32x128xf32>
    %357 = tpu.matmul %354, %356, %cst_225 {dimension_numbers = #tpu.dot_dimension_numbers<[1], [0], [0], [1], [0, 0, 1, 1], [], []>} : vector<32x384xbf16>, vector<384x128xbf16>, vector<32x128xf32> -> vector<32x128xf32>
    %358 = arith.addf %342, %357 : vector<32x128xf32>
    %c0_226 = arith.constant 0 : index
    %c0_227 = arith.constant 0 : index
    %359 = vector.load %arg4[%c0_226, %c0_227] : memref<1x128xf32, #tpu.memory_space<vmem>>, vector<1x128xf32>
    %360 = vector.broadcast %359 : vector<1x128xf32> to vector<32x128xf32>
    %361 = arith.addf %358, %360 : vector<32x128xf32>
    %362 = arith.negf %361 : vector<32x128xf32>
    %363 = math.exp %362 : vector<32x128xf32>
    %cst_228 = arith.constant 1.000000e+00 : f32
    %364 = vector.broadcast %cst_228 : f32 to vector<32x128xf32>
    %365 = arith.addf %364, %363 : vector<32x128xf32>
    %366 = arith.divf %364, %365 : vector<32x128xf32>
    %367 = arith.mulf %361, %366 : vector<32x128xf32>
    %368 = arith.truncf %367 : vector<32x128xf32> to vector<32x128xbf16>
    %c0_229 = arith.constant 0 : index
    %c5 = arith.constant 5 : index
    %c0_230 = arith.constant 0 : index
    %c0_231 = arith.constant 0 : index
    %369 = vector.load %arg5[%c0_229, %c5, %c0_230, %c0_231] : memref<1x8x32x128xbf16, #tpu.memory_space<vmem>>, vector<1x1x32x128xbf16>
    %370 = vector.shape_cast %369 : vector<1x1x32x128xbf16> to vector<32x128xbf16>
    %371 = vector.shape_cast %368 : vector<32x128xbf16> to vector<1x1x32x128xbf16>
    tpu.vector_store %arg5[%c0_229, %c5, %c0_230, %c0_231], %371 {strides = array<i32>} : memref<1x8x32x128xbf16, #tpu.memory_space<vmem>>, vector<1x1x32x128xbf16>,
    %cst_232 = arith.constant 0.000000e+00 : f32
    %372 = vector.broadcast %cst_232 : f32 to vector<32x128xf32>
    %c8_i32_233 = arith.constant 8 : i32
    %373 = arith.muli %arg1, %c8_i32_233 : i32
    %c6_i32 = arith.constant 6 : i32
    %374 = arith.addi %373, %c6_i32 : i32
    %c2_i32_234 = arith.constant 2 : i32
    %375 = arith.muli %c2_i32_234, %374 : i32
    %c0_i32_235 = arith.constant 0 : i32
    %376 = arith.addi %375, %c0_i32_235 : i32
    %c0_236 = arith.constant 0 : index
    %377 = arith.index_cast %376 : i32 to index
    %c0_237 = arith.constant 0 : index
    %c0_238 = arith.constant 0 : index
    %378 = vector.load %arg2[%c0_236, %377, %c0_237, %c0_238] : memref<1x34x34x128xbf16, #tpu.memory_space<vmem>>, vector<1x1x34x128xbf16>
    %379 = vector.shape_cast %378 : vector<1x1x34x128xbf16> to vector<1x34x128xbf16>
    %380 = vector.shape_cast %379 : vector<1x34x128xbf16> to vector<34x128xbf16>
    %381 = vector.extract_strided_slice %380 {offsets = [0, 0], sizes = [32, 128], strides = [1, 1]} : vector<34x128xbf16> to vector<32x128xbf16>
    %382 = vector.extract_strided_slice %380 {offsets = [1, 0], sizes = [32, 128], strides = [1, 1]} : vector<34x128xbf16> to vector<32x128xbf16>
    %383 = vector.extract_strided_slice %380 {offsets = [2, 0], sizes = [32, 128], strides = [1, 1]} : vector<34x128xbf16> to vector<32x128xbf16>
    %384 = tpu.concatenate %381, %382, %383 in 1 : vector<32x128xbf16>, vector<32x128xbf16>, vector<32x128xbf16> -> vector<32x384xbf16>
    %c0_239 = arith.constant 0 : index
    %c0_240 = arith.constant 0 : index
    %c0_241 = arith.constant 0 : index
    %385 = vector.load %arg3[%c0_239, %c0_240, %c0_241] : memref<3x384x128xbf16, #tpu.memory_space<vmem>>, vector<1x384x128xbf16>
    %386 = vector.shape_cast %385 : vector<1x384x128xbf16> to vector<384x128xbf16>
    %cst_242 = arith.constant dense<0.000000e+00> : vector<32x128xf32>
    %387 = tpu.matmul %384, %386, %cst_242 {dimension_numbers = #tpu.dot_dimension_numbers<[1], [0], [0], [1], [0, 0, 1, 1], [], []>} : vector<32x384xbf16>, vector<384x128xbf16>, vector<32x128xf32> -> vector<32x128xf32>
    %388 = arith.addf %372, %387 : vector<32x128xf32>
    %c8_i32_243 = arith.constant 8 : i32
    %389 = arith.muli %arg1, %c8_i32_243 : i32
    %c6_i32_244 = arith.constant 6 : i32
    %390 = arith.addi %389, %c6_i32_244 : i32
    %c2_i32_245 = arith.constant 2 : i32
    %391 = arith.muli %c2_i32_245, %390 : i32
    %c1_i32_246 = arith.constant 1 : i32
    %392 = arith.addi %391, %c1_i32_246 : i32
    %c0_247 = arith.constant 0 : index
    %393 = arith.index_cast %392 : i32 to index
    %c0_248 = arith.constant 0 : index
    %c0_249 = arith.constant 0 : index
    %394 = vector.load %arg2[%c0_247, %393, %c0_248, %c0_249] : memref<1x34x34x128xbf16, #tpu.memory_space<vmem>>, vector<1x1x34x128xbf16>
    %395 = vector.shape_cast %394 : vector<1x1x34x128xbf16> to vector<1x34x128xbf16>
    %396 = vector.shape_cast %395 : vector<1x34x128xbf16> to vector<34x128xbf16>
    %397 = vector.extract_strided_slice %396 {offsets = [0, 0], sizes = [32, 128], strides = [1, 1]} : vector<34x128xbf16> to vector<32x128xbf16>
    %398 = vector.extract_strided_slice %396 {offsets = [1, 0], sizes = [32, 128], strides = [1, 1]} : vector<34x128xbf16> to vector<32x128xbf16>
    %399 = vector.extract_strided_slice %396 {offsets = [2, 0], sizes = [32, 128], strides = [1, 1]} : vector<34x128xbf16> to vector<32x128xbf16>
    %400 = tpu.concatenate %397, %398, %399 in 1 : vector<32x128xbf16>, vector<32x128xbf16>, vector<32x128xbf16> -> vector<32x384xbf16>
    %c1_250 = arith.constant 1 : index
    %c0_251 = arith.constant 0 : index
    %c0_252 = arith.constant 0 : index
    %401 = vector.load %arg3[%c1_250, %c0_251, %c0_252] : memref<3x384x128xbf16, #tpu.memory_space<vmem>>, vector<1x384x128xbf16>
    %402 = vector.shape_cast %401 : vector<1x384x128xbf16> to vector<384x128xbf16>
    %cst_253 = arith.constant dense<0.000000e+00> : vector<32x128xf32>
    %403 = tpu.matmul %400, %402, %cst_253 {dimension_numbers = #tpu.dot_dimension_numbers<[1], [0], [0], [1], [0, 0, 1, 1], [], []>} : vector<32x384xbf16>, vector<384x128xbf16>, vector<32x128xf32> -> vector<32x128xf32>
    %404 = arith.addf %388, %403 : vector<32x128xf32>
    %c8_i32_254 = arith.constant 8 : i32
    %405 = arith.muli %arg1, %c8_i32_254 : i32
    %c6_i32_255 = arith.constant 6 : i32
    %406 = arith.addi %405, %c6_i32_255 : i32
    %c2_i32_256 = arith.constant 2 : i32
    %407 = arith.muli %c2_i32_256, %406 : i32
    %c2_i32_257 = arith.constant 2 : i32
    %408 = arith.addi %407, %c2_i32_257 : i32
    %c0_258 = arith.constant 0 : index
    %409 = arith.index_cast %408 : i32 to index
    %c0_259 = arith.constant 0 : index
    %c0_260 = arith.constant 0 : index
    %410 = vector.load %arg2[%c0_258, %409, %c0_259, %c0_260] : memref<1x34x34x128xbf16, #tpu.memory_space<vmem>>, vector<1x1x34x128xbf16>
    %411 = vector.shape_cast %410 : vector<1x1x34x128xbf16> to vector<1x34x128xbf16>
    %412 = vector.shape_cast %411 : vector<1x34x128xbf16> to vector<34x128xbf16>
    %413 = vector.extract_strided_slice %412 {offsets = [0, 0], sizes = [32, 128], strides = [1, 1]} : vector<34x128xbf16> to vector<32x128xbf16>
    %414 = vector.extract_strided_slice %412 {offsets = [1, 0], sizes = [32, 128], strides = [1, 1]} : vector<34x128xbf16> to vector<32x128xbf16>
    %415 = vector.extract_strided_slice %412 {offsets = [2, 0], sizes = [32, 128], strides = [1, 1]} : vector<34x128xbf16> to vector<32x128xbf16>
    %416 = tpu.concatenate %413, %414, %415 in 1 : vector<32x128xbf16>, vector<32x128xbf16>, vector<32x128xbf16> -> vector<32x384xbf16>
    %c2_261 = arith.constant 2 : index
    %c0_262 = arith.constant 0 : index
    %c0_263 = arith.constant 0 : index
    %417 = vector.load %arg3[%c2_261, %c0_262, %c0_263] : memref<3x384x128xbf16, #tpu.memory_space<vmem>>, vector<1x384x128xbf16>
    %418 = vector.shape_cast %417 : vector<1x384x128xbf16> to vector<384x128xbf16>
    %cst_264 = arith.constant dense<0.000000e+00> : vector<32x128xf32>
    %419 = tpu.matmul %416, %418, %cst_264 {dimension_numbers = #tpu.dot_dimension_numbers<[1], [0], [0], [1], [0, 0, 1, 1], [], []>} : vector<32x384xbf16>, vector<384x128xbf16>, vector<32x128xf32> -> vector<32x128xf32>
    %420 = arith.addf %404, %419 : vector<32x128xf32>
    %c0_265 = arith.constant 0 : index
    %c0_266 = arith.constant 0 : index
    %421 = vector.load %arg4[%c0_265, %c0_266] : memref<1x128xf32, #tpu.memory_space<vmem>>, vector<1x128xf32>
    %422 = vector.broadcast %421 : vector<1x128xf32> to vector<32x128xf32>
    %423 = arith.addf %420, %422 : vector<32x128xf32>
    %424 = arith.negf %423 : vector<32x128xf32>
    %425 = math.exp %424 : vector<32x128xf32>
    %cst_267 = arith.constant 1.000000e+00 : f32
    %426 = vector.broadcast %cst_267 : f32 to vector<32x128xf32>
    %427 = arith.addf %426, %425 : vector<32x128xf32>
    %428 = arith.divf %426, %427 : vector<32x128xf32>
    %429 = arith.mulf %423, %428 : vector<32x128xf32>
    %430 = arith.truncf %429 : vector<32x128xf32> to vector<32x128xbf16>
    %c0_268 = arith.constant 0 : index
    %c6 = arith.constant 6 : index
    %c0_269 = arith.constant 0 : index
    %c0_270 = arith.constant 0 : index
    %431 = vector.load %arg5[%c0_268, %c6, %c0_269, %c0_270] : memref<1x8x32x128xbf16, #tpu.memory_space<vmem>>, vector<1x1x32x128xbf16>
    %432 = vector.shape_cast %431 : vector<1x1x32x128xbf16> to vector<32x128xbf16>
    %433 = vector.shape_cast %430 : vector<32x128xbf16> to vector<1x1x32x128xbf16>
    tpu.vector_store %arg5[%c0_268, %c6, %c0_269, %c0_270], %433 {strides = array<i32>} : memref<1x8x32x128xbf16, #tpu.memory_space<vmem>>, vector<1x1x32x128xbf16>,
    %cst_271 = arith.constant 0.000000e+00 : f32
    %434 = vector.broadcast %cst_271 : f32 to vector<32x128xf32>
    %c8_i32_272 = arith.constant 8 : i32
    %435 = arith.muli %arg1, %c8_i32_272 : i32
    %c7_i32 = arith.constant 7 : i32
    %436 = arith.addi %435, %c7_i32 : i32
    %c2_i32_273 = arith.constant 2 : i32
    %437 = arith.muli %c2_i32_273, %436 : i32
    %c0_i32_274 = arith.constant 0 : i32
    %438 = arith.addi %437, %c0_i32_274 : i32
    %c0_275 = arith.constant 0 : index
    %439 = arith.index_cast %438 : i32 to index
    %c0_276 = arith.constant 0 : index
    %c0_277 = arith.constant 0 : index
    %440 = vector.load %arg2[%c0_275, %439, %c0_276, %c0_277] : memref<1x34x34x128xbf16, #tpu.memory_space<vmem>>, vector<1x1x34x128xbf16>
    %441 = vector.shape_cast %440 : vector<1x1x34x128xbf16> to vector<1x34x128xbf16>
    %442 = vector.shape_cast %441 : vector<1x34x128xbf16> to vector<34x128xbf16>
    %443 = vector.extract_strided_slice %442 {offsets = [0, 0], sizes = [32, 128], strides = [1, 1]} : vector<34x128xbf16> to vector<32x128xbf16>
    %444 = vector.extract_strided_slice %442 {offsets = [1, 0], sizes = [32, 128], strides = [1, 1]} : vector<34x128xbf16> to vector<32x128xbf16>
    %445 = vector.extract_strided_slice %442 {offsets = [2, 0], sizes = [32, 128], strides = [1, 1]} : vector<34x128xbf16> to vector<32x128xbf16>
    %446 = tpu.concatenate %443, %444, %445 in 1 : vector<32x128xbf16>, vector<32x128xbf16>, vector<32x128xbf16> -> vector<32x384xbf16>
    %c0_278 = arith.constant 0 : index
    %c0_279 = arith.constant 0 : index
    %c0_280 = arith.constant 0 : index
    %447 = vector.load %arg3[%c0_278, %c0_279, %c0_280] : memref<3x384x128xbf16, #tpu.memory_space<vmem>>, vector<1x384x128xbf16>
    %448 = vector.shape_cast %447 : vector<1x384x128xbf16> to vector<384x128xbf16>
    %cst_281 = arith.constant dense<0.000000e+00> : vector<32x128xf32>
    %449 = tpu.matmul %446, %448, %cst_281 {dimension_numbers = #tpu.dot_dimension_numbers<[1], [0], [0], [1], [0, 0, 1, 1], [], []>} : vector<32x384xbf16>, vector<384x128xbf16>, vector<32x128xf32> -> vector<32x128xf32>
    %450 = arith.addf %434, %449 : vector<32x128xf32>
    %c8_i32_282 = arith.constant 8 : i32
    %451 = arith.muli %arg1, %c8_i32_282 : i32
    %c7_i32_283 = arith.constant 7 : i32
    %452 = arith.addi %451, %c7_i32_283 : i32
    %c2_i32_284 = arith.constant 2 : i32
    %453 = arith.muli %c2_i32_284, %452 : i32
    %c1_i32_285 = arith.constant 1 : i32
    %454 = arith.addi %453, %c1_i32_285 : i32
    %c0_286 = arith.constant 0 : index
    %455 = arith.index_cast %454 : i32 to index
    %c0_287 = arith.constant 0 : index
    %c0_288 = arith.constant 0 : index
    %456 = vector.load %arg2[%c0_286, %455, %c0_287, %c0_288] : memref<1x34x34x128xbf16, #tpu.memory_space<vmem>>, vector<1x1x34x128xbf16>
    %457 = vector.shape_cast %456 : vector<1x1x34x128xbf16> to vector<1x34x128xbf16>
    %458 = vector.shape_cast %457 : vector<1x34x128xbf16> to vector<34x128xbf16>
    %459 = vector.extract_strided_slice %458 {offsets = [0, 0], sizes = [32, 128], strides = [1, 1]} : vector<34x128xbf16> to vector<32x128xbf16>
    %460 = vector.extract_strided_slice %458 {offsets = [1, 0], sizes = [32, 128], strides = [1, 1]} : vector<34x128xbf16> to vector<32x128xbf16>
    %461 = vector.extract_strided_slice %458 {offsets = [2, 0], sizes = [32, 128], strides = [1, 1]} : vector<34x128xbf16> to vector<32x128xbf16>
    %462 = tpu.concatenate %459, %460, %461 in 1 : vector<32x128xbf16>, vector<32x128xbf16>, vector<32x128xbf16> -> vector<32x384xbf16>
    %c1_289 = arith.constant 1 : index
    %c0_290 = arith.constant 0 : index
    %c0_291 = arith.constant 0 : index
    %463 = vector.load %arg3[%c1_289, %c0_290, %c0_291] : memref<3x384x128xbf16, #tpu.memory_space<vmem>>, vector<1x384x128xbf16>
    %464 = vector.shape_cast %463 : vector<1x384x128xbf16> to vector<384x128xbf16>
    %cst_292 = arith.constant dense<0.000000e+00> : vector<32x128xf32>
    %465 = tpu.matmul %462, %464, %cst_292 {dimension_numbers = #tpu.dot_dimension_numbers<[1], [0], [0], [1], [0, 0, 1, 1], [], []>} : vector<32x384xbf16>, vector<384x128xbf16>, vector<32x128xf32> -> vector<32x128xf32>
    %466 = arith.addf %450, %465 : vector<32x128xf32>
    %c8_i32_293 = arith.constant 8 : i32
    %467 = arith.muli %arg1, %c8_i32_293 : i32
    %c7_i32_294 = arith.constant 7 : i32
    %468 = arith.addi %467, %c7_i32_294 : i32
    %c2_i32_295 = arith.constant 2 : i32
    %469 = arith.muli %c2_i32_295, %468 : i32
    %c2_i32_296 = arith.constant 2 : i32
    %470 = arith.addi %469, %c2_i32_296 : i32
    %c0_297 = arith.constant 0 : index
    %471 = arith.index_cast %470 : i32 to index
    %c0_298 = arith.constant 0 : index
    %c0_299 = arith.constant 0 : index
    %472 = vector.load %arg2[%c0_297, %471, %c0_298, %c0_299] : memref<1x34x34x128xbf16, #tpu.memory_space<vmem>>, vector<1x1x34x128xbf16>
    %473 = vector.shape_cast %472 : vector<1x1x34x128xbf16> to vector<1x34x128xbf16>
    %474 = vector.shape_cast %473 : vector<1x34x128xbf16> to vector<34x128xbf16>
    %475 = vector.extract_strided_slice %474 {offsets = [0, 0], sizes = [32, 128], strides = [1, 1]} : vector<34x128xbf16> to vector<32x128xbf16>
    %476 = vector.extract_strided_slice %474 {offsets = [1, 0], sizes = [32, 128], strides = [1, 1]} : vector<34x128xbf16> to vector<32x128xbf16>
    %477 = vector.extract_strided_slice %474 {offsets = [2, 0], sizes = [32, 128], strides = [1, 1]} : vector<34x128xbf16> to vector<32x128xbf16>
    %478 = tpu.concatenate %475, %476, %477 in 1 : vector<32x128xbf16>, vector<32x128xbf16>, vector<32x128xbf16> -> vector<32x384xbf16>
    %c2_300 = arith.constant 2 : index
    %c0_301 = arith.constant 0 : index
    %c0_302 = arith.constant 0 : index
    %479 = vector.load %arg3[%c2_300, %c0_301, %c0_302] : memref<3x384x128xbf16, #tpu.memory_space<vmem>>, vector<1x384x128xbf16>
    %480 = vector.shape_cast %479 : vector<1x384x128xbf16> to vector<384x128xbf16>
    %cst_303 = arith.constant dense<0.000000e+00> : vector<32x128xf32>
    %481 = tpu.matmul %478, %480, %cst_303 {dimension_numbers = #tpu.dot_dimension_numbers<[1], [0], [0], [1], [0, 0, 1, 1], [], []>} : vector<32x384xbf16>, vector<384x128xbf16>, vector<32x128xf32> -> vector<32x128xf32>
    %482 = arith.addf %466, %481 : vector<32x128xf32>
    %c0_304 = arith.constant 0 : index
    %c0_305 = arith.constant 0 : index
    %483 = vector.load %arg4[%c0_304, %c0_305] : memref<1x128xf32, #tpu.memory_space<vmem>>, vector<1x128xf32>
    %484 = vector.broadcast %483 : vector<1x128xf32> to vector<32x128xf32>
    %485 = arith.addf %482, %484 : vector<32x128xf32>
    %486 = arith.negf %485 : vector<32x128xf32>
    %487 = math.exp %486 : vector<32x128xf32>
    %cst_306 = arith.constant 1.000000e+00 : f32
    %488 = vector.broadcast %cst_306 : f32 to vector<32x128xf32>
    %489 = arith.addf %488, %487 : vector<32x128xf32>
    %490 = arith.divf %488, %489 : vector<32x128xf32>
    %491 = arith.mulf %485, %490 : vector<32x128xf32>
    %492 = arith.truncf %491 : vector<32x128xf32> to vector<32x128xbf16>
    %c0_307 = arith.constant 0 : index
    %c7 = arith.constant 7 : index
    %c0_308 = arith.constant 0 : index
    %c0_309 = arith.constant 0 : index
    %493 = vector.load %arg5[%c0_307, %c7, %c0_308, %c0_309] : memref<1x8x32x128xbf16, #tpu.memory_space<vmem>>, vector<1x1x32x128xbf16>
    %494 = vector.shape_cast %493 : vector<1x1x32x128xbf16> to vector<32x128xbf16>
    %495 = vector.shape_cast %492 : vector<32x128xbf16> to vector<1x1x32x128xbf16>
    tpu.vector_store %arg5[%c0_307, %c7, %c0_308, %c0_309], %495 {strides = array<i32>} : memref<1x8x32x128xbf16, #tpu.memory_space<vmem>>, vector<1x1x32x128xbf16>,
    return
  }
  func.func @transform_0(%arg0: i32, %arg1: i32) -> (i32, i32, i32, i32) {
    %c0_i32 = arith.constant 0 : i32
    %c0_i32_0 = arith.constant 0 : i32
    %c0_i32_1 = arith.constant 0 : i32
    %c0_i32_2 = arith.constant 0 : i32
    return %arg0, %c0_i32, %c0_i32_0, %c0_i32_1 : i32, i32, i32, i32
  }
  func.func @transform_1(%arg0: i32, %arg1: i32) -> (i32, i32, i32) {
    %c0_i32 = arith.constant 0 : i32
    %c0_i32_0 = arith.constant 0 : i32
    %c0_i32_1 = arith.constant 0 : i32
    %c0_i32_2 = arith.constant 0 : i32
    return %c0_i32, %c0_i32_0, %c0_i32_1 : i32, i32, i32
  }
  func.func @transform_2(%arg0: i32, %arg1: i32) -> (i32, i32) {
    %c0_i32 = arith.constant 0 : i32
    %c0_i32_0 = arith.constant 0 : i32
    %c0_i32_1 = arith.constant 0 : i32
    return %c0_i32, %c0_i32_0 : i32, i32
  }
  func.func @transform_3(%arg0: i32, %arg1: i32) -> (i32, i32, i32, i32) {
    %c0_i32 = arith.constant 0 : i32
    %c0_i32_0 = arith.constant 0 : i32
    %c0_i32_1 = arith.constant 0 : i32
    return %arg0, %arg1, %c0_i32, %c0_i32_0 : i32, i32, i32, i32
  }
}

</mosaic_0001>

<llo_original>
// kernel: tpu_custom_call.1
$region0: #{tpu_custom_call.1}
  #allocation0 [shape = 'u32[]', space=smem, size = 0x4, offset = 0x4, fixed_abs, tag = 'smem constant byte address 0x4 - core index']
  #allocation1 [shape = 'u32[72,128]{1,0:T(1,128)}', space=vmem, size = 0x9000, scoped, tag = 'internal scratch']
  %s0 = inlined_call_operand.vmem [shape: bf16[2,34,34,128], index: 0, kind: input, shape index: {}]
  %s1 = inlined_call_operand.vmem [shape: bf16[3,384,128], index: 1, kind: input, shape index: {}]
  %s2 = inlined_call_operand.vmem [shape: f32[1,128], index: 2, kind: input, shape index: {}]
  %s3 = inlined_call_operand.hbm [shape: bf16[2,16,32,128], index: 3, kind: output, shape index: {}]
  %s4 = sld [smem:[#allocation0]]
  $region45: #{tpu_custom_call.1} parent=0
    _
  %s6 = ssub.s32 1, %s4
  %s7 = scalar_select 0, %s6, %s4
  $region1: #{tpu_custom_call.1} parent=0
    #allocation2 [shape = 'u8[131072]{0}', space=vmem, size = 0x20000, scoped, tag = 'output window, operand 0']
    #allocation3 [shape = 's32[2]{0}', space=sflag, size = 0x8, scoped, tag = 'scoped memory for tpu_custom_call.1']
    %8 = vsyncpa [#allocation3], 0
    %s9 = scalar_lea.sflag [#allocation3], 1
    %10 = vsyncpa %s9, 0
    loop: start=0, step=1, limit=6
    $region2: #{tpu_custom_call.1} parent=1 // loop_pre_header
      _
    $region3: #{tpu_custom_call.1} parent=1 // loop_header
      %s12 = sphi 0, %s16
      %p13 = scmp.ge.s32.totalorder %s12, 6
      %s19 = sphi 0, %s31
      %s20 = sphi 0, %s27
      %s21 = sphi 0, %s19
      %s22 = sphi 0, %s20
      %s23 = sphi 0, %s21
      %s24 = sphi 0, %s22
      %s34 = sphi 0, %s36
      %s37 = sphi 0, %s34
      %s38 = sphi 0, %s37
      %s54 = sphi 0, %s38
      %s58 = sphi 0, %s58
      %s60 = sphi 0, %s58
      %s61 = sphi 0, %s60
      %s75 = sphi 0, %s61
      %s79 = sphi 0, %s79
      %s81 = sphi 0, %s79
      %s82 = sphi 0, %s81
      %s96 = sphi 0, %s82
      %s104 = sphi 0, %s106
      %s107 = sphi 0, %s104
      %s108 = sphi 0, %s107
      %s124 = sphi 0, %s108
    $region4: #{tpu_custom_call.1} parent=1 // loop_header_branch
      %15 = sbr.rel (%p13) target = $region8
    $region5: #{tpu_custom_call.1} parent=1 // loop_body
      %s17 = ssub.s32 %s12, 1
      %s18 = ssub.s32 %s12, 2
      %s25 = sadd.s32 1, %s20
      %p26 = scmp.ge.s32.totalorder %s25, 2
      %s27 = scalar_select %p26, 0, %s25
      %s28 = sadd.s32 1, %s19
      %s29 = scalar_select %p26, %s28, %s19
      %p30 = scmp.ge.s32.totalorder %s29, 2
      %s31 = scalar_select %p30, 0, %s29
      %s32 = ssub.s32 %s19, %s31
      %p33 = scmp.eq.s32.totalorder %s32, 0
      %s35 = sadd.s32 %s34, 1
      %s36 = scalar_select %p33, %s34, %s35
      %p39 = pneg %p33
      %p40 = scmp.eq.s32.totalorder %s12, 3
      %p41 = por %p39, %p40
      %p42 = scmp.ne.s32.totalorder %s34, %s37
      %p43 = scmp.eq.s32.totalorder %s12, 0
      %p44 = por %p42, %p43
      %p45 = scmp.ne.s32.totalorder %s34, %s37
      %p46 = scmp.eq.s32.totalorder %s17, 3
      %p47 = por %p45, %p46
      %p48 = scmp.ne.s32.totalorder %s37, %s38
      %p49 = scmp.eq.s32.totalorder %s17, 0
      %p50 = por %p48, %p49
      %p51 = scmp.ne.s32.totalorder %s37, %s38
      %p52 = scmp.eq.s32.totalorder %s18, 3
      %p53 = por %p51, %p52
      %p55 = scmp.ne.s32.totalorder %s38, %s54
      %p56 = scmp.eq.s32.totalorder %s18, 0
      %p57 = por %p55, %p56
      %s59 = sadd.s32 %s58, 1
      %p62 = scmp.eq.s32.totalorder %s12, 3
      %p63 = scmp.ne.s32.totalorder %s58, %s60
      %p64 = scmp.eq.s32.totalorder %s12, 0
      %p65 = por %p63, %p64
      %p66 = scmp.ne.s32.totalorder %s58, %s60
      %p67 = scmp.eq.s32.totalorder %s17, 3
      %p68 = por %p66, %p67
      %p69 = scmp.ne.s32.totalorder %s60, %s61
      %p70 = scmp.eq.s32.totalorder %s17, 0
      %p71 = por %p69, %p70
      %p72 = scmp.ne.s32.totalorder %s60, %s61
      %p73 = scmp.eq.s32.totalorder %s18, 3
      %p74 = por %p72, %p73
      %p76 = scmp.ne.s32.totalorder %s61, %s75
      %p77 = scmp.eq.s32.totalorder %s18, 0
      %p78 = por %p76, %p77
      %s80 = sadd.s32 %s79, 1
      %p83 = scmp.eq.s32.totalorder %s12, 3
      %p84 = scmp.ne.s32.totalorder %s79, %s81
      %p85 = scmp.eq.s32.totalorder %s12, 0
      %p86 = por %p84, %p85
      %p87 = scmp.ne.s32.totalorder %s79, %s81
      %p88 = scmp.eq.s32.totalorder %s17, 3
      %p89 = por %p87, %p88
      %p90 = scmp.ne.s32.totalorder %s81, %s82
      %p91 = scmp.eq.s32.totalorder %s17, 0
      %p92 = por %p90, %p91
      %p93 = scmp.ne.s32.totalorder %s81, %s82
      %p94 = scmp.eq.s32.totalorder %s18, 3
      %p95 = por %p93, %p94
      %p97 = scmp.ne.s32.totalorder %s82, %s96
      %p98 = scmp.eq.s32.totalorder %s18, 0
      %p99 = por %p97, %p98
      %s100 = ssub.s32 %s19, %s31
      %s101 = ssub.s32 %s20, %s27
      %s102 = sor.u32 %s100, %s101
      %p103 = scmp.eq.s32.totalorder %s102, 0
      %s105 = sadd.s32 %s104, 1
      %s106 = scalar_select %p103, %s104, %s105
      %p109 = pneg %p103
      %p110 = scmp.eq.s32.totalorder %s12, 3
      %p111 = por %p109, %p110
      %p112 = scmp.ne.s32.totalorder %s104, %s107
      %p113 = scmp.eq.s32.totalorder %s12, 0
      %p114 = por %p112, %p113
      %p115 = scmp.ne.s32.totalorder %s104, %s107
      %p116 = scmp.eq.s32.totalorder %s17, 3
      %p117 = por %p115, %p116
      %p118 = scmp.ne.s32.totalorder %s107, %s108
      %p119 = scmp.eq.s32.totalorder %s17, 0
      %p120 = por %p118, %p119
      %p121 = scmp.ne.s32.totalorder %s107, %s108
      %p122 = scmp.eq.s32.totalorder %s18, 3
      %p123 = por %p121, %p122
      %p125 = scmp.ne.s32.totalorder %s108, %s124
      %p126 = scmp.eq.s32.totalorder %s18, 0
      %p127 = por %p125, %p126
      %p128 = scmp.le.s32.totalorder 1, %s12
      %p129 = scmp.lt.s32.totalorder %s12, 5
      %p130 = pnand %p128, %p129
      %p131 = pneg %p130
      // Predicated region
      $region9: #{tpu_custom_call.1} parent=5 // pred_check
        _
      $region10: #{tpu_custom_call.1} parent=5 // pred_check_branch
        %133 = sbr.rel (%p130) target = $region12
      $region11: #{tpu_custom_call.1} parent=5 // pred_region
        %s134 = ssub.s32 %s12, 1
        // Predicated region
        $region13: #{tpu_custom_call.1} parent=11 // pred_check
          %p135 = pneg %p71
        $region14: #{tpu_custom_call.1} parent=11 // pred_check_branch
          %137 = sbr.rel (%p135) target = $region16
        $region15: #{tpu_custom_call.1} parent=11 // pred_region
          _
        $region16: #{tpu_custom_call.1} parent=11 // pred_fallthru
          _
        // Predicated region
        $region17: #{tpu_custom_call.1} parent=11 // pred_check
          %p138 = pneg %p92
        $region18: #{tpu_custom_call.1} parent=11 // pred_check_branch
          %140 = sbr.rel (%p138) target = $region20
        $region19: #{tpu_custom_call.1} parent=11 // pred_region
          _
        $region20: #{tpu_custom_call.1} parent=11 // pred_fallthru
          _
      $region12: #{tpu_custom_call.1} parent=5 // pred_fallthru
        _
      %p141 = scmp.lt.s32.totalorder %s12, 4
      // Predicated region
      $region21: #{tpu_custom_call.1} parent=5 // pred_check
        %p142 = pneg %p141
      $region22: #{tpu_custom_call.1} parent=5 // pred_check_branch
        %144 = sbr.rel (%p142) target = $region24
      $region23: #{tpu_custom_call.1} parent=5 // pred_region
        // Predicated region
        $region25: #{tpu_custom_call.1} parent=23 // pred_check
          %p145 = pneg %p44
        $region26: #{tpu_custom_call.1} parent=23 // pred_check_branch
          %147 = sbr.rel (%p145) target = $region28
        $region27: #{tpu_custom_call.1} parent=23 // pred_region
          %p148 = scmp.lt.s32.totalorder %s19, 1
          %s149 = scalar_select %p148, %s19, 1
          %s150 = smul.addr %s149, 170
          %s151 = smul.addr %s150, 4
          %s152 = scalar_lea.vmem %s0, %s151
        $region28: #{tpu_custom_call.1} parent=23 // pred_fallthru
          _
      $region24: #{tpu_custom_call.1} parent=5 // pred_fallthru
        _
      %p153 = scmp.le.s32.totalorder 1, %s12
      %p154 = scmp.lt.s32.totalorder %s12, 5
      %p155 = pnand %p153, %p154
      %p156 = pneg %p155
      // Predicated region
      $region29: #{tpu_custom_call.1} parent=5 // pred_check
        _
      $region30: #{tpu_custom_call.1} parent=5 // pred_check_branch
        %158 = sbr.rel (%p155) target = $region32
      $region31: #{tpu_custom_call.1} parent=5 // pred_region
        %s159 = ssub.s32 %s12, 1
        %p160 = scmp.lt.s32.totalorder %s21, 1
        %s161 = scalar_select %p160, %s21, 1
        %s162 = smul.addr %s161, 170
        %s163 = smul.addr %s162, 4
        %s164 = scalar_lea.vmem %s0, %s163
        %p165 = pneg %p50
        %p166 = pneg %p47
        %p167 = pneg %p71
        %p168 = pneg %p68
        %p169 = pneg %p92
        %p170 = pneg %p89
        %p171 = pneg %p120
        %p172 = pneg %p117
        %s173 = sand.u32 %s107, 1
        %s174 = scalar_lea.sflag [#allocation3], %s173
        %s175 = sand.u32 %s107, 1
        %s176 = smul.addr %s175, 128
        %s177 = scalar_lea.vmem [#allocation2], %s176
        %p178 = scmp.lt.s32.totalorder %s21, 1
        %s179 = scalar_select %p178, %s21, 1
        %s180 = smul.addr %s179, 170
        %s181 = smul.addr %s180, 4
        %s182 = scalar_lea.vmem %s0, %s181
        %s183 = smul.u32 8, %s22
        %s184 = smul.u32 %s22, 16
        %s185 = smul.u32 %s184, 5
        %s186 = smul.addr %s185, 4
        %s187 = scalar_lea.vmem %s182, %s186
        %v188 = vld [vmem:[%s187] sm:$0xf]
        %v189 = vld [vmem:[%s187 + $0x4] sm:$0xf]
        %v190 = vld [vmem:[%s187 + $0x8] sm:$0xf]
        %v191 = vld [vmem:[%s187 + $0xc] sm:$0xf]
        %v192 = vld [vmem:[%s187 + $0x10] sm:$0x1]
        %v197 = vunpack.c.l.b16 %v188
        %v198 = vunpack.c.l.b16 %v189
        %v199 = vunpack.c.l.b16 %v190
        %v200 = vunpack.c.l.b16 %v191
        %v201 = vpack.c.b16 %v198, %v197
        %v202 = vpack.c.b16 %v200, %v199
        %v206 = vunpack.c.l.b16 %v192
        %v207 = vpack.c.b16 %v206, %v206
        %vm208 = vsmask.f32 7424
        %v210 = vshrl.u32 %v201, 16
        %v212 = vshll.u32 %v201, 16
        %v214 = vrot.slane %v212, 1
        %v215 = vor.u32 %v210, %v214
        %v217 = vshll.u32 %v202, 16
        %v219 = vrot.slane %v217, 1
        %v220 = vsel %vm208, %v215, %v219
        %v221 = vshrl.u32 %v202, 16
        %v223 = vor.u32 %v221, %v219
        %v225 = vshll.u32 %v207, 16
        %v227 = vrot.slane %v225, 1
        %v228 = vsel %vm208, %v223, %v227
        %vm231 = vcmask 1046528
        %v232 = vrot.slane %v201, 1
        %v233 = vrot.slane %v202, 1
        %v234 = vsel %vm231, %v232, %v233
        %v235 = vrot.slane %v207, 1
        %v236 = vsel %vm231, %v233, %v235
        %v239 = vld [vmem:[%s1] sm:$0xf]
        %v240 = vld [vmem:[%s1 + $0x4] sm:$0xf]
        %v241 = vld [vmem:[%s1 + $0x8] sm:$0xf]
        %v242 = vld [vmem:[%s1 + $0xc] sm:$0xf]
        %v243 = vld [vmem:[%s1 + $0x10] sm:$0xf]
        %v244 = vld [vmem:[%s1 + $0x14] sm:$0xf]
        %v245 = vld [vmem:[%s1 + $0x18] sm:$0xf]
        %v246 = vld [vmem:[%s1 + $0x1c] sm:$0xf]
        %v247 = vld [vmem:[%s1 + $0x20] sm:$0xf]
        %v248 = vld [vmem:[%s1 + $0x24] sm:$0xf]
        %v249 = vld [vmem:[%s1 + $0x28] sm:$0xf]
        %v250 = vld [vmem:[%s1 + $0x2c] sm:$0xf]
        %v251 = vld [vmem:[%s1 + $0x30] sm:$0xf]
        %v252 = vld [vmem:[%s1 + $0x34] sm:$0xf]
        %v253 = vld [vmem:[%s1 + $0x38] sm:$0xf]
        %v254 = vld [vmem:[%s1 + $0x3c] sm:$0xf]
        %v255 = vld [vmem:[%s1 + $0x40] sm:$0xf]
        %v256 = vld [vmem:[%s1 + $0x44] sm:$0xf]
        %v257 = vld [vmem:[%s1 + $0x48] sm:$0xf]
        %v258 = vld [vmem:[%s1 + $0x4c] sm:$0xf]
        %v259 = vld [vmem:[%s1 + $0x50] sm:$0xf]
        %v260 = vld [vmem:[%s1 + $0x54] sm:$0xf]
        %v261 = vld [vmem:[%s1 + $0x58] sm:$0xf]
        %v262 = vld [vmem:[%s1 + $0x5c] sm:$0xf]
        %v263 = vld [vmem:[%s1 + $0x60] sm:$0xf]
        %v264 = vld [vmem:[%s1 + $0x64] sm:$0xf]
        %v265 = vld [vmem:[%s1 + $0x68] sm:$0xf]
        %v266 = vld [vmem:[%s1 + $0x6c] sm:$0xf]
        %v267 = vld [vmem:[%s1 + $0x70] sm:$0xf]
        %v268 = vld [vmem:[%s1 + $0x74] sm:$0xf]
        %v269 = vld [vmem:[%s1 + $0x78] sm:$0xf]
        %v270 = vld [vmem:[%s1 + $0x7c] sm:$0xf]
        %v271 = vld [vmem:[%s1 + $0x80] sm:$0xf]
        %v272 = vld [vmem:[%s1 + $0x84] sm:$0xf]
        %v273 = vld [vmem:[%s1 + $0x88] sm:$0xf]
        %v274 = vld [vmem:[%s1 + $0x8c] sm:$0xf]
        %v275 = vld [vmem:[%s1 + $0x90] sm:$0xf]
        %v276 = vld [vmem:[%s1 + $0x94] sm:$0xf]
        %v277 = vld [vmem:[%s1 + $0x98] sm:$0xf]
        %v278 = vld [vmem:[%s1 + $0x9c] sm:$0xf]
        %v279 = vld [vmem:[%s1 + $0xa0] sm:$0xf]
        %v280 = vld [vmem:[%s1 + $0xa4] sm:$0xf]
        %v281 = vld [vmem:[%s1 + $0xa8] sm:$0xf]
        %v282 = vld [vmem:[%s1 + $0xac] sm:$0xf]
        %v283 = vld [vmem:[%s1 + $0xb0] sm:$0xf]
        %v284 = vld [vmem:[%s1 + $0xb4] sm:$0xf]
        %v285 = vld [vmem:[%s1 + $0xb8] sm:$0xf]
        %v286 = vld [vmem:[%s1 + $0xbc] sm:$0xf]
        %s287 = sadd.s32 %s184, 1
        %s288 = smul.u32 %s287, 5
        %s289 = smul.addr %s288, 4
        %s290 = scalar_lea.vmem %s182, %s289
        %v291 = vld [vmem:[%s290] sm:$0xf]
        %v292 = vld [vmem:[%s290 + $0x4] sm:$0xf]
        %v293 = vld [vmem:[%s290 + $0x8] sm:$0xf]
        %v294 = vld [vmem:[%s290 + $0xc] sm:$0xf]
        %v295 = vld [vmem:[%s290 + $0x10] sm:$0x1]
        %v300 = vunpack.c.l.b16 %v291
        %v301 = vunpack.c.l.b16 %v292
        %v302 = vunpack.c.l.b16 %v293
        %v303 = vunpack.c.l.b16 %v294
        %v304 = vpack.c.b16 %v301, %v300
        %v305 = vpack.c.b16 %v303, %v302
        %v309 = vunpack.c.l.b16 %v295
        %v310 = vpack.c.b16 %v309, %v309
        %v312 = vshrl.u32 %v304, 16
        %v314 = vshll.u32 %v304, 16
        %v316 = vrot.slane %v314, 1
        %v317 = vor.u32 %v312, %v316
        %v319 = vshll.u32 %v305, 16
        %v321 = vrot.slane %v319, 1
        %v322 = vsel %vm208, %v317, %v321
        %v323 = vshrl.u32 %v305, 16
        %v325 = vor.u32 %v323, %v321
        %v327 = vshll.u32 %v310, 16
        %v329 = vrot.slane %v327, 1
        %v330 = vsel %vm208, %v325, %v329
        %v333 = vrot.slane %v304, 1
        %v334 = vrot.slane %v305, 1
        %v335 = vsel %vm231, %v333, %v334
        %v336 = vrot.slane %v310, 1
        %v337 = vsel %vm231, %v334, %v336
        %s340 = scalar_lea.vmem %s1, 192
        %v341 = vld [vmem:[%s340] sm:$0xf]
        %v342 = vld [vmem:[%s340 + $0x4] sm:$0xf]
        %v343 = vld [vmem:[%s340 + $0x8] sm:$0xf]
        %v344 = vld [vmem:[%s340 + $0xc] sm:$0xf]
        %v345 = vld [vmem:[%s340 + $0x10] sm:$0xf]
        %v346 = vld [vmem:[%s340 + $0x14] sm:$0xf]
        %v347 = vld [vmem:[%s340 + $0x18] sm:$0xf]
        %v348 = vld [vmem:[%s340 + $0x1c] sm:$0xf]
        %v349 = vld [vmem:[%s340 + $0x20] sm:$0xf]
        %v350 = vld [vmem:[%s340 + $0x24] sm:$0xf]
        %v351 = vld [vmem:[%s340 + $0x28] sm:$0xf]
        %v352 = vld [vmem:[%s340 + $0x2c] sm:$0xf]
        %v353 = vld [vmem:[%s340 + $0x30] sm:$0xf]
        %v354 = vld [vmem:[%s340 + $0x34] sm:$0xf]
        %v355 = vld [vmem:[%s340 + $0x38] sm:$0xf]
        %v356 = vld [vmem:[%s340 + $0x3c] sm:$0xf]
        %v357 = vld [vmem:[%s340 + $0x40] sm:$0xf]
        %v358 = vld [vmem:[%s340 + $0x44] sm:$0xf]
        %v359 = vld [vmem:[%s340 + $0x48] sm:$0xf]
        %v360 = vld [vmem:[%s340 + $0x4c] sm:$0xf]
        %v361 = vld [vmem:[%s340 + $0x50] sm:$0xf]
        %v362 = vld [vmem:[%s340 + $0x54] sm:$0xf]
        %v363 = vld [vmem:[%s340 + $0x58] sm:$0xf]
        %v364 = vld [vmem:[%s340 + $0x5c] sm:$0xf]
        %v365 = vld [vmem:[%s340 + $0x60] sm:$0xf]
        %v366 = vld [vmem:[%s340 + $0x64] sm:$0xf]
        %v367 = vld [vmem:[%s340 + $0x68] sm:$0xf]
        %v368 = vld [vmem:[%s340 + $0x6c] sm:$0xf]
        %v369 = vld [vmem:[%s340 + $0x70] sm:$0xf]
        %v370 = vld [vmem:[%s340 + $0x74] sm:$0xf]
        %v371 = vld [vmem:[%s340 + $0x78] sm:$0xf]
        %v372 = vld [vmem:[%s340 + $0x7c] sm:$0xf]
        %v373 = vld [vmem:[%s340 + $0x80] sm:$0xf]
        %v374 = vld [vmem:[%s340 + $0x84] sm:$0xf]
        %v375 = vld [vmem:[%s340 + $0x88] sm:$0xf]
        %v376 = vld [vmem:[%s340 + $0x8c] sm:$0xf]
        %v377 = vld [vmem:[%s340 + $0x90] sm:$0xf]
        %v378 = vld [vmem:[%s340 + $0x94] sm:$0xf]
        %v379 = vld [vmem:[%s340 + $0x98] sm:$0xf]
        %v380 = vld [vmem:[%s340 + $0x9c] sm:$0xf]
        %v381 = vld [vmem:[%s340 + $0xa0] sm:$0xf]
        %v382 = vld [vmem:[%s340 + $0xa4] sm:$0xf]
        %v383 = vld [vmem:[%s340 + $0xa8] sm:$0xf]
        %v384 = vld [vmem:[%s340 + $0xac] sm:$0xf]
        %v385 = vld [vmem:[%s340 + $0xb0] sm:$0xf]
        %v386 = vld [vmem:[%s340 + $0xb4] sm:$0xf]
        %v387 = vld [vmem:[%s340 + $0xb8] sm:$0xf]
        %v388 = vld [vmem:[%s340 + $0xbc] sm:$0xf]
        %v437 = vunpack.c.l.b16 %v341
        %v438 = vunpack.c.l.b16 %v342
        %v439 = vunpack.c.l.b16 %v343
        %v440 = vunpack.c.l.b16 %v344
        %v441 = vunpack.c.l.b16 %v345
        %v442 = vunpack.c.l.b16 %v346
        %v443 = vunpack.c.l.b16 %v347
        %v444 = vunpack.c.l.b16 %v348
        %v445 = vunpack.c.l.b16 %v349
        %v446 = vunpack.c.l.b16 %v350
        %v447 = vunpack.c.l.b16 %v351
        %v448 = vunpack.c.l.b16 %v352
        %v449 = vunpack.c.l.b16 %v353
        %v450 = vunpack.c.l.b16 %v354
        %v451 = vunpack.c.l.b16 %v355
        %v452 = vunpack.c.l.b16 %v356
        %v453 = vunpack.c.l.b16 %v357
        %v454 = vunpack.c.l.b16 %v358
        %v455 = vunpack.c.l.b16 %v359
        %v456 = vunpack.c.l.b16 %v360
        %v457 = vunpack.c.l.b16 %v361
        %v458 = vunpack.c.l.b16 %v362
        %v459 = vunpack.c.l.b16 %v363
        %v460 = vunpack.c.l.b16 %v364
        %v461 = vunpack.c.l.b16 %v365
        %v462 = vunpack.c.l.b16 %v366
        %v463 = vunpack.c.l.b16 %v367
        %v464 = vunpack.c.l.b16 %v368
        %v465 = vunpack.c.l.b16 %v369
        %v466 = vunpack.c.l.b16 %v370
        %v467 = vunpack.c.l.b16 %v371
        %v468 = vunpack.c.l.b16 %v372
        %v469 = vunpack.c.l.b16 %v373
        %v470 = vunpack.c.l.b16 %v374
        %v471 = vunpack.c.l.b16 %v375
        %v472 = vunpack.c.l.b16 %v376
        %v473 = vunpack.c.l.b16 %v377
        %v474 = vunpack.c.l.b16 %v378
        %v475 = vunpack.c.l.b16 %v379
        %v476 = vunpack.c.l.b16 %v380
        %v477 = vunpack.c.l.b16 %v381
        %v478 = vunpack.c.l.b16 %v382
        %v479 = vunpack.c.l.b16 %v383
        %v480 = vunpack.c.l.b16 %v384
        %v481 = vunpack.c.l.b16 %v385
        %v482 = vunpack.c.l.b16 %v386
        %v483 = vunpack.c.l.b16 %v387
        %v484 = vunpack.c.l.b16 %v388
        %v485 = vpack.c.b16 %v438, %v437
        %v486 = vpack.c.b16 %v440, %v439
        %v487 = vpack.c.b16 %v442, %v441
        %v488 = vpack.c.b16 %v444, %v443
        %v489 = vpack.c.b16 %v446, %v445
        %v490 = vpack.c.b16 %v448, %v447
        %v491 = vpack.c.b16 %v450, %v449
        %v492 = vpack.c.b16 %v452, %v451
        %v493 = vpack.c.b16 %v454, %v453
        %v494 = vpack.c.b16 %v456, %v455
        %v495 = vpack.c.b16 %v458, %v457
        %v496 = vpack.c.b16 %v460, %v459
        %v497 = vpack.c.b16 %v462, %v461
        %v498 = vpack.c.b16 %v464, %v463
        %v499 = vpack.c.b16 %v466, %v465
        %v500 = vpack.c.b16 %v468, %v467
        %v501 = vpack.c.b16 %v470, %v469
        %v502 = vpack.c.b16 %v472, %v471
        %v503 = vpack.c.b16 %v474, %v473
        %v504 = vpack.c.b16 %v476, %v475
        %v505 = vpack.c.b16 %v478, %v477
        %v506 = vpack.c.b16 %v480, %v479
        %v507 = vpack.c.b16 %v482, %v481
        %v508 = vpack.c.b16 %v484, %v483
        %533 = vmatpush.bf16.msra.mxu0 %v492
        %534 = vmatpush.bf16.msra.mxu0 %v491
        %535 = vmatpush.bf16.msra.mxu0 %v490
        %536 = vmatpush.bf16.msra.mxu0 %v489
        %537 = vmatpush.bf16.msra.mxu0 %v488
        %538 = vmatpush.bf16.msra.mxu0 %v487
        %539 = vmatpush.bf16.msra.mxu0 %v486
        %540 = vmatpush.bf16.msra.mxu0 %v485
        %541 = vmatmul.bf16.gmra.mxu0 %v304
        %v542 = vpop.f32.mrf.mxu0
        %v543 = vadd.f32 0.0, %v542
        %v544 = vpop.f32.mrf.mxu0
        %v545 = vadd.f32 0.0, %v544
        %546 = vmatmul.bf16.gmra.mxu0 %v305
        %v547 = vpop.f32.mrf.mxu0
        %v548 = vadd.f32 0.0, %v547
        %v549 = vpop.f32.mrf.mxu0
        %v550 = vadd.f32 0.0, %v549
        %551 = vdwg.mxu0
        %552 = vmatpush.bf16.msra.mxu0 %v500
        %553 = vmatpush.bf16.msra.mxu0 %v499
        %554 = vmatpush.bf16.msra.mxu0 %v498
        %555 = vmatpush.bf16.msra.mxu0 %v497
        %556 = vmatpush.bf16.msra.mxu0 %v496
        %557 = vmatpush.bf16.msra.mxu0 %v495
        %558 = vmatpush.bf16.msra.mxu0 %v494
        %559 = vmatpush.bf16.msra.mxu0 %v493
        %560 = vmatmul.bf16.gmra.mxu0 %v322
        %v561 = vpop.f32.mrf.mxu0
        %v562 = vadd.f32 %v543, %v561
        %v563 = vpop.f32.mrf.mxu0
        %v564 = vadd.f32 %v545, %v563
        %565 = vmatmul.bf16.gmra.mxu0 %v330
        %v566 = vpop.f32.mrf.mxu0
        %v567 = vadd.f32 %v548, %v566
        %v568 = vpop.f32.mrf.mxu0
        %v569 = vadd.f32 %v550, %v568
        %570 = vdwg.mxu0
        %571 = vmatpush.bf16.msra.mxu0 %v508
        %572 = vmatpush.bf16.msra.mxu0 %v507
        %573 = vmatpush.bf16.msra.mxu0 %v506
        %574 = vmatpush.bf16.msra.mxu0 %v505
        %575 = vmatpush.bf16.msra.mxu0 %v504
        %576 = vmatpush.bf16.msra.mxu0 %v503
        %577 = vmatpush.bf16.msra.mxu0 %v502
        %578 = vmatpush.bf16.msra.mxu0 %v501
        %579 = vmatmul.bf16.gmra.mxu0 %v335
        %v580 = vpop.f32.mrf.mxu0
        %v581 = vadd.f32 %v562, %v580
        %v582 = vpop.f32.mrf.mxu0
        %v583 = vadd.f32 %v564, %v582
        %584 = vmatmul.bf16.gmra.mxu0 %v337
        %v585 = vpop.f32.mrf.mxu0
        %v586 = vadd.f32 %v567, %v585
        %v587 = vpop.f32.mrf.mxu0
        %v588 = vadd.f32 %v569, %v587
        %589 = vdwg.mxu0
        %v638 = vunpack.c.l.b16 %v239
        %v639 = vunpack.c.l.b16 %v240
        %v640 = vunpack.c.l.b16 %v241
        %v641 = vunpack.c.l.b16 %v242
        %v642 = vunpack.c.l.b16 %v243
        %v643 = vunpack.c.l.b16 %v244
        %v644 = vunpack.c.l.b16 %v245
        %v645 = vunpack.c.l.b16 %v246
        %v646 = vunpack.c.l.b16 %v247
        %v647 = vunpack.c.l.b16 %v248
        %v648 = vunpack.c.l.b16 %v249
        %v649 = vunpack.c.l.b16 %v250
        %v650 = vunpack.c.l.b16 %v251
        %v651 = vunpack.c.l.b16 %v252
        %v652 = vunpack.c.l.b16 %v253
        %v653 = vunpack.c.l.b16 %v254
        %v654 = vunpack.c.l.b16 %v255
        %v655 = vunpack.c.l.b16 %v256
        %v656 = vunpack.c.l.b16 %v257
        %v657 = vunpack.c.l.b16 %v258
        %v658 = vunpack.c.l.b16 %v259
        %v659 = vunpack.c.l.b16 %v260
        %v660 = vunpack.c.l.b16 %v261
        %v661 = vunpack.c.l.b16 %v262
        %v662 = vunpack.c.l.b16 %v263
        %v663 = vunpack.c.l.b16 %v264
        %v664 = vunpack.c.l.b16 %v265
        %v665 = vunpack.c.l.b16 %v266
        %v666 = vunpack.c.l.b16 %v267
        %v667 = vunpack.c.l.b16 %v268
        %v668 = vunpack.c.l.b16 %v269
        %v669 = vunpack.c.l.b16 %v270
        %v670 = vunpack.c.l.b16 %v271
        %v671 = vunpack.c.l.b16 %v272
        %v672 = vunpack.c.l.b16 %v273
        %v673 = vunpack.c.l.b16 %v274
        %v674 = vunpack.c.l.b16 %v275
        %v675 = vunpack.c.l.b16 %v276
        %v676 = vunpack.c.l.b16 %v277
        %v677 = vunpack.c.l.b16 %v278
        %v678 = vunpack.c.l.b16 %v279
        %v679 = vunpack.c.l.b16 %v280
        %v680 = vunpack.c.l.b16 %v281
        %v681 = vunpack.c.l.b16 %v282
        %v682 = vunpack.c.l.b16 %v283
        %v683 = vunpack.c.l.b16 %v284
        %v684 = vunpack.c.l.b16 %v285
        %v685 = vunpack.c.l.b16 %v286
        %v686 = vpack.c.b16 %v639, %v638
        %v687 = vpack.c.b16 %v641, %v640
        %v688 = vpack.c.b16 %v643, %v642
        %v689 = vpack.c.b16 %v645, %v644
        %v690 = vpack.c.b16 %v647, %v646
        %v691 = vpack.c.b16 %v649, %v648
        %v692 = vpack.c.b16 %v651, %v650
        %v693 = vpack.c.b16 %v653, %v652
        %v694 = vpack.c.b16 %v655, %v654
        %v695 = vpack.c.b16 %v657, %v656
        %v696 = vpack.c.b16 %v659, %v658
        %v697 = vpack.c.b16 %v661, %v660
        %v698 = vpack.c.b16 %v663, %v662
        %v699 = vpack.c.b16 %v665, %v664
        %v700 = vpack.c.b16 %v667, %v666
        %v701 = vpack.c.b16 %v669, %v668
        %v702 = vpack.c.b16 %v671, %v670
        %v703 = vpack.c.b16 %v673, %v672
        %v704 = vpack.c.b16 %v675, %v674
        %v705 = vpack.c.b16 %v677, %v676
        %v706 = vpack.c.b16 %v679, %v678
        %v707 = vpack.c.b16 %v681, %v680
        %v708 = vpack.c.b16 %v683, %v682
        %v709 = vpack.c.b16 %v685, %v684
        %734 = vmatpush.bf16.msra.mxu0 %v693
        %735 = vmatpush.bf16.msra.mxu0 %v692
        %736 = vmatpush.bf16.msra.mxu0 %v691
        %737 = vmatpush.bf16.msra.mxu0 %v690
        %738 = vmatpush.bf16.msra.mxu0 %v689
        %739 = vmatpush.bf16.msra.mxu0 %v688
        %740 = vmatpush.bf16.msra.mxu0 %v687
        %741 = vmatpush.bf16.msra.mxu0 %v686
        %742 = vmatmul.bf16.gmra.mxu0 %v201
        %v743 = vpop.f32.mrf.mxu0
        %v744 = vadd.f32 %v581, %v743
        %v745 = vpop.f32.mrf.mxu0
        %v746 = vadd.f32 %v583, %v745
        %747 = vmatmul.bf16.gmra.mxu0 %v202
        %v748 = vpop.f32.mrf.mxu0
        %v749 = vadd.f32 %v586, %v748
        %v750 = vpop.f32.mrf.mxu0
        %v751 = vadd.f32 %v588, %v750
        %752 = vdwg.mxu0
        %753 = vmatpush.bf16.msra.mxu0 %v701
        %754 = vmatpush.bf16.msra.mxu0 %v700
        %755 = vmatpush.bf16.msra.mxu0 %v699
        %756 = vmatpush.bf16.msra.mxu0 %v698
        %757 = vmatpush.bf16.msra.mxu0 %v697
        %758 = vmatpush.bf16.msra.mxu0 %v696
        %759 = vmatpush.bf16.msra.mxu0 %v695
        %760 = vmatpush.bf16.msra.mxu0 %v694
        %761 = vmatmul.bf16.gmra.mxu0 %v220
        %v762 = vpop.f32.mrf.mxu0
        %v763 = vadd.f32 %v744, %v762
        %v764 = vpop.f32.mrf.mxu0
        %v765 = vadd.f32 %v746, %v764
        %766 = vmatmul.bf16.gmra.mxu0 %v228
        %v767 = vpop.f32.mrf.mxu0
        %v768 = vadd.f32 %v749, %v767
        %v769 = vpop.f32.mrf.mxu0
        %v770 = vadd.f32 %v751, %v769
        %771 = vdwg.mxu0
        %772 = vmatpush.bf16.msra.mxu0 %v709
        %773 = vmatpush.bf16.msra.mxu0 %v708
        %774 = vmatpush.bf16.msra.mxu0 %v707
        %775 = vmatpush.bf16.msra.mxu0 %v706
        %776 = vmatpush.bf16.msra.mxu0 %v705
        %777 = vmatpush.bf16.msra.mxu0 %v704
        %778 = vmatpush.bf16.msra.mxu0 %v703
        %779 = vmatpush.bf16.msra.mxu0 %v702
        %780 = vmatmul.bf16.gmra.mxu0 %v234
        %v781 = vpop.f32.mrf.mxu0
        %v782 = vadd.f32 %v763, %v781
        %v783 = vpop.f32.mrf.mxu0
        %v784 = vadd.f32 %v765, %v783
        %785 = vmatmul.bf16.gmra.mxu0 %v236
        %v786 = vpop.f32.mrf.mxu0
        %v787 = vadd.f32 %v768, %v786
        %v788 = vpop.f32.mrf.mxu0
        %v789 = vadd.f32 %v770, %v788
        %790 = vdwg.mxu0
        %s791 = sadd.s32 %s184, 2
        %s792 = smul.u32 %s791, 5
        %s793 = smul.addr %s792, 4
        %s794 = scalar_lea.vmem %s182, %s793
        %v795 = vld [vmem:[%s794] sm:$0xf]
        %v796 = vld [vmem:[%s794 + $0x4] sm:$0xf]
        %v797 = vld [vmem:[%s794 + $0x8] sm:$0xf]
        %v798 = vld [vmem:[%s794 + $0xc] sm:$0xf]
        %v799 = vld [vmem:[%s794 + $0x10] sm:$0x1]
        %v804 = vunpack.c.l.b16 %v795
        %v805 = vunpack.c.l.b16 %v796
        %v806 = vunpack.c.l.b16 %v797
        %v807 = vunpack.c.l.b16 %v798
        %v808 = vpack.c.b16 %v805, %v804
        %v809 = vpack.c.b16 %v807, %v806
        %v813 = vunpack.c.l.b16 %v799
        %v814 = vpack.c.b16 %v813, %v813
        %v816 = vshrl.u32 %v808, 16
        %v818 = vshll.u32 %v808, 16
        %v820 = vrot.slane %v818, 1
        %v821 = vor.u32 %v816, %v820
        %v823 = vshll.u32 %v809, 16
        %v825 = vrot.slane %v823, 1
        %v826 = vsel %vm208, %v821, %v825
        %v827 = vshrl.u32 %v809, 16
        %v829 = vor.u32 %v827, %v825
        %v831 = vshll.u32 %v814, 16
        %v833 = vrot.slane %v831, 1
        %v834 = vsel %vm208, %v829, %v833
        %v837 = vrot.slane %v808, 1
        %v838 = vrot.slane %v809, 1
        %v839 = vsel %vm231, %v837, %v838
        %v840 = vrot.slane %v814, 1
        %v841 = vsel %vm231, %v838, %v840
        %s844 = scalar_lea.vmem %s1, 384
        %v845 = vld [vmem:[%s844] sm:$0xf]
        %v846 = vld [vmem:[%s844 + $0x4] sm:$0xf]
        %v847 = vld [vmem:[%s844 + $0x8] sm:$0xf]
        %v848 = vld [vmem:[%s844 + $0xc] sm:$0xf]
        %v849 = vld [vmem:[%s844 + $0x10] sm:$0xf]
        %v850 = vld [vmem:[%s844 + $0x14] sm:$0xf]
        %v851 = vld [vmem:[%s844 + $0x18] sm:$0xf]
        %v852 = vld [vmem:[%s844 + $0x1c] sm:$0xf]
        %v853 = vld [vmem:[%s844 + $0x20] sm:$0xf]
        %v854 = vld [vmem:[%s844 + $0x24] sm:$0xf]
        %v855 = vld [vmem:[%s844 + $0x28] sm:$0xf]
        %v856 = vld [vmem:[%s844 + $0x2c] sm:$0xf]
        %v857 = vld [vmem:[%s844 + $0x30] sm:$0xf]
        %v858 = vld [vmem:[%s844 + $0x34] sm:$0xf]
        %v859 = vld [vmem:[%s844 + $0x38] sm:$0xf]
        %v860 = vld [vmem:[%s844 + $0x3c] sm:$0xf]
        %v861 = vld [vmem:[%s844 + $0x40] sm:$0xf]
        %v862 = vld [vmem:[%s844 + $0x44] sm:$0xf]
        %v863 = vld [vmem:[%s844 + $0x48] sm:$0xf]
        %v864 = vld [vmem:[%s844 + $0x4c] sm:$0xf]
        %v865 = vld [vmem:[%s844 + $0x50] sm:$0xf]
        %v866 = vld [vmem:[%s844 + $0x54] sm:$0xf]
        %v867 = vld [vmem:[%s844 + $0x58] sm:$0xf]
        %v868 = vld [vmem:[%s844 + $0x5c] sm:$0xf]
        %v869 = vld [vmem:[%s844 + $0x60] sm:$0xf]
        %v870 = vld [vmem:[%s844 + $0x64] sm:$0xf]
        %v871 = vld [vmem:[%s844 + $0x68] sm:$0xf]
        %v872 = vld [vmem:[%s844 + $0x6c] sm:$0xf]
        %v873 = vld [vmem:[%s844 + $0x70] sm:$0xf]
        %v874 = vld [vmem:[%s844 + $0x74] sm:$0xf]
        %v875 = vld [vmem:[%s844 + $0x78] sm:$0xf]
        %v876 = vld [vmem:[%s844 + $0x7c] sm:$0xf]
        %v877 = vld [vmem:[%s844 + $0x80] sm:$0xf]
        %v878 = vld [vmem:[%s844 + $0x84] sm:$0xf]
        %v879 = vld [vmem:[%s844 + $0x88] sm:$0xf]
        %v880 = vld [vmem:[%s844 + $0x8c] sm:$0xf]
        %v881 = vld [vmem:[%s844 + $0x90] sm:$0xf]
        %v882 = vld [vmem:[%s844 + $0x94] sm:$0xf]
        %v883 = vld [vmem:[%s844 + $0x98] sm:$0xf]
        %v884 = vld [vmem:[%s844 + $0x9c] sm:$0xf]
        %v885 = vld [vmem:[%s844 + $0xa0] sm:$0xf]
        %v886 = vld [vmem:[%s844 + $0xa4] sm:$0xf]
        %v887 = vld [vmem:[%s844 + $0xa8] sm:$0xf]
        %v888 = vld [vmem:[%s844 + $0xac] sm:$0xf]
        %v889 = vld [vmem:[%s844 + $0xb0] sm:$0xf]
        %v890 = vld [vmem:[%s844 + $0xb4] sm:$0xf]
        %v891 = vld [vmem:[%s844 + $0xb8] sm:$0xf]
        %v892 = vld [vmem:[%s844 + $0xbc] sm:$0xf]
        %v941 = vunpack.c.l.b16 %v845
        %v942 = vunpack.c.l.b16 %v846
        %v943 = vunpack.c.l.b16 %v847
        %v944 = vunpack.c.l.b16 %v848
        %v945 = vunpack.c.l.b16 %v849
        %v946 = vunpack.c.l.b16 %v850
        %v947 = vunpack.c.l.b16 %v851
        %v948 = vunpack.c.l.b16 %v852
        %v949 = vunpack.c.l.b16 %v853
        %v950 = vunpack.c.l.b16 %v854
        %v951 = vunpack.c.l.b16 %v855
        %v952 = vunpack.c.l.b16 %v856
        %v953 = vunpack.c.l.b16 %v857
        %v954 = vunpack.c.l.b16 %v858
        %v955 = vunpack.c.l.b16 %v859
        %v956 = vunpack.c.l.b16 %v860
        %v957 = vunpack.c.l.b16 %v861
        %v958 = vunpack.c.l.b16 %v862
        %v959 = vunpack.c.l.b16 %v863
        %v960 = vunpack.c.l.b16 %v864
        %v961 = vunpack.c.l.b16 %v865
        %v962 = vunpack.c.l.b16 %v866
        %v963 = vunpack.c.l.b16 %v867
        %v964 = vunpack.c.l.b16 %v868
        %v965 = vunpack.c.l.b16 %v869
        %v966 = vunpack.c.l.b16 %v870
        %v967 = vunpack.c.l.b16 %v871
        %v968 = vunpack.c.l.b16 %v872
        %v969 = vunpack.c.l.b16 %v873
        %v970 = vunpack.c.l.b16 %v874
        %v971 = vunpack.c.l.b16 %v875
        %v972 = vunpack.c.l.b16 %v876
        %v973 = vunpack.c.l.b16 %v877
        %v974 = vunpack.c.l.b16 %v878
        %v975 = vunpack.c.l.b16 %v879
        %v976 = vunpack.c.l.b16 %v880
        %v977 = vunpack.c.l.b16 %v881
        %v978 = vunpack.c.l.b16 %v882
        %v979 = vunpack.c.l.b16 %v883
        %v980 = vunpack.c.l.b16 %v884
        %v981 = vunpack.c.l.b16 %v885
        %v982 = vunpack.c.l.b16 %v886
        %v983 = vunpack.c.l.b16 %v887
        %v984 = vunpack.c.l.b16 %v888
        %v985 = vunpack.c.l.b16 %v889
        %v986 = vunpack.c.l.b16 %v890
        %v987 = vunpack.c.l.b16 %v891
        %v988 = vunpack.c.l.b16 %v892
        %v989 = vpack.c.b16 %v942, %v941
        %v990 = vpack.c.b16 %v944, %v943
        %v991 = vpack.c.b16 %v946, %v945
        %v992 = vpack.c.b16 %v948, %v947
        %v993 = vpack.c.b16 %v950, %v949
        %v994 = vpack.c.b16 %v952, %v951
        %v995 = vpack.c.b16 %v954, %v953
        %v996 = vpack.c.b16 %v956, %v955
        %v997 = vpack.c.b16 %v958, %v957
        %v998 = vpack.c.b16 %v960, %v959
        %v999 = vpack.c.b16 %v962, %v961
        %v1000 = vpack.c.b16 %v964, %v963
        %v1001 = vpack.c.b16 %v966, %v965
        %v1002 = vpack.c.b16 %v968, %v967
        %v1003 = vpack.c.b16 %v970, %v969
        %v1004 = vpack.c.b16 %v972, %v971
        %v1005 = vpack.c.b16 %v974, %v973
        %v1006 = vpack.c.b16 %v976, %v975
        %v1007 = vpack.c.b16 %v978, %v977
        %v1008 = vpack.c.b16 %v980, %v979
        %v1009 = vpack.c.b16 %v982, %v981
        %v1010 = vpack.c.b16 %v984, %v983
        %v1011 = vpack.c.b16 %v986, %v985
        %v1012 = vpack.c.b16 %v988, %v987
        %1037 = vmatpush.bf16.msra.mxu0 %v996
        %1038 = vmatpush.bf16.msra.mxu0 %v995
        %1039 = vmatpush.bf16.msra.mxu0 %v994
        %1040 = vmatpush.bf16.msra.mxu0 %v993
        %1041 = vmatpush.bf16.msra.mxu0 %v992
        %1042 = vmatpush.bf16.msra.mxu0 %v991
        %1043 = vmatpush.bf16.msra.mxu0 %v990
        %1044 = vmatpush.bf16.msra.mxu0 %v989
        %1045 = vmatmul.bf16.gmra.mxu0 %v808
        %v1046 = vpop.f32.mrf.mxu0
        %v1047 = vadd.f32 0.0, %v1046
        %v1048 = vpop.f32.mrf.mxu0
        %v1049 = vadd.f32 0.0, %v1048
        %1050 = vmatmul.bf16.gmra.mxu0 %v809
        %v1051 = vpop.f32.mrf.mxu0
        %v1052 = vadd.f32 0.0, %v1051
        %v1053 = vpop.f32.mrf.mxu0
        %v1054 = vadd.f32 0.0, %v1053
        %1055 = vdwg.mxu0
        %1056 = vmatpush.bf16.msra.mxu0 %v1004
        %1057 = vmatpush.bf16.msra.mxu0 %v1003
        %1058 = vmatpush.bf16.msra.mxu0 %v1002
        %1059 = vmatpush.bf16.msra.mxu0 %v1001
        %1060 = vmatpush.bf16.msra.mxu0 %v1000
        %1061 = vmatpush.bf16.msra.mxu0 %v999
        %1062 = vmatpush.bf16.msra.mxu0 %v998
        %1063 = vmatpush.bf16.msra.mxu0 %v997
        %1064 = vmatmul.bf16.gmra.mxu0 %v826
        %v1065 = vpop.f32.mrf.mxu0
        %v1066 = vadd.f32 %v1047, %v1065
        %v1067 = vpop.f32.mrf.mxu0
        %v1068 = vadd.f32 %v1049, %v1067
        %1069 = vmatmul.bf16.gmra.mxu0 %v834
        %v1070 = vpop.f32.mrf.mxu0
        %v1071 = vadd.f32 %v1052, %v1070
        %v1072 = vpop.f32.mrf.mxu0
        %v1073 = vadd.f32 %v1054, %v1072
        %1074 = vdwg.mxu0
        %1075 = vmatpush.bf16.msra.mxu0 %v1012
        %1076 = vmatpush.bf16.msra.mxu0 %v1011
        %1077 = vmatpush.bf16.msra.mxu0 %v1010
        %1078 = vmatpush.bf16.msra.mxu0 %v1009
        %1079 = vmatpush.bf16.msra.mxu0 %v1008
        %1080 = vmatpush.bf16.msra.mxu0 %v1007
        %1081 = vmatpush.bf16.msra.mxu0 %v1006
        %1082 = vmatpush.bf16.msra.mxu0 %v1005
        %1083 = vmatmul.bf16.gmra.mxu0 %v839
        %v1084 = vpop.f32.mrf.mxu0
        %v1085 = vadd.f32 %v1066, %v1084
        %v1086 = vpop.f32.mrf.mxu0
        %v1087 = vadd.f32 %v1068, %v1086
        %1088 = vmatmul.bf16.gmra.mxu0 %v841
        %v1089 = vpop.f32.mrf.mxu0
        %v1090 = vadd.f32 %v1071, %v1089
        %v1091 = vpop.f32.mrf.mxu0
        %v1092 = vadd.f32 %v1073, %v1091
        %1093 = vdwg.mxu0
        %v1094 = vadd.f32 %v782, %v1085
        %v1095 = vadd.f32 %v784, %v1087
        %v1096 = vadd.f32 %v787, %v1090
        %v1097 = vadd.f32 %v789, %v1092
        %v1098 = vld [vmem:[%s2] sm:$0x1]
        %v1100 = vperm.slane %v1098, 0
        %v1102 = vadd.f32 %v1094, %v1100
        %v1103 = vadd.f32 %v1095, %v1100
        %v1104 = vadd.f32 %v1096, %v1100
        %v1105 = vadd.f32 %v1097, %v1100
        %v1106 = vxor.u32 %v1102, 2147483648
        %v1107 = vxor.u32 %v1103, 2147483648
        %v1108 = vxor.u32 %v1104, 2147483648
        %v1109 = vxor.u32 %v1105, 2147483648
        %v1110 = vmul.f32 %v1106, 1.442695
        %v1111 = vpow.pop %v1110
        %v1112 = vmul.f32 %v1107, 1.442695
        %v1113 = vpow.pop %v1112
        %v1114 = vmul.f32 %v1108, 1.442695
        %v1115 = vpow.pop %v1114
        %v1116 = vmul.f32 %v1109, 1.442695
        %v1117 = vpow.pop %v1116
        %v1118 = vadd.f32 %v1111, 1.0
        %v1119 = vadd.f32 %v1113, 1.0
        %v1120 = vadd.f32 %v1115, 1.0
        %v1121 = vadd.f32 %v1117, 1.0
        %v1122 = vrcp.pop %v1118
        %v1123 = vmul.f32 %v1118, %v1122
        %v1124 = vsub.f32 1.0, %v1123
        %v1125 = vmul.f32 %v1122, %v1124
        %v1126 = vadd.f32 %v1122, %v1125
        %vm1127 = vweird.f32 %v1118
        %vm1128 = vweird.f32 %v1122
        %vm1129 = vmor %vm1127, %vm1128
        %v1130 = vsel %vm1129, %v1122, %v1126
        %v1131 = vand.u32 2147483647, %v1118
        %vm1132 = vcmp.eq.f32.partialorder %v1131, 8.507059e+37
        %v1133 = vand.u32 %v1118, 2147483648
        %v1134 = vor.u32 1.1754944e-38, %v1133
        %v1135 = vsel %vm1132, %v1134, %v1130
        %v1136 = vmul.f32 1.0, %v1135
        %v1137 = vrcp.pop %v1119
        %v1138 = vmul.f32 %v1119, %v1137
        %v1139 = vsub.f32 1.0, %v1138
        %v1140 = vmul.f32 %v1137, %v1139
        %v1141 = vadd.f32 %v1137, %v1140
        %vm1142 = vweird.f32 %v1119
        %vm1143 = vweird.f32 %v1137
        %vm1144 = vmor %vm1142, %vm1143
        %v1145 = vsel %vm1144, %v1137, %v1141
        %v1146 = vand.u32 2147483647, %v1119
        %vm1147 = vcmp.eq.f32.partialorder %v1146, 8.507059e+37
        %v1148 = vand.u32 %v1119, 2147483648
        %v1149 = vor.u32 1.1754944e-38, %v1148
        %v1150 = vsel %vm1147, %v1149, %v1145
        %v1151 = vmul.f32 1.0, %v1150
        %v1152 = vrcp.pop %v1120
        %v1153 = vmul.f32 %v1120, %v1152
        %v1154 = vsub.f32 1.0, %v1153
        %v1155 = vmul.f32 %v1152, %v1154
        %v1156 = vadd.f32 %v1152, %v1155
        %vm1157 = vweird.f32 %v1120
        %vm1158 = vweird.f32 %v1152
        %vm1159 = vmor %vm1157, %vm1158
        %v1160 = vsel %vm1159, %v1152, %v1156
        %v1161 = vand.u32 2147483647, %v1120
        %vm1162 = vcmp.eq.f32.partialorder %v1161, 8.507059e+37
        %v1163 = vand.u32 %v1120, 2147483648
        %v1164 = vor.u32 1.1754944e-38, %v1163
        %v1165 = vsel %vm1162, %v1164, %v1160
        %v1166 = vmul.f32 1.0, %v1165
        %v1167 = vrcp.pop %v1121
        %v1168 = vmul.f32 %v1121, %v1167
        %v1169 = vsub.f32 1.0, %v1168
        %v1170 = vmul.f32 %v1167, %v1169
        %v1171 = vadd.f32 %v1167, %v1170
        %vm1172 = vweird.f32 %v1121
        %vm1173 = vweird.f32 %v1167
        %vm1174 = vmor %vm1172, %vm1173
        %v1175 = vsel %vm1174, %v1167, %v1171
        %v1176 = vand.u32 2147483647, %v1121
        %vm1177 = vcmp.eq.f32.partialorder %v1176, 8.507059e+37
        %v1178 = vand.u32 %v1121, 2147483648
        %v1179 = vor.u32 1.1754944e-38, %v1178
        %v1180 = vsel %vm1177, %v1179, %v1175
        %v1181 = vmul.f32 1.0, %v1180
        %v1182 = vmul.f32 %v1102, %v1136
        %v1183 = vmul.f32 %v1103, %v1151
        %v1184 = vmul.f32 %v1104, %v1166
        %v1185 = vmul.f32 %v1105, %v1181
        %v1186 = vpack.c.bf16 %v1182, %v1182
        %v1187 = vpack.c.bf16 %v1183, %v1183
        %v1188 = vpack.c.bf16 %v1184, %v1184
        %v1189 = vpack.c.bf16 %v1185, %v1185
        %1190 = vst [vmem:[%s177] sm:$0xf] %v1186
        %1191 = vst [vmem:[%s177 + $0x4] sm:$0xf] %v1187
        %1192 = vst [vmem:[%s177 + $0x8] sm:$0xf] %v1188
        %1193 = vst [vmem:[%s177 + $0xc] sm:$0xf] %v1189
        %s1194 = smul.u32 %s22, 8
        %s1195 = sadd.s32 %s1194, 1
        %s1196 = smul.u32 %s1195, 2
        %s1197 = smul.u32 %s1196, 5
        %s1198 = smul.addr %s1197, 4
        %s1199 = scalar_lea.vmem %s182, %s1198
        %v1200 = vld [vmem:[%s1199] sm:$0xf]
        %v1201 = vld [vmem:[%s1199 + $0x4] sm:$0xf]
        %v1202 = vld [vmem:[%s1199 + $0x8] sm:$0xf]
        %v1203 = vld [vmem:[%s1199 + $0xc] sm:$0xf]
        %v1204 = vld [vmem:[%s1199 + $0x10] sm:$0x1]
        %v1209 = vunpack.c.l.b16 %v1200
        %v1210 = vunpack.c.l.b16 %v1201
        %v1211 = vunpack.c.l.b16 %v1202
        %v1212 = vunpack.c.l.b16 %v1203
        %v1213 = vpack.c.b16 %v1210, %v1209
        %v1214 = vpack.c.b16 %v1212, %v1211
        %v1218 = vunpack.c.l.b16 %v1204
        %v1219 = vpack.c.b16 %v1218, %v1218
        %v1221 = vshrl.u32 %v1213, 16
        %v1223 = vshll.u32 %v1213, 16
        %v1225 = vrot.slane %v1223, 1
        %v1226 = vor.u32 %v1221, %v1225
        %v1228 = vshll.u32 %v1214, 16
        %v1230 = vrot.slane %v1228, 1
        %v1231 = vsel %vm208, %v1226, %v1230
        %v1232 = vshrl.u32 %v1214, 16
        %v1234 = vor.u32 %v1232, %v1230
        %v1236 = vshll.u32 %v1219, 16
        %v1238 = vrot.slane %v1236, 1
        %v1239 = vsel %vm208, %v1234, %v1238
        %v1242 = vrot.slane %v1213, 1
        %v1243 = vrot.slane %v1214, 1
        %v1244 = vsel %vm231, %v1242, %v1243
        %v1245 = vrot.slane %v1219, 1
        %v1246 = vsel %vm231, %v1243, %v1245
        %v1249 = vld [vmem:[%s1] sm:$0xf]
        %v1250 = vld [vmem:[%s1 + $0x4] sm:$0xf]
        %v1251 = vld [vmem:[%s1 + $0x8] sm:$0xf]
        %v1252 = vld [vmem:[%s1 + $0xc] sm:$0xf]
        %v1253 = vld [vmem:[%s1 + $0x10] sm:$0xf]
        %v1254 = vld [vmem:[%s1 + $0x14] sm:$0xf]
        %v1255 = vld [vmem:[%s1 + $0x18] sm:$0xf]
        %v1256 = vld [vmem:[%s1 + $0x1c] sm:$0xf]
        %v1257 = vld [vmem:[%s1 + $0x20] sm:$0xf]
        %v1258 = vld [vmem:[%s1 + $0x24] sm:$0xf]
        %v1259 = vld [vmem:[%s1 + $0x28] sm:$0xf]
        %v1260 = vld [vmem:[%s1 + $0x2c] sm:$0xf]
        %v1261 = vld [vmem:[%s1 + $0x30] sm:$0xf]
        %v1262 = vld [vmem:[%s1 + $0x34] sm:$0xf]
        %v1263 = vld [vmem:[%s1 + $0x38] sm:$0xf]
        %v1264 = vld [vmem:[%s1 + $0x3c] sm:$0xf]
        %v1265 = vld [vmem:[%s1 + $0x40] sm:$0xf]
        %v1266 = vld [vmem:[%s1 + $0x44] sm:$0xf]
        %v1267 = vld [vmem:[%s1 + $0x48] sm:$0xf]
        %v1268 = vld [vmem:[%s1 + $0x4c] sm:$0xf]
        %v1269 = vld [vmem:[%s1 + $0x50] sm:$0xf]
        %v1270 = vld [vmem:[%s1 + $0x54] sm:$0xf]
        %v1271 = vld [vmem:[%s1 + $0x58] sm:$0xf]
        %v1272 = vld [vmem:[%s1 + $0x5c] sm:$0xf]
        %v1273 = vld [vmem:[%s1 + $0x60] sm:$0xf]
        %v1274 = vld [vmem:[%s1 + $0x64] sm:$0xf]
        %v1275 = vld [vmem:[%s1 + $0x68] sm:$0xf]
        %v1276 = vld [vmem:[%s1 + $0x6c] sm:$0xf]
        %v1277 = vld [vmem:[%s1 + $0x70] sm:$0xf]
        %v1278 = vld [vmem:[%s1 + $0x74] sm:$0xf]
        %v1279 = vld [vmem:[%s1 + $0x78] sm:$0xf]
        %v1280 = vld [vmem:[%s1 + $0x7c] sm:$0xf]
        %v1281 = vld [vmem:[%s1 + $0x80] sm:$0xf]
        %v1282 = vld [vmem:[%s1 + $0x84] sm:$0xf]
        %v1283 = vld [vmem:[%s1 + $0x88] sm:$0xf]
        %v1284 = vld [vmem:[%s1 + $0x8c] sm:$0xf]
        %v1285 = vld [vmem:[%s1 + $0x90] sm:$0xf]
        %v1286 = vld [vmem:[%s1 + $0x94] sm:$0xf]
        %v1287 = vld [vmem:[%s1 + $0x98] sm:$0xf]
        %v1288 = vld [vmem:[%s1 + $0x9c] sm:$0xf]
        %v1289 = vld [vmem:[%s1 + $0xa0] sm:$0xf]
        %v1290 = vld [vmem:[%s1 + $0xa4] sm:$0xf]
        %v1291 = vld [vmem:[%s1 + $0xa8] sm:$0xf]
        %v1292 = vld [vmem:[%s1 + $0xac] sm:$0xf]
        %v1293 = vld [vmem:[%s1 + $0xb0] sm:$0xf]
        %v1294 = vld [vmem:[%s1 + $0xb4] sm:$0xf]
        %v1295 = vld [vmem:[%s1 + $0xb8] sm:$0xf]
        %v1296 = vld [vmem:[%s1 + $0xbc] sm:$0xf]
        %s1297 = sadd.s32 %s1196, 1
        %s1298 = smul.u32 %s1297, 5
        %s1299 = smul.addr %s1298, 4
        %s1300 = scalar_lea.vmem %s182, %s1299
        %v1301 = vld [vmem:[%s1300] sm:$0xf]
        %v1302 = vld [vmem:[%s1300 + $0x4] sm:$0xf]
        %v1303 = vld [vmem:[%s1300 + $0x8] sm:$0xf]
        %v1304 = vld [vmem:[%s1300 + $0xc] sm:$0xf]
        %v1305 = vld [vmem:[%s1300 + $0x10] sm:$0x1]
        %v1310 = vunpack.c.l.b16 %v1301
        %v1311 = vunpack.c.l.b16 %v1302
        %v1312 = vunpack.c.l.b16 %v1303
        %v1313 = vunpack.c.l.b16 %v1304
        %v1314 = vpack.c.b16 %v1311, %v1310
        %v1315 = vpack.c.b16 %v1313, %v1312
        %v1319 = vunpack.c.l.b16 %v1305
        %v1320 = vpack.c.b16 %v1319, %v1319
        %v1322 = vshrl.u32 %v1314, 16
        %v1324 = vshll.u32 %v1314, 16
        %v1326 = vrot.slane %v1324, 1
        %v1327 = vor.u32 %v1322, %v1326
        %v1329 = vshll.u32 %v1315, 16
        %v1331 = vrot.slane %v1329, 1
        %v1332 = vsel %vm208, %v1327, %v1331
        %v1333 = vshrl.u32 %v1315, 16
        %v1335 = vor.u32 %v1333, %v1331
        %v1337 = vshll.u32 %v1320, 16
        %v1339 = vrot.slane %v1337, 1
        %v1340 = vsel %vm208, %v1335, %v1339
        %v1343 = vrot.slane %v1314, 1
        %v1344 = vrot.slane %v1315, 1
        %v1345 = vsel %vm231, %v1343, %v1344
        %v1346 = vrot.slane %v1320, 1
        %v1347 = vsel %vm231, %v1344, %v1346
        %v1350 = vld [vmem:[%s340] sm:$0xf]
        %v1351 = vld [vmem:[%s340 + $0x4] sm:$0xf]
        %v1352 = vld [vmem:[%s340 + $0x8] sm:$0xf]
        %v1353 = vld [vmem:[%s340 + $0xc] sm:$0xf]
        %v1354 = vld [vmem:[%s340 + $0x10] sm:$0xf]
        %v1355 = vld [vmem:[%s340 + $0x14] sm:$0xf]
        %v1356 = vld [vmem:[%s340 + $0x18] sm:$0xf]
        %v1357 = vld [vmem:[%s340 + $0x1c] sm:$0xf]
        %v1358 = vld [vmem:[%s340 + $0x20] sm:$0xf]
        %v1359 = vld [vmem:[%s340 + $0x24] sm:$0xf]
        %v1360 = vld [vmem:[%s340 + $0x28] sm:$0xf]
        %v1361 = vld [vmem:[%s340 + $0x2c] sm:$0xf]
        %v1362 = vld [vmem:[%s340 + $0x30] sm:$0xf]
        %v1363 = vld [vmem:[%s340 + $0x34] sm:$0xf]
        %v1364 = vld [vmem:[%s340 + $0x38] sm:$0xf]
        %v1365 = vld [vmem:[%s340 + $0x3c] sm:$0xf]
        %v1366 = vld [vmem:[%s340 + $0x40] sm:$0xf]
        %v1367 = vld [vmem:[%s340 + $0x44] sm:$0xf]
        %v1368 = vld [vmem:[%s340 + $0x48] sm:$0xf]
        %v1369 = vld [vmem:[%s340 + $0x4c] sm:$0xf]
        %v1370 = vld [vmem:[%s340 + $0x50] sm:$0xf]
        %v1371 = vld [vmem:[%s340 + $0x54] sm:$0xf]
        %v1372 = vld [vmem:[%s340 + $0x58] sm:$0xf]
        %v1373 = vld [vmem:[%s340 + $0x5c] sm:$0xf]
        %v1374 = vld [vmem:[%s340 + $0x60] sm:$0xf]
        %v1375 = vld [vmem:[%s340 + $0x64] sm:$0xf]
        %v1376 = vld [vmem:[%s340 + $0x68] sm:$0xf]
        %v1377 = vld [vmem:[%s340 + $0x6c] sm:$0xf]
        %v1378 = vld [vmem:[%s340 + $0x70] sm:$0xf]
        %v1379 = vld [vmem:[%s340 + $0x74] sm:$0xf]
        %v1380 = vld [vmem:[%s340 + $0x78] sm:$0xf]
        %v1381 = vld [vmem:[%s340 + $0x7c] sm:$0xf]
        %v1382 = vld [vmem:[%s340 + $0x80] sm:$0xf]
        %v1383 = vld [vmem:[%s340 + $0x84] sm:$0xf]
        %v1384 = vld [vmem:[%s340 + $0x88] sm:$0xf]
        %v1385 = vld [vmem:[%s340 + $0x8c] sm:$0xf]
        %v1386 = vld [vmem:[%s340 + $0x90] sm:$0xf]
        %v1387 = vld [vmem:[%s340 + $0x94] sm:$0xf]
        %v1388 = vld [vmem:[%s340 + $0x98] sm:$0xf]
        %v1389 = vld [vmem:[%s340 + $0x9c] sm:$0xf]
        %v1390 = vld [vmem:[%s340 + $0xa0] sm:$0xf]
        %v1391 = vld [vmem:[%s340 + $0xa4] sm:$0xf]
        %v1392 = vld [vmem:[%s340 + $0xa8] sm:$0xf]
        %v1393 = vld [vmem:[%s340 + $0xac] sm:$0xf]
        %v1394 = vld [vmem:[%s340 + $0xb0] sm:$0xf]
        %v1395 = vld [vmem:[%s340 + $0xb4] sm:$0xf]
        %v1396 = vld [vmem:[%s340 + $0xb8] sm:$0xf]
        %v1397 = vld [vmem:[%s340 + $0xbc] sm:$0xf]
        %v1446 = vunpack.c.l.b16 %v1350
        %v1447 = vunpack.c.l.b16 %v1351
        %v1448 = vunpack.c.l.b16 %v1352
        %v1449 = vunpack.c.l.b16 %v1353
        %v1450 = vunpack.c.l.b16 %v1354
        %v1451 = vunpack.c.l.b16 %v1355
        %v1452 = vunpack.c.l.b16 %v1356
        %v1453 = vunpack.c.l.b16 %v1357
        %v1454 = vunpack.c.l.b16 %v1358
        %v1455 = vunpack.c.l.b16 %v1359
        %v1456 = vunpack.c.l.b16 %v1360
        %v1457 = vunpack.c.l.b16 %v1361
        %v1458 = vunpack.c.l.b16 %v1362
        %v1459 = vunpack.c.l.b16 %v1363
        %v1460 = vunpack.c.l.b16 %v1364
        %v1461 = vunpack.c.l.b16 %v1365
        %v1462 = vunpack.c.l.b16 %v1366
        %v1463 = vunpack.c.l.b16 %v1367
        %v1464 = vunpack.c.l.b16 %v1368
        %v1465 = vunpack.c.l.b16 %v1369
        %v1466 = vunpack.c.l.b16 %v1370
        %v1467 = vunpack.c.l.b16 %v1371
        %v1468 = vunpack.c.l.b16 %v1372
        %v1469 = vunpack.c.l.b16 %v1373
        %v1470 = vunpack.c.l.b16 %v1374
        %v1471 = vunpack.c.l.b16 %v1375
        %v1472 = vunpack.c.l.b16 %v1376
        %v1473 = vunpack.c.l.b16 %v1377
        %v1474 = vunpack.c.l.b16 %v1378
        %v1475 = vunpack.c.l.b16 %v1379
        %v1476 = vunpack.c.l.b16 %v1380
        %v1477 = vunpack.c.l.b16 %v1381
        %v1478 = vunpack.c.l.b16 %v1382
        %v1479 = vunpack.c.l.b16 %v1383
        %v1480 = vunpack.c.l.b16 %v1384
        %v1481 = vunpack.c.l.b16 %v1385
        %v1482 = vunpack.c.l.b16 %v1386
        %v1483 = vunpack.c.l.b16 %v1387
        %v1484 = vunpack.c.l.b16 %v1388
        %v1485 = vunpack.c.l.b16 %v1389
        %v1486 = vunpack.c.l.b16 %v1390
        %v1487 = vunpack.c.l.b16 %v1391
        %v1488 = vunpack.c.l.b16 %v1392
        %v1489 = vunpack.c.l.b16 %v1393
        %v1490 = vunpack.c.l.b16 %v1394
        %v1491 = vunpack.c.l.b16 %v1395
        %v1492 = vunpack.c.l.b16 %v1396
        %v1493 = vunpack.c.l.b16 %v1397
        %v1494 = vpack.c.b16 %v1447, %v1446
        %v1495 = vpack.c.b16 %v1449, %v1448
        %v1496 = vpack.c.b16 %v1451, %v1450
        %v1497 = vpack.c.b16 %v1453, %v1452
        %v1498 = vpack.c.b16 %v1455, %v1454
        %v1499 = vpack.c.b16 %v1457, %v1456
        %v1500 = vpack.c.b16 %v1459, %v1458
        %v1501 = vpack.c.b16 %v1461, %v1460
        %v1502 = vpack.c.b16 %v1463, %v1462
        %v1503 = vpack.c.b16 %v1465, %v1464
        %v1504 = vpack.c.b16 %v1467, %v1466
        %v1505 = vpack.c.b16 %v1469, %v1468
        %v1506 = vpack.c.b16 %v1471, %v1470
        %v1507 = vpack.c.b16 %v1473, %v1472
        %v1508 = vpack.c.b16 %v1475, %v1474
        %v1509 = vpack.c.b16 %v1477, %v1476
        %v1510 = vpack.c.b16 %v1479, %v1478
        %v1511 = vpack.c.b16 %v1481, %v1480
        %v1512 = vpack.c.b16 %v1483, %v1482
        %v1513 = vpack.c.b16 %v1485, %v1484
        %v1514 = vpack.c.b16 %v1487, %v1486
        %v1515 = vpack.c.b16 %v1489, %v1488
        %v1516 = vpack.c.b16 %v1491, %v1490
        %v1517 = vpack.c.b16 %v1493, %v1492
        %1542 = vmatpush.bf16.msra.mxu0 %v1501
        %1543 = vmatpush.bf16.msra.mxu0 %v1500
        %1544 = vmatpush.bf16.msra.mxu0 %v1499
        %1545 = vmatpush.bf16.msra.mxu0 %v1498
        %1546 = vmatpush.bf16.msra.mxu0 %v1497
        %1547 = vmatpush.bf16.msra.mxu0 %v1496
        %1548 = vmatpush.bf16.msra.mxu0 %v1495
        %1549 = vmatpush.bf16.msra.mxu0 %v1494
        %1550 = vmatmul.bf16.gmra.mxu0 %v1314
        %v1551 = vpop.f32.mrf.mxu0
        %v1552 = vadd.f32 0.0, %v1551
        %v1553 = vpop.f32.mrf.mxu0
        %v1554 = vadd.f32 0.0, %v1553
        %1555 = vmatmul.bf16.gmra.mxu0 %v1315
        %v1556 = vpop.f32.mrf.mxu0
        %v1557 = vadd.f32 0.0, %v1556
        %v1558 = vpop.f32.mrf.mxu0
        %v1559 = vadd.f32 0.0, %v1558
        %1560 = vdwg.mxu0
        %1561 = vmatpush.bf16.msra.mxu0 %v1509
        %1562 = vmatpush.bf16.msra.mxu0 %v1508
        %1563 = vmatpush.bf16.msra.mxu0 %v1507
        %1564 = vmatpush.bf16.msra.mxu0 %v1506
        %1565 = vmatpush.bf16.msra.mxu0 %v1505
        %1566 = vmatpush.bf16.msra.mxu0 %v1504
        %1567 = vmatpush.bf16.msra.mxu0 %v1503
        %1568 = vmatpush.bf16.msra.mxu0 %v1502
        %1569 = vmatmul.bf16.gmra.mxu0 %v1332
        %v1570 = vpop.f32.mrf.mxu0
        %v1571 = vadd.f32 %v1552, %v1570
        %v1572 = vpop.f32.mrf.mxu0
        %v1573 = vadd.f32 %v1554, %v1572
        %1574 = vmatmul.bf16.gmra.mxu0 %v1340
        %v1575 = vpop.f32.mrf.mxu0
        %v1576 = vadd.f32 %v1557, %v1575
        %v1577 = vpop.f32.mrf.mxu0
        %v1578 = vadd.f32 %v1559, %v1577
        %1579 = vdwg.mxu0
        %1580 = vmatpush.bf16.msra.mxu0 %v1517
        %1581 = vmatpush.bf16.msra.mxu0 %v1516
        %1582 = vmatpush.bf16.msra.mxu0 %v1515
        %1583 = vmatpush.bf16.msra.mxu0 %v1514
        %1584 = vmatpush.bf16.msra.mxu0 %v1513
        %1585 = vmatpush.bf16.msra.mxu0 %v1512
        %1586 = vmatpush.bf16.msra.mxu0 %v1511
        %1587 = vmatpush.bf16.msra.mxu0 %v1510
        %1588 = vmatmul.bf16.gmra.mxu0 %v1345
        %v1589 = vpop.f32.mrf.mxu0
        %v1590 = vadd.f32 %v1571, %v1589
        %v1591 = vpop.f32.mrf.mxu0
        %v1592 = vadd.f32 %v1573, %v1591
        %1593 = vmatmul.bf16.gmra.mxu0 %v1347
        %v1594 = vpop.f32.mrf.mxu0
        %v1595 = vadd.f32 %v1576, %v1594
        %v1596 = vpop.f32.mrf.mxu0
        %v1597 = vadd.f32 %v1578, %v1596
        %1598 = vdwg.mxu0
        %v1647 = vunpack.c.l.b16 %v1249
        %v1648 = vunpack.c.l.b16 %v1250
        %v1649 = vunpack.c.l.b16 %v1251
        %v1650 = vunpack.c.l.b16 %v1252
        %v1651 = vunpack.c.l.b16 %v1253
        %v1652 = vunpack.c.l.b16 %v1254
        %v1653 = vunpack.c.l.b16 %v1255
        %v1654 = vunpack.c.l.b16 %v1256
        %v1655 = vunpack.c.l.b16 %v1257
        %v1656 = vunpack.c.l.b16 %v1258
        %v1657 = vunpack.c.l.b16 %v1259
        %v1658 = vunpack.c.l.b16 %v1260
        %v1659 = vunpack.c.l.b16 %v1261
        %v1660 = vunpack.c.l.b16 %v1262
        %v1661 = vunpack.c.l.b16 %v1263
        %v1662 = vunpack.c.l.b16 %v1264
        %v1663 = vunpack.c.l.b16 %v1265
        %v1664 = vunpack.c.l.b16 %v1266
        %v1665 = vunpack.c.l.b16 %v1267
        %v1666 = vunpack.c.l.b16 %v1268
        %v1667 = vunpack.c.l.b16 %v1269
        %v1668 = vunpack.c.l.b16 %v1270
        %v1669 = vunpack.c.l.b16 %v1271
        %v1670 = vunpack.c.l.b16 %v1272
        %v1671 = vunpack.c.l.b16 %v1273
        %v1672 = vunpack.c.l.b16 %v1274
        %v1673 = vunpack.c.l.b16 %v1275
        %v1674 = vunpack.c.l.b16 %v1276
        %v1675 = vunpack.c.l.b16 %v1277
        %v1676 = vunpack.c.l.b16 %v1278
        %v1677 = vunpack.c.l.b16 %v1279
        %v1678 = vunpack.c.l.b16 %v1280
        %v1679 = vunpack.c.l.b16 %v1281
        %v1680 = vunpack.c.l.b16 %v1282
        %v1681 = vunpack.c.l.b16 %v1283
        %v1682 = vunpack.c.l.b16 %v1284
        %v1683 = vunpack.c.l.b16 %v1285
        %v1684 = vunpack.c.l.b16 %v1286
        %v1685 = vunpack.c.l.b16 %v1287
        %v1686 = vunpack.c.l.b16 %v1288
        %v1687 = vunpack.c.l.b16 %v1289
        %v1688 = vunpack.c.l.b16 %v1290
        %v1689 = vunpack.c.l.b16 %v1291
        %v1690 = vunpack.c.l.b16 %v1292
        %v1691 = vunpack.c.l.b16 %v1293
        %v1692 = vunpack.c.l.b16 %v1294
        %v1693 = vunpack.c.l.b16 %v1295
        %v1694 = vunpack.c.l.b16 %v1296
        %v1695 = vpack.c.b16 %v1648, %v1647
        %v1696 = vpack.c.b16 %v1650, %v1649
        %v1697 = vpack.c.b16 %v1652, %v1651
        %v1698 = vpack.c.b16 %v1654, %v1653
        %v1699 = vpack.c.b16 %v1656, %v1655
        %v1700 = vpack.c.b16 %v1658, %v1657
        %v1701 = vpack.c.b16 %v1660, %v1659
        %v1702 = vpack.c.b16 %v1662, %v1661
        %v1703 = vpack.c.b16 %v1664, %v1663
        %v1704 = vpack.c.b16 %v1666, %v1665
        %v1705 = vpack.c.b16 %v1668, %v1667
        %v1706 = vpack.c.b16 %v1670, %v1669
        %v1707 = vpack.c.b16 %v1672, %v1671
        %v1708 = vpack.c.b16 %v1674, %v1673
        %v1709 = vpack.c.b16 %v1676, %v1675
        %v1710 = vpack.c.b16 %v1678, %v1677
        %v1711 = vpack.c.b16 %v1680, %v1679
        %v1712 = vpack.c.b16 %v1682, %v1681
        %v1713 = vpack.c.b16 %v1684, %v1683
        %v1714 = vpack.c.b16 %v1686, %v1685
        %v1715 = vpack.c.b16 %v1688, %v1687
        %v1716 = vpack.c.b16 %v1690, %v1689
        %v1717 = vpack.c.b16 %v1692, %v1691
        %v1718 = vpack.c.b16 %v1694, %v1693
        %1743 = vmatpush.bf16.msra.mxu0 %v1702
        %1744 = vmatpush.bf16.msra.mxu0 %v1701
        %1745 = vmatpush.bf16.msra.mxu0 %v1700
        %1746 = vmatpush.bf16.msra.mxu0 %v1699
        %1747 = vmatpush.bf16.msra.mxu0 %v1698
        %1748 = vmatpush.bf16.msra.mxu0 %v1697
        %1749 = vmatpush.bf16.msra.mxu0 %v1696
        %1750 = vmatpush.bf16.msra.mxu0 %v1695
        %1751 = vmatmul.bf16.gmra.mxu0 %v1213
        %v1752 = vpop.f32.mrf.mxu0
        %v1753 = vadd.f32 %v1590, %v1752
        %v1754 = vpop.f32.mrf.mxu0
        %v1755 = vadd.f32 %v1592, %v1754
        %1756 = vmatmul.bf16.gmra.mxu0 %v1214
        %v1757 = vpop.f32.mrf.mxu0
        %v1758 = vadd.f32 %v1595, %v1757
        %v1759 = vpop.f32.mrf.mxu0
        %v1760 = vadd.f32 %v1597, %v1759
        %1761 = vdwg.mxu0
        %1762 = vmatpush.bf16.msra.mxu0 %v1710
        %1763 = vmatpush.bf16.msra.mxu0 %v1709
        %1764 = vmatpush.bf16.msra.mxu0 %v1708
        %1765 = vmatpush.bf16.msra.mxu0 %v1707
        %1766 = vmatpush.bf16.msra.mxu0 %v1706
        %1767 = vmatpush.bf16.msra.mxu0 %v1705
        %1768 = vmatpush.bf16.msra.mxu0 %v1704
        %1769 = vmatpush.bf16.msra.mxu0 %v1703
        %1770 = vmatmul.bf16.gmra.mxu0 %v1231
        %v1771 = vpop.f32.mrf.mxu0
        %v1772 = vadd.f32 %v1753, %v1771
        %v1773 = vpop.f32.mrf.mxu0
        %v1774 = vadd.f32 %v1755, %v1773
        %1775 = vmatmul.bf16.gmra.mxu0 %v1239
        %v1776 = vpop.f32.mrf.mxu0
        %v1777 = vadd.f32 %v1758, %v1776
        %v1778 = vpop.f32.mrf.mxu0
        %v1779 = vadd.f32 %v1760, %v1778
        %1780 = vdwg.mxu0
        %1781 = vmatpush.bf16.msra.mxu0 %v1718
        %1782 = vmatpush.bf16.msra.mxu0 %v1717
        %1783 = vmatpush.bf16.msra.mxu0 %v1716
        %1784 = vmatpush.bf16.msra.mxu0 %v1715
        %1785 = vmatpush.bf16.msra.mxu0 %v1714
        %1786 = vmatpush.bf16.msra.mxu0 %v1713
        %1787 = vmatpush.bf16.msra.mxu0 %v1712
        %1788 = vmatpush.bf16.msra.mxu0 %v1711
        %1789 = vmatmul.bf16.gmra.mxu0 %v1244
        %v1790 = vpop.f32.mrf.mxu0
        %v1791 = vadd.f32 %v1772, %v1790
        %v1792 = vpop.f32.mrf.mxu0
        %v1793 = vadd.f32 %v1774, %v1792
        %1794 = vmatmul.bf16.gmra.mxu0 %v1246
        %v1795 = vpop.f32.mrf.mxu0
        %v1796 = vadd.f32 %v1777, %v1795
        %v1797 = vpop.f32.mrf.mxu0
        %v1798 = vadd.f32 %v1779, %v1797
        %1799 = vdwg.mxu0
        %s1800 = sadd.s32 %s1196, 2
        %s1801 = smul.u32 %s1800, 5
        %s1802 = smul.addr %s1801, 4
        %s1803 = scalar_lea.vmem %s182, %s1802
        %v1804 = vld [vmem:[%s1803] sm:$0xf]
        %v1805 = vld [vmem:[%s1803 + $0x4] sm:$0xf]
        %v1806 = vld [vmem:[%s1803 + $0x8] sm:$0xf]
        %v1807 = vld [vmem:[%s1803 + $0xc] sm:$0xf]
        %v1808 = vld [vmem:[%s1803 + $0x10] sm:$0x1]
        %v1813 = vunpack.c.l.b16 %v1804
        %v1814 = vunpack.c.l.b16 %v1805
        %v1815 = vunpack.c.l.b16 %v1806
        %v1816 = vunpack.c.l.b16 %v1807
        %v1817 = vpack.c.b16 %v1814, %v1813
        %v1818 = vpack.c.b16 %v1816, %v1815
        %v1822 = vunpack.c.l.b16 %v1808
        %v1823 = vpack.c.b16 %v1822, %v1822
        %v1825 = vshrl.u32 %v1817, 16
        %v1827 = vshll.u32 %v1817, 16
        %v1829 = vrot.slane %v1827, 1
        %v1830 = vor.u32 %v1825, %v1829
        %v1832 = vshll.u32 %v1818, 16
        %v1834 = vrot.slane %v1832, 1
        %v1835 = vsel %vm208, %v1830, %v1834
        %v1836 = vshrl.u32 %v1818, 16
        %v1838 = vor.u32 %v1836, %v1834
        %v1840 = vshll.u32 %v1823, 16
        %v1842 = vrot.slane %v1840, 1
        %v1843 = vsel %vm208, %v1838, %v1842
        %v1846 = vrot.slane %v1817, 1
        %v1847 = vrot.slane %v1818, 1
        %v1848 = vsel %vm231, %v1846, %v1847
        %v1849 = vrot.slane %v1823, 1
        %v1850 = vsel %vm231, %v1847, %v1849
        %v1853 = vld [vmem:[%s844] sm:$0xf]
        %v1854 = vld [vmem:[%s844 + $0x4] sm:$0xf]
        %v1855 = vld [vmem:[%s844 + $0x8] sm:$0xf]
        %v1856 = vld [vmem:[%s844 + $0xc] sm:$0xf]
        %v1857 = vld [vmem:[%s844 + $0x10] sm:$0xf]
        %v1858 = vld [vmem:[%s844 + $0x14] sm:$0xf]
        %v1859 = vld [vmem:[%s844 + $0x18] sm:$0xf]
        %v1860 = vld [vmem:[%s844 + $0x1c] sm:$0xf]
        %v1861 = vld [vmem:[%s844 + $0x20] sm:$0xf]
        %v1862 = vld [vmem:[%s844 + $0x24] sm:$0xf]
        %v1863 = vld [vmem:[%s844 + $0x28] sm:$0xf]
        %v1864 = vld [vmem:[%s844 + $0x2c] sm:$0xf]
        %v1865 = vld [vmem:[%s844 + $0x30] sm:$0xf]
        %v1866 = vld [vmem:[%s844 + $0x34] sm:$0xf]
        %v1867 = vld [vmem:[%s844 + $0x38] sm:$0xf]
        %v1868 = vld [vmem:[%s844 + $0x3c] sm:$0xf]
        %v1869 = vld [vmem:[%s844 + $0x40] sm:$0xf]
        %v1870 = vld [vmem:[%s844 + $0x44] sm:$0xf]
        %v1871 = vld [vmem:[%s844 + $0x48] sm:$0xf]
        %v1872 = vld [vmem:[%s844 + $0x4c] sm:$0xf]
        %v1873 = vld [vmem:[%s844 + $0x50] sm:$0xf]
        %v1874 = vld [vmem:[%s844 + $0x54] sm:$0xf]
        %v1875 = vld [vmem:[%s844 + $0x58] sm:$0xf]
        %v1876 = vld [vmem:[%s844 + $0x5c] sm:$0xf]
        %v1877 = vld [vmem:[%s844 + $0x60] sm:$0xf]
        %v1878 = vld [vmem:[%s844 + $0x64] sm:$0xf]
        %v1879 = vld [vmem:[%s844 + $0x68] sm:$0xf]
        %v1880 = vld [vmem:[%s844 + $0x6c] sm:$0xf]
        %v1881 = vld [vmem:[%s844 + $0x70] sm:$0xf]
        %v1882 = vld [vmem:[%s844 + $0x74] sm:$0xf]
        %v1883 = vld [vmem:[%s844 + $0x78] sm:$0xf]
        %v1884 = vld [vmem:[%s844 + $0x7c] sm:$0xf]
        %v1885 = vld [vmem:[%s844 + $0x80] sm:$0xf]
        %v1886 = vld [vmem:[%s844 + $0x84] sm:$0xf]
        %v1887 = vld [vmem:[%s844 + $0x88] sm:$0xf]
        %v1888 = vld [vmem:[%s844 + $0x8c] sm:$0xf]
        %v1889 = vld [vmem:[%s844 + $0x90] sm:$0xf]
        %v1890 = vld [vmem:[%s844 + $0x94] sm:$0xf]
        %v1891 = vld [vmem:[%s844 + $0x98] sm:$0xf]
        %v1892 = vld [vmem:[%s844 + $0x9c] sm:$0xf]
        %v1893 = vld [vmem:[%s844 + $0xa0] sm:$0xf]
        %v1894 = vld [vmem:[%s844 + $0xa4] sm:$0xf]
        %v1895 = vld [vmem:[%s844 + $0xa8] sm:$0xf]
        %v1896 = vld [vmem:[%s844 + $0xac] sm:$0xf]
        %v1897 = vld [vmem:[%s844 + $0xb0] sm:$0xf]
        %v1898 = vld [vmem:[%s844 + $0xb4] sm:$0xf]
        %v1899 = vld [vmem:[%s844 + $0xb8] sm:$0xf]
        %v1900 = vld [vmem:[%s844 + $0xbc] sm:$0xf]
        %v1949 = vunpack.c.l.b16 %v1853
        %v1950 = vunpack.c.l.b16 %v1854
        %v1951 = vunpack.c.l.b16 %v1855
        %v1952 = vunpack.c.l.b16 %v1856
        %v1953 = vunpack.c.l.b16 %v1857
        %v1954 = vunpack.c.l.b16 %v1858
        %v1955 = vunpack.c.l.b16 %v1859
        %v1956 = vunpack.c.l.b16 %v1860
        %v1957 = vunpack.c.l.b16 %v1861
        %v1958 = vunpack.c.l.b16 %v1862
        %v1959 = vunpack.c.l.b16 %v1863
        %v1960 = vunpack.c.l.b16 %v1864
        %v1961 = vunpack.c.l.b16 %v1865
        %v1962 = vunpack.c.l.b16 %v1866
        %v1963 = vunpack.c.l.b16 %v1867
        %v1964 = vunpack.c.l.b16 %v1868
        %v1965 = vunpack.c.l.b16 %v1869
        %v1966 = vunpack.c.l.b16 %v1870
        %v1967 = vunpack.c.l.b16 %v1871
        %v1968 = vunpack.c.l.b16 %v1872
        %v1969 = vunpack.c.l.b16 %v1873
        %v1970 = vunpack.c.l.b16 %v1874
        %v1971 = vunpack.c.l.b16 %v1875
        %v1972 = vunpack.c.l.b16 %v1876
        %v1973 = vunpack.c.l.b16 %v1877
        %v1974 = vunpack.c.l.b16 %v1878
        %v1975 = vunpack.c.l.b16 %v1879
        %v1976 = vunpack.c.l.b16 %v1880
        %v1977 = vunpack.c.l.b16 %v1881
        %v1978 = vunpack.c.l.b16 %v1882
        %v1979 = vunpack.c.l.b16 %v1883
        %v1980 = vunpack.c.l.b16 %v1884
        %v1981 = vunpack.c.l.b16 %v1885
        %v1982 = vunpack.c.l.b16 %v1886
        %v1983 = vunpack.c.l.b16 %v1887
        %v1984 = vunpack.c.l.b16 %v1888
        %v1985 = vunpack.c.l.b16 %v1889
        %v1986 = vunpack.c.l.b16 %v1890
        %v1987 = vunpack.c.l.b16 %v1891
        %v1988 = vunpack.c.l.b16 %v1892
        %v1989 = vunpack.c.l.b16 %v1893
        %v1990 = vunpack.c.l.b16 %v1894
        %v1991 = vunpack.c.l.b16 %v1895
        %v1992 = vunpack.c.l.b16 %v1896
        %v1993 = vunpack.c.l.b16 %v1897
        %v1994 = vunpack.c.l.b16 %v1898
        %v1995 = vunpack.c.l.b16 %v1899
        %v1996 = vunpack.c.l.b16 %v1900
        %v1997 = vpack.c.b16 %v1950, %v1949
        %v1998 = vpack.c.b16 %v1952, %v1951
        %v1999 = vpack.c.b16 %v1954, %v1953
        %v2000 = vpack.c.b16 %v1956, %v1955
        %v2001 = vpack.c.b16 %v1958, %v1957
        %v2002 = vpack.c.b16 %v1960, %v1959
        %v2003 = vpack.c.b16 %v1962, %v1961
        %v2004 = vpack.c.b16 %v1964, %v1963
        %v2005 = vpack.c.b16 %v1966, %v1965
        %v2006 = vpack.c.b16 %v1968, %v1967
        %v2007 = vpack.c.b16 %v1970, %v1969
        %v2008 = vpack.c.b16 %v1972, %v1971
        %v2009 = vpack.c.b16 %v1974, %v1973
        %v2010 = vpack.c.b16 %v1976, %v1975
        %v2011 = vpack.c.b16 %v1978, %v1977
        %v2012 = vpack.c.b16 %v1980, %v1979
        %v2013 = vpack.c.b16 %v1982, %v1981
        %v2014 = vpack.c.b16 %v1984, %v1983
        %v2015 = vpack.c.b16 %v1986, %v1985
        %v2016 = vpack.c.b16 %v1988, %v1987
        %v2017 = vpack.c.b16 %v1990, %v1989
        %v2018 = vpack.c.b16 %v1992, %v1991
        %v2019 = vpack.c.b16 %v1994, %v1993
        %v2020 = vpack.c.b16 %v1996, %v1995
        %2045 = vmatpush.bf16.msra.mxu0 %v2004
        %2046 = vmatpush.bf16.msra.mxu0 %v2003
        %2047 = vmatpush.bf16.msra.mxu0 %v2002
        %2048 = vmatpush.bf16.msra.mxu0 %v2001
        %2049 = vmatpush.bf16.msra.mxu0 %v2000
        %2050 = vmatpush.bf16.msra.mxu0 %v1999
        %2051 = vmatpush.bf16.msra.mxu0 %v1998
        %2052 = vmatpush.bf16.msra.mxu0 %v1997
        %2053 = vmatmul.bf16.gmra.mxu0 %v1817
        %v2054 = vpop.f32.mrf.mxu0
        %v2055 = vadd.f32 0.0, %v2054
        %v2056 = vpop.f32.mrf.mxu0
        %v2057 = vadd.f32 0.0, %v2056
        %2058 = vmatmul.bf16.gmra.mxu0 %v1818
        %v2059 = vpop.f32.mrf.mxu0
        %v2060 = vadd.f32 0.0, %v2059
        %v2061 = vpop.f32.mrf.mxu0
        %v2062 = vadd.f32 0.0, %v2061
        %2063 = vdwg.mxu0
        %2064 = vmatpush.bf16.msra.mxu0 %v2012
        %2065 = vmatpush.bf16.msra.mxu0 %v2011
        %2066 = vmatpush.bf16.msra.mxu0 %v2010
        %2067 = vmatpush.bf16.msra.mxu0 %v2009
        %2068 = vmatpush.bf16.msra.mxu0 %v2008
        %2069 = vmatpush.bf16.msra.mxu0 %v2007
        %2070 = vmatpush.bf16.msra.mxu0 %v2006
        %2071 = vmatpush.bf16.msra.mxu0 %v2005
        %2072 = vmatmul.bf16.gmra.mxu0 %v1835
        %v2073 = vpop.f32.mrf.mxu0
        %v2074 = vadd.f32 %v2055, %v2073
        %v2075 = vpop.f32.mrf.mxu0
        %v2076 = vadd.f32 %v2057, %v2075
        %2077 = vmatmul.bf16.gmra.mxu0 %v1843
        %v2078 = vpop.f32.mrf.mxu0
        %v2079 = vadd.f32 %v2060, %v2078
        %v2080 = vpop.f32.mrf.mxu0
        %v2081 = vadd.f32 %v2062, %v2080
        %2082 = vdwg.mxu0
        %2083 = vmatpush.bf16.msra.mxu0 %v2020
        %2084 = vmatpush.bf16.msra.mxu0 %v2019
        %2085 = vmatpush.bf16.msra.mxu0 %v2018
        %2086 = vmatpush.bf16.msra.mxu0 %v2017
        %2087 = vmatpush.bf16.msra.mxu0 %v2016
        %2088 = vmatpush.bf16.msra.mxu0 %v2015
        %2089 = vmatpush.bf16.msra.mxu0 %v2014
        %2090 = vmatpush.bf16.msra.mxu0 %v2013
        %2091 = vmatmul.bf16.gmra.mxu0 %v1848
        %v2092 = vpop.f32.mrf.mxu0
        %v2093 = vadd.f32 %v2074, %v2092
        %v2094 = vpop.f32.mrf.mxu0
        %v2095 = vadd.f32 %v2076, %v2094
        %2096 = vmatmul.bf16.gmra.mxu0 %v1850
        %v2097 = vpop.f32.mrf.mxu0
        %v2098 = vadd.f32 %v2079, %v2097
        %v2099 = vpop.f32.mrf.mxu0
        %v2100 = vadd.f32 %v2081, %v2099
        %2101 = vdwg.mxu0
        %v2102 = vadd.f32 %v1791, %v2093
        %v2103 = vadd.f32 %v1793, %v2095
        %v2104 = vadd.f32 %v1796, %v2098
        %v2105 = vadd.f32 %v1798, %v2100
        %v2106 = vld [vmem:[%s2] sm:$0x1]
        %v2108 = vperm.slane %v2106, 0
        %v2110 = vadd.f32 %v2102, %v2108
        %v2111 = vadd.f32 %v2103, %v2108
        %v2112 = vadd.f32 %v2104, %v2108
        %v2113 = vadd.f32 %v2105, %v2108
        %v2114 = vxor.u32 %v2110, 2147483648
        %v2115 = vxor.u32 %v2111, 2147483648
        %v2116 = vxor.u32 %v2112, 2147483648
        %v2117 = vxor.u32 %v2113, 2147483648
        %v2118 = vmul.f32 %v2114, 1.442695
        %v2119 = vpow.pop %v2118
        %v2120 = vmul.f32 %v2115, 1.442695
        %v2121 = vpow.pop %v2120
        %v2122 = vmul.f32 %v2116, 1.442695
        %v2123 = vpow.pop %v2122
        %v2124 = vmul.f32 %v2117, 1.442695
        %v2125 = vpow.pop %v2124
        %v2126 = vadd.f32 %v2119, 1.0
        %v2127 = vadd.f32 %v2121, 1.0
        %v2128 = vadd.f32 %v2123, 1.0
        %v2129 = vadd.f32 %v2125, 1.0
        %v2130 = vrcp.pop %v2126
        %v2131 = vmul.f32 %v2126, %v2130
        %v2132 = vsub.f32 1.0, %v2131
        %v2133 = vmul.f32 %v2130, %v2132
        %v2134 = vadd.f32 %v2130, %v2133
        %vm2135 = vweird.f32 %v2126
        %vm2136 = vweird.f32 %v2130
        %vm2137 = vmor %vm2135, %vm2136
        %v2138 = vsel %vm2137, %v2130, %v2134
        %v2139 = vand.u32 2147483647, %v2126
        %vm2140 = vcmp.eq.f32.partialorder %v2139, 8.507059e+37
        %v2141 = vand.u32 %v2126, 2147483648
        %v2142 = vor.u32 1.1754944e-38, %v2141
        %v2143 = vsel %vm2140, %v2142, %v2138
        %v2144 = vmul.f32 1.0, %v2143
        %v2145 = vrcp.pop %v2127
        %v2146 = vmul.f32 %v2127, %v2145
        %v2147 = vsub.f32 1.0, %v2146
        %v2148 = vmul.f32 %v2145, %v2147
        %v2149 = vadd.f32 %v2145, %v2148
        %vm2150 = vweird.f32 %v2127
        %vm2151 = vweird.f32 %v2145
        %vm2152 = vmor %vm2150, %vm2151
        %v2153 = vsel %vm2152, %v2145, %v2149
        %v2154 = vand.u32 2147483647, %v2127
        %vm2155 = vcmp.eq.f32.partialorder %v2154, 8.507059e+37
        %v2156 = vand.u32 %v2127, 2147483648
        %v2157 = vor.u32 1.1754944e-38, %v2156
        %v2158 = vsel %vm2155, %v2157, %v2153
        %v2159 = vmul.f32 1.0, %v2158
        %v2160 = vrcp.pop %v2128
        %v2161 = vmul.f32 %v2128, %v2160
        %v2162 = vsub.f32 1.0, %v2161
        %v2163 = vmul.f32 %v2160, %v2162
        %v2164 = vadd.f32 %v2160, %v2163
        %vm2165 = vweird.f32 %v2128
        %vm2166 = vweird.f32 %v2160
        %vm2167 = vmor %vm2165, %vm2166
        %v2168 = vsel %vm2167, %v2160, %v2164
        %v2169 = vand.u32 2147483647, %v2128
        %vm2170 = vcmp.eq.f32.partialorder %v2169, 8.507059e+37
        %v2171 = vand.u32 %v2128, 2147483648
        %v2172 = vor.u32 1.1754944e-38, %v2171
        %v2173 = vsel %vm2170, %v2172, %v2168
        %v2174 = vmul.f32 1.0, %v2173
        %v2175 = vrcp.pop %v2129
        %v2176 = vmul.f32 %v2129, %v2175
        %v2177 = vsub.f32 1.0, %v2176
        %v2178 = vmul.f32 %v2175, %v2177
        %v2179 = vadd.f32 %v2175, %v2178
        %vm2180 = vweird.f32 %v2129
        %vm2181 = vweird.f32 %v2175
        %vm2182 = vmor %vm2180, %vm2181
        %v2183 = vsel %vm2182, %v2175, %v2179
        %v2184 = vand.u32 2147483647, %v2129
        %vm2185 = vcmp.eq.f32.partialorder %v2184, 8.507059e+37
        %v2186 = vand.u32 %v2129, 2147483648
        %v2187 = vor.u32 1.1754944e-38, %v2186
        %v2188 = vsel %vm2185, %v2187, %v2183
        %v2189 = vmul.f32 1.0, %v2188
        %v2190 = vmul.f32 %v2110, %v2144
        %v2191 = vmul.f32 %v2111, %v2159
        %v2192 = vmul.f32 %v2112, %v2174
        %v2193 = vmul.f32 %v2113, %v2189
        %v2194 = vpack.c.bf16 %v2190, %v2190
        %v2195 = vpack.c.bf16 %v2191, %v2191
        %v2196 = vpack.c.bf16 %v2192, %v2192
        %v2197 = vpack.c.bf16 %v2193, %v2193
        %s2198 = scalar_lea.vmem %s177, 16 [#allocation2]
        %2199 = vst [vmem:[%s2198] sm:$0xf] %v2194
        %2200 = vst [vmem:[%s2198 + $0x4] sm:$0xf] %v2195
        %2201 = vst [vmem:[%s2198 + $0x8] sm:$0xf] %v2196
        %2202 = vst [vmem:[%s2198 + $0xc] sm:$0xf] %v2197
        %s2203 = sadd.s32 %s1194, 2
        %s2204 = smul.u32 %s2203, 2
        %s2205 = smul.u32 %s2204, 5
        %s2206 = smul.addr %s2205, 4
        %s2207 = scalar_lea.vmem %s182, %s2206
        %v2208 = vld [vmem:[%s2207] sm:$0xf]
        %v2209 = vld [vmem:[%s2207 + $0x4] sm:$0xf]
        %v2210 = vld [vmem:[%s2207 + $0x8] sm:$0xf]
        %v2211 = vld [vmem:[%s2207 + $0xc] sm:$0xf]
        %v2212 = vld [vmem:[%s2207 + $0x10] sm:$0x1]
        %v2217 = vunpack.c.l.b16 %v2208
        %v2218 = vunpack.c.l.b16 %v2209
        %v2219 = vunpack.c.l.b16 %v2210
        %v2220 = vunpack.c.l.b16 %v2211
        %v2221 = vpack.c.b16 %v2218, %v2217
        %v2222 = vpack.c.b16 %v2220, %v2219
        %v2226 = vunpack.c.l.b16 %v2212
        %v2227 = vpack.c.b16 %v2226, %v2226
        %v2229 = vshrl.u32 %v2221, 16
        %v2231 = vshll.u32 %v2221, 16
        %v2233 = vrot.slane %v2231, 1
        %v2234 = vor.u32 %v2229, %v2233
        %v2236 = vshll.u32 %v2222, 16
        %v2238 = vrot.slane %v2236, 1
        %v2239 = vsel %vm208, %v2234, %v2238
        %v2240 = vshrl.u32 %v2222, 16
        %v2242 = vor.u32 %v2240, %v2238
        %v2244 = vshll.u32 %v2227, 16
        %v2246 = vrot.slane %v2244, 1
        %v2247 = vsel %vm208, %v2242, %v2246
        %v2250 = vrot.slane %v2221, 1
        %v2251 = vrot.slane %v2222, 1
        %v2252 = vsel %vm231, %v2250, %v2251
        %v2253 = vrot.slane %v2227, 1
        %v2254 = vsel %vm231, %v2251, %v2253
        %v2257 = vld [vmem:[%s1] sm:$0xf]
        %v2258 = vld [vmem:[%s1 + $0x4] sm:$0xf]
        %v2259 = vld [vmem:[%s1 + $0x8] sm:$0xf]
        %v2260 = vld [vmem:[%s1 + $0xc] sm:$0xf]
        %v2261 = vld [vmem:[%s1 + $0x10] sm:$0xf]
        %v2262 = vld [vmem:[%s1 + $0x14] sm:$0xf]
        %v2263 = vld [vmem:[%s1 + $0x18] sm:$0xf]
        %v2264 = vld [vmem:[%s1 + $0x1c] sm:$0xf]
        %v2265 = vld [vmem:[%s1 + $0x20] sm:$0xf]
        %v2266 = vld [vmem:[%s1 + $0x24] sm:$0xf]
        %v2267 = vld [vmem:[%s1 + $0x28] sm:$0xf]
        %v2268 = vld [vmem:[%s1 + $0x2c] sm:$0xf]
        %v2269 = vld [vmem:[%s1 + $0x30] sm:$0xf]
        %v2270 = vld [vmem:[%s1 + $0x34] sm:$0xf]
        %v2271 = vld [vmem:[%s1 + $0x38] sm:$0xf]
        %v2272 = vld [vmem:[%s1 + $0x3c] sm:$0xf]
        %v2273 = vld [vmem:[%s1 + $0x40] sm:$0xf]
        %v2274 = vld [vmem:[%s1 + $0x44] sm:$0xf]
        %v2275 = vld [vmem:[%s1 + $0x48] sm:$0xf]
        %v2276 = vld [vmem:[%s1 + $0x4c] sm:$0xf]
        %v2277 = vld [vmem:[%s1 + $0x50] sm:$0xf]
        %v2278 = vld [vmem:[%s1 + $0x54] sm:$0xf]
        %v2279 = vld [vmem:[%s1 + $0x58] sm:$0xf]
        %v2280 = vld [vmem:[%s1 + $0x5c] sm:$0xf]
        %v2281 = vld [vmem:[%s1 + $0x60] sm:$0xf]
        %v2282 = vld [vmem:[%s1 + $0x64] sm:$0xf]
        %v2283 = vld [vmem:[%s1 + $0x68] sm:$0xf]
        %v2284 = vld [vmem:[%s1 + $0x6c] sm:$0xf]
        %v2285 = vld [vmem:[%s1 + $0x70] sm:$0xf]
        %v2286 = vld [vmem:[%s1 + $0x74] sm:$0xf]
        %v2287 = vld [vmem:[%s1 + $0x78] sm:$0xf]
        %v2288 = vld [vmem:[%s1 + $0x7c] sm:$0xf]
        %v2289 = vld [vmem:[%s1 + $0x80] sm:$0xf]
        %v2290 = vld [vmem:[%s1 + $0x84] sm:$0xf]
        %v2291 = vld [vmem:[%s1 + $0x88] sm:$0xf]
        %v2292 = vld [vmem:[%s1 + $0x8c] sm:$0xf]
        %v2293 = vld [vmem:[%s1 + $0x90] sm:$0xf]
        %v2294 = vld [vmem:[%s1 + $0x94] sm:$0xf]
        %v2295 = vld [vmem:[%s1 + $0x98] sm:$0xf]
        %v2296 = vld [vmem:[%s1 + $0x9c] sm:$0xf]
        %v2297 = vld [vmem:[%s1 + $0xa0] sm:$0xf]
        %v2298 = vld [vmem:[%s1 + $0xa4] sm:$0xf]
        %v2299 = vld [vmem:[%s1 + $0xa8] sm:$0xf]
        %v2300 = vld [vmem:[%s1 + $0xac] sm:$0xf]
        %v2301 = vld [vmem:[%s1 + $0xb0] sm:$0xf]
        %v2302 = vld [vmem:[%s1 + $0xb4] sm:$0xf]
        %v2303 = vld [vmem:[%s1 + $0xb8] sm:$0xf]
        %v2304 = vld [vmem:[%s1 + $0xbc] sm:$0xf]
        %s2305 = sadd.s32 %s2204, 1
        %s2306 = smul.u32 %s2305, 5
        %s2307 = smul.addr %s2306, 4
        %s2308 = scalar_lea.vmem %s182, %s2307
        %v2309 = vld [vmem:[%s2308] sm:$0xf]
        %v2310 = vld [vmem:[%s2308 + $0x4] sm:$0xf]
        %v2311 = vld [vmem:[%s2308 + $0x8] sm:$0xf]
        %v2312 = vld [vmem:[%s2308 + $0xc] sm:$0xf]
        %v2313 = vld [vmem:[%s2308 + $0x10] sm:$0x1]
        %v2318 = vunpack.c.l.b16 %v2309
        %v2319 = vunpack.c.l.b16 %v2310
        %v2320 = vunpack.c.l.b16 %v2311
        %v2321 = vunpack.c.l.b16 %v2312
        %v2322 = vpack.c.b16 %v2319, %v2318
        %v2323 = vpack.c.b16 %v2321, %v2320
        %v2327 = vunpack.c.l.b16 %v2313
        %v2328 = vpack.c.b16 %v2327, %v2327
        %v2330 = vshrl.u32 %v2322, 16
        %v2332 = vshll.u32 %v2322, 16
        %v2334 = vrot.slane %v2332, 1
        %v2335 = vor.u32 %v2330, %v2334
        %v2337 = vshll.u32 %v2323, 16
        %v2339 = vrot.slane %v2337, 1
        %v2340 = vsel %vm208, %v2335, %v2339
        %v2341 = vshrl.u32 %v2323, 16
        %v2343 = vor.u32 %v2341, %v2339
        %v2345 = vshll.u32 %v2328, 16
        %v2347 = vrot.slane %v2345, 1
        %v2348 = vsel %vm208, %v2343, %v2347
        %v2351 = vrot.slane %v2322, 1
        %v2352 = vrot.slane %v2323, 1
        %v2353 = vsel %vm231, %v2351, %v2352
        %v2354 = vrot.slane %v2328, 1
        %v2355 = vsel %vm231, %v2352, %v2354
        %v2358 = vld [vmem:[%s340] sm:$0xf]
        %v2359 = vld [vmem:[%s340 + $0x4] sm:$0xf]
        %v2360 = vld [vmem:[%s340 + $0x8] sm:$0xf]
        %v2361 = vld [vmem:[%s340 + $0xc] sm:$0xf]
        %v2362 = vld [vmem:[%s340 + $0x10] sm:$0xf]
        %v2363 = vld [vmem:[%s340 + $0x14] sm:$0xf]
        %v2364 = vld [vmem:[%s340 + $0x18] sm:$0xf]
        %v2365 = vld [vmem:[%s340 + $0x1c] sm:$0xf]
        %v2366 = vld [vmem:[%s340 + $0x20] sm:$0xf]
        %v2367 = vld [vmem:[%s340 + $0x24] sm:$0xf]
        %v2368 = vld [vmem:[%s340 + $0x28] sm:$0xf]
        %v2369 = vld [vmem:[%s340 + $0x2c] sm:$0xf]
        %v2370 = vld [vmem:[%s340 + $0x30] sm:$0xf]
        %v2371 = vld [vmem:[%s340 + $0x34] sm:$0xf]
        %v2372 = vld [vmem:[%s340 + $0x38] sm:$0xf]
        %v2373 = vld [vmem:[%s340 + $0x3c] sm:$0xf]
        %v2374 = vld [vmem:[%s340 + $0x40] sm:$0xf]
        %v2375 = vld [vmem:[%s340 + $0x44] sm:$0xf]
        %v2376 = vld [vmem:[%s340 + $0x48] sm:$0xf]
        %v2377 = vld [vmem:[%s340 + $0x4c] sm:$0xf]
        %v2378 = vld [vmem:[%s340 + $0x50] sm:$0xf]
        %v2379 = vld [vmem:[%s340 + $0x54] sm:$0xf]
        %v2380 = vld [vmem:[%s340 + $0x58] sm:$0xf]
        %v2381 = vld [vmem:[%s340 + $0x5c] sm:$0xf]
        %v2382 = vld [vmem:[%s340 + $0x60] sm:$0xf]
        %v2383 = vld [vmem:[%s340 + $0x64] sm:$0xf]
        %v2384 = vld [vmem:[%s340 + $0x68] sm:$0xf]
        %v2385 = vld [vmem:[%s340 + $0x6c] sm:$0xf]
        %v2386 = vld [vmem:[%s340 + $0x70] sm:$0xf]
        %v2387 = vld [vmem:[%s340 + $0x74] sm:$0xf]
        %v2388 = vld [vmem:[%s340 + $0x78] sm:$0xf]
        %v2389 = vld [vmem:[%s340 + $0x7c] sm:$0xf]
        %v2390 = vld [vmem:[%s340 + $0x80] sm:$0xf]
        %v2391 = vld [vmem:[%s340 + $0x84] sm:$0xf]
        %v2392 = vld [vmem:[%s340 + $0x88] sm:$0xf]
        %v2393 = vld [vmem:[%s340 + $0x8c] sm:$0xf]
        %v2394 = vld [vmem:[%s340 + $0x90] sm:$0xf]
        %v2395 = vld [vmem:[%s340 + $0x94] sm:$0xf]
        %v2396 = vld [vmem:[%s340 + $0x98] sm:$0xf]
        %v2397 = vld [vmem:[%s340 + $0x9c] sm:$0xf]
        %v2398 = vld [vmem:[%s340 + $0xa0] sm:$0xf]
        %v2399 = vld [vmem:[%s340 + $0xa4] sm:$0xf]
        %v2400 = vld [vmem:[%s340 + $0xa8] sm:$0xf]
        %v2401 = vld [vmem:[%s340 + $0xac] sm:$0xf]
        %v2402 = vld [vmem:[%s340 + $0xb0] sm:$0xf]
        %v2403 = vld [vmem:[%s340 + $0xb4] sm:$0xf]
        %v2404 = vld [vmem:[%s340 + $0xb8] sm:$0xf]
        %v2405 = vld [vmem:[%s340 + $0xbc] sm:$0xf]
        %v2454 = vunpack.c.l.b16 %v2358
        %v2455 = vunpack.c.l.b16 %v2359
        %v2456 = vunpack.c.l.b16 %v2360
        %v2457 = vunpack.c.l.b16 %v2361
        %v2458 = vunpack.c.l.b16 %v2362
        %v2459 = vunpack.c.l.b16 %v2363
        %v2460 = vunpack.c.l.b16 %v2364
        %v2461 = vunpack.c.l.b16 %v2365
        %v2462 = vunpack.c.l.b16 %v2366
        %v2463 = vunpack.c.l.b16 %v2367
        %v2464 = vunpack.c.l.b16 %v2368
        %v2465 = vunpack.c.l.b16 %v2369
        %v2466 = vunpack.c.l.b16 %v2370
        %v2467 = vunpack.c.l.b16 %v2371
        %v2468 = vunpack.c.l.b16 %v2372
        %v2469 = vunpack.c.l.b16 %v2373
        %v2470 = vunpack.c.l.b16 %v2374
        %v2471 = vunpack.c.l.b16 %v2375
        %v2472 = vunpack.c.l.b16 %v2376
        %v2473 = vunpack.c.l.b16 %v2377
        %v2474 = vunpack.c.l.b16 %v2378
        %v2475 = vunpack.c.l.b16 %v2379
        %v2476 = vunpack.c.l.b16 %v2380
        %v2477 = vunpack.c.l.b16 %v2381
        %v2478 = vunpack.c.l.b16 %v2382
        %v2479 = vunpack.c.l.b16 %v2383
        %v2480 = vunpack.c.l.b16 %v2384
        %v2481 = vunpack.c.l.b16 %v2385
        %v2482 = vunpack.c.l.b16 %v2386
        %v2483 = vunpack.c.l.b16 %v2387
        %v2484 = vunpack.c.l.b16 %v2388
        %v2485 = vunpack.c.l.b16 %v2389
        %v2486 = vunpack.c.l.b16 %v2390
        %v2487 = vunpack.c.l.b16 %v2391
        %v2488 = vunpack.c.l.b16 %v2392
        %v2489 = vunpack.c.l.b16 %v2393
        %v2490 = vunpack.c.l.b16 %v2394
        %v2491 = vunpack.c.l.b16 %v2395
        %v2492 = vunpack.c.l.b16 %v2396
        %v2493 = vunpack.c.l.b16 %v2397
        %v2494 = vunpack.c.l.b16 %v2398
        %v2495 = vunpack.c.l.b16 %v2399
        %v2496 = vunpack.c.l.b16 %v2400
        %v2497 = vunpack.c.l.b16 %v2401
        %v2498 = vunpack.c.l.b16 %v2402
        %v2499 = vunpack.c.l.b16 %v2403
        %v2500 = vunpack.c.l.b16 %v2404
        %v2501 = vunpack.c.l.b16 %v2405
        %v2502 = vpack.c.b16 %v2455, %v2454
        %v2503 = vpack.c.b16 %v2457, %v2456
        %v2504 = vpack.c.b16 %v2459, %v2458
        %v2505 = vpack.c.b16 %v2461, %v2460
        %v2506 = vpack.c.b16 %v2463, %v2462
        %v2507 = vpack.c.b16 %v2465, %v2464
        %v2508 = vpack.c.b16 %v2467, %v2466
        %v2509 = vpack.c.b16 %v2469, %v2468
        %v2510 = vpack.c.b16 %v2471, %v2470
        %v2511 = vpack.c.b16 %v2473, %v2472
        %v2512 = vpack.c.b16 %v2475, %v2474
        %v2513 = vpack.c.b16 %v2477, %v2476
        %v2514 = vpack.c.b16 %v2479, %v2478
        %v2515 = vpack.c.b16 %v2481, %v2480
        %v2516 = vpack.c.b16 %v2483, %v2482
        %v2517 = vpack.c.b16 %v2485, %v2484
        %v2518 = vpack.c.b16 %v2487, %v2486
        %v2519 = vpack.c.b16 %v2489, %v2488
        %v2520 = vpack.c.b16 %v2491, %v2490
        %v2521 = vpack.c.b16 %v2493, %v2492
        %v2522 = vpack.c.b16 %v2495, %v2494
        %v2523 = vpack.c.b16 %v2497, %v2496
        %v2524 = vpack.c.b16 %v2499, %v2498
        %v2525 = vpack.c.b16 %v2501, %v2500
        %2550 = vmatpush.bf16.msra.mxu0 %v2509
        %2551 = vmatpush.bf16.msra.mxu0 %v2508
        %2552 = vmatpush.bf16.msra.mxu0 %v2507
        %2553 = vmatpush.bf16.msra.mxu0 %v2506
        %2554 = vmatpush.bf16.msra.mxu0 %v2505
        %2555 = vmatpush.bf16.msra.mxu0 %v2504
        %2556 = vmatpush.bf16.msra.mxu0 %v2503
        %2557 = vmatpush.bf16.msra.mxu0 %v2502
        %2558 = vmatmul.bf16.gmra.mxu0 %v2322
        %v2559 = vpop.f32.mrf.mxu0
        %v2560 = vadd.f32 0.0, %v2559
        %v2561 = vpop.f32.mrf.mxu0
        %v2562 = vadd.f32 0.0, %v2561
        %2563 = vmatmul.bf16.gmra.mxu0 %v2323
        %v2564 = vpop.f32.mrf.mxu0
        %v2565 = vadd.f32 0.0, %v2564
        %v2566 = vpop.f32.mrf.mxu0
        %v2567 = vadd.f32 0.0, %v2566
        %2568 = vdwg.mxu0
        %2569 = vmatpush.bf16.msra.mxu0 %v2517
        %2570 = vmatpush.bf16.msra.mxu0 %v2516
        %2571 = vmatpush.bf16.msra.mxu0 %v2515
        %2572 = vmatpush.bf16.msra.mxu0 %v2514
        %2573 = vmatpush.bf16.msra.mxu0 %v2513
        %2574 = vmatpush.bf16.msra.mxu0 %v2512
        %2575 = vmatpush.bf16.msra.mxu0 %v2511
        %2576 = vmatpush.bf16.msra.mxu0 %v2510
        %2577 = vmatmul.bf16.gmra.mxu0 %v2340
        %v2578 = vpop.f32.mrf.mxu0
        %v2579 = vadd.f32 %v2560, %v2578
        %v2580 = vpop.f32.mrf.mxu0
        %v2581 = vadd.f32 %v2562, %v2580
        %2582 = vmatmul.bf16.gmra.mxu0 %v2348
        %v2583 = vpop.f32.mrf.mxu0
        %v2584 = vadd.f32 %v2565, %v2583
        %v2585 = vpop.f32.mrf.mxu0
        %v2586 = vadd.f32 %v2567, %v2585
        %2587 = vdwg.mxu0
        %2588 = vmatpush.bf16.msra.mxu0 %v2525
        %2589 = vmatpush.bf16.msra.mxu0 %v2524
        %2590 = vmatpush.bf16.msra.mxu0 %v2523
        %2591 = vmatpush.bf16.msra.mxu0 %v2522
        %2592 = vmatpush.bf16.msra.mxu0 %v2521
        %2593 = vmatpush.bf16.msra.mxu0 %v2520
        %2594 = vmatpush.bf16.msra.mxu0 %v2519
        %2595 = vmatpush.bf16.msra.mxu0 %v2518
        %2596 = vmatmul.bf16.gmra.mxu0 %v2353
        %v2597 = vpop.f32.mrf.mxu0
        %v2598 = vadd.f32 %v2579, %v2597
        %v2599 = vpop.f32.mrf.mxu0
        %v2600 = vadd.f32 %v2581, %v2599
        %2601 = vmatmul.bf16.gmra.mxu0 %v2355
        %v2602 = vpop.f32.mrf.mxu0
        %v2603 = vadd.f32 %v2584, %v2602
        %v2604 = vpop.f32.mrf.mxu0
        %v2605 = vadd.f32 %v2586, %v2604
        %2606 = vdwg.mxu0
        %v2655 = vunpack.c.l.b16 %v2257
        %v2656 = vunpack.c.l.b16 %v2258
        %v2657 = vunpack.c.l.b16 %v2259
        %v2658 = vunpack.c.l.b16 %v2260
        %v2659 = vunpack.c.l.b16 %v2261
        %v2660 = vunpack.c.l.b16 %v2262
        %v2661 = vunpack.c.l.b16 %v2263
        %v2662 = vunpack.c.l.b16 %v2264
        %v2663 = vunpack.c.l.b16 %v2265
        %v2664 = vunpack.c.l.b16 %v2266
        %v2665 = vunpack.c.l.b16 %v2267
        %v2666 = vunpack.c.l.b16 %v2268
        %v2667 = vunpack.c.l.b16 %v2269
        %v2668 = vunpack.c.l.b16 %v2270
        %v2669 = vunpack.c.l.b16 %v2271
        %v2670 = vunpack.c.l.b16 %v2272
        %v2671 = vunpack.c.l.b16 %v2273
        %v2672 = vunpack.c.l.b16 %v2274
        %v2673 = vunpack.c.l.b16 %v2275
        %v2674 = vunpack.c.l.b16 %v2276
        %v2675 = vunpack.c.l.b16 %v2277
        %v2676 = vunpack.c.l.b16 %v2278
        %v2677 = vunpack.c.l.b16 %v2279
        %v2678 = vunpack.c.l.b16 %v2280
        %v2679 = vunpack.c.l.b16 %v2281
        %v2680 = vunpack.c.l.b16 %v2282
        %v2681 = vunpack.c.l.b16 %v2283
        %v2682 = vunpack.c.l.b16 %v2284
        %v2683 = vunpack.c.l.b16 %v2285
        %v2684 = vunpack.c.l.b16 %v2286
        %v2685 = vunpack.c.l.b16 %v2287
        %v2686 = vunpack.c.l.b16 %v2288
        %v2687 = vunpack.c.l.b16 %v2289
        %v2688 = vunpack.c.l.b16 %v2290
        %v2689 = vunpack.c.l.b16 %v2291
        %v2690 = vunpack.c.l.b16 %v2292
        %v2691 = vunpack.c.l.b16 %v2293
        %v2692 = vunpack.c.l.b16 %v2294
        %v2693 = vunpack.c.l.b16 %v2295
        %v2694 = vunpack.c.l.b16 %v2296
        %v2695 = vunpack.c.l.b16 %v2297
        %v2696 = vunpack.c.l.b16 %v2298
        %v2697 = vunpack.c.l.b16 %v2299
        %v2698 = vunpack.c.l.b16 %v2300
        %v2699 = vunpack.c.l.b16 %v2301
        %v2700 = vunpack.c.l.b16 %v2302
        %v2701 = vunpack.c.l.b16 %v2303
        %v2702 = vunpack.c.l.b16 %v2304
        %v2703 = vpack.c.b16 %v2656, %v2655
        %v2704 = vpack.c.b16 %v2658, %v2657
        %v2705 = vpack.c.b16 %v2660, %v2659
        %v2706 = vpack.c.b16 %v2662, %v2661
        %v2707 = vpack.c.b16 %v2664, %v2663
        %v2708 = vpack.c.b16 %v2666, %v2665
        %v2709 = vpack.c.b16 %v2668, %v2667
        %v2710 = vpack.c.b16 %v2670, %v2669
        %v2711 = vpack.c.b16 %v2672, %v2671
        %v2712 = vpack.c.b16 %v2674, %v2673
        %v2713 = vpack.c.b16 %v2676, %v2675
        %v2714 = vpack.c.b16 %v2678, %v2677
        %v2715 = vpack.c.b16 %v2680, %v2679
        %v2716 = vpack.c.b16 %v2682, %v2681
        %v2717 = vpack.c.b16 %v2684, %v2683
        %v2718 = vpack.c.b16 %v2686, %v2685
        %v2719 = vpack.c.b16 %v2688, %v2687
        %v2720 = vpack.c.b16 %v2690, %v2689
        %v2721 = vpack.c.b16 %v2692, %v2691
        %v2722 = vpack.c.b16 %v2694, %v2693
        %v2723 = vpack.c.b16 %v2696, %v2695
        %v2724 = vpack.c.b16 %v2698, %v2697
        %v2725 = vpack.c.b16 %v2700, %v2699
        %v2726 = vpack.c.b16 %v2702, %v2701
        %2751 = vmatpush.bf16.msra.mxu0 %v2710
        %2752 = vmatpush.bf16.msra.mxu0 %v2709
        %2753 = vmatpush.bf16.msra.mxu0 %v2708
        %2754 = vmatpush.bf16.msra.mxu0 %v2707
        %2755 = vmatpush.bf16.msra.mxu0 %v2706
        %2756 = vmatpush.bf16.msra.mxu0 %v2705
        %2757 = vmatpush.bf16.msra.mxu0 %v2704
        %2758 = vmatpush.bf16.msra.mxu0 %v2703
        %2759 = vmatmul.bf16.gmra.mxu0 %v2221
        %v2760 = vpop.f32.mrf.mxu0
        %v2761 = vadd.f32 %v2598, %v2760
        %v2762 = vpop.f32.mrf.mxu0
        %v2763 = vadd.f32 %v2600, %v2762
        %2764 = vmatmul.bf16.gmra.mxu0 %v2222
        %v2765 = vpop.f32.mrf.mxu0
        %v2766 = vadd.f32 %v2603, %v2765
        %v2767 = vpop.f32.mrf.mxu0
        %v2768 = vadd.f32 %v2605, %v2767
        %2769 = vdwg.mxu0
        %2770 = vmatpush.bf16.msra.mxu0 %v2718
        %2771 = vmatpush.bf16.msra.mxu0 %v2717
        %2772 = vmatpush.bf16.msra.mxu0 %v2716
        %2773 = vmatpush.bf16.msra.mxu0 %v2715
        %2774 = vmatpush.bf16.msra.mxu0 %v2714
        %2775 = vmatpush.bf16.msra.mxu0 %v2713
        %2776 = vmatpush.bf16.msra.mxu0 %v2712
        %2777 = vmatpush.bf16.msra.mxu0 %v2711
        %2778 = vmatmul.bf16.gmra.mxu0 %v2239
        %v2779 = vpop.f32.mrf.mxu0
        %v2780 = vadd.f32 %v2761, %v2779
        %v2781 = vpop.f32.mrf.mxu0
        %v2782 = vadd.f32 %v2763, %v2781
        %2783 = vmatmul.bf16.gmra.mxu0 %v2247
        %v2784 = vpop.f32.mrf.mxu0
        %v2785 = vadd.f32 %v2766, %v2784
        %v2786 = vpop.f32.mrf.mxu0
        %v2787 = vadd.f32 %v2768, %v2786
        %2788 = vdwg.mxu0
        %2789 = vmatpush.bf16.msra.mxu0 %v2726
        %2790 = vmatpush.bf16.msra.mxu0 %v2725
        %2791 = vmatpush.bf16.msra.mxu0 %v2724
        %2792 = vmatpush.bf16.msra.mxu0 %v2723
        %2793 = vmatpush.bf16.msra.mxu0 %v2722
        %2794 = vmatpush.bf16.msra.mxu0 %v2721
        %2795 = vmatpush.bf16.msra.mxu0 %v2720
        %2796 = vmatpush.bf16.msra.mxu0 %v2719
        %2797 = vmatmul.bf16.gmra.mxu0 %v2252
        %v2798 = vpop.f32.mrf.mxu0
        %v2799 = vadd.f32 %v2780, %v2798
        %v2800 = vpop.f32.mrf.mxu0
        %v2801 = vadd.f32 %v2782, %v2800
        %2802 = vmatmul.bf16.gmra.mxu0 %v2254
        %v2803 = vpop.f32.mrf.mxu0
        %v2804 = vadd.f32 %v2785, %v2803
        %v2805 = vpop.f32.mrf.mxu0
        %v2806 = vadd.f32 %v2787, %v2805
        %2807 = vdwg.mxu0
        %s2808 = sadd.s32 %s2204, 2
        %s2809 = smul.u32 %s2808, 5
        %s2810 = smul.addr %s2809, 4
        %s2811 = scalar_lea.vmem %s182, %s2810
        %v2812 = vld [vmem:[%s2811] sm:$0xf]
        %v2813 = vld [vmem:[%s2811 + $0x4] sm:$0xf]
        %v2814 = vld [vmem:[%s2811 + $0x8] sm:$0xf]
        %v2815 = vld [vmem:[%s2811 + $0xc] sm:$0xf]
        %v2816 = vld [vmem:[%s2811 + $0x10] sm:$0x1]
        %v2821 = vunpack.c.l.b16 %v2812
        %v2822 = vunpack.c.l.b16 %v2813
        %v2823 = vunpack.c.l.b16 %v2814
        %v2824 = vunpack.c.l.b16 %v2815
        %v2825 = vpack.c.b16 %v2822, %v2821
        %v2826 = vpack.c.b16 %v2824, %v2823
        %v2830 = vunpack.c.l.b16 %v2816
        %v2831 = vpack.c.b16 %v2830, %v2830
        %v2833 = vshrl.u32 %v2825, 16
        %v2835 = vshll.u32 %v2825, 16
        %v2837 = vrot.slane %v2835, 1
        %v2838 = vor.u32 %v2833, %v2837
        %v2840 = vshll.u32 %v2826, 16
        %v2842 = vrot.slane %v2840, 1
        %v2843 = vsel %vm208, %v2838, %v2842
        %v2844 = vshrl.u32 %v2826, 16
        %v2846 = vor.u32 %v2844, %v2842
        %v2848 = vshll.u32 %v2831, 16
        %v2850 = vrot.slane %v2848, 1
        %v2851 = vsel %vm208, %v2846, %v2850
        %v2854 = vrot.slane %v2825, 1
        %v2855 = vrot.slane %v2826, 1
        %v2856 = vsel %vm231, %v2854, %v2855
        %v2857 = vrot.slane %v2831, 1
        %v2858 = vsel %vm231, %v2855, %v2857
        %v2861 = vld [vmem:[%s844] sm:$0xf]
        %v2862 = vld [vmem:[%s844 + $0x4] sm:$0xf]
        %v2863 = vld [vmem:[%s844 + $0x8] sm:$0xf]
        %v2864 = vld [vmem:[%s844 + $0xc] sm:$0xf]
        %v2865 = vld [vmem:[%s844 + $0x10] sm:$0xf]
        %v2866 = vld [vmem:[%s844 + $0x14] sm:$0xf]
        %v2867 = vld [vmem:[%s844 + $0x18] sm:$0xf]
        %v2868 = vld [vmem:[%s844 + $0x1c] sm:$0xf]
        %v2869 = vld [vmem:[%s844 + $0x20] sm:$0xf]
        %v2870 = vld [vmem:[%s844 + $0x24] sm:$0xf]
        %v2871 = vld [vmem:[%s844 + $0x28] sm:$0xf]
        %v2872 = vld [vmem:[%s844 + $0x2c] sm:$0xf]
        %v2873 = vld [vmem:[%s844 + $0x30] sm:$0xf]
        %v2874 = vld [vmem:[%s844 + $0x34] sm:$0xf]
        %v2875 = vld [vmem:[%s844 + $0x38] sm:$0xf]
        %v2876 = vld [vmem:[%s844 + $0x3c] sm:$0xf]
        %v2877 = vld [vmem:[%s844 + $0x40] sm:$0xf]
        %v2878 = vld [vmem:[%s844 + $0x44] sm:$0xf]
        %v2879 = vld [vmem:[%s844 + $0x48] sm:$0xf]
        %v2880 = vld [vmem:[%s844 + $0x4c] sm:$0xf]
        %v2881 = vld [vmem:[%s844 + $0x50] sm:$0xf]
        %v2882 = vld [vmem:[%s844 + $0x54] sm:$0xf]
        %v2883 = vld [vmem:[%s844 + $0x58] sm:$0xf]
        %v2884 = vld [vmem:[%s844 + $0x5c] sm:$0xf]
        %v2885 = vld [vmem:[%s844 + $0x60] sm:$0xf]
        %v2886 = vld [vmem:[%s844 + $0x64] sm:$0xf]
        %v2887 = vld [vmem:[%s844 + $0x68] sm:$0xf]
        %v2888 = vld [vmem:[%s844 + $0x6c] sm:$0xf]
        %v2889 = vld [vmem:[%s844 + $0x70] sm:$0xf]
        %v2890 = vld [vmem:[%s844 + $0x74] sm:$0xf]
        %v2891 = vld [vmem:[%s844 + $0x78] sm:$0xf]
        %v2892 = vld [vmem:[%s844 + $0x7c] sm:$0xf]
        %v2893 = vld [vmem:[%s844 + $0x80] sm:$0xf]
        %v2894 = vld [vmem:[%s844 + $0x84] sm:$0xf]
        %v2895 = vld [vmem:[%s844 + $0x88] sm:$0xf]
        %v2896 = vld [vmem:[%s844 + $0x8c] sm:$0xf]
        %v2897 = vld [vmem:[%s844 + $0x90] sm:$0xf]
        %v2898 = vld [vmem:[%s844 + $0x94] sm:$0xf]
        %v2899 = vld [vmem:[%s844 + $0x98] sm:$0xf]
        %v2900 = vld [vmem:[%s844 + $0x9c] sm:$0xf]
        %v2901 = vld [vmem:[%s844 + $0xa0] sm:$0xf]
        %v2902 = vld [vmem:[%s844 + $0xa4] sm:$0xf]
        %v2903 = vld [vmem:[%s844 + $0xa8] sm:$0xf]
        %v2904 = vld [vmem:[%s844 + $0xac] sm:$0xf]
        %v2905 = vld [vmem:[%s844 + $0xb0] sm:$0xf]
        %v2906 = vld [vmem:[%s844 + $0xb4] sm:$0xf]
        %v2907 = vld [vmem:[%s844 + $0xb8] sm:$0xf]
        %v2908 = vld [vmem:[%s844 + $0xbc] sm:$0xf]
        %v2957 = vunpack.c.l.b16 %v2861
        %v2958 = vunpack.c.l.b16 %v2862
        %v2959 = vunpack.c.l.b16 %v2863
        %v2960 = vunpack.c.l.b16 %v2864
        %v2961 = vunpack.c.l.b16 %v2865
        %v2962 = vunpack.c.l.b16 %v2866
        %v2963 = vunpack.c.l.b16 %v2867
        %v2964 = vunpack.c.l.b16 %v2868
        %v2965 = vunpack.c.l.b16 %v2869
        %v2966 = vunpack.c.l.b16 %v2870
        %v2967 = vunpack.c.l.b16 %v2871
        %v2968 = vunpack.c.l.b16 %v2872
        %v2969 = vunpack.c.l.b16 %v2873
        %v2970 = vunpack.c.l.b16 %v2874
        %v2971 = vunpack.c.l.b16 %v2875
        %v2972 = vunpack.c.l.b16 %v2876
        %v2973 = vunpack.c.l.b16 %v2877
        %v2974 = vunpack.c.l.b16 %v2878
        %v2975 = vunpack.c.l.b16 %v2879
        %v2976 = vunpack.c.l.b16 %v2880
        %v2977 = vunpack.c.l.b16 %v2881
        %v2978 = vunpack.c.l.b16 %v2882
        %v2979 = vunpack.c.l.b16 %v2883
        %v2980 = vunpack.c.l.b16 %v2884
        %v2981 = vunpack.c.l.b16 %v2885
        %v2982 = vunpack.c.l.b16 %v2886
        %v2983 = vunpack.c.l.b16 %v2887
        %v2984 = vunpack.c.l.b16 %v2888
        %v2985 = vunpack.c.l.b16 %v2889
        %v2986 = vunpack.c.l.b16 %v2890
        %v2987 = vunpack.c.l.b16 %v2891
        %v2988 = vunpack.c.l.b16 %v2892
        %v2989 = vunpack.c.l.b16 %v2893
        %v2990 = vunpack.c.l.b16 %v2894
        %v2991 = vunpack.c.l.b16 %v2895
        %v2992 = vunpack.c.l.b16 %v2896
        %v2993 = vunpack.c.l.b16 %v2897
        %v2994 = vunpack.c.l.b16 %v2898
        %v2995 = vunpack.c.l.b16 %v2899
        %v2996 = vunpack.c.l.b16 %v2900
        %v2997 = vunpack.c.l.b16 %v2901
        %v2998 = vunpack.c.l.b16 %v2902
        %v2999 = vunpack.c.l.b16 %v2903
        %v3000 = vunpack.c.l.b16 %v2904
        %v3001 = vunpack.c.l.b16 %v2905
        %v3002 = vunpack.c.l.b16 %v2906
        %v3003 = vunpack.c.l.b16 %v2907
        %v3004 = vunpack.c.l.b16 %v2908
        %v3005 = vpack.c.b16 %v2958, %v2957
        %v3006 = vpack.c.b16 %v2960, %v2959
        %v3007 = vpack.c.b16 %v2962, %v2961
        %v3008 = vpack.c.b16 %v2964, %v2963
        %v3009 = vpack.c.b16 %v2966, %v2965
        %v3010 = vpack.c.b16 %v2968, %v2967
        %v3011 = vpack.c.b16 %v2970, %v2969
        %v3012 = vpack.c.b16 %v2972, %v2971
        %v3013 = vpack.c.b16 %v2974, %v2973
        %v3014 = vpack.c.b16 %v2976, %v2975
        %v3015 = vpack.c.b16 %v2978, %v2977
        %v3016 = vpack.c.b16 %v2980, %v2979
        %v3017 = vpack.c.b16 %v2982, %v2981
        %v3018 = vpack.c.b16 %v2984, %v2983
        %v3019 = vpack.c.b16 %v2986, %v2985
        %v3020 = vpack.c.b16 %v2988, %v2987
        %v3021 = vpack.c.b16 %v2990, %v2989
        %v3022 = vpack.c.b16 %v2992, %v2991
        %v3023 = vpack.c.b16 %v2994, %v2993
        %v3024 = vpack.c.b16 %v2996, %v2995
        %v3025 = vpack.c.b16 %v2998, %v2997
        %v3026 = vpack.c.b16 %v3000, %v2999
        %v3027 = vpack.c.b16 %v3002, %v3001
        %v3028 = vpack.c.b16 %v3004, %v3003
        %3053 = vmatpush.bf16.msra.mxu0 %v3012
        %3054 = vmatpush.bf16.msra.mxu0 %v3011
        %3055 = vmatpush.bf16.msra.mxu0 %v3010
        %3056 = vmatpush.bf16.msra.mxu0 %v3009
        %3057 = vmatpush.bf16.msra.mxu0 %v3008
        %3058 = vmatpush.bf16.msra.mxu0 %v3007
        %3059 = vmatpush.bf16.msra.mxu0 %v3006
        %3060 = vmatpush.bf16.msra.mxu0 %v3005
        %3061 = vmatmul.bf16.gmra.mxu0 %v2825
        %v3062 = vpop.f32.mrf.mxu0
        %v3063 = vadd.f32 0.0, %v3062
        %v3064 = vpop.f32.mrf.mxu0
        %v3065 = vadd.f32 0.0, %v3064
        %3066 = vmatmul.bf16.gmra.mxu0 %v2826
        %v3067 = vpop.f32.mrf.mxu0
        %v3068 = vadd.f32 0.0, %v3067
        %v3069 = vpop.f32.mrf.mxu0
        %v3070 = vadd.f32 0.0, %v3069
        %3071 = vdwg.mxu0
        %3072 = vmatpush.bf16.msra.mxu0 %v3020
        %3073 = vmatpush.bf16.msra.mxu0 %v3019
        %3074 = vmatpush.bf16.msra.mxu0 %v3018
        %3075 = vmatpush.bf16.msra.mxu0 %v3017
        %3076 = vmatpush.bf16.msra.mxu0 %v3016
        %3077 = vmatpush.bf16.msra.mxu0 %v3015
        %3078 = vmatpush.bf16.msra.mxu0 %v3014
        %3079 = vmatpush.bf16.msra.mxu0 %v3013
        %3080 = vmatmul.bf16.gmra.mxu0 %v2843
        %v3081 = vpop.f32.mrf.mxu0
        %v3082 = vadd.f32 %v3063, %v3081
        %v3083 = vpop.f32.mrf.mxu0
        %v3084 = vadd.f32 %v3065, %v3083
        %3085 = vmatmul.bf16.gmra.mxu0 %v2851
        %v3086 = vpop.f32.mrf.mxu0
        %v3087 = vadd.f32 %v3068, %v3086
        %v3088 = vpop.f32.mrf.mxu0
        %v3089 = vadd.f32 %v3070, %v3088
        %3090 = vdwg.mxu0
        %3091 = vmatpush.bf16.msra.mxu0 %v3028
        %3092 = vmatpush.bf16.msra.mxu0 %v3027
        %3093 = vmatpush.bf16.msra.mxu0 %v3026
        %3094 = vmatpush.bf16.msra.mxu0 %v3025
        %3095 = vmatpush.bf16.msra.mxu0 %v3024
        %3096 = vmatpush.bf16.msra.mxu0 %v3023
        %3097 = vmatpush.bf16.msra.mxu0 %v3022
        %3098 = vmatpush.bf16.msra.mxu0 %v3021
        %3099 = vmatmul.bf16.gmra.mxu0 %v2856
        %v3100 = vpop.f32.mrf.mxu0
        %v3101 = vadd.f32 %v3082, %v3100
        %v3102 = vpop.f32.mrf.mxu0
        %v3103 = vadd.f32 %v3084, %v3102
        %3104 = vmatmul.bf16.gmra.mxu0 %v2858
        %v3105 = vpop.f32.mrf.mxu0
        %v3106 = vadd.f32 %v3087, %v3105
        %v3107 = vpop.f32.mrf.mxu0
        %v3108 = vadd.f32 %v3089, %v3107
        %3109 = vdwg.mxu0
        %v3110 = vadd.f32 %v2799, %v3101
        %v3111 = vadd.f32 %v2801, %v3103
        %v3112 = vadd.f32 %v2804, %v3106
        %v3113 = vadd.f32 %v2806, %v3108
        %v3114 = vld [vmem:[%s2] sm:$0x1]
        %v3116 = vperm.slane %v3114, 0
        %v3118 = vadd.f32 %v3110, %v3116
        %v3119 = vadd.f32 %v3111, %v3116
        %v3120 = vadd.f32 %v3112, %v3116
        %v3121 = vadd.f32 %v3113, %v3116
        %v3122 = vxor.u32 %v3118, 2147483648
        %v3123 = vxor.u32 %v3119, 2147483648
        %v3124 = vxor.u32 %v3120, 2147483648
        %v3125 = vxor.u32 %v3121, 2147483648
        %v3126 = vmul.f32 %v3122, 1.442695
        %v3127 = vpow.pop %v3126
        %v3128 = vmul.f32 %v3123, 1.442695
        %v3129 = vpow.pop %v3128
        %v3130 = vmul.f32 %v3124, 1.442695
        %v3131 = vpow.pop %v3130
        %v3132 = vmul.f32 %v3125, 1.442695
        %v3133 = vpow.pop %v3132
        %v3134 = vadd.f32 %v3127, 1.0
        %v3135 = vadd.f32 %v3129, 1.0
        %v3136 = vadd.f32 %v3131, 1.0
        %v3137 = vadd.f32 %v3133, 1.0
        %v3138 = vrcp.pop %v3134
        %v3139 = vmul.f32 %v3134, %v3138
        %v3140 = vsub.f32 1.0, %v3139
        %v3141 = vmul.f32 %v3138, %v3140
        %v3142 = vadd.f32 %v3138, %v3141
        %vm3143 = vweird.f32 %v3134
        %vm3144 = vweird.f32 %v3138
        %vm3145 = vmor %vm3143, %vm3144
        %v3146 = vsel %vm3145, %v3138, %v3142
        %v3147 = vand.u32 2147483647, %v3134
        %vm3148 = vcmp.eq.f32.partialorder %v3147, 8.507059e+37
        %v3149 = vand.u32 %v3134, 2147483648
        %v3150 = vor.u32 1.1754944e-38, %v3149
        %v3151 = vsel %vm3148, %v3150, %v3146
        %v3152 = vmul.f32 1.0, %v3151
        %v3153 = vrcp.pop %v3135
        %v3154 = vmul.f32 %v3135, %v3153
        %v3155 = vsub.f32 1.0, %v3154
        %v3156 = vmul.f32 %v3153, %v3155
        %v3157 = vadd.f32 %v3153, %v3156
        %vm3158 = vweird.f32 %v3135
        %vm3159 = vweird.f32 %v3153
        %vm3160 = vmor %vm3158, %vm3159
        %v3161 = vsel %vm3160, %v3153, %v3157
        %v3162 = vand.u32 2147483647, %v3135
        %vm3163 = vcmp.eq.f32.partialorder %v3162, 8.507059e+37
        %v3164 = vand.u32 %v3135, 2147483648
        %v3165 = vor.u32 1.1754944e-38, %v3164
        %v3166 = vsel %vm3163, %v3165, %v3161
        %v3167 = vmul.f32 1.0, %v3166
        %v3168 = vrcp.pop %v3136
        %v3169 = vmul.f32 %v3136, %v3168
        %v3170 = vsub.f32 1.0, %v3169
        %v3171 = vmul.f32 %v3168, %v3170
        %v3172 = vadd.f32 %v3168, %v3171
        %vm3173 = vweird.f32 %v3136
        %vm3174 = vweird.f32 %v3168
        %vm3175 = vmor %vm3173, %vm3174
        %v3176 = vsel %vm3175, %v3168, %v3172
        %v3177 = vand.u32 2147483647, %v3136
        %vm3178 = vcmp.eq.f32.partialorder %v3177, 8.507059e+37
        %v3179 = vand.u32 %v3136, 2147483648
        %v3180 = vor.u32 1.1754944e-38, %v3179
        %v3181 = vsel %vm3178, %v3180, %v3176
        %v3182 = vmul.f32 1.0, %v3181
        %v3183 = vrcp.pop %v3137
        %v3184 = vmul.f32 %v3137, %v3183
        %v3185 = vsub.f32 1.0, %v3184
        %v3186 = vmul.f32 %v3183, %v3185
        %v3187 = vadd.f32 %v3183, %v3186
        %vm3188 = vweird.f32 %v3137
        %vm3189 = vweird.f32 %v3183
        %vm3190 = vmor %vm3188, %vm3189
        %v3191 = vsel %vm3190, %v3183, %v3187
        %v3192 = vand.u32 2147483647, %v3137
        %vm3193 = vcmp.eq.f32.partialorder %v3192, 8.507059e+37
        %v3194 = vand.u32 %v3137, 2147483648
        %v3195 = vor.u32 1.1754944e-38, %v3194
        %v3196 = vsel %vm3193, %v3195, %v3191
        %v3197 = vmul.f32 1.0, %v3196
        %v3198 = vmul.f32 %v3118, %v3152
        %v3199 = vmul.f32 %v3119, %v3167
        %v3200 = vmul.f32 %v3120, %v3182
        %v3201 = vmul.f32 %v3121, %v3197
        %v3202 = vpack.c.bf16 %v3198, %v3198
        %v3203 = vpack.c.bf16 %v3199, %v3199
        %v3204 = vpack.c.bf16 %v3200, %v3200
        %v3205 = vpack.c.bf16 %v3201, %v3201
        %s3206 = scalar_lea.vmem %s177, 32 [#allocation2]
        %3207 = vst [vmem:[%s3206] sm:$0xf] %v3202
        %3208 = vst [vmem:[%s3206 + $0x4] sm:$0xf] %v3203
        %3209 = vst [vmem:[%s3206 + $0x8] sm:$0xf] %v3204
        %3210 = vst [vmem:[%s3206 + $0xc] sm:$0xf] %v3205
        %s3211 = sadd.s32 %s1194, 3
        %s3212 = smul.u32 %s3211, 2
        %s3213 = smul.u32 %s3212, 5
        %s3214 = smul.addr %s3213, 4
        %s3215 = scalar_lea.vmem %s182, %s3214
        %v3216 = vld [vmem:[%s3215] sm:$0xf]
        %v3217 = vld [vmem:[%s3215 + $0x4] sm:$0xf]
        %v3218 = vld [vmem:[%s3215 + $0x8] sm:$0xf]
        %v3219 = vld [vmem:[%s3215 + $0xc] sm:$0xf]
        %v3220 = vld [vmem:[%s3215 + $0x10] sm:$0x1]
        %v3225 = vunpack.c.l.b16 %v3216
        %v3226 = vunpack.c.l.b16 %v3217
        %v3227 = vunpack.c.l.b16 %v3218
        %v3228 = vunpack.c.l.b16 %v3219
        %v3229 = vpack.c.b16 %v3226, %v3225
        %v3230 = vpack.c.b16 %v3228, %v3227
        %v3234 = vunpack.c.l.b16 %v3220
        %v3235 = vpack.c.b16 %v3234, %v3234
        %v3237 = vshrl.u32 %v3229, 16
        %v3239 = vshll.u32 %v3229, 16
        %v3241 = vrot.slane %v3239, 1
        %v3242 = vor.u32 %v3237, %v3241
        %v3244 = vshll.u32 %v3230, 16
        %v3246 = vrot.slane %v3244, 1
        %v3247 = vsel %vm208, %v3242, %v3246
        %v3248 = vshrl.u32 %v3230, 16
        %v3250 = vor.u32 %v3248, %v3246
        %v3252 = vshll.u32 %v3235, 16
        %v3254 = vrot.slane %v3252, 1
        %v3255 = vsel %vm208, %v3250, %v3254
        %v3258 = vrot.slane %v3229, 1
        %v3259 = vrot.slane %v3230, 1
        %v3260 = vsel %vm231, %v3258, %v3259
        %v3261 = vrot.slane %v3235, 1
        %v3262 = vsel %vm231, %v3259, %v3261
        %v3265 = vld [vmem:[%s1] sm:$0xf]
        %v3266 = vld [vmem:[%s1 + $0x4] sm:$0xf]
        %v3267 = vld [vmem:[%s1 + $0x8] sm:$0xf]
        %v3268 = vld [vmem:[%s1 + $0xc] sm:$0xf]
        %v3269 = vld [vmem:[%s1 + $0x10] sm:$0xf]
        %v3270 = vld [vmem:[%s1 + $0x14] sm:$0xf]
        %v3271 = vld [vmem:[%s1 + $0x18] sm:$0xf]
        %v3272 = vld [vmem:[%s1 + $0x1c] sm:$0xf]
        %v3273 = vld [vmem:[%s1 + $0x20] sm:$0xf]
        %v3274 = vld [vmem:[%s1 + $0x24] sm:$0xf]
        %v3275 = vld [vmem:[%s1 + $0x28] sm:$0xf]
        %v3276 = vld [vmem:[%s1 + $0x2c] sm:$0xf]
        %v3277 = vld [vmem:[%s1 + $0x30] sm:$0xf]
        %v3278 = vld [vmem:[%s1 + $0x34] sm:$0xf]
        %v3279 = vld [vmem:[%s1 + $0x38] sm:$0xf]
        %v3280 = vld [vmem:[%s1 + $0x3c] sm:$0xf]
        %v3281 = vld [vmem:[%s1 + $0x40] sm:$0xf]
        %v3282 = vld [vmem:[%s1 + $0x44] sm:$0xf]
        %v3283 = vld [vmem:[%s1 + $0x48] sm:$0xf]
        %v3284 = vld [vmem:[%s1 + $0x4c] sm:$0xf]
        %v3285 = vld [vmem:[%s1 + $0x50] sm:$0xf]
        %v3286 = vld [vmem:[%s1 + $0x54] sm:$0xf]
        %v3287 = vld [vmem:[%s1 + $0x58] sm:$0xf]
        %v3288 = vld [vmem:[%s1 + $0x5c] sm:$0xf]
        %v3289 = vld [vmem:[%s1 + $0x60] sm:$0xf]
        %v3290 = vld [vmem:[%s1 + $0x64] sm:$0xf]
        %v3291 = vld [vmem:[%s1 + $0x68] sm:$0xf]
        %v3292 = vld [vmem:[%s1 + $0x6c] sm:$0xf]
        %v3293 = vld [vmem:[%s1 + $0x70] sm:$0xf]
        %v3294 = vld [vmem:[%s1 + $0x74] sm:$0xf]
        %v3295 = vld [vmem:[%s1 + $0x78] sm:$0xf]
        %v3296 = vld [vmem:[%s1 + $0x7c] sm:$0xf]
        %v3297 = vld [vmem:[%s1 + $0x80] sm:$0xf]
        %v3298 = vld [vmem:[%s1 + $0x84] sm:$0xf]
        %v3299 = vld [vmem:[%s1 + $0x88] sm:$0xf]
        %v3300 = vld [vmem:[%s1 + $0x8c] sm:$0xf]
        %v3301 = vld [vmem:[%s1 + $0x90] sm:$0xf]
        %v3302 = vld [vmem:[%s1 + $0x94] sm:$0xf]
        %v3303 = vld [vmem:[%s1 + $0x98] sm:$0xf]
        %v3304 = vld [vmem:[%s1 + $0x9c] sm:$0xf]
        %v3305 = vld [vmem:[%s1 + $0xa0] sm:$0xf]
        %v3306 = vld [vmem:[%s1 + $0xa4] sm:$0xf]
        %v3307 = vld [vmem:[%s1 + $0xa8] sm:$0xf]
        %v3308 = vld [vmem:[%s1 + $0xac] sm:$0xf]
        %v3309 = vld [vmem:[%s1 + $0xb0] sm:$0xf]
        %v3310 = vld [vmem:[%s1 + $0xb4] sm:$0xf]
        %v3311 = vld [vmem:[%s1 + $0xb8] sm:$0xf]
        %v3312 = vld [vmem:[%s1 + $0xbc] sm:$0xf]
        %s3313 = sadd.s32 %s3212, 1
        %s3314 = smul.u32 %s3313, 5
        %s3315 = smul.addr %s3314, 4
        %s3316 = scalar_lea.vmem %s182, %s3315
        %v3317 = vld [vmem:[%s3316] sm:$0xf]
        %v3318 = vld [vmem:[%s3316 + $0x4] sm:$0xf]
        %v3319 = vld [vmem:[%s3316 + $0x8] sm:$0xf]
        %v3320 = vld [vmem:[%s3316 + $0xc] sm:$0xf]
        %v3321 = vld [vmem:[%s3316 + $0x10] sm:$0x1]
        %v3326 = vunpack.c.l.b16 %v3317
        %v3327 = vunpack.c.l.b16 %v3318
        %v3328 = vunpack.c.l.b16 %v3319
        %v3329 = vunpack.c.l.b16 %v3320
        %v3330 = vpack.c.b16 %v3327, %v3326
        %v3331 = vpack.c.b16 %v3329, %v3328
        %v3335 = vunpack.c.l.b16 %v3321
        %v3336 = vpack.c.b16 %v3335, %v3335
        %v3338 = vshrl.u32 %v3330, 16
        %v3340 = vshll.u32 %v3330, 16
        %v3342 = vrot.slane %v3340, 1
        %v3343 = vor.u32 %v3338, %v3342
        %v3345 = vshll.u32 %v3331, 16
        %v3347 = vrot.slane %v3345, 1
        %v3348 = vsel %vm208, %v3343, %v3347
        %v3349 = vshrl.u32 %v3331, 16
        %v3351 = vor.u32 %v3349, %v3347
        %v3353 = vshll.u32 %v3336, 16
        %v3355 = vrot.slane %v3353, 1
        %v3356 = vsel %vm208, %v3351, %v3355
        %v3359 = vrot.slane %v3330, 1
        %v3360 = vrot.slane %v3331, 1
        %v3361 = vsel %vm231, %v3359, %v3360
        %v3362 = vrot.slane %v3336, 1
        %v3363 = vsel %vm231, %v3360, %v3362
        %v3366 = vld [vmem:[%s340] sm:$0xf]
        %v3367 = vld [vmem:[%s340 + $0x4] sm:$0xf]
        %v3368 = vld [vmem:[%s340 + $0x8] sm:$0xf]
        %v3369 = vld [vmem:[%s340 + $0xc] sm:$0xf]
        %v3370 = vld [vmem:[%s340 + $0x10] sm:$0xf]
        %v3371 = vld [vmem:[%s340 + $0x14] sm:$0xf]
        %v3372 = vld [vmem:[%s340 + $0x18] sm:$0xf]
        %v3373 = vld [vmem:[%s340 + $0x1c] sm:$0xf]
        %v3374 = vld [vmem:[%s340 + $0x20] sm:$0xf]
        %v3375 = vld [vmem:[%s340 + $0x24] sm:$0xf]
        %v3376 = vld [vmem:[%s340 + $0x28] sm:$0xf]
        %v3377 = vld [vmem:[%s340 + $0x2c] sm:$0xf]
        %v3378 = vld [vmem:[%s340 + $0x30] sm:$0xf]
        %v3379 = vld [vmem:[%s340 + $0x34] sm:$0xf]
        %v3380 = vld [vmem:[%s340 + $0x38] sm:$0xf]
        %v3381 = vld [vmem:[%s340 + $0x3c] sm:$0xf]
        %v3382 = vld [vmem:[%s340 + $0x40] sm:$0xf]
        %v3383 = vld [vmem:[%s340 + $0x44] sm:$0xf]
        %v3384 = vld [vmem:[%s340 + $0x48] sm:$0xf]
        %v3385 = vld [vmem:[%s340 + $0x4c] sm:$0xf]
        %v3386 = vld [vmem:[%s340 + $0x50] sm:$0xf]
        %v3387 = vld [vmem:[%s340 + $0x54] sm:$0xf]
        %v3388 = vld [vmem:[%s340 + $0x58] sm:$0xf]
        %v3389 = vld [vmem:[%s340 + $0x5c] sm:$0xf]
        %v3390 = vld [vmem:[%s340 + $0x60] sm:$0xf]
        %v3391 = vld [vmem:[%s340 + $0x64] sm:$0xf]
        %v3392 = vld [vmem:[%s340 + $0x68] sm:$0xf]
        %v3393 = vld [vmem:[%s340 + $0x6c] sm:$0xf]
        %v3394 = vld [vmem:[%s340 + $0x70] sm:$0xf]
        %v3395 = vld [vmem:[%s340 + $0x74] sm:$0xf]
        %v3396 = vld [vmem:[%s340 + $0x78] sm:$0xf]
        %v3397 = vld [vmem:[%s340 + $0x7c] sm:$0xf]
        %v3398 = vld [vmem:[%s340 + $0x80] sm:$0xf]
        %v3399 = vld [vmem:[%s340 + $0x84] sm:$0xf]
        %v3400 = vld [vmem:[%s340 + $0x88] sm:$0xf]
        %v3401 = vld [vmem:[%s340 + $0x8c] sm:$0xf]
        %v3402 = vld [vmem:[%s340 + $0x90] sm:$0xf]
        %v3403 = vld [vmem:[%s340 + $0x94] sm:$0xf]
        %v3404 = vld [vmem:[%s340 + $0x98] sm:$0xf]
        %v3405 = vld [vmem:[%s340 + $0x9c] sm:$0xf]
        %v3406 = vld [vmem:[%s340 + $0xa0] sm:$0xf]
        %v3407 = vld [vmem:[%s340 + $0xa4] sm:$0xf]
        %v3408 = vld [vmem:[%s340 + $0xa8] sm:$0xf]
        %v3409 = vld [vmem:[%s340 + $0xac] sm:$0xf]
        %v3410 = vld [vmem:[%s340 + $0xb0] sm:$0xf]
        %v3411 = vld [vmem:[%s340 + $0xb4] sm:$0xf]
        %v3412 = vld [vmem:[%s340 + $0xb8] sm:$0xf]
        %v3413 = vld [vmem:[%s340 + $0xbc] sm:$0xf]
        %v3462 = vunpack.c.l.b16 %v3366
        %v3463 = vunpack.c.l.b16 %v3367
        %v3464 = vunpack.c.l.b16 %v3368
        %v3465 = vunpack.c.l.b16 %v3369
        %v3466 = vunpack.c.l.b16 %v3370
        %v3467 = vunpack.c.l.b16 %v3371
        %v3468 = vunpack.c.l.b16 %v3372
        %v3469 = vunpack.c.l.b16 %v3373
        %v3470 = vunpack.c.l.b16 %v3374
        %v3471 = vunpack.c.l.b16 %v3375
        %v3472 = vunpack.c.l.b16 %v3376
        %v3473 = vunpack.c.l.b16 %v3377
        %v3474 = vunpack.c.l.b16 %v3378
        %v3475 = vunpack.c.l.b16 %v3379
        %v3476 = vunpack.c.l.b16 %v3380
        %v3477 = vunpack.c.l.b16 %v3381
        %v3478 = vunpack.c.l.b16 %v3382
        %v3479 = vunpack.c.l.b16 %v3383
        %v3480 = vunpack.c.l.b16 %v3384
        %v3481 = vunpack.c.l.b16 %v3385
        %v3482 = vunpack.c.l.b16 %v3386
        %v3483 = vunpack.c.l.b16 %v3387
        %v3484 = vunpack.c.l.b16 %v3388
        %v3485 = vunpack.c.l.b16 %v3389
        %v3486 = vunpack.c.l.b16 %v3390
        %v3487 = vunpack.c.l.b16 %v3391
        %v3488 = vunpack.c.l.b16 %v3392
        %v3489 = vunpack.c.l.b16 %v3393
        %v3490 = vunpack.c.l.b16 %v3394
        %v3491 = vunpack.c.l.b16 %v3395
        %v3492 = vunpack.c.l.b16 %v3396
        %v3493 = vunpack.c.l.b16 %v3397
        %v3494 = vunpack.c.l.b16 %v3398
        %v3495 = vunpack.c.l.b16 %v3399
        %v3496 = vunpack.c.l.b16 %v3400
        %v3497 = vunpack.c.l.b16 %v3401
        %v3498 = vunpack.c.l.b16 %v3402
        %v3499 = vunpack.c.l.b16 %v3403
        %v3500 = vunpack.c.l.b16 %v3404
        %v3501 = vunpack.c.l.b16 %v3405
        %v3502 = vunpack.c.l.b16 %v3406
        %v3503 = vunpack.c.l.b16 %v3407
        %v3504 = vunpack.c.l.b16 %v3408
        %v3505 = vunpack.c.l.b16 %v3409
        %v3506 = vunpack.c.l.b16 %v3410
        %v3507 = vunpack.c.l.b16 %v3411
        %v3508 = vunpack.c.l.b16 %v3412
        %v3509 = vunpack.c.l.b16 %v3413
        %v3510 = vpack.c.b16 %v3463, %v3462
        %v3511 = vpack.c.b16 %v3465, %v3464
        %v3512 = vpack.c.b16 %v3467, %v3466
        %v3513 = vpack.c.b16 %v3469, %v3468
        %v3514 = vpack.c.b16 %v3471, %v3470
        %v3515 = vpack.c.b16 %v3473, %v3472
        %v3516 = vpack.c.b16 %v3475, %v3474
        %v3517 = vpack.c.b16 %v3477, %v3476
        %v3518 = vpack.c.b16 %v3479, %v3478
        %v3519 = vpack.c.b16 %v3481, %v3480
        %v3520 = vpack.c.b16 %v3483, %v3482
        %v3521 = vpack.c.b16 %v3485, %v3484
        %v3522 = vpack.c.b16 %v3487, %v3486
        %v3523 = vpack.c.b16 %v3489, %v3488
        %v3524 = vpack.c.b16 %v3491, %v3490
        %v3525 = vpack.c.b16 %v3493, %v3492
        %v3526 = vpack.c.b16 %v3495, %v3494
        %v3527 = vpack.c.b16 %v3497, %v3496
        %v3528 = vpack.c.b16 %v3499, %v3498
        %v3529 = vpack.c.b16 %v3501, %v3500
        %v3530 = vpack.c.b16 %v3503, %v3502
        %v3531 = vpack.c.b16 %v3505, %v3504
        %v3532 = vpack.c.b16 %v3507, %v3506
        %v3533 = vpack.c.b16 %v3509, %v3508
        %3558 = vmatpush.bf16.msra.mxu0 %v3517
        %3559 = vmatpush.bf16.msra.mxu0 %v3516
        %3560 = vmatpush.bf16.msra.mxu0 %v3515
        %3561 = vmatpush.bf16.msra.mxu0 %v3514
        %3562 = vmatpush.bf16.msra.mxu0 %v3513
        %3563 = vmatpush.bf16.msra.mxu0 %v3512
        %3564 = vmatpush.bf16.msra.mxu0 %v3511
        %3565 = vmatpush.bf16.msra.mxu0 %v3510
        %3566 = vmatmul.bf16.gmra.mxu0 %v3330
        %v3567 = vpop.f32.mrf.mxu0
        %v3568 = vadd.f32 0.0, %v3567
        %v3569 = vpop.f32.mrf.mxu0
        %v3570 = vadd.f32 0.0, %v3569
        %3571 = vmatmul.bf16.gmra.mxu0 %v3331
        %v3572 = vpop.f32.mrf.mxu0
        %v3573 = vadd.f32 0.0, %v3572
        %v3574 = vpop.f32.mrf.mxu0
        %v3575 = vadd.f32 0.0, %v3574
        %3576 = vdwg.mxu0
        %3577 = vmatpush.bf16.msra.mxu0 %v3525
        %3578 = vmatpush.bf16.msra.mxu0 %v3524
        %3579 = vmatpush.bf16.msra.mxu0 %v3523
        %3580 = vmatpush.bf16.msra.mxu0 %v3522
        %3581 = vmatpush.bf16.msra.mxu0 %v3521
        %3582 = vmatpush.bf16.msra.mxu0 %v3520
        %3583 = vmatpush.bf16.msra.mxu0 %v3519
        %3584 = vmatpush.bf16.msra.mxu0 %v3518
        %3585 = vmatmul.bf16.gmra.mxu0 %v3348
        %v3586 = vpop.f32.mrf.mxu0
        %v3587 = vadd.f32 %v3568, %v3586
        %v3588 = vpop.f32.mrf.mxu0
        %v3589 = vadd.f32 %v3570, %v3588
        %3590 = vmatmul.bf16.gmra.mxu0 %v3356
        %v3591 = vpop.f32.mrf.mxu0
        %v3592 = vadd.f32 %v3573, %v3591
        %v3593 = vpop.f32.mrf.mxu0
        %v3594 = vadd.f32 %v3575, %v3593
        %3595 = vdwg.mxu0
        %3596 = vmatpush.bf16.msra.mxu0 %v3533
        %3597 = vmatpush.bf16.msra.mxu0 %v3532
        %3598 = vmatpush.bf16.msra.mxu0 %v3531
        %3599 = vmatpush.bf16.msra.mxu0 %v3530
        %3600 = vmatpush.bf16.msra.mxu0 %v3529
        %3601 = vmatpush.bf16.msra.mxu0 %v3528
        %3602 = vmatpush.bf16.msra.mxu0 %v3527
        %3603 = vmatpush.bf16.msra.mxu0 %v3526
        %3604 = vmatmul.bf16.gmra.mxu0 %v3361
        %v3605 = vpop.f32.mrf.mxu0
        %v3606 = vadd.f32 %v3587, %v3605
        %v3607 = vpop.f32.mrf.mxu0
        %v3608 = vadd.f32 %v3589, %v3607
        %3609 = vmatmul.bf16.gmra.mxu0 %v3363
        %v3610 = vpop.f32.mrf.mxu0
        %v3611 = vadd.f32 %v3592, %v3610
        %v3612 = vpop.f32.mrf.mxu0
        %v3613 = vadd.f32 %v3594, %v3612
        %3614 = vdwg.mxu0
        %v3663 = vunpack.c.l.b16 %v3265
        %v3664 = vunpack.c.l.b16 %v3266
        %v3665 = vunpack.c.l.b16 %v3267
        %v3666 = vunpack.c.l.b16 %v3268
        %v3667 = vunpack.c.l.b16 %v3269
        %v3668 = vunpack.c.l.b16 %v3270
        %v3669 = vunpack.c.l.b16 %v3271
        %v3670 = vunpack.c.l.b16 %v3272
        %v3671 = vunpack.c.l.b16 %v3273
        %v3672 = vunpack.c.l.b16 %v3274
        %v3673 = vunpack.c.l.b16 %v3275
        %v3674 = vunpack.c.l.b16 %v3276
        %v3675 = vunpack.c.l.b16 %v3277
        %v3676 = vunpack.c.l.b16 %v3278
        %v3677 = vunpack.c.l.b16 %v3279
        %v3678 = vunpack.c.l.b16 %v3280
        %v3679 = vunpack.c.l.b16 %v3281
        %v3680 = vunpack.c.l.b16 %v3282
        %v3681 = vunpack.c.l.b16 %v3283
        %v3682 = vunpack.c.l.b16 %v3284
        %v3683 = vunpack.c.l.b16 %v3285
        %v3684 = vunpack.c.l.b16 %v3286
        %v3685 = vunpack.c.l.b16 %v3287
        %v3686 = vunpack.c.l.b16 %v3288
        %v3687 = vunpack.c.l.b16 %v3289
        %v3688 = vunpack.c.l.b16 %v3290
        %v3689 = vunpack.c.l.b16 %v3291
        %v3690 = vunpack.c.l.b16 %v3292
        %v3691 = vunpack.c.l.b16 %v3293
        %v3692 = vunpack.c.l.b16 %v3294
        %v3693 = vunpack.c.l.b16 %v3295
        %v3694 = vunpack.c.l.b16 %v3296
        %v3695 = vunpack.c.l.b16 %v3297
        %v3696 = vunpack.c.l.b16 %v3298
        %v3697 = vunpack.c.l.b16 %v3299
        %v3698 = vunpack.c.l.b16 %v3300
        %v3699 = vunpack.c.l.b16 %v3301
        %v3700 = vunpack.c.l.b16 %v3302
        %v3701 = vunpack.c.l.b16 %v3303
        %v3702 = vunpack.c.l.b16 %v3304
        %v3703 = vunpack.c.l.b16 %v3305
        %v3704 = vunpack.c.l.b16 %v3306
        %v3705 = vunpack.c.l.b16 %v3307
        %v3706 = vunpack.c.l.b16 %v3308
        %v3707 = vunpack.c.l.b16 %v3309
        %v3708 = vunpack.c.l.b16 %v3310
        %v3709 = vunpack.c.l.b16 %v3311
        %v3710 = vunpack.c.l.b16 %v3312
        %v3711 = vpack.c.b16 %v3664, %v3663
        %v3712 = vpack.c.b16 %v3666, %v3665
        %v3713 = vpack.c.b16 %v3668, %v3667
        %v3714 = vpack.c.b16 %v3670, %v3669
        %v3715 = vpack.c.b16 %v3672, %v3671
        %v3716 = vpack.c.b16 %v3674, %v3673
        %v3717 = vpack.c.b16 %v3676, %v3675
        %v3718 = vpack.c.b16 %v3678, %v3677
        %v3719 = vpack.c.b16 %v3680, %v3679
        %v3720 = vpack.c.b16 %v3682, %v3681
        %v3721 = vpack.c.b16 %v3684, %v3683
        %v3722 = vpack.c.b16 %v3686, %v3685
        %v3723 = vpack.c.b16 %v3688, %v3687
        %v3724 = vpack.c.b16 %v3690, %v3689
        %v3725 = vpack.c.b16 %v3692, %v3691
        %v3726 = vpack.c.b16 %v3694, %v3693
        %v3727 = vpack.c.b16 %v3696, %v3695
        %v3728 = vpack.c.b16 %v3698, %v3697
        %v3729 = vpack.c.b16 %v3700, %v3699
        %v3730 = vpack.c.b16 %v3702, %v3701
        %v3731 = vpack.c.b16 %v3704, %v3703
        %v3732 = vpack.c.b16 %v3706, %v3705
        %v3733 = vpack.c.b16 %v3708, %v3707
        %v3734 = vpack.c.b16 %v3710, %v3709
        %3759 = vmatpush.bf16.msra.mxu0 %v3718
        %3760 = vmatpush.bf16.msra.mxu0 %v3717
        %3761 = vmatpush.bf16.msra.mxu0 %v3716
        %3762 = vmatpush.bf16.msra.mxu0 %v3715
        %3763 = vmatpush.bf16.msra.mxu0 %v3714
        %3764 = vmatpush.bf16.msra.mxu0 %v3713
        %3765 = vmatpush.bf16.msra.mxu0 %v3712
        %3766 = vmatpush.bf16.msra.mxu0 %v3711
        %3767 = vmatmul.bf16.gmra.mxu0 %v3229
        %v3768 = vpop.f32.mrf.mxu0
        %v3769 = vadd.f32 %v3606, %v3768
        %v3770 = vpop.f32.mrf.mxu0
        %v3771 = vadd.f32 %v3608, %v3770
        %3772 = vmatmul.bf16.gmra.mxu0 %v3230
        %v3773 = vpop.f32.mrf.mxu0
        %v3774 = vadd.f32 %v3611, %v3773
        %v3775 = vpop.f32.mrf.mxu0
        %v3776 = vadd.f32 %v3613, %v3775
        %3777 = vdwg.mxu0
        %3778 = vmatpush.bf16.msra.mxu0 %v3726
        %3779 = vmatpush.bf16.msra.mxu0 %v3725
        %3780 = vmatpush.bf16.msra.mxu0 %v3724
        %3781 = vmatpush.bf16.msra.mxu0 %v3723
        %3782 = vmatpush.bf16.msra.mxu0 %v3722
        %3783 = vmatpush.bf16.msra.mxu0 %v3721
        %3784 = vmatpush.bf16.msra.mxu0 %v3720
        %3785 = vmatpush.bf16.msra.mxu0 %v3719
        %3786 = vmatmul.bf16.gmra.mxu0 %v3247
        %v3787 = vpop.f32.mrf.mxu0
        %v3788 = vadd.f32 %v3769, %v3787
        %v3789 = vpop.f32.mrf.mxu0
        %v3790 = vadd.f32 %v3771, %v3789
        %3791 = vmatmul.bf16.gmra.mxu0 %v3255
        %v3792 = vpop.f32.mrf.mxu0
        %v3793 = vadd.f32 %v3774, %v3792
        %v3794 = vpop.f32.mrf.mxu0
        %v3795 = vadd.f32 %v3776, %v3794
        %3796 = vdwg.mxu0
        %3797 = vmatpush.bf16.msra.mxu0 %v3734
        %3798 = vmatpush.bf16.msra.mxu0 %v3733
        %3799 = vmatpush.bf16.msra.mxu0 %v3732
        %3800 = vmatpush.bf16.msra.mxu0 %v3731
        %3801 = vmatpush.bf16.msra.mxu0 %v3730
        %3802 = vmatpush.bf16.msra.mxu0 %v3729
        %3803 = vmatpush.bf16.msra.mxu0 %v3728
        %3804 = vmatpush.bf16.msra.mxu0 %v3727
        %3805 = vmatmul.bf16.gmra.mxu0 %v3260
        %v3806 = vpop.f32.mrf.mxu0
        %v3807 = vadd.f32 %v3788, %v3806
        %v3808 = vpop.f32.mrf.mxu0
        %v3809 = vadd.f32 %v3790, %v3808
        %3810 = vmatmul.bf16.gmra.mxu0 %v3262
        %v3811 = vpop.f32.mrf.mxu0
        %v3812 = vadd.f32 %v3793, %v3811
        %v3813 = vpop.f32.mrf.mxu0
        %v3814 = vadd.f32 %v3795, %v3813
        %3815 = vdwg.mxu0
        %s3816 = sadd.s32 %s3212, 2
        %s3817 = smul.u32 %s3816, 5
        %s3818 = smul.addr %s3817, 4
        %s3819 = scalar_lea.vmem %s182, %s3818
        %v3820 = vld [vmem:[%s3819] sm:$0xf]
        %v3821 = vld [vmem:[%s3819 + $0x4] sm:$0xf]
        %v3822 = vld [vmem:[%s3819 + $0x8] sm:$0xf]
        %v3823 = vld [vmem:[%s3819 + $0xc] sm:$0xf]
        %v3824 = vld [vmem:[%s3819 + $0x10] sm:$0x1]
        %v3829 = vunpack.c.l.b16 %v3820
        %v3830 = vunpack.c.l.b16 %v3821
        %v3831 = vunpack.c.l.b16 %v3822
        %v3832 = vunpack.c.l.b16 %v3823
        %v3833 = vpack.c.b16 %v3830, %v3829
        %v3834 = vpack.c.b16 %v3832, %v3831
        %v3838 = vunpack.c.l.b16 %v3824
        %v3839 = vpack.c.b16 %v3838, %v3838
        %v3841 = vshrl.u32 %v3833, 16
        %v3843 = vshll.u32 %v3833, 16
        %v3845 = vrot.slane %v3843, 1
        %v3846 = vor.u32 %v3841, %v3845
        %v3848 = vshll.u32 %v3834, 16
        %v3850 = vrot.slane %v3848, 1
        %v3851 = vsel %vm208, %v3846, %v3850
        %v3852 = vshrl.u32 %v3834, 16
        %v3854 = vor.u32 %v3852, %v3850
        %v3856 = vshll.u32 %v3839, 16
        %v3858 = vrot.slane %v3856, 1
        %v3859 = vsel %vm208, %v3854, %v3858
        %v3862 = vrot.slane %v3833, 1
        %v3863 = vrot.slane %v3834, 1
        %v3864 = vsel %vm231, %v3862, %v3863
        %v3865 = vrot.slane %v3839, 1
        %v3866 = vsel %vm231, %v3863, %v3865
        %v3869 = vld [vmem:[%s844] sm:$0xf]
        %v3870 = vld [vmem:[%s844 + $0x4] sm:$0xf]
        %v3871 = vld [vmem:[%s844 + $0x8] sm:$0xf]
        %v3872 = vld [vmem:[%s844 + $0xc] sm:$0xf]
        %v3873 = vld [vmem:[%s844 + $0x10] sm:$0xf]
        %v3874 = vld [vmem:[%s844 + $0x14] sm:$0xf]
        %v3875 = vld [vmem:[%s844 + $0x18] sm:$0xf]
        %v3876 = vld [vmem:[%s844 + $0x1c] sm:$0xf]
        %v3877 = vld [vmem:[%s844 + $0x20] sm:$0xf]
        %v3878 = vld [vmem:[%s844 + $0x24] sm:$0xf]
        %v3879 = vld [vmem:[%s844 + $0x28] sm:$0xf]
        %v3880 = vld [vmem:[%s844 + $0x2c] sm:$0xf]
        %v3881 = vld [vmem:[%s844 + $0x30] sm:$0xf]
        %v3882 = vld [vmem:[%s844 + $0x34] sm:$0xf]
        %v3883 = vld [vmem:[%s844 + $0x38] sm:$0xf]
        %v3884 = vld [vmem:[%s844 + $0x3c] sm:$0xf]
        %v3885 = vld [vmem:[%s844 + $0x40] sm:$0xf]
        %v3886 = vld [vmem:[%s844 + $0x44] sm:$0xf]
        %v3887 = vld [vmem:[%s844 + $0x48] sm:$0xf]
        %v3888 = vld [vmem:[%s844 + $0x4c] sm:$0xf]
        %v3889 = vld [vmem:[%s844 + $0x50] sm:$0xf]
        %v3890 = vld [vmem:[%s844 + $0x54] sm:$0xf]
        %v3891 = vld [vmem:[%s844 + $0x58] sm:$0xf]
        %v3892 = vld [vmem:[%s844 + $0x5c] sm:$0xf]
        %v3893 = vld [vmem:[%s844 + $0x60] sm:$0xf]
        %v3894 = vld [vmem:[%s844 + $0x64] sm:$0xf]
        %v3895 = vld [vmem:[%s844 + $0x68] sm:$0xf]
        %v3896 = vld [vmem:[%s844 + $0x6c] sm:$0xf]
        %v3897 = vld [vmem:[%s844 + $0x70] sm:$0xf]
        %v3898 = vld [vmem:[%s844 + $0x74] sm:$0xf]
        %v3899 = vld [vmem:[%s844 + $0x78] sm:$0xf]
        %v3900 = vld [vmem:[%s844 + $0x7c] sm:$0xf]
        %v3901 = vld [vmem:[%s844 + $0x80] sm:$0xf]
        %v3902 = vld [vmem:[%s844 + $0x84] sm:$0xf]
        %v3903 = vld [vmem:[%s844 + $0x88] sm:$0xf]
        %v3904 = vld [vmem:[%s844 + $0x8c] sm:$0xf]
        %v3905 = vld [vmem:[%s844 + $0x90] sm:$0xf]
        %v3906 = vld [vmem:[%s844 + $0x94] sm:$0xf]
        %v3907 = vld [vmem:[%s844 + $0x98] sm:$0xf]
        %v3908 = vld [vmem:[%s844 + $0x9c] sm:$0xf]
        %v3909 = vld [vmem:[%s844 + $0xa0] sm:$0xf]
        %v3910 = vld [vmem:[%s844 + $0xa4] sm:$0xf]
        %v3911 = vld [vmem:[%s844 + $0xa8] sm:$0xf]
        %v3912 = vld [vmem:[%s844 + $0xac] sm:$0xf]
        %v3913 = vld [vmem:[%s844 + $0xb0] sm:$0xf]
        %v3914 = vld [vmem:[%s844 + $0xb4] sm:$0xf]
        %v3915 = vld [vmem:[%s844 + $0xb8] sm:$0xf]
        %v3916 = vld [vmem:[%s844 + $0xbc] sm:$0xf]
        %v3965 = vunpack.c.l.b16 %v3869
        %v3966 = vunpack.c.l.b16 %v3870
        %v3967 = vunpack.c.l.b16 %v3871
        %v3968 = vunpack.c.l.b16 %v3872
        %v3969 = vunpack.c.l.b16 %v3873
        %v3970 = vunpack.c.l.b16 %v3874
        %v3971 = vunpack.c.l.b16 %v3875
        %v3972 = vunpack.c.l.b16 %v3876
        %v3973 = vunpack.c.l.b16 %v3877
        %v3974 = vunpack.c.l.b16 %v3878
        %v3975 = vunpack.c.l.b16 %v3879
        %v3976 = vunpack.c.l.b16 %v3880
        %v3977 = vunpack.c.l.b16 %v3881
        %v3978 = vunpack.c.l.b16 %v3882
        %v3979 = vunpack.c.l.b16 %v3883
        %v3980 = vunpack.c.l.b16 %v3884
        %v3981 = vunpack.c.l.b16 %v3885
        %v3982 = vunpack.c.l.b16 %v3886
        %v3983 = vunpack.c.l.b16 %v3887
        %v3984 = vunpack.c.l.b16 %v3888
        %v3985 = vunpack.c.l.b16 %v3889
        %v3986 = vunpack.c.l.b16 %v3890
        %v3987 = vunpack.c.l.b16 %v3891
        %v3988 = vunpack.c.l.b16 %v3892
        %v3989 = vunpack.c.l.b16 %v3893
        %v3990 = vunpack.c.l.b16 %v3894
        %v3991 = vunpack.c.l.b16 %v3895
        %v3992 = vunpack.c.l.b16 %v3896
        %v3993 = vunpack.c.l.b16 %v3897
        %v3994 = vunpack.c.l.b16 %v3898
        %v3995 = vunpack.c.l.b16 %v3899
        %v3996 = vunpack.c.l.b16 %v3900
        %v3997 = vunpack.c.l.b16 %v3901
        %v3998 = vunpack.c.l.b16 %v3902
        %v3999 = vunpack.c.l.b16 %v3903
        %v4000 = vunpack.c.l.b16 %v3904
        %v4001 = vunpack.c.l.b16 %v3905
        %v4002 = vunpack.c.l.b16 %v3906
        %v4003 = vunpack.c.l.b16 %v3907
        %v4004 = vunpack.c.l.b16 %v3908
        %v4005 = vunpack.c.l.b16 %v3909
        %v4006 = vunpack.c.l.b16 %v3910
        %v4007 = vunpack.c.l.b16 %v3911
        %v4008 = vunpack.c.l.b16 %v3912
        %v4009 = vunpack.c.l.b16 %v3913
        %v4010 = vunpack.c.l.b16 %v3914
        %v4011 = vunpack.c.l.b16 %v3915
        %v4012 = vunpack.c.l.b16 %v3916
        %v4013 = vpack.c.b16 %v3966, %v3965
        %v4014 = vpack.c.b16 %v3968, %v3967
        %v4015 = vpack.c.b16 %v3970, %v3969
        %v4016 = vpack.c.b16 %v3972, %v3971
        %v4017 = vpack.c.b16 %v3974, %v3973
        %v4018 = vpack.c.b16 %v3976, %v3975
        %v4019 = vpack.c.b16 %v3978, %v3977
        %v4020 = vpack.c.b16 %v3980, %v3979
        %v4021 = vpack.c.b16 %v3982, %v3981
        %v4022 = vpack.c.b16 %v3984, %v3983
        %v4023 = vpack.c.b16 %v3986, %v3985
        %v4024 = vpack.c.b16 %v3988, %v3987
        %v4025 = vpack.c.b16 %v3990, %v3989
        %v4026 = vpack.c.b16 %v3992, %v3991
        %v4027 = vpack.c.b16 %v3994, %v3993
        %v4028 = vpack.c.b16 %v3996, %v3995
        %v4029 = vpack.c.b16 %v3998, %v3997
        %v4030 = vpack.c.b16 %v4000, %v3999
        %v4031 = vpack.c.b16 %v4002, %v4001
        %v4032 = vpack.c.b16 %v4004, %v4003
        %v4033 = vpack.c.b16 %v4006, %v4005
        %v4034 = vpack.c.b16 %v4008, %v4007
        %v4035 = vpack.c.b16 %v4010, %v4009
        %v4036 = vpack.c.b16 %v4012, %v4011
        %4061 = vmatpush.bf16.msra.mxu0 %v4020
        %4062 = vmatpush.bf16.msra.mxu0 %v4019
        %4063 = vmatpush.bf16.msra.mxu0 %v4018
        %4064 = vmatpush.bf16.msra.mxu0 %v4017
        %4065 = vmatpush.bf16.msra.mxu0 %v4016
        %4066 = vmatpush.bf16.msra.mxu0 %v4015
        %4067 = vmatpush.bf16.msra.mxu0 %v4014
        %4068 = vmatpush.bf16.msra.mxu0 %v4013
        %4069 = vmatmul.bf16.gmra.mxu0 %v3833
        %v4070 = vpop.f32.mrf.mxu0
        %v4071 = vadd.f32 0.0, %v4070
        %v4072 = vpop.f32.mrf.mxu0
        %v4073 = vadd.f32 0.0, %v4072
        %4074 = vmatmul.bf16.gmra.mxu0 %v3834
        %v4075 = vpop.f32.mrf.mxu0
        %v4076 = vadd.f32 0.0, %v4075
        %v4077 = vpop.f32.mrf.mxu0
        %v4078 = vadd.f32 0.0, %v4077
        %4079 = vdwg.mxu0
        %4080 = vmatpush.bf16.msra.mxu0 %v4028
        %4081 = vmatpush.bf16.msra.mxu0 %v4027
        %4082 = vmatpush.bf16.msra.mxu0 %v4026
        %4083 = vmatpush.bf16.msra.mxu0 %v4025
        %4084 = vmatpush.bf16.msra.mxu0 %v4024
        %4085 = vmatpush.bf16.msra.mxu0 %v4023
        %4086 = vmatpush.bf16.msra.mxu0 %v4022
        %4087 = vmatpush.bf16.msra.mxu0 %v4021
        %4088 = vmatmul.bf16.gmra.mxu0 %v3851
        %v4089 = vpop.f32.mrf.mxu0
        %v4090 = vadd.f32 %v4071, %v4089
        %v4091 = vpop.f32.mrf.mxu0
        %v4092 = vadd.f32 %v4073, %v4091
        %4093 = vmatmul.bf16.gmra.mxu0 %v3859
        %v4094 = vpop.f32.mrf.mxu0
        %v4095 = vadd.f32 %v4076, %v4094
        %v4096 = vpop.f32.mrf.mxu0
        %v4097 = vadd.f32 %v4078, %v4096
        %4098 = vdwg.mxu0
        %4099 = vmatpush.bf16.msra.mxu0 %v4036
        %4100 = vmatpush.bf16.msra.mxu0 %v4035
        %4101 = vmatpush.bf16.msra.mxu0 %v4034
        %4102 = vmatpush.bf16.msra.mxu0 %v4033
        %4103 = vmatpush.bf16.msra.mxu0 %v4032
        %4104 = vmatpush.bf16.msra.mxu0 %v4031
        %4105 = vmatpush.bf16.msra.mxu0 %v4030
        %4106 = vmatpush.bf16.msra.mxu0 %v4029
        %4107 = vmatmul.bf16.gmra.mxu0 %v3864
        %v4108 = vpop.f32.mrf.mxu0
        %v4109 = vadd.f32 %v4090, %v4108
        %v4110 = vpop.f32.mrf.mxu0
        %v4111 = vadd.f32 %v4092, %v4110
        %4112 = vmatmul.bf16.gmra.mxu0 %v3866
        %v4113 = vpop.f32.mrf.mxu0
        %v4114 = vadd.f32 %v4095, %v4113
        %v4115 = vpop.f32.mrf.mxu0
        %v4116 = vadd.f32 %v4097, %v4115
        %4117 = vdwg.mxu0
        %v4118 = vadd.f32 %v3807, %v4109
        %v4119 = vadd.f32 %v3809, %v4111
        %v4120 = vadd.f32 %v3812, %v4114
        %v4121 = vadd.f32 %v3814, %v4116
        %v4122 = vld [vmem:[%s2] sm:$0x1]
        %v4124 = vperm.slane %v4122, 0
        %v4126 = vadd.f32 %v4118, %v4124
        %v4127 = vadd.f32 %v4119, %v4124
        %v4128 = vadd.f32 %v4120, %v4124
        %v4129 = vadd.f32 %v4121, %v4124
        %v4130 = vxor.u32 %v4126, 2147483648
        %v4131 = vxor.u32 %v4127, 2147483648
        %v4132 = vxor.u32 %v4128, 2147483648
        %v4133 = vxor.u32 %v4129, 2147483648
        %v4134 = vmul.f32 %v4130, 1.442695
        %v4135 = vpow.pop %v4134
        %v4136 = vmul.f32 %v4131, 1.442695
        %v4137 = vpow.pop %v4136
        %v4138 = vmul.f32 %v4132, 1.442695
        %v4139 = vpow.pop %v4138
        %v4140 = vmul.f32 %v4133, 1.442695
        %v4141 = vpow.pop %v4140
        %v4142 = vadd.f32 %v4135, 1.0
        %v4143 = vadd.f32 %v4137, 1.0
        %v4144 = vadd.f32 %v4139, 1.0
        %v4145 = vadd.f32 %v4141, 1.0
        %v4146 = vrcp.pop %v4142
        %v4147 = vmul.f32 %v4142, %v4146
        %v4148 = vsub.f32 1.0, %v4147
        %v4149 = vmul.f32 %v4146, %v4148
        %v4150 = vadd.f32 %v4146, %v4149
        %vm4151 = vweird.f32 %v4142
        %vm4152 = vweird.f32 %v4146
        %vm4153 = vmor %vm4151, %vm4152
        %v4154 = vsel %vm4153, %v4146, %v4150
        %v4155 = vand.u32 2147483647, %v4142
        %vm4156 = vcmp.eq.f32.partialorder %v4155, 8.507059e+37
        %v4157 = vand.u32 %v4142, 2147483648
        %v4158 = vor.u32 1.1754944e-38, %v4157
        %v4159 = vsel %vm4156, %v4158, %v4154
        %v4160 = vmul.f32 1.0, %v4159
        %v4161 = vrcp.pop %v4143
        %v4162 = vmul.f32 %v4143, %v4161
        %v4163 = vsub.f32 1.0, %v4162
        %v4164 = vmul.f32 %v4161, %v4163
        %v4165 = vadd.f32 %v4161, %v4164
        %vm4166 = vweird.f32 %v4143
        %vm4167 = vweird.f32 %v4161
        %vm4168 = vmor %vm4166, %vm4167
        %v4169 = vsel %vm4168, %v4161, %v4165
        %v4170 = vand.u32 2147483647, %v4143
        %vm4171 = vcmp.eq.f32.partialorder %v4170, 8.507059e+37
        %v4172 = vand.u32 %v4143, 2147483648
        %v4173 = vor.u32 1.1754944e-38, %v4172
        %v4174 = vsel %vm4171, %v4173, %v4169
        %v4175 = vmul.f32 1.0, %v4174
        %v4176 = vrcp.pop %v4144
        %v4177 = vmul.f32 %v4144, %v4176
        %v4178 = vsub.f32 1.0, %v4177
        %v4179 = vmul.f32 %v4176, %v4178
        %v4180 = vadd.f32 %v4176, %v4179
        %vm4181 = vweird.f32 %v4144
        %vm4182 = vweird.f32 %v4176
        %vm4183 = vmor %vm4181, %vm4182
        %v4184 = vsel %vm4183, %v4176, %v4180
        %v4185 = vand.u32 2147483647, %v4144
        %vm4186 = vcmp.eq.f32.partialorder %v4185, 8.507059e+37
        %v4187 = vand.u32 %v4144, 2147483648
        %v4188 = vor.u32 1.1754944e-38, %v4187
        %v4189 = vsel %vm4186, %v4188, %v4184
        %v4190 = vmul.f32 1.0, %v4189
        %v4191 = vrcp.pop %v4145
        %v4192 = vmul.f32 %v4145, %v4191
        %v4193 = vsub.f32 1.0, %v4192
        %v4194 = vmul.f32 %v4191, %v4193
        %v4195 = vadd.f32 %v4191, %v4194
        %vm4196 = vweird.f32 %v4145
        %vm4197 = vweird.f32 %v4191
        %vm4198 = vmor %vm4196, %vm4197
        %v4199 = vsel %vm4198, %v4191, %v4195
        %v4200 = vand.u32 2147483647, %v4145
        %vm4201 = vcmp.eq.f32.partialorder %v4200, 8.507059e+37
        %v4202 = vand.u32 %v4145, 2147483648
        %v4203 = vor.u32 1.1754944e-38, %v4202
        %v4204 = vsel %vm4201, %v4203, %v4199
        %v4205 = vmul.f32 1.0, %v4204
        %v4206 = vmul.f32 %v4126, %v4160
        %v4207 = vmul.f32 %v4127, %v4175
        %v4208 = vmul.f32 %v4128, %v4190
        %v4209 = vmul.f32 %v4129, %v4205
        %v4210 = vpack.c.bf16 %v4206, %v4206
        %v4211 = vpack.c.bf16 %v4207, %v4207
        %v4212 = vpack.c.bf16 %v4208, %v4208
        %v4213 = vpack.c.bf16 %v4209, %v4209
        %s4214 = scalar_lea.vmem %s177, 48 [#allocation2]
        %4215 = vst [vmem:[%s4214] sm:$0xf] %v4210
        %4216 = vst [vmem:[%s4214 + $0x4] sm:$0xf] %v4211
        %4217 = vst [vmem:[%s4214 + $0x8] sm:$0xf] %v4212
        %4218 = vst [vmem:[%s4214 + $0xc] sm:$0xf] %v4213
        %s4219 = sadd.s32 %s1194, 4
        %s4220 = smul.u32 %s4219, 2
        %s4221 = smul.u32 %s4220, 5
        %s4222 = smul.addr %s4221, 4
        %s4223 = scalar_lea.vmem %s182, %s4222
        %v4224 = vld [vmem:[%s4223] sm:$0xf]
        %v4225 = vld [vmem:[%s4223 + $0x4] sm:$0xf]
        %v4226 = vld [vmem:[%s4223 + $0x8] sm:$0xf]
        %v4227 = vld [vmem:[%s4223 + $0xc] sm:$0xf]
        %v4228 = vld [vmem:[%s4223 + $0x10] sm:$0x1]
        %v4233 = vunpack.c.l.b16 %v4224
        %v4234 = vunpack.c.l.b16 %v4225
        %v4235 = vunpack.c.l.b16 %v4226
        %v4236 = vunpack.c.l.b16 %v4227
        %v4237 = vpack.c.b16 %v4234, %v4233
        %v4238 = vpack.c.b16 %v4236, %v4235
        %v4242 = vunpack.c.l.b16 %v4228
        %v4243 = vpack.c.b16 %v4242, %v4242
        %v4245 = vshrl.u32 %v4237, 16
        %v4247 = vshll.u32 %v4237, 16
        %v4249 = vrot.slane %v4247, 1
        %v4250 = vor.u32 %v4245, %v4249
        %v4252 = vshll.u32 %v4238, 16
        %v4254 = vrot.slane %v4252, 1
        %v4255 = vsel %vm208, %v4250, %v4254
        %v4256 = vshrl.u32 %v4238, 16
        %v4258 = vor.u32 %v4256, %v4254
        %v4260 = vshll.u32 %v4243, 16
        %v4262 = vrot.slane %v4260, 1
        %v4263 = vsel %vm208, %v4258, %v4262
        %v4266 = vrot.slane %v4237, 1
        %v4267 = vrot.slane %v4238, 1
        %v4268 = vsel %vm231, %v4266, %v4267
        %v4269 = vrot.slane %v4243, 1
        %v4270 = vsel %vm231, %v4267, %v4269
        %v4273 = vld [vmem:[%s1] sm:$0xf]
        %v4274 = vld [vmem:[%s1 + $0x4] sm:$0xf]
        %v4275 = vld [vmem:[%s1 + $0x8] sm:$0xf]
        %v4276 = vld [vmem:[%s1 + $0xc] sm:$0xf]
        %v4277 = vld [vmem:[%s1 + $0x10] sm:$0xf]
        %v4278 = vld [vmem:[%s1 + $0x14] sm:$0xf]
        %v4279 = vld [vmem:[%s1 + $0x18] sm:$0xf]
        %v4280 = vld [vmem:[%s1 + $0x1c] sm:$0xf]
        %v4281 = vld [vmem:[%s1 + $0x20] sm:$0xf]
        %v4282 = vld [vmem:[%s1 + $0x24] sm:$0xf]
        %v4283 = vld [vmem:[%s1 + $0x28] sm:$0xf]
        %v4284 = vld [vmem:[%s1 + $0x2c] sm:$0xf]
        %v4285 = vld [vmem:[%s1 + $0x30] sm:$0xf]
        %v4286 = vld [vmem:[%s1 + $0x34] sm:$0xf]
        %v4287 = vld [vmem:[%s1 + $0x38] sm:$0xf]
        %v4288 = vld [vmem:[%s1 + $0x3c] sm:$0xf]
        %v4289 = vld [vmem:[%s1 + $0x40] sm:$0xf]
        %v4290 = vld [vmem:[%s1 + $0x44] sm:$0xf]
        %v4291 = vld [vmem:[%s1 + $0x48] sm:$0xf]
        %v4292 = vld [vmem:[%s1 + $0x4c] sm:$0xf]
        %v4293 = vld [vmem:[%s1 + $0x50] sm:$0xf]
        %v4294 = vld [vmem:[%s1 + $0x54] sm:$0xf]
        %v4295 = vld [vmem:[%s1 + $0x58] sm:$0xf]
        %v4296 = vld [vmem:[%s1 + $0x5c] sm:$0xf]
        %v4297 = vld [vmem:[%s1 + $0x60] sm:$0xf]
        %v4298 = vld [vmem:[%s1 + $0x64] sm:$0xf]
        %v4299 = vld [vmem:[%s1 + $0x68] sm:$0xf]
        %v4300 = vld [vmem:[%s1 + $0x6c] sm:$0xf]
        %v4301 = vld [vmem:[%s1 + $0x70] sm:$0xf]
        %v4302 = vld [vmem:[%s1 + $0x74] sm:$0xf]
        %v4303 = vld [vmem:[%s1 + $0x78] sm:$0xf]
        %v4304 = vld [vmem:[%s1 + $0x7c] sm:$0xf]
        %v4305 = vld [vmem:[%s1 + $0x80] sm:$0xf]
        %v4306 = vld [vmem:[%s1 + $0x84] sm:$0xf]
        %v4307 = vld [vmem:[%s1 + $0x88] sm:$0xf]
        %v4308 = vld [vmem:[%s1 + $0x8c] sm:$0xf]
        %v4309 = vld [vmem:[%s1 + $0x90] sm:$0xf]
        %v4310 = vld [vmem:[%s1 + $0x94] sm:$0xf]
        %v4311 = vld [vmem:[%s1 + $0x98] sm:$0xf]
        %v4312 = vld [vmem:[%s1 + $0x9c] sm:$0xf]
        %v4313 = vld [vmem:[%s1 + $0xa0] sm:$0xf]
        %v4314 = vld [vmem:[%s1 + $0xa4] sm:$0xf]
        %v4315 = vld [vmem:[%s1 + $0xa8] sm:$0xf]
        %v4316 = vld [vmem:[%s1 + $0xac] sm:$0xf]
        %v4317 = vld [vmem:[%s1 + $0xb0] sm:$0xf]
        %v4318 = vld [vmem:[%s1 + $0xb4] sm:$0xf]
        %v4319 = vld [vmem:[%s1 + $0xb8] sm:$0xf]
        %v4320 = vld [vmem:[%s1 + $0xbc] sm:$0xf]
        %s4321 = sadd.s32 %s4220, 1
        %s4322 = smul.u32 %s4321, 5
        %s4323 = smul.addr %s4322, 4
        %s4324 = scalar_lea.vmem %s182, %s4323
        %v4325 = vld [vmem:[%s4324] sm:$0xf]
        %v4326 = vld [vmem:[%s4324 + $0x4] sm:$0xf]
        %v4327 = vld [vmem:[%s4324 + $0x8] sm:$0xf]
        %v4328 = vld [vmem:[%s4324 + $0xc] sm:$0xf]
        %v4329 = vld [vmem:[%s4324 + $0x10] sm:$0x1]
        %v4334 = vunpack.c.l.b16 %v4325
        %v4335 = vunpack.c.l.b16 %v4326
        %v4336 = vunpack.c.l.b16 %v4327
        %v4337 = vunpack.c.l.b16 %v4328
        %v4338 = vpack.c.b16 %v4335, %v4334
        %v4339 = vpack.c.b16 %v4337, %v4336
        %v4343 = vunpack.c.l.b16 %v4329
        %v4344 = vpack.c.b16 %v4343, %v4343
        %v4346 = vshrl.u32 %v4338, 16
        %v4348 = vshll.u32 %v4338, 16
        %v4350 = vrot.slane %v4348, 1
        %v4351 = vor.u32 %v4346, %v4350
        %v4353 = vshll.u32 %v4339, 16
        %v4355 = vrot.slane %v4353, 1
        %v4356 = vsel %vm208, %v4351, %v4355
        %v4357 = vshrl.u32 %v4339, 16
        %v4359 = vor.u32 %v4357, %v4355
        %v4361 = vshll.u32 %v4344, 16
        %v4363 = vrot.slane %v4361, 1
        %v4364 = vsel %vm208, %v4359, %v4363
        %v4367 = vrot.slane %v4338, 1
        %v4368 = vrot.slane %v4339, 1
        %v4369 = vsel %vm231, %v4367, %v4368
        %v4370 = vrot.slane %v4344, 1
        %v4371 = vsel %vm231, %v4368, %v4370
        %v4374 = vld [vmem:[%s340] sm:$0xf]
        %v4375 = vld [vmem:[%s340 + $0x4] sm:$0xf]
        %v4376 = vld [vmem:[%s340 + $0x8] sm:$0xf]
        %v4377 = vld [vmem:[%s340 + $0xc] sm:$0xf]
        %v4378 = vld [vmem:[%s340 + $0x10] sm:$0xf]
        %v4379 = vld [vmem:[%s340 + $0x14] sm:$0xf]
        %v4380 = vld [vmem:[%s340 + $0x18] sm:$0xf]
        %v4381 = vld [vmem:[%s340 + $0x1c] sm:$0xf]
        %v4382 = vld [vmem:[%s340 + $0x20] sm:$0xf]
        %v4383 = vld [vmem:[%s340 + $0x24] sm:$0xf]
        %v4384 = vld [vmem:[%s340 + $0x28] sm:$0xf]
        %v4385 = vld [vmem:[%s340 + $0x2c] sm:$0xf]
        %v4386 = vld [vmem:[%s340 + $0x30] sm:$0xf]
        %v4387 = vld [vmem:[%s340 + $0x34] sm:$0xf]
        %v4388 = vld [vmem:[%s340 + $0x38] sm:$0xf]
        %v4389 = vld [vmem:[%s340 + $0x3c] sm:$0xf]
        %v4390 = vld [vmem:[%s340 + $0x40] sm:$0xf]
        %v4391 = vld [vmem:[%s340 + $0x44] sm:$0xf]
        %v4392 = vld [vmem:[%s340 + $0x48] sm:$0xf]
        %v4393 = vld [vmem:[%s340 + $0x4c] sm:$0xf]
        %v4394 = vld [vmem:[%s340 + $0x50] sm:$0xf]
        %v4395 = vld [vmem:[%s340 + $0x54] sm:$0xf]
        %v4396 = vld [vmem:[%s340 + $0x58] sm:$0xf]
        %v4397 = vld [vmem:[%s340 + $0x5c] sm:$0xf]
        %v4398 = vld [vmem:[%s340 + $0x60] sm:$0xf]
        %v4399 = vld [vmem:[%s340 + $0x64] sm:$0xf]
        %v4400 = vld [vmem:[%s340 + $0x68] sm:$0xf]
        %v4401 = vld [vmem:[%s340 + $0x6c] sm:$0xf]
        %v4402 = vld [vmem:[%s340 + $0x70] sm:$0xf]
        %v4403 = vld [vmem:[%s340 + $0x74] sm:$0xf]
        %v4404 = vld [vmem:[%s340 + $0x78] sm:$0xf]
        %v4405 = vld [vmem:[%s340 + $0x7c] sm:$0xf]
        %v4406 = vld [vmem:[%s340 + $0x80] sm:$0xf]
        %v4407 = vld [vmem:[%s340 + $0x84] sm:$0xf]
        %v4408 = vld [vmem:[%s340 + $0x88] sm:$0xf]
        %v4409 = vld [vmem:[%s340 + $0x8c] sm:$0xf]
        %v4410 = vld [vmem:[%s340 + $0x90] sm:$0xf]
        %v4411 = vld [vmem:[%s340 + $0x94] sm:$0xf]
        %v4412 = vld [vmem:[%s340 + $0x98] sm:$0xf]
        %v4413 = vld [vmem:[%s340 + $0x9c] sm:$0xf]
        %v4414 = vld [vmem:[%s340 + $0xa0] sm:$0xf]
        %v4415 = vld [vmem:[%s340 + $0xa4] sm:$0xf]
        %v4416 = vld [vmem:[%s340 + $0xa8] sm:$0xf]
        %v4417 = vld [vmem:[%s340 + $0xac] sm:$0xf]
        %v4418 = vld [vmem:[%s340 + $0xb0] sm:$0xf]
        %v4419 = vld [vmem:[%s340 + $0xb4] sm:$0xf]
        %v4420 = vld [vmem:[%s340 + $0xb8] sm:$0xf]
        %v4421 = vld [vmem:[%s340 + $0xbc] sm:$0xf]
        %v4470 = vunpack.c.l.b16 %v4374
        %v4471 = vunpack.c.l.b16 %v4375
        %v4472 = vunpack.c.l.b16 %v4376
        %v4473 = vunpack.c.l.b16 %v4377
        %v4474 = vunpack.c.l.b16 %v4378
        %v4475 = vunpack.c.l.b16 %v4379
        %v4476 = vunpack.c.l.b16 %v4380
        %v4477 = vunpack.c.l.b16 %v4381
        %v4478 = vunpack.c.l.b16 %v4382
        %v4479 = vunpack.c.l.b16 %v4383
        %v4480 = vunpack.c.l.b16 %v4384
        %v4481 = vunpack.c.l.b16 %v4385
        %v4482 = vunpack.c.l.b16 %v4386
        %v4483 = vunpack.c.l.b16 %v4387
        %v4484 = vunpack.c.l.b16 %v4388
        %v4485 = vunpack.c.l.b16 %v4389
        %v4486 = vunpack.c.l.b16 %v4390
        %v4487 = vunpack.c.l.b16 %v4391
        %v4488 = vunpack.c.l.b16 %v4392
        %v4489 = vunpack.c.l.b16 %v4393
        %v4490 = vunpack.c.l.b16 %v4394
        %v4491 = vunpack.c.l.b16 %v4395
        %v4492 = vunpack.c.l.b16 %v4396
        %v4493 = vunpack.c.l.b16 %v4397
        %v4494 = vunpack.c.l.b16 %v4398
        %v4495 = vunpack.c.l.b16 %v4399
        %v4496 = vunpack.c.l.b16 %v4400
        %v4497 = vunpack.c.l.b16 %v4401
        %v4498 = vunpack.c.l.b16 %v4402
        %v4499 = vunpack.c.l.b16 %v4403
        %v4500 = vunpack.c.l.b16 %v4404
        %v4501 = vunpack.c.l.b16 %v4405
        %v4502 = vunpack.c.l.b16 %v4406
        %v4503 = vunpack.c.l.b16 %v4407
        %v4504 = vunpack.c.l.b16 %v4408
        %v4505 = vunpack.c.l.b16 %v4409
        %v4506 = vunpack.c.l.b16 %v4410
        %v4507 = vunpack.c.l.b16 %v4411
        %v4508 = vunpack.c.l.b16 %v4412
        %v4509 = vunpack.c.l.b16 %v4413
        %v4510 = vunpack.c.l.b16 %v4414
        %v4511 = vunpack.c.l.b16 %v4415
        %v4512 = vunpack.c.l.b16 %v4416
        %v4513 = vunpack.c.l.b16 %v4417
        %v4514 = vunpack.c.l.b16 %v4418
        %v4515 = vunpack.c.l.b16 %v4419
        %v4516 = vunpack.c.l.b16 %v4420
        %v4517 = vunpack.c.l.b16 %v4421
        %v4518 = vpack.c.b16 %v4471, %v4470
        %v4519 = vpack.c.b16 %v4473, %v4472
        %v4520 = vpack.c.b16 %v4475, %v4474
        %v4521 = vpack.c.b16 %v4477, %v4476
        %v4522 = vpack.c.b16 %v4479, %v4478
        %v4523 = vpack.c.b16 %v4481, %v4480
        %v4524 = vpack.c.b16 %v4483, %v4482
        %v4525 = vpack.c.b16 %v4485, %v4484
        %v4526 = vpack.c.b16 %v4487, %v4486
        %v4527 = vpack.c.b16 %v4489, %v4488
        %v4528 = vpack.c.b16 %v4491, %v4490
        %v4529 = vpack.c.b16 %v4493, %v4492
        %v4530 = vpack.c.b16 %v4495, %v4494
        %v4531 = vpack.c.b16 %v4497, %v4496
        %v4532 = vpack.c.b16 %v4499, %v4498
        %v4533 = vpack.c.b16 %v4501, %v4500
        %v4534 = vpack.c.b16 %v4503, %v4502
        %v4535 = vpack.c.b16 %v4505, %v4504
        %v4536 = vpack.c.b16 %v4507, %v4506
        %v4537 = vpack.c.b16 %v4509, %v4508
        %v4538 = vpack.c.b16 %v4511, %v4510
        %v4539 = vpack.c.b16 %v4513, %v4512
        %v4540 = vpack.c.b16 %v4515, %v4514
        %v4541 = vpack.c.b16 %v4517, %v4516
        %4566 = vmatpush.bf16.msra.mxu0 %v4525
        %4567 = vmatpush.bf16.msra.mxu0 %v4524
        %4568 = vmatpush.bf16.msra.mxu0 %v4523
        %4569 = vmatpush.bf16.msra.mxu0 %v4522
        %4570 = vmatpush.bf16.msra.mxu0 %v4521
        %4571 = vmatpush.bf16.msra.mxu0 %v4520
        %4572 = vmatpush.bf16.msra.mxu0 %v4519
        %4573 = vmatpush.bf16.msra.mxu0 %v4518
        %4574 = vmatmul.bf16.gmra.mxu0 %v4338
        %v4575 = vpop.f32.mrf.mxu0
        %v4576 = vadd.f32 0.0, %v4575
        %v4577 = vpop.f32.mrf.mxu0
        %v4578 = vadd.f32 0.0, %v4577
        %4579 = vmatmul.bf16.gmra.mxu0 %v4339
        %v4580 = vpop.f32.mrf.mxu0
        %v4581 = vadd.f32 0.0, %v4580
        %v4582 = vpop.f32.mrf.mxu0
        %v4583 = vadd.f32 0.0, %v4582
        %4584 = vdwg.mxu0
        %4585 = vmatpush.bf16.msra.mxu0 %v4533
        %4586 = vmatpush.bf16.msra.mxu0 %v4532
        %4587 = vmatpush.bf16.msra.mxu0 %v4531
        %4588 = vmatpush.bf16.msra.mxu0 %v4530
        %4589 = vmatpush.bf16.msra.mxu0 %v4529
        %4590 = vmatpush.bf16.msra.mxu0 %v4528
        %4591 = vmatpush.bf16.msra.mxu0 %v4527
        %4592 = vmatpush.bf16.msra.mxu0 %v4526
        %4593 = vmatmul.bf16.gmra.mxu0 %v4356
        %v4594 = vpop.f32.mrf.mxu0
        %v4595 = vadd.f32 %v4576, %v4594
        %v4596 = vpop.f32.mrf.mxu0
        %v4597 = vadd.f32 %v4578, %v4596
        %4598 = vmatmul.bf16.gmra.mxu0 %v4364
        %v4599 = vpop.f32.mrf.mxu0
        %v4600 = vadd.f32 %v4581, %v4599
        %v4601 = vpop.f32.mrf.mxu0
        %v4602 = vadd.f32 %v4583, %v4601
        %4603 = vdwg.mxu0
        %4604 = vmatpush.bf16.msra.mxu0 %v4541
        %4605 = vmatpush.bf16.msra.mxu0 %v4540
        %4606 = vmatpush.bf16.msra.mxu0 %v4539
        %4607 = vmatpush.bf16.msra.mxu0 %v4538
        %4608 = vmatpush.bf16.msra.mxu0 %v4537
        %4609 = vmatpush.bf16.msra.mxu0 %v4536
        %4610 = vmatpush.bf16.msra.mxu0 %v4535
        %4611 = vmatpush.bf16.msra.mxu0 %v4534
        %4612 = vmatmul.bf16.gmra.mxu0 %v4369
        %v4613 = vpop.f32.mrf.mxu0
        %v4614 = vadd.f32 %v4595, %v4613
        %v4615 = vpop.f32.mrf.mxu0
        %v4616 = vadd.f32 %v4597, %v4615
        %4617 = vmatmul.bf16.gmra.mxu0 %v4371
        %v4618 = vpop.f32.mrf.mxu0
        %v4619 = vadd.f32 %v4600, %v4618
        %v4620 = vpop.f32.mrf.mxu0
        %v4621 = vadd.f32 %v4602, %v4620
        %4622 = vdwg.mxu0
        %v4671 = vunpack.c.l.b16 %v4273
        %v4672 = vunpack.c.l.b16 %v4274
        %v4673 = vunpack.c.l.b16 %v4275
        %v4674 = vunpack.c.l.b16 %v4276
        %v4675 = vunpack.c.l.b16 %v4277
        %v4676 = vunpack.c.l.b16 %v4278
        %v4677 = vunpack.c.l.b16 %v4279
        %v4678 = vunpack.c.l.b16 %v4280
        %v4679 = vunpack.c.l.b16 %v4281
        %v4680 = vunpack.c.l.b16 %v4282
        %v4681 = vunpack.c.l.b16 %v4283
        %v4682 = vunpack.c.l.b16 %v4284
        %v4683 = vunpack.c.l.b16 %v4285
        %v4684 = vunpack.c.l.b16 %v4286
        %v4685 = vunpack.c.l.b16 %v4287
        %v4686 = vunpack.c.l.b16 %v4288
        %v4687 = vunpack.c.l.b16 %v4289
        %v4688 = vunpack.c.l.b16 %v4290
        %v4689 = vunpack.c.l.b16 %v4291
        %v4690 = vunpack.c.l.b16 %v4292
        %v4691 = vunpack.c.l.b16 %v4293
        %v4692 = vunpack.c.l.b16 %v4294
        %v4693 = vunpack.c.l.b16 %v4295
        %v4694 = vunpack.c.l.b16 %v4296
        %v4695 = vunpack.c.l.b16 %v4297
        %v4696 = vunpack.c.l.b16 %v4298
        %v4697 = vunpack.c.l.b16 %v4299
        %v4698 = vunpack.c.l.b16 %v4300
        %v4699 = vunpack.c.l.b16 %v4301
        %v4700 = vunpack.c.l.b16 %v4302
        %v4701 = vunpack.c.l.b16 %v4303
        %v4702 = vunpack.c.l.b16 %v4304
        %v4703 = vunpack.c.l.b16 %v4305
        %v4704 = vunpack.c.l.b16 %v4306
        %v4705 = vunpack.c.l.b16 %v4307
        %v4706 = vunpack.c.l.b16 %v4308
        %v4707 = vunpack.c.l.b16 %v4309
        %v4708 = vunpack.c.l.b16 %v4310
        %v4709 = vunpack.c.l.b16 %v4311
        %v4710 = vunpack.c.l.b16 %v4312
        %v4711 = vunpack.c.l.b16 %v4313
        %v4712 = vunpack.c.l.b16 %v4314
        %v4713 = vunpack.c.l.b16 %v4315
        %v4714 = vunpack.c.l.b16 %v4316
        %v4715 = vunpack.c.l.b16 %v4317
        %v4716 = vunpack.c.l.b16 %v4318
        %v4717 = vunpack.c.l.b16 %v4319
        %v4718 = vunpack.c.l.b16 %v4320
        %v4719 = vpack.c.b16 %v4672, %v4671
        %v4720 = vpack.c.b16 %v4674, %v4673
        %v4721 = vpack.c.b16 %v4676, %v4675
        %v4722 = vpack.c.b16 %v4678, %v4677
        %v4723 = vpack.c.b16 %v4680, %v4679
        %v4724 = vpack.c.b16 %v4682, %v4681
        %v4725 = vpack.c.b16 %v4684, %v4683
        %v4726 = vpack.c.b16 %v4686, %v4685
        %v4727 = vpack.c.b16 %v4688, %v4687
        %v4728 = vpack.c.b16 %v4690, %v4689
        %v4729 = vpack.c.b16 %v4692, %v4691
        %v4730 = vpack.c.b16 %v4694, %v4693
        %v4731 = vpack.c.b16 %v4696, %v4695
        %v4732 = vpack.c.b16 %v4698, %v4697
        %v4733 = vpack.c.b16 %v4700, %v4699
        %v4734 = vpack.c.b16 %v4702, %v4701
        %v4735 = vpack.c.b16 %v4704, %v4703
        %v4736 = vpack.c.b16 %v4706, %v4705
        %v4737 = vpack.c.b16 %v4708, %v4707
        %v4738 = vpack.c.b16 %v4710, %v4709
        %v4739 = vpack.c.b16 %v4712, %v4711
        %v4740 = vpack.c.b16 %v4714, %v4713
        %v4741 = vpack.c.b16 %v4716, %v4715
        %v4742 = vpack.c.b16 %v4718, %v4717
        %4767 = vmatpush.bf16.msra.mxu0 %v4726
        %4768 = vmatpush.bf16.msra.mxu0 %v4725
        %4769 = vmatpush.bf16.msra.mxu0 %v4724
        %4770 = vmatpush.bf16.msra.mxu0 %v4723
        %4771 = vmatpush.bf16.msra.mxu0 %v4722
        %4772 = vmatpush.bf16.msra.mxu0 %v4721
        %4773 = vmatpush.bf16.msra.mxu0 %v4720
        %4774 = vmatpush.bf16.msra.mxu0 %v4719
        %4775 = vmatmul.bf16.gmra.mxu0 %v4237
        %v4776 = vpop.f32.mrf.mxu0
        %v4777 = vadd.f32 %v4614, %v4776
        %v4778 = vpop.f32.mrf.mxu0
        %v4779 = vadd.f32 %v4616, %v4778
        %4780 = vmatmul.bf16.gmra.mxu0 %v4238
        %v4781 = vpop.f32.mrf.mxu0
        %v4782 = vadd.f32 %v4619, %v4781
        %v4783 = vpop.f32.mrf.mxu0
        %v4784 = vadd.f32 %v4621, %v4783
        %4785 = vdwg.mxu0
        %4786 = vmatpush.bf16.msra.mxu0 %v4734
        %4787 = vmatpush.bf16.msra.mxu0 %v4733
        %4788 = vmatpush.bf16.msra.mxu0 %v4732
        %4789 = vmatpush.bf16.msra.mxu0 %v4731
        %4790 = vmatpush.bf16.msra.mxu0 %v4730
        %4791 = vmatpush.bf16.msra.mxu0 %v4729
        %4792 = vmatpush.bf16.msra.mxu0 %v4728
        %4793 = vmatpush.bf16.msra.mxu0 %v4727
        %4794 = vmatmul.bf16.gmra.mxu0 %v4255
        %v4795 = vpop.f32.mrf.mxu0
        %v4796 = vadd.f32 %v4777, %v4795
        %v4797 = vpop.f32.mrf.mxu0
        %v4798 = vadd.f32 %v4779, %v4797
        %4799 = vmatmul.bf16.gmra.mxu0 %v4263
        %v4800 = vpop.f32.mrf.mxu0
        %v4801 = vadd.f32 %v4782, %v4800
        %v4802 = vpop.f32.mrf.mxu0
        %v4803 = vadd.f32 %v4784, %v4802
        %4804 = vdwg.mxu0
        %4805 = vmatpush.bf16.msra.mxu0 %v4742
        %4806 = vmatpush.bf16.msra.mxu0 %v4741
        %4807 = vmatpush.bf16.msra.mxu0 %v4740
        %4808 = vmatpush.bf16.msra.mxu0 %v4739
        %4809 = vmatpush.bf16.msra.mxu0 %v4738
        %4810 = vmatpush.bf16.msra.mxu0 %v4737
        %4811 = vmatpush.bf16.msra.mxu0 %v4736
        %4812 = vmatpush.bf16.msra.mxu0 %v4735
        %4813 = vmatmul.bf16.gmra.mxu0 %v4268
        %v4814 = vpop.f32.mrf.mxu0
        %v4815 = vadd.f32 %v4796, %v4814
        %v4816 = vpop.f32.mrf.mxu0
        %v4817 = vadd.f32 %v4798, %v4816
        %4818 = vmatmul.bf16.gmra.mxu0 %v4270
        %v4819 = vpop.f32.mrf.mxu0
        %v4820 = vadd.f32 %v4801, %v4819
        %v4821 = vpop.f32.mrf.mxu0
        %v4822 = vadd.f32 %v4803, %v4821
        %4823 = vdwg.mxu0
        %s4824 = sadd.s32 %s4220, 2
        %s4825 = smul.u32 %s4824, 5
        %s4826 = smul.addr %s4825, 4
        %s4827 = scalar_lea.vmem %s182, %s4826
        %v4828 = vld [vmem:[%s4827] sm:$0xf]
        %v4829 = vld [vmem:[%s4827 + $0x4] sm:$0xf]
        %v4830 = vld [vmem:[%s4827 + $0x8] sm:$0xf]
        %v4831 = vld [vmem:[%s4827 + $0xc] sm:$0xf]
        %v4832 = vld [vmem:[%s4827 + $0x10] sm:$0x1]
        %v4837 = vunpack.c.l.b16 %v4828
        %v4838 = vunpack.c.l.b16 %v4829
        %v4839 = vunpack.c.l.b16 %v4830
        %v4840 = vunpack.c.l.b16 %v4831
        %v4841 = vpack.c.b16 %v4838, %v4837
        %v4842 = vpack.c.b16 %v4840, %v4839
        %v4846 = vunpack.c.l.b16 %v4832
        %v4847 = vpack.c.b16 %v4846, %v4846
        %v4849 = vshrl.u32 %v4841, 16
        %v4851 = vshll.u32 %v4841, 16
        %v4853 = vrot.slane %v4851, 1
        %v4854 = vor.u32 %v4849, %v4853
        %v4856 = vshll.u32 %v4842, 16
        %v4858 = vrot.slane %v4856, 1
        %v4859 = vsel %vm208, %v4854, %v4858
        %v4860 = vshrl.u32 %v4842, 16
        %v4862 = vor.u32 %v4860, %v4858
        %v4864 = vshll.u32 %v4847, 16
        %v4866 = vrot.slane %v4864, 1
        %v4867 = vsel %vm208, %v4862, %v4866
        %v4870 = vrot.slane %v4841, 1
        %v4871 = vrot.slane %v4842, 1
        %v4872 = vsel %vm231, %v4870, %v4871
        %v4873 = vrot.slane %v4847, 1
        %v4874 = vsel %vm231, %v4871, %v4873
        %v4877 = vld [vmem:[%s844] sm:$0xf]
        %v4878 = vld [vmem:[%s844 + $0x4] sm:$0xf]
        %v4879 = vld [vmem:[%s844 + $0x8] sm:$0xf]
        %v4880 = vld [vmem:[%s844 + $0xc] sm:$0xf]
        %v4881 = vld [vmem:[%s844 + $0x10] sm:$0xf]
        %v4882 = vld [vmem:[%s844 + $0x14] sm:$0xf]
        %v4883 = vld [vmem:[%s844 + $0x18] sm:$0xf]
        %v4884 = vld [vmem:[%s844 + $0x1c] sm:$0xf]
        %v4885 = vld [vmem:[%s844 + $0x20] sm:$0xf]
        %v4886 = vld [vmem:[%s844 + $0x24] sm:$0xf]
        %v4887 = vld [vmem:[%s844 + $0x28] sm:$0xf]
        %v4888 = vld [vmem:[%s844 + $0x2c] sm:$0xf]
        %v4889 = vld [vmem:[%s844 + $0x30] sm:$0xf]
        %v4890 = vld [vmem:[%s844 + $0x34] sm:$0xf]
        %v4891 = vld [vmem:[%s844 + $0x38] sm:$0xf]
        %v4892 = vld [vmem:[%s844 + $0x3c] sm:$0xf]
        %v4893 = vld [vmem:[%s844 + $0x40] sm:$0xf]
        %v4894 = vld [vmem:[%s844 + $0x44] sm:$0xf]
        %v4895 = vld [vmem:[%s844 + $0x48] sm:$0xf]
        %v4896 = vld [vmem:[%s844 + $0x4c] sm:$0xf]
        %v4897 = vld [vmem:[%s844 + $0x50] sm:$0xf]
        %v4898 = vld [vmem:[%s844 + $0x54] sm:$0xf]
        %v4899 = vld [vmem:[%s844 + $0x58] sm:$0xf]
        %v4900 = vld [vmem:[%s844 + $0x5c] sm:$0xf]
        %v4901 = vld [vmem:[%s844 + $0x60] sm:$0xf]
        %v4902 = vld [vmem:[%s844 + $0x64] sm:$0xf]
        %v4903 = vld [vmem:[%s844 + $0x68] sm:$0xf]
        %v4904 = vld [vmem:[%s844 + $0x6c] sm:$0xf]
        %v4905 = vld [vmem:[%s844 + $0x70] sm:$0xf]
        %v4906 = vld [vmem:[%s844 + $0x74] sm:$0xf]
        %v4907 = vld [vmem:[%s844 + $0x78] sm:$0xf]
        %v4908 = vld [vmem:[%s844 + $0x7c] sm:$0xf]
        %v4909 = vld [vmem:[%s844 + $0x80] sm:$0xf]
        %v4910 = vld [vmem:[%s844 + $0x84] sm:$0xf]
        %v4911 = vld [vmem:[%s844 + $0x88] sm:$0xf]
        %v4912 = vld [vmem:[%s844 + $0x8c] sm:$0xf]
        %v4913 = vld [vmem:[%s844 + $0x90] sm:$0xf]
        %v4914 = vld [vmem:[%s844 + $0x94] sm:$0xf]
        %v4915 = vld [vmem:[%s844 + $0x98] sm:$0xf]
        %v4916 = vld [vmem:[%s844 + $0x9c] sm:$0xf]
        %v4917 = vld [vmem:[%s844 + $0xa0] sm:$0xf]
        %v4918 = vld [vmem:[%s844 + $0xa4] sm:$0xf]
        %v4919 = vld [vmem:[%s844 + $0xa8] sm:$0xf]
        %v4920 = vld [vmem:[%s844 + $0xac] sm:$0xf]
        %v4921 = vld [vmem:[%s844 + $0xb0] sm:$0xf]
        %v4922 = vld [vmem:[%s844 + $0xb4] sm:$0xf]
        %v4923 = vld [vmem:[%s844 + $0xb8] sm:$0xf]
        %v4924 = vld [vmem:[%s844 + $0xbc] sm:$0xf]
        %v4973 = vunpack.c.l.b16 %v4877
        %v4974 = vunpack.c.l.b16 %v4878
        %v4975 = vunpack.c.l.b16 %v4879
        %v4976 = vunpack.c.l.b16 %v4880
        %v4977 = vunpack.c.l.b16 %v4881
        %v4978 = vunpack.c.l.b16 %v4882
        %v4979 = vunpack.c.l.b16 %v4883
        %v4980 = vunpack.c.l.b16 %v4884
        %v4981 = vunpack.c.l.b16 %v4885
        %v4982 = vunpack.c.l.b16 %v4886
        %v4983 = vunpack.c.l.b16 %v4887
        %v4984 = vunpack.c.l.b16 %v4888
        %v4985 = vunpack.c.l.b16 %v4889
        %v4986 = vunpack.c.l.b16 %v4890
        %v4987 = vunpack.c.l.b16 %v4891
        %v4988 = vunpack.c.l.b16 %v4892
        %v4989 = vunpack.c.l.b16 %v4893
        %v4990 = vunpack.c.l.b16 %v4894
        %v4991 = vunpack.c.l.b16 %v4895
        %v4992 = vunpack.c.l.b16 %v4896
        %v4993 = vunpack.c.l.b16 %v4897
        %v4994 = vunpack.c.l.b16 %v4898
        %v4995 = vunpack.c.l.b16 %v4899
        %v4996 = vunpack.c.l.b16 %v4900
        %v4997 = vunpack.c.l.b16 %v4901
        %v4998 = vunpack.c.l.b16 %v4902
        %v4999 = vunpack.c.l.b16 %v4903
        %v5000 = vunpack.c.l.b16 %v4904
        %v5001 = vunpack.c.l.b16 %v4905
        %v5002 = vunpack.c.l.b16 %v4906
        %v5003 = vunpack.c.l.b16 %v4907
        %v5004 = vunpack.c.l.b16 %v4908
        %v5005 = vunpack.c.l.b16 %v4909
        %v5006 = vunpack.c.l.b16 %v4910
        %v5007 = vunpack.c.l.b16 %v4911
        %v5008 = vunpack.c.l.b16 %v4912
        %v5009 = vunpack.c.l.b16 %v4913
        %v5010 = vunpack.c.l.b16 %v4914
        %v5011 = vunpack.c.l.b16 %v4915
        %v5012 = vunpack.c.l.b16 %v4916
        %v5013 = vunpack.c.l.b16 %v4917
        %v5014 = vunpack.c.l.b16 %v4918
        %v5015 = vunpack.c.l.b16 %v4919
        %v5016 = vunpack.c.l.b16 %v4920
        %v5017 = vunpack.c.l.b16 %v4921
        %v5018 = vunpack.c.l.b16 %v4922
        %v5019 = vunpack.c.l.b16 %v4923
        %v5020 = vunpack.c.l.b16 %v4924
        %v5021 = vpack.c.b16 %v4974, %v4973
        %v5022 = vpack.c.b16 %v4976, %v4975
        %v5023 = vpack.c.b16 %v4978, %v4977
        %v5024 = vpack.c.b16 %v4980, %v4979
        %v5025 = vpack.c.b16 %v4982, %v4981
        %v5026 = vpack.c.b16 %v4984, %v4983
        %v5027 = vpack.c.b16 %v4986, %v4985
        %v5028 = vpack.c.b16 %v4988, %v4987
        %v5029 = vpack.c.b16 %v4990, %v4989
        %v5030 = vpack.c.b16 %v4992, %v4991
        %v5031 = vpack.c.b16 %v4994, %v4993
        %v5032 = vpack.c.b16 %v4996, %v4995
        %v5033 = vpack.c.b16 %v4998, %v4997
        %v5034 = vpack.c.b16 %v5000, %v4999
        %v5035 = vpack.c.b16 %v5002, %v5001
        %v5036 = vpack.c.b16 %v5004, %v5003
        %v5037 = vpack.c.b16 %v5006, %v5005
        %v5038 = vpack.c.b16 %v5008, %v5007
        %v5039 = vpack.c.b16 %v5010, %v5009
        %v5040 = vpack.c.b16 %v5012, %v5011
        %v5041 = vpack.c.b16 %v5014, %v5013
        %v5042 = vpack.c.b16 %v5016, %v5015
        %v5043 = vpack.c.b16 %v5018, %v5017
        %v5044 = vpack.c.b16 %v5020, %v5019
        %5069 = vmatpush.bf16.msra.mxu0 %v5028
        %5070 = vmatpush.bf16.msra.mxu0 %v5027
        %5071 = vmatpush.bf16.msra.mxu0 %v5026
        %5072 = vmatpush.bf16.msra.mxu0 %v5025
        %5073 = vmatpush.bf16.msra.mxu0 %v5024
        %5074 = vmatpush.bf16.msra.mxu0 %v5023
        %5075 = vmatpush.bf16.msra.mxu0 %v5022
        %5076 = vmatpush.bf16.msra.mxu0 %v5021
        %5077 = vmatmul.bf16.gmra.mxu0 %v4841
        %v5078 = vpop.f32.mrf.mxu0
        %v5079 = vadd.f32 0.0, %v5078
        %v5080 = vpop.f32.mrf.mxu0
        %v5081 = vadd.f32 0.0, %v5080
        %5082 = vmatmul.bf16.gmra.mxu0 %v4842
        %v5083 = vpop.f32.mrf.mxu0
        %v5084 = vadd.f32 0.0, %v5083
        %v5085 = vpop.f32.mrf.mxu0
        %v5086 = vadd.f32 0.0, %v5085
        %5087 = vdwg.mxu0
        %5088 = vmatpush.bf16.msra.mxu0 %v5036
        %5089 = vmatpush.bf16.msra.mxu0 %v5035
        %5090 = vmatpush.bf16.msra.mxu0 %v5034
        %5091 = vmatpush.bf16.msra.mxu0 %v5033
        %5092 = vmatpush.bf16.msra.mxu0 %v5032
        %5093 = vmatpush.bf16.msra.mxu0 %v5031
        %5094 = vmatpush.bf16.msra.mxu0 %v5030
        %5095 = vmatpush.bf16.msra.mxu0 %v5029
        %5096 = vmatmul.bf16.gmra.mxu0 %v4859
        %v5097 = vpop.f32.mrf.mxu0
        %v5098 = vadd.f32 %v5079, %v5097
        %v5099 = vpop.f32.mrf.mxu0
        %v5100 = vadd.f32 %v5081, %v5099
        %5101 = vmatmul.bf16.gmra.mxu0 %v4867
        %v5102 = vpop.f32.mrf.mxu0
        %v5103 = vadd.f32 %v5084, %v5102
        %v5104 = vpop.f32.mrf.mxu0
        %v5105 = vadd.f32 %v5086, %v5104
        %5106 = vdwg.mxu0
        %5107 = vmatpush.bf16.msra.mxu0 %v5044
        %5108 = vmatpush.bf16.msra.mxu0 %v5043
        %5109 = vmatpush.bf16.msra.mxu0 %v5042
        %5110 = vmatpush.bf16.msra.mxu0 %v5041
        %5111 = vmatpush.bf16.msra.mxu0 %v5040
        %5112 = vmatpush.bf16.msra.mxu0 %v5039
        %5113 = vmatpush.bf16.msra.mxu0 %v5038
        %5114 = vmatpush.bf16.msra.mxu0 %v5037
        %5115 = vmatmul.bf16.gmra.mxu0 %v4872
        %v5116 = vpop.f32.mrf.mxu0
        %v5117 = vadd.f32 %v5098, %v5116
        %v5118 = vpop.f32.mrf.mxu0
        %v5119 = vadd.f32 %v5100, %v5118
        %5120 = vmatmul.bf16.gmra.mxu0 %v4874
        %v5121 = vpop.f32.mrf.mxu0
        %v5122 = vadd.f32 %v5103, %v5121
        %v5123 = vpop.f32.mrf.mxu0
        %v5124 = vadd.f32 %v5105, %v5123
        %5125 = vdwg.mxu0
        %v5126 = vadd.f32 %v4815, %v5117
        %v5127 = vadd.f32 %v4817, %v5119
        %v5128 = vadd.f32 %v4820, %v5122
        %v5129 = vadd.f32 %v4822, %v5124
        %v5130 = vld [vmem:[%s2] sm:$0x1]
        %v5132 = vperm.slane %v5130, 0
        %v5134 = vadd.f32 %v5126, %v5132
        %v5135 = vadd.f32 %v5127, %v5132
        %v5136 = vadd.f32 %v5128, %v5132
        %v5137 = vadd.f32 %v5129, %v5132
        %v5138 = vxor.u32 %v5134, 2147483648
        %v5139 = vxor.u32 %v5135, 2147483648
        %v5140 = vxor.u32 %v5136, 2147483648
        %v5141 = vxor.u32 %v5137, 2147483648
        %v5142 = vmul.f32 %v5138, 1.442695
        %v5143 = vpow.pop %v5142
        %v5144 = vmul.f32 %v5139, 1.442695
        %v5145 = vpow.pop %v5144
        %v5146 = vmul.f32 %v5140, 1.442695
        %v5147 = vpow.pop %v5146
        %v5148 = vmul.f32 %v5141, 1.442695
        %v5149 = vpow.pop %v5148
        %v5150 = vadd.f32 %v5143, 1.0
        %v5151 = vadd.f32 %v5145, 1.0
        %v5152 = vadd.f32 %v5147, 1.0
        %v5153 = vadd.f32 %v5149, 1.0
        %v5154 = vrcp.pop %v5150
        %v5155 = vmul.f32 %v5150, %v5154
        %v5156 = vsub.f32 1.0, %v5155
        %v5157 = vmul.f32 %v5154, %v5156
        %v5158 = vadd.f32 %v5154, %v5157
        %vm5159 = vweird.f32 %v5150
        %vm5160 = vweird.f32 %v5154
        %vm5161 = vmor %vm5159, %vm5160
        %v5162 = vsel %vm5161, %v5154, %v5158
        %v5163 = vand.u32 2147483647, %v5150
        %vm5164 = vcmp.eq.f32.partialorder %v5163, 8.507059e+37
        %v5165 = vand.u32 %v5150, 2147483648
        %v5166 = vor.u32 1.1754944e-38, %v5165
        %v5167 = vsel %vm5164, %v5166, %v5162
        %v5168 = vmul.f32 1.0, %v5167
        %v5169 = vrcp.pop %v5151
        %v5170 = vmul.f32 %v5151, %v5169
        %v5171 = vsub.f32 1.0, %v5170
        %v5172 = vmul.f32 %v5169, %v5171
        %v5173 = vadd.f32 %v5169, %v5172
        %vm5174 = vweird.f32 %v5151
        %vm5175 = vweird.f32 %v5169
        %vm5176 = vmor %vm5174, %vm5175
        %v5177 = vsel %vm5176, %v5169, %v5173
        %v5178 = vand.u32 2147483647, %v5151
        %vm5179 = vcmp.eq.f32.partialorder %v5178, 8.507059e+37
        %v5180 = vand.u32 %v5151, 2147483648
        %v5181 = vor.u32 1.1754944e-38, %v5180
        %v5182 = vsel %vm5179, %v5181, %v5177
        %v5183 = vmul.f32 1.0, %v5182
        %v5184 = vrcp.pop %v5152
        %v5185 = vmul.f32 %v5152, %v5184
        %v5186 = vsub.f32 1.0, %v5185
        %v5187 = vmul.f32 %v5184, %v5186
        %v5188 = vadd.f32 %v5184, %v5187
        %vm5189 = vweird.f32 %v5152
        %vm5190 = vweird.f32 %v5184
        %vm5191 = vmor %vm5189, %vm5190
        %v5192 = vsel %vm5191, %v5184, %v5188
        %v5193 = vand.u32 2147483647, %v5152
        %vm5194 = vcmp.eq.f32.partialorder %v5193, 8.507059e+37
        %v5195 = vand.u32 %v5152, 2147483648
        %v5196 = vor.u32 1.1754944e-38, %v5195
        %v5197 = vsel %vm5194, %v5196, %v5192
        %v5198 = vmul.f32 1.0, %v5197
        %v5199 = vrcp.pop %v5153
        %v5200 = vmul.f32 %v5153, %v5199
        %v5201 = vsub.f32 1.0, %v5200
        %v5202 = vmul.f32 %v5199, %v5201
        %v5203 = vadd.f32 %v5199, %v5202
        %vm5204 = vweird.f32 %v5153
        %vm5205 = vweird.f32 %v5199
        %vm5206 = vmor %vm5204, %vm5205
        %v5207 = vsel %vm5206, %v5199, %v5203
        %v5208 = vand.u32 2147483647, %v5153
        %vm5209 = vcmp.eq.f32.partialorder %v5208, 8.507059e+37
        %v5210 = vand.u32 %v5153, 2147483648
        %v5211 = vor.u32 1.1754944e-38, %v5210
        %v5212 = vsel %vm5209, %v5211, %v5207
        %v5213 = vmul.f32 1.0, %v5212
        %v5214 = vmul.f32 %v5134, %v5168
        %v5215 = vmul.f32 %v5135, %v5183
        %v5216 = vmul.f32 %v5136, %v5198
        %v5217 = vmul.f32 %v5137, %v5213
        %v5218 = vpack.c.bf16 %v5214, %v5214
        %v5219 = vpack.c.bf16 %v5215, %v5215
        %v5220 = vpack.c.bf16 %v5216, %v5216
        %v5221 = vpack.c.bf16 %v5217, %v5217
        %s5222 = scalar_lea.vmem %s177, 64 [#allocation2]
        %5223 = vst [vmem:[%s5222] sm:$0xf] %v5218
        %5224 = vst [vmem:[%s5222 + $0x4] sm:$0xf] %v5219
        %5225 = vst [vmem:[%s5222 + $0x8] sm:$0xf] %v5220
        %5226 = vst [vmem:[%s5222 + $0xc] sm:$0xf] %v5221
        %s5227 = sadd.s32 %s1194, 5
        %s5228 = smul.u32 %s5227, 2
        %s5229 = smul.u32 %s5228, 5
        %s5230 = smul.addr %s5229, 4
        %s5231 = scalar_lea.vmem %s182, %s5230
        %v5232 = vld [vmem:[%s5231] sm:$0xf]
        %v5233 = vld [vmem:[%s5231 + $0x4] sm:$0xf]
        %v5234 = vld [vmem:[%s5231 + $0x8] sm:$0xf]
        %v5235 = vld [vmem:[%s5231 + $0xc] sm:$0xf]
        %v5236 = vld [vmem:[%s5231 + $0x10] sm:$0x1]
        %v5241 = vunpack.c.l.b16 %v5232
        %v5242 = vunpack.c.l.b16 %v5233
        %v5243 = vunpack.c.l.b16 %v5234
        %v5244 = vunpack.c.l.b16 %v5235
        %v5245 = vpack.c.b16 %v5242, %v5241
        %v5246 = vpack.c.b16 %v5244, %v5243
        %v5250 = vunpack.c.l.b16 %v5236
        %v5251 = vpack.c.b16 %v5250, %v5250
        %v5253 = vshrl.u32 %v5245, 16
        %v5255 = vshll.u32 %v5245, 16
        %v5257 = vrot.slane %v5255, 1
        %v5258 = vor.u32 %v5253, %v5257
        %v5260 = vshll.u32 %v5246, 16
        %v5262 = vrot.slane %v5260, 1
        %v5263 = vsel %vm208, %v5258, %v5262
        %v5264 = vshrl.u32 %v5246, 16
        %v5266 = vor.u32 %v5264, %v5262
        %v5268 = vshll.u32 %v5251, 16
        %v5270 = vrot.slane %v5268, 1
        %v5271 = vsel %vm208, %v5266, %v5270
        %v5274 = vrot.slane %v5245, 1
        %v5275 = vrot.slane %v5246, 1
        %v5276 = vsel %vm231, %v5274, %v5275
        %v5277 = vrot.slane %v5251, 1
        %v5278 = vsel %vm231, %v5275, %v5277
        %v5281 = vld [vmem:[%s1] sm:$0xf]
        %v5282 = vld [vmem:[%s1 + $0x4] sm:$0xf]
        %v5283 = vld [vmem:[%s1 + $0x8] sm:$0xf]
        %v5284 = vld [vmem:[%s1 + $0xc] sm:$0xf]
        %v5285 = vld [vmem:[%s1 + $0x10] sm:$0xf]
        %v5286 = vld [vmem:[%s1 + $0x14] sm:$0xf]
        %v5287 = vld [vmem:[%s1 + $0x18] sm:$0xf]
        %v5288 = vld [vmem:[%s1 + $0x1c] sm:$0xf]
        %v5289 = vld [vmem:[%s1 + $0x20] sm:$0xf]
        %v5290 = vld [vmem:[%s1 + $0x24] sm:$0xf]
        %v5291 = vld [vmem:[%s1 + $0x28] sm:$0xf]
        %v5292 = vld [vmem:[%s1 + $0x2c] sm:$0xf]
        %v5293 = vld [vmem:[%s1 + $0x30] sm:$0xf]
        %v5294 = vld [vmem:[%s1 + $0x34] sm:$0xf]
        %v5295 = vld [vmem:[%s1 + $0x38] sm:$0xf]
        %v5296 = vld [vmem:[%s1 + $0x3c] sm:$0xf]
        %v5297 = vld [vmem:[%s1 + $0x40] sm:$0xf]
        %v5298 = vld [vmem:[%s1 + $0x44] sm:$0xf]
        %v5299 = vld [vmem:[%s1 + $0x48] sm:$0xf]
        %v5300 = vld [vmem:[%s1 + $0x4c] sm:$0xf]
        %v5301 = vld [vmem:[%s1 + $0x50] sm:$0xf]
        %v5302 = vld [vmem:[%s1 + $0x54] sm:$0xf]
        %v5303 = vld [vmem:[%s1 + $0x58] sm:$0xf]
        %v5304 = vld [vmem:[%s1 + $0x5c] sm:$0xf]
        %v5305 = vld [vmem:[%s1 + $0x60] sm:$0xf]
        %v5306 = vld [vmem:[%s1 + $0x64] sm:$0xf]
        %v5307 = vld [vmem:[%s1 + $0x68] sm:$0xf]
        %v5308 = vld [vmem:[%s1 + $0x6c] sm:$0xf]
        %v5309 = vld [vmem:[%s1 + $0x70] sm:$0xf]
        %v5310 = vld [vmem:[%s1 + $0x74] sm:$0xf]
        %v5311 = vld [vmem:[%s1 + $0x78] sm:$0xf]
        %v5312 = vld [vmem:[%s1 + $0x7c] sm:$0xf]
        %v5313 = vld [vmem:[%s1 + $0x80] sm:$0xf]
        %v5314 = vld [vmem:[%s1 + $0x84] sm:$0xf]
        %v5315 = vld [vmem:[%s1 + $0x88] sm:$0xf]
        %v5316 = vld [vmem:[%s1 + $0x8c] sm:$0xf]
        %v5317 = vld [vmem:[%s1 + $0x90] sm:$0xf]
        %v5318 = vld [vmem:[%s1 + $0x94] sm:$0xf]
        %v5319 = vld [vmem:[%s1 + $0x98] sm:$0xf]
        %v5320 = vld [vmem:[%s1 + $0x9c] sm:$0xf]
        %v5321 = vld [vmem:[%s1 + $0xa0] sm:$0xf]
        %v5322 = vld [vmem:[%s1 + $0xa4] sm:$0xf]
        %v5323 = vld [vmem:[%s1 + $0xa8] sm:$0xf]
        %v5324 = vld [vmem:[%s1 + $0xac] sm:$0xf]
        %v5325 = vld [vmem:[%s1 + $0xb0] sm:$0xf]
        %v5326 = vld [vmem:[%s1 + $0xb4] sm:$0xf]
        %v5327 = vld [vmem:[%s1 + $0xb8] sm:$0xf]
        %v5328 = vld [vmem:[%s1 + $0xbc] sm:$0xf]
        %s5329 = sadd.s32 %s5228, 1
        %s5330 = smul.u32 %s5329, 5
        %s5331 = smul.addr %s5330, 4
        %s5332 = scalar_lea.vmem %s182, %s5331
        %v5333 = vld [vmem:[%s5332] sm:$0xf]
        %v5334 = vld [vmem:[%s5332 + $0x4] sm:$0xf]
        %v5335 = vld [vmem:[%s5332 + $0x8] sm:$0xf]
        %v5336 = vld [vmem:[%s5332 + $0xc] sm:$0xf]
        %v5337 = vld [vmem:[%s5332 + $0x10] sm:$0x1]
        %v5342 = vunpack.c.l.b16 %v5333
        %v5343 = vunpack.c.l.b16 %v5334
        %v5344 = vunpack.c.l.b16 %v5335
        %v5345 = vunpack.c.l.b16 %v5336
        %v5346 = vpack.c.b16 %v5343, %v5342
        %v5347 = vpack.c.b16 %v5345, %v5344
        %v5351 = vunpack.c.l.b16 %v5337
        %v5352 = vpack.c.b16 %v5351, %v5351
        %v5354 = vshrl.u32 %v5346, 16
        %v5356 = vshll.u32 %v5346, 16
        %v5358 = vrot.slane %v5356, 1
        %v5359 = vor.u32 %v5354, %v5358
        %v5361 = vshll.u32 %v5347, 16
        %v5363 = vrot.slane %v5361, 1
        %v5364 = vsel %vm208, %v5359, %v5363
        %v5365 = vshrl.u32 %v5347, 16
        %v5367 = vor.u32 %v5365, %v5363
        %v5369 = vshll.u32 %v5352, 16
        %v5371 = vrot.slane %v5369, 1
        %v5372 = vsel %vm208, %v5367, %v5371
        %v5375 = vrot.slane %v5346, 1
        %v5376 = vrot.slane %v5347, 1
        %v5377 = vsel %vm231, %v5375, %v5376
        %v5378 = vrot.slane %v5352, 1
        %v5379 = vsel %vm231, %v5376, %v5378
        %v5382 = vld [vmem:[%s340] sm:$0xf]
        %v5383 = vld [vmem:[%s340 + $0x4] sm:$0xf]
        %v5384 = vld [vmem:[%s340 + $0x8] sm:$0xf]
        %v5385 = vld [vmem:[%s340 + $0xc] sm:$0xf]
        %v5386 = vld [vmem:[%s340 + $0x10] sm:$0xf]
        %v5387 = vld [vmem:[%s340 + $0x14] sm:$0xf]
        %v5388 = vld [vmem:[%s340 + $0x18] sm:$0xf]
        %v5389 = vld [vmem:[%s340 + $0x1c] sm:$0xf]
        %v5390 = vld [vmem:[%s340 + $0x20] sm:$0xf]
        %v5391 = vld [vmem:[%s340 + $0x24] sm:$0xf]
        %v5392 = vld [vmem:[%s340 + $0x28] sm:$0xf]
        %v5393 = vld [vmem:[%s340 + $0x2c] sm:$0xf]
        %v5394 = vld [vmem:[%s340 + $0x30] sm:$0xf]
        %v5395 = vld [vmem:[%s340 + $0x34] sm:$0xf]
        %v5396 = vld [vmem:[%s340 + $0x38] sm:$0xf]
        %v5397 = vld [vmem:[%s340 + $0x3c] sm:$0xf]
        %v5398 = vld [vmem:[%s340 + $0x40] sm:$0xf]
        %v5399 = vld [vmem:[%s340 + $0x44] sm:$0xf]
        %v5400 = vld [vmem:[%s340 + $0x48] sm:$0xf]
        %v5401 = vld [vmem:[%s340 + $0x4c] sm:$0xf]
        %v5402 = vld [vmem:[%s340 + $0x50] sm:$0xf]
        %v5403 = vld [vmem:[%s340 + $0x54] sm:$0xf]
        %v5404 = vld [vmem:[%s340 + $0x58] sm:$0xf]
        %v5405 = vld [vmem:[%s340 + $0x5c] sm:$0xf]
        %v5406 = vld [vmem:[%s340 + $0x60] sm:$0xf]
        %v5407 = vld [vmem:[%s340 + $0x64] sm:$0xf]
        %v5408 = vld [vmem:[%s340 + $0x68] sm:$0xf]
        %v5409 = vld [vmem:[%s340 + $0x6c] sm:$0xf]
        %v5410 = vld [vmem:[%s340 + $0x70] sm:$0xf]
        %v5411 = vld [vmem:[%s340 + $0x74] sm:$0xf]
        %v5412 = vld [vmem:[%s340 + $0x78] sm:$0xf]
        %v5413 = vld [vmem:[%s340 + $0x7c] sm:$0xf]
        %v5414 = vld [vmem:[%s340 + $0x80] sm:$0xf]
        %v5415 = vld [vmem:[%s340 + $0x84] sm:$0xf]
        %v5416 = vld [vmem:[%s340 + $0x88] sm:$0xf]
        %v5417 = vld [vmem:[%s340 + $0x8c] sm:$0xf]
        %v5418 = vld [vmem:[%s340 + $0x90] sm:$0xf]
        %v5419 = vld [vmem:[%s340 + $0x94] sm:$0xf]
        %v5420 = vld [vmem:[%s340 + $0x98] sm:$0xf]
        %v5421 = vld [vmem:[%s340 + $0x9c] sm:$0xf]
        %v5422 = vld [vmem:[%s340 + $0xa0] sm:$0xf]
        %v5423 = vld [vmem:[%s340 + $0xa4] sm:$0xf]
        %v5424 = vld [vmem:[%s340 + $0xa8] sm:$0xf]
        %v5425 = vld [vmem:[%s340 + $0xac] sm:$0xf]
        %v5426 = vld [vmem:[%s340 + $0xb0] sm:$0xf]
        %v5427 = vld [vmem:[%s340 + $0xb4] sm:$0xf]
        %v5428 = vld [vmem:[%s340 + $0xb8] sm:$0xf]
        %v5429 = vld [vmem:[%s340 + $0xbc] sm:$0xf]
        %v5478 = vunpack.c.l.b16 %v5382
        %v5479 = vunpack.c.l.b16 %v5383
        %v5480 = vunpack.c.l.b16 %v5384
        %v5481 = vunpack.c.l.b16 %v5385
        %v5482 = vunpack.c.l.b16 %v5386
        %v5483 = vunpack.c.l.b16 %v5387
        %v5484 = vunpack.c.l.b16 %v5388
        %v5485 = vunpack.c.l.b16 %v5389
        %v5486 = vunpack.c.l.b16 %v5390
        %v5487 = vunpack.c.l.b16 %v5391
        %v5488 = vunpack.c.l.b16 %v5392
        %v5489 = vunpack.c.l.b16 %v5393
        %v5490 = vunpack.c.l.b16 %v5394
        %v5491 = vunpack.c.l.b16 %v5395
        %v5492 = vunpack.c.l.b16 %v5396
        %v5493 = vunpack.c.l.b16 %v5397
        %v5494 = vunpack.c.l.b16 %v5398
        %v5495 = vunpack.c.l.b16 %v5399
        %v5496 = vunpack.c.l.b16 %v5400
        %v5497 = vunpack.c.l.b16 %v5401
        %v5498 = vunpack.c.l.b16 %v5402
        %v5499 = vunpack.c.l.b16 %v5403
        %v5500 = vunpack.c.l.b16 %v5404
        %v5501 = vunpack.c.l.b16 %v5405
        %v5502 = vunpack.c.l.b16 %v5406
        %v5503 = vunpack.c.l.b16 %v5407
        %v5504 = vunpack.c.l.b16 %v5408
        %v5505 = vunpack.c.l.b16 %v5409
        %v5506 = vunpack.c.l.b16 %v5410
        %v5507 = vunpack.c.l.b16 %v5411
        %v5508 = vunpack.c.l.b16 %v5412
        %v5509 = vunpack.c.l.b16 %v5413
        %v5510 = vunpack.c.l.b16 %v5414
        %v5511 = vunpack.c.l.b16 %v5415
        %v5512 = vunpack.c.l.b16 %v5416
        %v5513 = vunpack.c.l.b16 %v5417
        %v5514 = vunpack.c.l.b16 %v5418
        %v5515 = vunpack.c.l.b16 %v5419
        %v5516 = vunpack.c.l.b16 %v5420
        %v5517 = vunpack.c.l.b16 %v5421
        %v5518 = vunpack.c.l.b16 %v5422
        %v5519 = vunpack.c.l.b16 %v5423
        %v5520 = vunpack.c.l.b16 %v5424
        %v5521 = vunpack.c.l.b16 %v5425
        %v5522 = vunpack.c.l.b16 %v5426
        %v5523 = vunpack.c.l.b16 %v5427
        %v5524 = vunpack.c.l.b16 %v5428
        %v5525 = vunpack.c.l.b16 %v5429
        %v5526 = vpack.c.b16 %v5479, %v5478
        %v5527 = vpack.c.b16 %v5481, %v5480
        %v5528 = vpack.c.b16 %v5483, %v5482
        %v5529 = vpack.c.b16 %v5485, %v5484
        %v5530 = vpack.c.b16 %v5487, %v5486
        %v5531 = vpack.c.b16 %v5489, %v5488
        %v5532 = vpack.c.b16 %v5491, %v5490
        %v5533 = vpack.c.b16 %v5493, %v5492
        %v5534 = vpack.c.b16 %v5495, %v5494
        %v5535 = vpack.c.b16 %v5497, %v5496
        %v5536 = vpack.c.b16 %v5499, %v5498
        %v5537 = vpack.c.b16 %v5501, %v5500
        %v5538 = vpack.c.b16 %v5503, %v5502
        %v5539 = vpack.c.b16 %v5505, %v5504
        %v5540 = vpack.c.b16 %v5507, %v5506
        %v5541 = vpack.c.b16 %v5509, %v5508
        %v5542 = vpack.c.b16 %v5511, %v5510
        %v5543 = vpack.c.b16 %v5513, %v5512
        %v5544 = vpack.c.b16 %v5515, %v5514
        %v5545 = vpack.c.b16 %v5517, %v5516
        %v5546 = vpack.c.b16 %v5519, %v5518
        %v5547 = vpack.c.b16 %v5521, %v5520
        %v5548 = vpack.c.b16 %v5523, %v5522
        %v5549 = vpack.c.b16 %v5525, %v5524
        %5574 = vmatpush.bf16.msra.mxu0 %v5533
        %5575 = vmatpush.bf16.msra.mxu0 %v5532
        %5576 = vmatpush.bf16.msra.mxu0 %v5531
        %5577 = vmatpush.bf16.msra.mxu0 %v5530
        %5578 = vmatpush.bf16.msra.mxu0 %v5529
        %5579 = vmatpush.bf16.msra.mxu0 %v5528
        %5580 = vmatpush.bf16.msra.mxu0 %v5527
        %5581 = vmatpush.bf16.msra.mxu0 %v5526
        %5582 = vmatmul.bf16.gmra.mxu0 %v5346
        %v5583 = vpop.f32.mrf.mxu0
        %v5584 = vadd.f32 0.0, %v5583
        %v5585 = vpop.f32.mrf.mxu0
        %v5586 = vadd.f32 0.0, %v5585
        %5587 = vmatmul.bf16.gmra.mxu0 %v5347
        %v5588 = vpop.f32.mrf.mxu0
        %v5589 = vadd.f32 0.0, %v5588
        %v5590 = vpop.f32.mrf.mxu0
        %v5591 = vadd.f32 0.0, %v5590
        %5592 = vdwg.mxu0
        %5593 = vmatpush.bf16.msra.mxu0 %v5541
        %5594 = vmatpush.bf16.msra.mxu0 %v5540
        %5595 = vmatpush.bf16.msra.mxu0 %v5539
        %5596 = vmatpush.bf16.msra.mxu0 %v5538
        %5597 = vmatpush.bf16.msra.mxu0 %v5537
        %5598 = vmatpush.bf16.msra.mxu0 %v5536
        %5599 = vmatpush.bf16.msra.mxu0 %v5535
        %5600 = vmatpush.bf16.msra.mxu0 %v5534
        %5601 = vmatmul.bf16.gmra.mxu0 %v5364
        %v5602 = vpop.f32.mrf.mxu0
        %v5603 = vadd.f32 %v5584, %v5602
        %v5604 = vpop.f32.mrf.mxu0
        %v5605 = vadd.f32 %v5586, %v5604
        %5606 = vmatmul.bf16.gmra.mxu0 %v5372
        %v5607 = vpop.f32.mrf.mxu0
        %v5608 = vadd.f32 %v5589, %v5607
        %v5609 = vpop.f32.mrf.mxu0
        %v5610 = vadd.f32 %v5591, %v5609
        %5611 = vdwg.mxu0
        %5612 = vmatpush.bf16.msra.mxu0 %v5549
        %5613 = vmatpush.bf16.msra.mxu0 %v5548
        %5614 = vmatpush.bf16.msra.mxu0 %v5547
        %5615 = vmatpush.bf16.msra.mxu0 %v5546
        %5616 = vmatpush.bf16.msra.mxu0 %v5545
        %5617 = vmatpush.bf16.msra.mxu0 %v5544
        %5618 = vmatpush.bf16.msra.mxu0 %v5543
        %5619 = vmatpush.bf16.msra.mxu0 %v5542
        %5620 = vmatmul.bf16.gmra.mxu0 %v5377
        %v5621 = vpop.f32.mrf.mxu0
        %v5622 = vadd.f32 %v5603, %v5621
        %v5623 = vpop.f32.mrf.mxu0
        %v5624 = vadd.f32 %v5605, %v5623
        %5625 = vmatmul.bf16.gmra.mxu0 %v5379
        %v5626 = vpop.f32.mrf.mxu0
        %v5627 = vadd.f32 %v5608, %v5626
        %v5628 = vpop.f32.mrf.mxu0
        %v5629 = vadd.f32 %v5610, %v5628
        %5630 = vdwg.mxu0
        %v5679 = vunpack.c.l.b16 %v5281
        %v5680 = vunpack.c.l.b16 %v5282
        %v5681 = vunpack.c.l.b16 %v5283
        %v5682 = vunpack.c.l.b16 %v5284
        %v5683 = vunpack.c.l.b16 %v5285
        %v5684 = vunpack.c.l.b16 %v5286
        %v5685 = vunpack.c.l.b16 %v5287
        %v5686 = vunpack.c.l.b16 %v5288
        %v5687 = vunpack.c.l.b16 %v5289
        %v5688 = vunpack.c.l.b16 %v5290
        %v5689 = vunpack.c.l.b16 %v5291
        %v5690 = vunpack.c.l.b16 %v5292
        %v5691 = vunpack.c.l.b16 %v5293
        %v5692 = vunpack.c.l.b16 %v5294
        %v5693 = vunpack.c.l.b16 %v5295
        %v5694 = vunpack.c.l.b16 %v5296
        %v5695 = vunpack.c.l.b16 %v5297
        %v5696 = vunpack.c.l.b16 %v5298
        %v5697 = vunpack.c.l.b16 %v5299
        %v5698 = vunpack.c.l.b16 %v5300
        %v5699 = vunpack.c.l.b16 %v5301
        %v5700 = vunpack.c.l.b16 %v5302
        %v5701 = vunpack.c.l.b16 %v5303
        %v5702 = vunpack.c.l.b16 %v5304
        %v5703 = vunpack.c.l.b16 %v5305
        %v5704 = vunpack.c.l.b16 %v5306
        %v5705 = vunpack.c.l.b16 %v5307
        %v5706 = vunpack.c.l.b16 %v5308
        %v5707 = vunpack.c.l.b16 %v5309
        %v5708 = vunpack.c.l.b16 %v5310
        %v5709 = vunpack.c.l.b16 %v5311
        %v5710 = vunpack.c.l.b16 %v5312
        %v5711 = vunpack.c.l.b16 %v5313
        %v5712 = vunpack.c.l.b16 %v5314
        %v5713 = vunpack.c.l.b16 %v5315
        %v5714 = vunpack.c.l.b16 %v5316
        %v5715 = vunpack.c.l.b16 %v5317
        %v5716 = vunpack.c.l.b16 %v5318
        %v5717 = vunpack.c.l.b16 %v5319
        %v5718 = vunpack.c.l.b16 %v5320
        %v5719 = vunpack.c.l.b16 %v5321
        %v5720 = vunpack.c.l.b16 %v5322
        %v5721 = vunpack.c.l.b16 %v5323
        %v5722 = vunpack.c.l.b16 %v5324
        %v5723 = vunpack.c.l.b16 %v5325
        %v5724 = vunpack.c.l.b16 %v5326
        %v5725 = vunpack.c.l.b16 %v5327
        %v5726 = vunpack.c.l.b16 %v5328
        %v5727 = vpack.c.b16 %v5680, %v5679
        %v5728 = vpack.c.b16 %v5682, %v5681
        %v5729 = vpack.c.b16 %v5684, %v5683
        %v5730 = vpack.c.b16 %v5686, %v5685
        %v5731 = vpack.c.b16 %v5688, %v5687
        %v5732 = vpack.c.b16 %v5690, %v5689
        %v5733 = vpack.c.b16 %v5692, %v5691
        %v5734 = vpack.c.b16 %v5694, %v5693
        %v5735 = vpack.c.b16 %v5696, %v5695
        %v5736 = vpack.c.b16 %v5698, %v5697
        %v5737 = vpack.c.b16 %v5700, %v5699
        %v5738 = vpack.c.b16 %v5702, %v5701
        %v5739 = vpack.c.b16 %v5704, %v5703
        %v5740 = vpack.c.b16 %v5706, %v5705
        %v5741 = vpack.c.b16 %v5708, %v5707
        %v5742 = vpack.c.b16 %v5710, %v5709
        %v5743 = vpack.c.b16 %v5712, %v5711
        %v5744 = vpack.c.b16 %v5714, %v5713
        %v5745 = vpack.c.b16 %v5716, %v5715
        %v5746 = vpack.c.b16 %v5718, %v5717
        %v5747 = vpack.c.b16 %v5720, %v5719
        %v5748 = vpack.c.b16 %v5722, %v5721
        %v5749 = vpack.c.b16 %v5724, %v5723
        %v5750 = vpack.c.b16 %v5726, %v5725
        %5775 = vmatpush.bf16.msra.mxu0 %v5734
        %5776 = vmatpush.bf16.msra.mxu0 %v5733
        %5777 = vmatpush.bf16.msra.mxu0 %v5732
        %5778 = vmatpush.bf16.msra.mxu0 %v5731
        %5779 = vmatpush.bf16.msra.mxu0 %v5730
        %5780 = vmatpush.bf16.msra.mxu0 %v5729
        %5781 = vmatpush.bf16.msra.mxu0 %v5728
        %5782 = vmatpush.bf16.msra.mxu0 %v5727
        %5783 = vmatmul.bf16.gmra.mxu0 %v5245
        %v5784 = vpop.f32.mrf.mxu0
        %v5785 = vadd.f32 %v5622, %v5784
        %v5786 = vpop.f32.mrf.mxu0
        %v5787 = vadd.f32 %v5624, %v5786
        %5788 = vmatmul.bf16.gmra.mxu0 %v5246
        %v5789 = vpop.f32.mrf.mxu0
        %v5790 = vadd.f32 %v5627, %v5789
        %v5791 = vpop.f32.mrf.mxu0
        %v5792 = vadd.f32 %v5629, %v5791
        %5793 = vdwg.mxu0
        %5794 = vmatpush.bf16.msra.mxu0 %v5742
        %5795 = vmatpush.bf16.msra.mxu0 %v5741
        %5796 = vmatpush.bf16.msra.mxu0 %v5740
        %5797 = vmatpush.bf16.msra.mxu0 %v5739
        %5798 = vmatpush.bf16.msra.mxu0 %v5738
        %5799 = vmatpush.bf16.msra.mxu0 %v5737
        %5800 = vmatpush.bf16.msra.mxu0 %v5736
        %5801 = vmatpush.bf16.msra.mxu0 %v5735
        %5802 = vmatmul.bf16.gmra.mxu0 %v5263
        %v5803 = vpop.f32.mrf.mxu0
        %v5804 = vadd.f32 %v5785, %v5803
        %v5805 = vpop.f32.mrf.mxu0
        %v5806 = vadd.f32 %v5787, %v5805
        %5807 = vmatmul.bf16.gmra.mxu0 %v5271
        %v5808 = vpop.f32.mrf.mxu0
        %v5809 = vadd.f32 %v5790, %v5808
        %v5810 = vpop.f32.mrf.mxu0
        %v5811 = vadd.f32 %v5792, %v5810
        %5812 = vdwg.mxu0
        %5813 = vmatpush.bf16.msra.mxu0 %v5750
        %5814 = vmatpush.bf16.msra.mxu0 %v5749
        %5815 = vmatpush.bf16.msra.mxu0 %v5748
        %5816 = vmatpush.bf16.msra.mxu0 %v5747
        %5817 = vmatpush.bf16.msra.mxu0 %v5746
        %5818 = vmatpush.bf16.msra.mxu0 %v5745
        %5819 = vmatpush.bf16.msra.mxu0 %v5744
        %5820 = vmatpush.bf16.msra.mxu0 %v5743
        %5821 = vmatmul.bf16.gmra.mxu0 %v5276
        %v5822 = vpop.f32.mrf.mxu0
        %v5823 = vadd.f32 %v5804, %v5822
        %v5824 = vpop.f32.mrf.mxu0
        %v5825 = vadd.f32 %v5806, %v5824
        %5826 = vmatmul.bf16.gmra.mxu0 %v5278
        %v5827 = vpop.f32.mrf.mxu0
        %v5828 = vadd.f32 %v5809, %v5827
        %v5829 = vpop.f32.mrf.mxu0
        %v5830 = vadd.f32 %v5811, %v5829
        %5831 = vdwg.mxu0
        %s5832 = sadd.s32 %s5228, 2
        %s5833 = smul.u32 %s5832, 5
        %s5834 = smul.addr %s5833, 4
        %s5835 = scalar_lea.vmem %s182, %s5834
        %v5836 = vld [vmem:[%s5835] sm:$0xf]
        %v5837 = vld [vmem:[%s5835 + $0x4] sm:$0xf]
        %v5838 = vld [vmem:[%s5835 + $0x8] sm:$0xf]
        %v5839 = vld [vmem:[%s5835 + $0xc] sm:$0xf]
        %v5840 = vld [vmem:[%s5835 + $0x10] sm:$0x1]
        %v5845 = vunpack.c.l.b16 %v5836
        %v5846 = vunpack.c.l.b16 %v5837
        %v5847 = vunpack.c.l.b16 %v5838
        %v5848 = vunpack.c.l.b16 %v5839
        %v5849 = vpack.c.b16 %v5846, %v5845
        %v5850 = vpack.c.b16 %v5848, %v5847
        %v5854 = vunpack.c.l.b16 %v5840
        %v5855 = vpack.c.b16 %v5854, %v5854
        %v5857 = vshrl.u32 %v5849, 16
        %v5859 = vshll.u32 %v5849, 16
        %v5861 = vrot.slane %v5859, 1
        %v5862 = vor.u32 %v5857, %v5861
        %v5864 = vshll.u32 %v5850, 16
        %v5866 = vrot.slane %v5864, 1
        %v5867 = vsel %vm208, %v5862, %v5866
        %v5868 = vshrl.u32 %v5850, 16
        %v5870 = vor.u32 %v5868, %v5866
        %v5872 = vshll.u32 %v5855, 16
        %v5874 = vrot.slane %v5872, 1
        %v5875 = vsel %vm208, %v5870, %v5874
        %v5878 = vrot.slane %v5849, 1
        %v5879 = vrot.slane %v5850, 1
        %v5880 = vsel %vm231, %v5878, %v5879
        %v5881 = vrot.slane %v5855, 1
        %v5882 = vsel %vm231, %v5879, %v5881
        %v5885 = vld [vmem:[%s844] sm:$0xf]
        %v5886 = vld [vmem:[%s844 + $0x4] sm:$0xf]
        %v5887 = vld [vmem:[%s844 + $0x8] sm:$0xf]
        %v5888 = vld [vmem:[%s844 + $0xc] sm:$0xf]
        %v5889 = vld [vmem:[%s844 + $0x10] sm:$0xf]
        %v5890 = vld [vmem:[%s844 + $0x14] sm:$0xf]
        %v5891 = vld [vmem:[%s844 + $0x18] sm:$0xf]
        %v5892 = vld [vmem:[%s844 + $0x1c] sm:$0xf]
        %v5893 = vld [vmem:[%s844 + $0x20] sm:$0xf]
        %v5894 = vld [vmem:[%s844 + $0x24] sm:$0xf]
        %v5895 = vld [vmem:[%s844 + $0x28] sm:$0xf]
        %v5896 = vld [vmem:[%s844 + $0x2c] sm:$0xf]
        %v5897 = vld [vmem:[%s844 + $0x30] sm:$0xf]
        %v5898 = vld [vmem:[%s844 + $0x34] sm:$0xf]
        %v5899 = vld [vmem:[%s844 + $0x38] sm:$0xf]
        %v5900 = vld [vmem:[%s844 + $0x3c] sm:$0xf]
        %v5901 = vld [vmem:[%s844 + $0x40] sm:$0xf]
        %v5902 = vld [vmem:[%s844 + $0x44] sm:$0xf]
        %v5903 = vld [vmem:[%s844 + $0x48] sm:$0xf]
        %v5904 = vld [vmem:[%s844 + $0x4c] sm:$0xf]
        %v5905 = vld [vmem:[%s844 + $0x50] sm:$0xf]
        %v5906 = vld [vmem:[%s844 + $0x54] sm:$0xf]
        %v5907 = vld [vmem:[%s844 + $0x58] sm:$0xf]
        %v5908 = vld [vmem:[%s844 + $0x5c] sm:$0xf]
        %v5909 = vld [vmem:[%s844 + $0x60] sm:$0xf]
        %v5910 = vld [vmem:[%s844 + $0x64] sm:$0xf]
        %v5911 = vld [vmem:[%s844 + $0x68] sm:$0xf]
        %v5912 = vld [vmem:[%s844 + $0x6c] sm:$0xf]
        %v5913 = vld [vmem:[%s844 + $0x70] sm:$0xf]
        %v5914 = vld [vmem:[%s844 + $0x74] sm:$0xf]
        %v5915 = vld [vmem:[%s844 + $0x78] sm:$0xf]
        %v5916 = vld [vmem:[%s844 + $0x7c] sm:$0xf]
        %v5917 = vld [vmem:[%s844 + $0x80] sm:$0xf]
        %v5918 = vld [vmem:[%s844 + $0x84] sm:$0xf]
        %v5919 = vld [vmem:[%s844 + $0x88] sm:$0xf]
        %v5920 = vld [vmem:[%s844 + $0x8c] sm:$0xf]
        %v5921 = vld [vmem:[%s844 + $0x90] sm:$0xf]
        %v5922 = vld [vmem:[%s844 + $0x94] sm:$0xf]
        %v5923 = vld [vmem:[%s844 + $0x98] sm:$0xf]
        %v5924 = vld [vmem:[%s844 + $0x9c] sm:$0xf]
        %v5925 = vld [vmem:[%s844 + $0xa0] sm:$0xf]
        %v5926 = vld [vmem:[%s844 + $0xa4] sm:$0xf]
        %v5927 = vld [vmem:[%s844 + $0xa8] sm:$0xf]
        %v5928 = vld [vmem:[%s844 + $0xac] sm:$0xf]
        %v5929 = vld [vmem:[%s844 + $0xb0] sm:$0xf]
        %v5930 = vld [vmem:[%s844 + $0xb4] sm:$0xf]
        %v5931 = vld [vmem:[%s844 + $0xb8] sm:$0xf]
        %v5932 = vld [vmem:[%s844 + $0xbc] sm:$0xf]
        %v5981 = vunpack.c.l.b16 %v5885
        %v5982 = vunpack.c.l.b16 %v5886
        %v5983 = vunpack.c.l.b16 %v5887
        %v5984 = vunpack.c.l.b16 %v5888
        %v5985 = vunpack.c.l.b16 %v5889
        %v5986 = vunpack.c.l.b16 %v5890
        %v5987 = vunpack.c.l.b16 %v5891
        %v5988 = vunpack.c.l.b16 %v5892
        %v5989 = vunpack.c.l.b16 %v5893
        %v5990 = vunpack.c.l.b16 %v5894
        %v5991 = vunpack.c.l.b16 %v5895
        %v5992 = vunpack.c.l.b16 %v5896
        %v5993 = vunpack.c.l.b16 %v5897
        %v5994 = vunpack.c.l.b16 %v5898
        %v5995 = vunpack.c.l.b16 %v5899
        %v5996 = vunpack.c.l.b16 %v5900
        %v5997 = vunpack.c.l.b16 %v5901
        %v5998 = vunpack.c.l.b16 %v5902
        %v5999 = vunpack.c.l.b16 %v5903
        %v6000 = vunpack.c.l.b16 %v5904
        %v6001 = vunpack.c.l.b16 %v5905
        %v6002 = vunpack.c.l.b16 %v5906
        %v6003 = vunpack.c.l.b16 %v5907
        %v6004 = vunpack.c.l.b16 %v5908
        %v6005 = vunpack.c.l.b16 %v5909
        %v6006 = vunpack.c.l.b16 %v5910
        %v6007 = vunpack.c.l.b16 %v5911
        %v6008 = vunpack.c.l.b16 %v5912
        %v6009 = vunpack.c.l.b16 %v5913
        %v6010 = vunpack.c.l.b16 %v5914
        %v6011 = vunpack.c.l.b16 %v5915
        %v6012 = vunpack.c.l.b16 %v5916
        %v6013 = vunpack.c.l.b16 %v5917
        %v6014 = vunpack.c.l.b16 %v5918
        %v6015 = vunpack.c.l.b16 %v5919
        %v6016 = vunpack.c.l.b16 %v5920
        %v6017 = vunpack.c.l.b16 %v5921
        %v6018 = vunpack.c.l.b16 %v5922
        %v6019 = vunpack.c.l.b16 %v5923
        %v6020 = vunpack.c.l.b16 %v5924
        %v6021 = vunpack.c.l.b16 %v5925
        %v6022 = vunpack.c.l.b16 %v5926
        %v6023 = vunpack.c.l.b16 %v5927
        %v6024 = vunpack.c.l.b16 %v5928
        %v6025 = vunpack.c.l.b16 %v5929
        %v6026 = vunpack.c.l.b16 %v5930
        %v6027 = vunpack.c.l.b16 %v5931
        %v6028 = vunpack.c.l.b16 %v5932
        %v6029 = vpack.c.b16 %v5982, %v5981
        %v6030 = vpack.c.b16 %v5984, %v5983
        %v6031 = vpack.c.b16 %v5986, %v5985
        %v6032 = vpack.c.b16 %v5988, %v5987
        %v6033 = vpack.c.b16 %v5990, %v5989
        %v6034 = vpack.c.b16 %v5992, %v5991
        %v6035 = vpack.c.b16 %v5994, %v5993
        %v6036 = vpack.c.b16 %v5996, %v5995
        %v6037 = vpack.c.b16 %v5998, %v5997
        %v6038 = vpack.c.b16 %v6000, %v5999
        %v6039 = vpack.c.b16 %v6002, %v6001
        %v6040 = vpack.c.b16 %v6004, %v6003
        %v6041 = vpack.c.b16 %v6006, %v6005
        %v6042 = vpack.c.b16 %v6008, %v6007
        %v6043 = vpack.c.b16 %v6010, %v6009
        %v6044 = vpack.c.b16 %v6012, %v6011
        %v6045 = vpack.c.b16 %v6014, %v6013
        %v6046 = vpack.c.b16 %v6016, %v6015
        %v6047 = vpack.c.b16 %v6018, %v6017
        %v6048 = vpack.c.b16 %v6020, %v6019
        %v6049 = vpack.c.b16 %v6022, %v6021
        %v6050 = vpack.c.b16 %v6024, %v6023
        %v6051 = vpack.c.b16 %v6026, %v6025
        %v6052 = vpack.c.b16 %v6028, %v6027
        %6077 = vmatpush.bf16.msra.mxu0 %v6036
        %6078 = vmatpush.bf16.msra.mxu0 %v6035
        %6079 = vmatpush.bf16.msra.mxu0 %v6034
        %6080 = vmatpush.bf16.msra.mxu0 %v6033
        %6081 = vmatpush.bf16.msra.mxu0 %v6032
        %6082 = vmatpush.bf16.msra.mxu0 %v6031
        %6083 = vmatpush.bf16.msra.mxu0 %v6030
        %6084 = vmatpush.bf16.msra.mxu0 %v6029
        %6085 = vmatmul.bf16.gmra.mxu0 %v5849
        %v6086 = vpop.f32.mrf.mxu0
        %v6087 = vadd.f32 0.0, %v6086
        %v6088 = vpop.f32.mrf.mxu0
        %v6089 = vadd.f32 0.0, %v6088
        %6090 = vmatmul.bf16.gmra.mxu0 %v5850
        %v6091 = vpop.f32.mrf.mxu0
        %v6092 = vadd.f32 0.0, %v6091
        %v6093 = vpop.f32.mrf.mxu0
        %v6094 = vadd.f32 0.0, %v6093
        %6095 = vdwg.mxu0
        %6096 = vmatpush.bf16.msra.mxu0 %v6044
        %6097 = vmatpush.bf16.msra.mxu0 %v6043
        %6098 = vmatpush.bf16.msra.mxu0 %v6042
        %6099 = vmatpush.bf16.msra.mxu0 %v6041
        %6100 = vmatpush.bf16.msra.mxu0 %v6040
        %6101 = vmatpush.bf16.msra.mxu0 %v6039
        %6102 = vmatpush.bf16.msra.mxu0 %v6038
        %6103 = vmatpush.bf16.msra.mxu0 %v6037
        %6104 = vmatmul.bf16.gmra.mxu0 %v5867
        %v6105 = vpop.f32.mrf.mxu0
        %v6106 = vadd.f32 %v6087, %v6105
        %v6107 = vpop.f32.mrf.mxu0
        %v6108 = vadd.f32 %v6089, %v6107
        %6109 = vmatmul.bf16.gmra.mxu0 %v5875
        %v6110 = vpop.f32.mrf.mxu0
        %v6111 = vadd.f32 %v6092, %v6110
        %v6112 = vpop.f32.mrf.mxu0
        %v6113 = vadd.f32 %v6094, %v6112
        %6114 = vdwg.mxu0
        %6115 = vmatpush.bf16.msra.mxu0 %v6052
        %6116 = vmatpush.bf16.msra.mxu0 %v6051
        %6117 = vmatpush.bf16.msra.mxu0 %v6050
        %6118 = vmatpush.bf16.msra.mxu0 %v6049
        %6119 = vmatpush.bf16.msra.mxu0 %v6048
        %6120 = vmatpush.bf16.msra.mxu0 %v6047
        %6121 = vmatpush.bf16.msra.mxu0 %v6046
        %6122 = vmatpush.bf16.msra.mxu0 %v6045
        %6123 = vmatmul.bf16.gmra.mxu0 %v5880
        %v6124 = vpop.f32.mrf.mxu0
        %v6125 = vadd.f32 %v6106, %v6124
        %v6126 = vpop.f32.mrf.mxu0
        %v6127 = vadd.f32 %v6108, %v6126
        %6128 = vmatmul.bf16.gmra.mxu0 %v5882
        %v6129 = vpop.f32.mrf.mxu0
        %v6130 = vadd.f32 %v6111, %v6129
        %v6131 = vpop.f32.mrf.mxu0
        %v6132 = vadd.f32 %v6113, %v6131
        %6133 = vdwg.mxu0
        %v6134 = vadd.f32 %v5823, %v6125
        %v6135 = vadd.f32 %v5825, %v6127
        %v6136 = vadd.f32 %v5828, %v6130
        %v6137 = vadd.f32 %v5830, %v6132
        %v6138 = vld [vmem:[%s2] sm:$0x1]
        %v6140 = vperm.slane %v6138, 0
        %v6142 = vadd.f32 %v6134, %v6140
        %v6143 = vadd.f32 %v6135, %v6140
        %v6144 = vadd.f32 %v6136, %v6140
        %v6145 = vadd.f32 %v6137, %v6140
        %v6146 = vxor.u32 %v6142, 2147483648
        %v6147 = vxor.u32 %v6143, 2147483648
        %v6148 = vxor.u32 %v6144, 2147483648
        %v6149 = vxor.u32 %v6145, 2147483648
        %v6150 = vmul.f32 %v6146, 1.442695
        %v6151 = vpow.pop %v6150
        %v6152 = vmul.f32 %v6147, 1.442695
        %v6153 = vpow.pop %v6152
        %v6154 = vmul.f32 %v6148, 1.442695
        %v6155 = vpow.pop %v6154
        %v6156 = vmul.f32 %v6149, 1.442695
        %v6157 = vpow.pop %v6156
        %v6158 = vadd.f32 %v6151, 1.0
        %v6159 = vadd.f32 %v6153, 1.0
        %v6160 = vadd.f32 %v6155, 1.0
        %v6161 = vadd.f32 %v6157, 1.0
        %v6162 = vrcp.pop %v6158
        %v6163 = vmul.f32 %v6158, %v6162
        %v6164 = vsub.f32 1.0, %v6163
        %v6165 = vmul.f32 %v6162, %v6164
        %v6166 = vadd.f32 %v6162, %v6165
        %vm6167 = vweird.f32 %v6158
        %vm6168 = vweird.f32 %v6162
        %vm6169 = vmor %vm6167, %vm6168
        %v6170 = vsel %vm6169, %v6162, %v6166
        %v6171 = vand.u32 2147483647, %v6158
        %vm6172 = vcmp.eq.f32.partialorder %v6171, 8.507059e+37
        %v6173 = vand.u32 %v6158, 2147483648
        %v6174 = vor.u32 1.1754944e-38, %v6173
        %v6175 = vsel %vm6172, %v6174, %v6170
        %v6176 = vmul.f32 1.0, %v6175
        %v6177 = vrcp.pop %v6159
        %v6178 = vmul.f32 %v6159, %v6177
        %v6179 = vsub.f32 1.0, %v6178
        %v6180 = vmul.f32 %v6177, %v6179
        %v6181 = vadd.f32 %v6177, %v6180
        %vm6182 = vweird.f32 %v6159
        %vm6183 = vweird.f32 %v6177
        %vm6184 = vmor %vm6182, %vm6183
        %v6185 = vsel %vm6184, %v6177, %v6181
        %v6186 = vand.u32 2147483647, %v6159
        %vm6187 = vcmp.eq.f32.partialorder %v6186, 8.507059e+37
        %v6188 = vand.u32 %v6159, 2147483648
        %v6189 = vor.u32 1.1754944e-38, %v6188
        %v6190 = vsel %vm6187, %v6189, %v6185
        %v6191 = vmul.f32 1.0, %v6190
        %v6192 = vrcp.pop %v6160
        %v6193 = vmul.f32 %v6160, %v6192
        %v6194 = vsub.f32 1.0, %v6193
        %v6195 = vmul.f32 %v6192, %v6194
        %v6196 = vadd.f32 %v6192, %v6195
        %vm6197 = vweird.f32 %v6160
        %vm6198 = vweird.f32 %v6192
        %vm6199 = vmor %vm6197, %vm6198
        %v6200 = vsel %vm6199, %v6192, %v6196
        %v6201 = vand.u32 2147483647, %v6160
        %vm6202 = vcmp.eq.f32.partialorder %v6201, 8.507059e+37
        %v6203 = vand.u32 %v6160, 2147483648
        %v6204 = vor.u32 1.1754944e-38, %v6203
        %v6205 = vsel %vm6202, %v6204, %v6200
        %v6206 = vmul.f32 1.0, %v6205
        %v6207 = vrcp.pop %v6161
        %v6208 = vmul.f32 %v6161, %v6207
        %v6209 = vsub.f32 1.0, %v6208
        %v6210 = vmul.f32 %v6207, %v6209
        %v6211 = vadd.f32 %v6207, %v6210
        %vm6212 = vweird.f32 %v6161
        %vm6213 = vweird.f32 %v6207
        %vm6214 = vmor %vm6212, %vm6213
        %v6215 = vsel %vm6214, %v6207, %v6211
        %v6216 = vand.u32 2147483647, %v6161
        %vm6217 = vcmp.eq.f32.partialorder %v6216, 8.507059e+37
        %v6218 = vand.u32 %v6161, 2147483648
        %v6219 = vor.u32 1.1754944e-38, %v6218
        %v6220 = vsel %vm6217, %v6219, %v6215
        %v6221 = vmul.f32 1.0, %v6220
        %v6222 = vmul.f32 %v6142, %v6176
        %v6223 = vmul.f32 %v6143, %v6191
        %v6224 = vmul.f32 %v6144, %v6206
        %v6225 = vmul.f32 %v6145, %v6221
        %v6226 = vpack.c.bf16 %v6222, %v6222
        %v6227 = vpack.c.bf16 %v6223, %v6223
        %v6228 = vpack.c.bf16 %v6224, %v6224
        %v6229 = vpack.c.bf16 %v6225, %v6225
        %s6230 = scalar_lea.vmem %s177, 80 [#allocation2]
        %6231 = vst [vmem:[%s6230] sm:$0xf] %v6226
        %6232 = vst [vmem:[%s6230 + $0x4] sm:$0xf] %v6227
        %6233 = vst [vmem:[%s6230 + $0x8] sm:$0xf] %v6228
        %6234 = vst [vmem:[%s6230 + $0xc] sm:$0xf] %v6229
        %s6235 = sadd.s32 %s1194, 6
        %s6236 = smul.u32 %s6235, 2
        %s6237 = smul.u32 %s6236, 5
        %s6238 = smul.addr %s6237, 4
        %s6239 = scalar_lea.vmem %s182, %s6238
        %v6240 = vld [vmem:[%s6239] sm:$0xf]
        %v6241 = vld [vmem:[%s6239 + $0x4] sm:$0xf]
        %v6242 = vld [vmem:[%s6239 + $0x8] sm:$0xf]
        %v6243 = vld [vmem:[%s6239 + $0xc] sm:$0xf]
        %v6244 = vld [vmem:[%s6239 + $0x10] sm:$0x1]
        %v6249 = vunpack.c.l.b16 %v6240
        %v6250 = vunpack.c.l.b16 %v6241
        %v6251 = vunpack.c.l.b16 %v6242
        %v6252 = vunpack.c.l.b16 %v6243
        %v6253 = vpack.c.b16 %v6250, %v6249
        %v6254 = vpack.c.b16 %v6252, %v6251
        %v6258 = vunpack.c.l.b16 %v6244
        %v6259 = vpack.c.b16 %v6258, %v6258
        %v6261 = vshrl.u32 %v6253, 16
        %v6263 = vshll.u32 %v6253, 16
        %v6265 = vrot.slane %v6263, 1
        %v6266 = vor.u32 %v6261, %v6265
        %v6268 = vshll.u32 %v6254, 16
        %v6270 = vrot.slane %v6268, 1
        %v6271 = vsel %vm208, %v6266, %v6270
        %v6272 = vshrl.u32 %v6254, 16
        %v6274 = vor.u32 %v6272, %v6270
        %v6276 = vshll.u32 %v6259, 16
        %v6278 = vrot.slane %v6276, 1
        %v6279 = vsel %vm208, %v6274, %v6278
        %v6282 = vrot.slane %v6253, 1
        %v6283 = vrot.slane %v6254, 1
        %v6284 = vsel %vm231, %v6282, %v6283
        %v6285 = vrot.slane %v6259, 1
        %v6286 = vsel %vm231, %v6283, %v6285
        %v6289 = vld [vmem:[%s1] sm:$0xf]
        %v6290 = vld [vmem:[%s1 + $0x4] sm:$0xf]
        %v6291 = vld [vmem:[%s1 + $0x8] sm:$0xf]
        %v6292 = vld [vmem:[%s1 + $0xc] sm:$0xf]
        %v6293 = vld [vmem:[%s1 + $0x10] sm:$0xf]
        %v6294 = vld [vmem:[%s1 + $0x14] sm:$0xf]
        %v6295 = vld [vmem:[%s1 + $0x18] sm:$0xf]
        %v6296 = vld [vmem:[%s1 + $0x1c] sm:$0xf]
        %v6297 = vld [vmem:[%s1 + $0x20] sm:$0xf]
        %v6298 = vld [vmem:[%s1 + $0x24] sm:$0xf]
        %v6299 = vld [vmem:[%s1 + $0x28] sm:$0xf]
        %v6300 = vld [vmem:[%s1 + $0x2c] sm:$0xf]
        %v6301 = vld [vmem:[%s1 + $0x30] sm:$0xf]
        %v6302 = vld [vmem:[%s1 + $0x34] sm:$0xf]
        %v6303 = vld [vmem:[%s1 + $0x38] sm:$0xf]
        %v6304 = vld [vmem:[%s1 + $0x3c] sm:$0xf]
        %v6305 = vld [vmem:[%s1 + $0x40] sm:$0xf]
        %v6306 = vld [vmem:[%s1 + $0x44] sm:$0xf]
        %v6307 = vld [vmem:[%s1 + $0x48] sm:$0xf]
        %v6308 = vld [vmem:[%s1 + $0x4c] sm:$0xf]
        %v6309 = vld [vmem:[%s1 + $0x50] sm:$0xf]
        %v6310 = vld [vmem:[%s1 + $0x54] sm:$0xf]
        %v6311 = vld [vmem:[%s1 + $0x58] sm:$0xf]
        %v6312 = vld [vmem:[%s1 + $0x5c] sm:$0xf]
        %v6313 = vld [vmem:[%s1 + $0x60] sm:$0xf]
        %v6314 = vld [vmem:[%s1 + $0x64] sm:$0xf]
        %v6315 = vld [vmem:[%s1 + $0x68] sm:$0xf]
        %v6316 = vld [vmem:[%s1 + $0x6c] sm:$0xf]
        %v6317 = vld [vmem:[%s1 + $0x70] sm:$0xf]
        %v6318 = vld [vmem:[%s1 + $0x74] sm:$0xf]
        %v6319 = vld [vmem:[%s1 + $0x78] sm:$0xf]
        %v6320 = vld [vmem:[%s1 + $0x7c] sm:$0xf]
        %v6321 = vld [vmem:[%s1 + $0x80] sm:$0xf]
        %v6322 = vld [vmem:[%s1 + $0x84] sm:$0xf]
        %v6323 = vld [vmem:[%s1 + $0x88] sm:$0xf]
        %v6324 = vld [vmem:[%s1 + $0x8c] sm:$0xf]
        %v6325 = vld [vmem:[%s1 + $0x90] sm:$0xf]
        %v6326 = vld [vmem:[%s1 + $0x94] sm:$0xf]
        %v6327 = vld [vmem:[%s1 + $0x98] sm:$0xf]
        %v6328 = vld [vmem:[%s1 + $0x9c] sm:$0xf]
        %v6329 = vld [vmem:[%s1 + $0xa0] sm:$0xf]
        %v6330 = vld [vmem:[%s1 + $0xa4] sm:$0xf]
        %v6331 = vld [vmem:[%s1 + $0xa8] sm:$0xf]
        %v6332 = vld [vmem:[%s1 + $0xac] sm:$0xf]
        %v6333 = vld [vmem:[%s1 + $0xb0] sm:$0xf]
        %v6334 = vld [vmem:[%s1 + $0xb4] sm:$0xf]
        %v6335 = vld [vmem:[%s1 + $0xb8] sm:$0xf]
        %v6336 = vld [vmem:[%s1 + $0xbc] sm:$0xf]
        %s6337 = sadd.s32 %s6236, 1
        %s6338 = smul.u32 %s6337, 5
        %s6339 = smul.addr %s6338, 4
        %s6340 = scalar_lea.vmem %s182, %s6339
        %v6341 = vld [vmem:[%s6340] sm:$0xf]
        %v6342 = vld [vmem:[%s6340 + $0x4] sm:$0xf]
        %v6343 = vld [vmem:[%s6340 + $0x8] sm:$0xf]
        %v6344 = vld [vmem:[%s6340 + $0xc] sm:$0xf]
        %v6345 = vld [vmem:[%s6340 + $0x10] sm:$0x1]
        %v6350 = vunpack.c.l.b16 %v6341
        %v6351 = vunpack.c.l.b16 %v6342
        %v6352 = vunpack.c.l.b16 %v6343
        %v6353 = vunpack.c.l.b16 %v6344
        %v6354 = vpack.c.b16 %v6351, %v6350
        %v6355 = vpack.c.b16 %v6353, %v6352
        %v6359 = vunpack.c.l.b16 %v6345
        %v6360 = vpack.c.b16 %v6359, %v6359
        %v6362 = vshrl.u32 %v6354, 16
        %v6364 = vshll.u32 %v6354, 16
        %v6366 = vrot.slane %v6364, 1
        %v6367 = vor.u32 %v6362, %v6366
        %v6369 = vshll.u32 %v6355, 16
        %v6371 = vrot.slane %v6369, 1
        %v6372 = vsel %vm208, %v6367, %v6371
        %v6373 = vshrl.u32 %v6355, 16
        %v6375 = vor.u32 %v6373, %v6371
        %v6377 = vshll.u32 %v6360, 16
        %v6379 = vrot.slane %v6377, 1
        %v6380 = vsel %vm208, %v6375, %v6379
        %v6383 = vrot.slane %v6354, 1
        %v6384 = vrot.slane %v6355, 1
        %v6385 = vsel %vm231, %v6383, %v6384
        %v6386 = vrot.slane %v6360, 1
        %v6387 = vsel %vm231, %v6384, %v6386
        %v6390 = vld [vmem:[%s340] sm:$0xf]
        %v6391 = vld [vmem:[%s340 + $0x4] sm:$0xf]
        %v6392 = vld [vmem:[%s340 + $0x8] sm:$0xf]
        %v6393 = vld [vmem:[%s340 + $0xc] sm:$0xf]
        %v6394 = vld [vmem:[%s340 + $0x10] sm:$0xf]
        %v6395 = vld [vmem:[%s340 + $0x14] sm:$0xf]
        %v6396 = vld [vmem:[%s340 + $0x18] sm:$0xf]
        %v6397 = vld [vmem:[%s340 + $0x1c] sm:$0xf]
        %v6398 = vld [vmem:[%s340 + $0x20] sm:$0xf]
        %v6399 = vld [vmem:[%s340 + $0x24] sm:$0xf]
        %v6400 = vld [vmem:[%s340 + $0x28] sm:$0xf]
        %v6401 = vld [vmem:[%s340 + $0x2c] sm:$0xf]
        %v6402 = vld [vmem:[%s340 + $0x30] sm:$0xf]
        %v6403 = vld [vmem:[%s340 + $0x34] sm:$0xf]
        %v6404 = vld [vmem:[%s340 + $0x38] sm:$0xf]
        %v6405 = vld [vmem:[%s340 + $0x3c] sm:$0xf]
        %v6406 = vld [vmem:[%s340 + $0x40] sm:$0xf]
        %v6407 = vld [vmem:[%s340 + $0x44] sm:$0xf]
        %v6408 = vld [vmem:[%s340 + $0x48] sm:$0xf]
        %v6409 = vld [vmem:[%s340 + $0x4c] sm:$0xf]
        %v6410 = vld [vmem:[%s340 + $0x50] sm:$0xf]
        %v6411 = vld [vmem:[%s340 + $0x54] sm:$0xf]
        %v6412 = vld [vmem:[%s340 + $0x58] sm:$0xf]
        %v6413 = vld [vmem:[%s340 + $0x5c] sm:$0xf]
        %v6414 = vld [vmem:[%s340 + $0x60] sm:$0xf]
        %v6415 = vld [vmem:[%s340 + $0x64] sm:$0xf]
        %v6416 = vld [vmem:[%s340 + $0x68] sm:$0xf]
        %v6417 = vld [vmem:[%s340 + $0x6c] sm:$0xf]
        %v6418 = vld [vmem:[%s340 + $0x70] sm:$0xf]
        %v6419 = vld [vmem:[%s340 + $0x74] sm:$0xf]
        %v6420 = vld [vmem:[%s340 + $0x78] sm:$0xf]
        %v6421 = vld [vmem:[%s340 + $0x7c] sm:$0xf]
        %v6422 = vld [vmem:[%s340 + $0x80] sm:$0xf]
        %v6423 = vld [vmem:[%s340 + $0x84] sm:$0xf]
        %v6424 = vld [vmem:[%s340 + $0x88] sm:$0xf]
        %v6425 = vld [vmem:[%s340 + $0x8c] sm:$0xf]
        %v6426 = vld [vmem:[%s340 + $0x90] sm:$0xf]
        %v6427 = vld [vmem:[%s340 + $0x94] sm:$0xf]
        %v6428 = vld [vmem:[%s340 + $0x98] sm:$0xf]
        %v6429 = vld [vmem:[%s340 + $0x9c] sm:$0xf]
        %v6430 = vld [vmem:[%s340 + $0xa0] sm:$0xf]
        %v6431 = vld [vmem:[%s340 + $0xa4] sm:$0xf]
        %v6432 = vld [vmem:[%s340 + $0xa8] sm:$0xf]
        %v6433 = vld [vmem:[%s340 + $0xac] sm:$0xf]
        %v6434 = vld [vmem:[%s340 + $0xb0] sm:$0xf]
        %v6435 = vld [vmem:[%s340 + $0xb4] sm:$0xf]
        %v6436 = vld [vmem:[%s340 + $0xb8] sm:$0xf]
        %v6437 = vld [vmem:[%s340 + $0xbc] sm:$0xf]
        %v6486 = vunpack.c.l.b16 %v6390
        %v6487 = vunpack.c.l.b16 %v6391
        %v6488 = vunpack.c.l.b16 %v6392
        %v6489 = vunpack.c.l.b16 %v6393
        %v6490 = vunpack.c.l.b16 %v6394
        %v6491 = vunpack.c.l.b16 %v6395
        %v6492 = vunpack.c.l.b16 %v6396
        %v6493 = vunpack.c.l.b16 %v6397
        %v6494 = vunpack.c.l.b16 %v6398
        %v6495 = vunpack.c.l.b16 %v6399
        %v6496 = vunpack.c.l.b16 %v6400
        %v6497 = vunpack.c.l.b16 %v6401
        %v6498 = vunpack.c.l.b16 %v6402
        %v6499 = vunpack.c.l.b16 %v6403
        %v6500 = vunpack.c.l.b16 %v6404
        %v6501 = vunpack.c.l.b16 %v6405
        %v6502 = vunpack.c.l.b16 %v6406
        %v6503 = vunpack.c.l.b16 %v6407
        %v6504 = vunpack.c.l.b16 %v6408
        %v6505 = vunpack.c.l.b16 %v6409
        %v6506 = vunpack.c.l.b16 %v6410
        %v6507 = vunpack.c.l.b16 %v6411
        %v6508 = vunpack.c.l.b16 %v6412
        %v6509 = vunpack.c.l.b16 %v6413
        %v6510 = vunpack.c.l.b16 %v6414
        %v6511 = vunpack.c.l.b16 %v6415
        %v6512 = vunpack.c.l.b16 %v6416
        %v6513 = vunpack.c.l.b16 %v6417
        %v6514 = vunpack.c.l.b16 %v6418
        %v6515 = vunpack.c.l.b16 %v6419
        %v6516 = vunpack.c.l.b16 %v6420
        %v6517 = vunpack.c.l.b16 %v6421
        %v6518 = vunpack.c.l.b16 %v6422
        %v6519 = vunpack.c.l.b16 %v6423
        %v6520 = vunpack.c.l.b16 %v6424
        %v6521 = vunpack.c.l.b16 %v6425
        %v6522 = vunpack.c.l.b16 %v6426
        %v6523 = vunpack.c.l.b16 %v6427
        %v6524 = vunpack.c.l.b16 %v6428
        %v6525 = vunpack.c.l.b16 %v6429
        %v6526 = vunpack.c.l.b16 %v6430
        %v6527 = vunpack.c.l.b16 %v6431
        %v6528 = vunpack.c.l.b16 %v6432
        %v6529 = vunpack.c.l.b16 %v6433
        %v6530 = vunpack.c.l.b16 %v6434
        %v6531 = vunpack.c.l.b16 %v6435
        %v6532 = vunpack.c.l.b16 %v6436
        %v6533 = vunpack.c.l.b16 %v6437
        %v6534 = vpack.c.b16 %v6487, %v6486
        %v6535 = vpack.c.b16 %v6489, %v6488
        %v6536 = vpack.c.b16 %v6491, %v6490
        %v6537 = vpack.c.b16 %v6493, %v6492
        %v6538 = vpack.c.b16 %v6495, %v6494
        %v6539 = vpack.c.b16 %v6497, %v6496
        %v6540 = vpack.c.b16 %v6499, %v6498
        %v6541 = vpack.c.b16 %v6501, %v6500
        %v6542 = vpack.c.b16 %v6503, %v6502
        %v6543 = vpack.c.b16 %v6505, %v6504
        %v6544 = vpack.c.b16 %v6507, %v6506
        %v6545 = vpack.c.b16 %v6509, %v6508
        %v6546 = vpack.c.b16 %v6511, %v6510
        %v6547 = vpack.c.b16 %v6513, %v6512
        %v6548 = vpack.c.b16 %v6515, %v6514
        %v6549 = vpack.c.b16 %v6517, %v6516
        %v6550 = vpack.c.b16 %v6519, %v6518
        %v6551 = vpack.c.b16 %v6521, %v6520
        %v6552 = vpack.c.b16 %v6523, %v6522
        %v6553 = vpack.c.b16 %v6525, %v6524
        %v6554 = vpack.c.b16 %v6527, %v6526
        %v6555 = vpack.c.b16 %v6529, %v6528
        %v6556 = vpack.c.b16 %v6531, %v6530
        %v6557 = vpack.c.b16 %v6533, %v6532
        %6582 = vmatpush.bf16.msra.mxu0 %v6541
        %6583 = vmatpush.bf16.msra.mxu0 %v6540
        %6584 = vmatpush.bf16.msra.mxu0 %v6539
        %6585 = vmatpush.bf16.msra.mxu0 %v6538
        %6586 = vmatpush.bf16.msra.mxu0 %v6537
        %6587 = vmatpush.bf16.msra.mxu0 %v6536
        %6588 = vmatpush.bf16.msra.mxu0 %v6535
        %6589 = vmatpush.bf16.msra.mxu0 %v6534
        %6590 = vmatmul.bf16.gmra.mxu0 %v6354
        %v6591 = vpop.f32.mrf.mxu0
        %v6592 = vadd.f32 0.0, %v6591
        %v6593 = vpop.f32.mrf.mxu0
        %v6594 = vadd.f32 0.0, %v6593
        %6595 = vmatmul.bf16.gmra.mxu0 %v6355
        %v6596 = vpop.f32.mrf.mxu0
        %v6597 = vadd.f32 0.0, %v6596
        %v6598 = vpop.f32.mrf.mxu0
        %v6599 = vadd.f32 0.0, %v6598
        %6600 = vdwg.mxu0
        %6601 = vmatpush.bf16.msra.mxu0 %v6549
        %6602 = vmatpush.bf16.msra.mxu0 %v6548
        %6603 = vmatpush.bf16.msra.mxu0 %v6547
        %6604 = vmatpush.bf16.msra.mxu0 %v6546
        %6605 = vmatpush.bf16.msra.mxu0 %v6545
        %6606 = vmatpush.bf16.msra.mxu0 %v6544
        %6607 = vmatpush.bf16.msra.mxu0 %v6543
        %6608 = vmatpush.bf16.msra.mxu0 %v6542
        %6609 = vmatmul.bf16.gmra.mxu0 %v6372
        %v6610 = vpop.f32.mrf.mxu0
        %v6611 = vadd.f32 %v6592, %v6610
        %v6612 = vpop.f32.mrf.mxu0
        %v6613 = vadd.f32 %v6594, %v6612
        %6614 = vmatmul.bf16.gmra.mxu0 %v6380
        %v6615 = vpop.f32.mrf.mxu0
        %v6616 = vadd.f32 %v6597, %v6615
        %v6617 = vpop.f32.mrf.mxu0
        %v6618 = vadd.f32 %v6599, %v6617
        %6619 = vdwg.mxu0
        %6620 = vmatpush.bf16.msra.mxu0 %v6557
        %6621 = vmatpush.bf16.msra.mxu0 %v6556
        %6622 = vmatpush.bf16.msra.mxu0 %v6555
        %6623 = vmatpush.bf16.msra.mxu0 %v6554
        %6624 = vmatpush.bf16.msra.mxu0 %v6553
        %6625 = vmatpush.bf16.msra.mxu0 %v6552
        %6626 = vmatpush.bf16.msra.mxu0 %v6551
        %6627 = vmatpush.bf16.msra.mxu0 %v6550
        %6628 = vmatmul.bf16.gmra.mxu0 %v6385
        %v6629 = vpop.f32.mrf.mxu0
        %v6630 = vadd.f32 %v6611, %v6629
        %v6631 = vpop.f32.mrf.mxu0
        %v6632 = vadd.f32 %v6613, %v6631
        %6633 = vmatmul.bf16.gmra.mxu0 %v6387
        %v6634 = vpop.f32.mrf.mxu0
        %v6635 = vadd.f32 %v6616, %v6634
        %v6636 = vpop.f32.mrf.mxu0
        %v6637 = vadd.f32 %v6618, %v6636
        %6638 = vdwg.mxu0
        %v6687 = vunpack.c.l.b16 %v6289
        %v6688 = vunpack.c.l.b16 %v6290
        %v6689 = vunpack.c.l.b16 %v6291
        %v6690 = vunpack.c.l.b16 %v6292
        %v6691 = vunpack.c.l.b16 %v6293
        %v6692 = vunpack.c.l.b16 %v6294
        %v6693 = vunpack.c.l.b16 %v6295
        %v6694 = vunpack.c.l.b16 %v6296
        %v6695 = vunpack.c.l.b16 %v6297
        %v6696 = vunpack.c.l.b16 %v6298
        %v6697 = vunpack.c.l.b16 %v6299
        %v6698 = vunpack.c.l.b16 %v6300
        %v6699 = vunpack.c.l.b16 %v6301
        %v6700 = vunpack.c.l.b16 %v6302
        %v6701 = vunpack.c.l.b16 %v6303
        %v6702 = vunpack.c.l.b16 %v6304
        %v6703 = vunpack.c.l.b16 %v6305
        %v6704 = vunpack.c.l.b16 %v6306
        %v6705 = vunpack.c.l.b16 %v6307
        %v6706 = vunpack.c.l.b16 %v6308
        %v6707 = vunpack.c.l.b16 %v6309
        %v6708 = vunpack.c.l.b16 %v6310
        %v6709 = vunpack.c.l.b16 %v6311
        %v6710 = vunpack.c.l.b16 %v6312
        %v6711 = vunpack.c.l.b16 %v6313
        %v6712 = vunpack.c.l.b16 %v6314
        %v6713 = vunpack.c.l.b16 %v6315
        %v6714 = vunpack.c.l.b16 %v6316
        %v6715 = vunpack.c.l.b16 %v6317
        %v6716 = vunpack.c.l.b16 %v6318
        %v6717 = vunpack.c.l.b16 %v6319
        %v6718 = vunpack.c.l.b16 %v6320
        %v6719 = vunpack.c.l.b16 %v6321
        %v6720 = vunpack.c.l.b16 %v6322
        %v6721 = vunpack.c.l.b16 %v6323
        %v6722 = vunpack.c.l.b16 %v6324
        %v6723 = vunpack.c.l.b16 %v6325
        %v6724 = vunpack.c.l.b16 %v6326
        %v6725 = vunpack.c.l.b16 %v6327
        %v6726 = vunpack.c.l.b16 %v6328
        %v6727 = vunpack.c.l.b16 %v6329
        %v6728 = vunpack.c.l.b16 %v6330
        %v6729 = vunpack.c.l.b16 %v6331
        %v6730 = vunpack.c.l.b16 %v6332
        %v6731 = vunpack.c.l.b16 %v6333
        %v6732 = vunpack.c.l.b16 %v6334
        %v6733 = vunpack.c.l.b16 %v6335
        %v6734 = vunpack.c.l.b16 %v6336
        %v6735 = vpack.c.b16 %v6688, %v6687
        %v6736 = vpack.c.b16 %v6690, %v6689
        %v6737 = vpack.c.b16 %v6692, %v6691
        %v6738 = vpack.c.b16 %v6694, %v6693
        %v6739 = vpack.c.b16 %v6696, %v6695
        %v6740 = vpack.c.b16 %v6698, %v6697
        %v6741 = vpack.c.b16 %v6700, %v6699
        %v6742 = vpack.c.b16 %v6702, %v6701
        %v6743 = vpack.c.b16 %v6704, %v6703
        %v6744 = vpack.c.b16 %v6706, %v6705
        %v6745 = vpack.c.b16 %v6708, %v6707
        %v6746 = vpack.c.b16 %v6710, %v6709
        %v6747 = vpack.c.b16 %v6712, %v6711
        %v6748 = vpack.c.b16 %v6714, %v6713
        %v6749 = vpack.c.b16 %v6716, %v6715
        %v6750 = vpack.c.b16 %v6718, %v6717
        %v6751 = vpack.c.b16 %v6720, %v6719
        %v6752 = vpack.c.b16 %v6722, %v6721
        %v6753 = vpack.c.b16 %v6724, %v6723
        %v6754 = vpack.c.b16 %v6726, %v6725
        %v6755 = vpack.c.b16 %v6728, %v6727
        %v6756 = vpack.c.b16 %v6730, %v6729
        %v6757 = vpack.c.b16 %v6732, %v6731
        %v6758 = vpack.c.b16 %v6734, %v6733
        %6783 = vmatpush.bf16.msra.mxu0 %v6742
        %6784 = vmatpush.bf16.msra.mxu0 %v6741
        %6785 = vmatpush.bf16.msra.mxu0 %v6740
        %6786 = vmatpush.bf16.msra.mxu0 %v6739
        %6787 = vmatpush.bf16.msra.mxu0 %v6738
        %6788 = vmatpush.bf16.msra.mxu0 %v6737
        %6789 = vmatpush.bf16.msra.mxu0 %v6736
        %6790 = vmatpush.bf16.msra.mxu0 %v6735
        %6791 = vmatmul.bf16.gmra.mxu0 %v6253
        %v6792 = vpop.f32.mrf.mxu0
        %v6793 = vadd.f32 %v6630, %v6792
        %v6794 = vpop.f32.mrf.mxu0
        %v6795 = vadd.f32 %v6632, %v6794
        %6796 = vmatmul.bf16.gmra.mxu0 %v6254
        %v6797 = vpop.f32.mrf.mxu0
        %v6798 = vadd.f32 %v6635, %v6797
        %v6799 = vpop.f32.mrf.mxu0
        %v6800 = vadd.f32 %v6637, %v6799
        %6801 = vdwg.mxu0
        %6802 = vmatpush.bf16.msra.mxu0 %v6750
        %6803 = vmatpush.bf16.msra.mxu0 %v6749
        %6804 = vmatpush.bf16.msra.mxu0 %v6748
        %6805 = vmatpush.bf16.msra.mxu0 %v6747
        %6806 = vmatpush.bf16.msra.mxu0 %v6746
        %6807 = vmatpush.bf16.msra.mxu0 %v6745
        %6808 = vmatpush.bf16.msra.mxu0 %v6744
        %6809 = vmatpush.bf16.msra.mxu0 %v6743
        %6810 = vmatmul.bf16.gmra.mxu0 %v6271
        %v6811 = vpop.f32.mrf.mxu0
        %v6812 = vadd.f32 %v6793, %v6811
        %v6813 = vpop.f32.mrf.mxu0
        %v6814 = vadd.f32 %v6795, %v6813
        %6815 = vmatmul.bf16.gmra.mxu0 %v6279
        %v6816 = vpop.f32.mrf.mxu0
        %v6817 = vadd.f32 %v6798, %v6816
        %v6818 = vpop.f32.mrf.mxu0
        %v6819 = vadd.f32 %v6800, %v6818
        %6820 = vdwg.mxu0
        %6821 = vmatpush.bf16.msra.mxu0 %v6758
        %6822 = vmatpush.bf16.msra.mxu0 %v6757
        %6823 = vmatpush.bf16.msra.mxu0 %v6756
        %6824 = vmatpush.bf16.msra.mxu0 %v6755
        %6825 = vmatpush.bf16.msra.mxu0 %v6754
        %6826 = vmatpush.bf16.msra.mxu0 %v6753
        %6827 = vmatpush.bf16.msra.mxu0 %v6752
        %6828 = vmatpush.bf16.msra.mxu0 %v6751
        %6829 = vmatmul.bf16.gmra.mxu0 %v6284
        %v6830 = vpop.f32.mrf.mxu0
        %v6831 = vadd.f32 %v6812, %v6830
        %v6832 = vpop.f32.mrf.mxu0
        %v6833 = vadd.f32 %v6814, %v6832
        %6834 = vmatmul.bf16.gmra.mxu0 %v6286
        %v6835 = vpop.f32.mrf.mxu0
        %v6836 = vadd.f32 %v6817, %v6835
        %v6837 = vpop.f32.mrf.mxu0
        %v6838 = vadd.f32 %v6819, %v6837
        %6839 = vdwg.mxu0
        %s6840 = sadd.s32 %s6236, 2
        %s6841 = smul.u32 %s6840, 5
        %s6842 = smul.addr %s6841, 4
        %s6843 = scalar_lea.vmem %s182, %s6842
        %v6844 = vld [vmem:[%s6843] sm:$0xf]
        %v6845 = vld [vmem:[%s6843 + $0x4] sm:$0xf]
        %v6846 = vld [vmem:[%s6843 + $0x8] sm:$0xf]
        %v6847 = vld [vmem:[%s6843 + $0xc] sm:$0xf]
        %v6848 = vld [vmem:[%s6843 + $0x10] sm:$0x1]
        %v6853 = vunpack.c.l.b16 %v6844
        %v6854 = vunpack.c.l.b16 %v6845
        %v6855 = vunpack.c.l.b16 %v6846
        %v6856 = vunpack.c.l.b16 %v6847
        %v6857 = vpack.c.b16 %v6854, %v6853
        %v6858 = vpack.c.b16 %v6856, %v6855
        %v6862 = vunpack.c.l.b16 %v6848
        %v6863 = vpack.c.b16 %v6862, %v6862
        %v6865 = vshrl.u32 %v6857, 16
        %v6867 = vshll.u32 %v6857, 16
        %v6869 = vrot.slane %v6867, 1
        %v6870 = vor.u32 %v6865, %v6869
        %v6872 = vshll.u32 %v6858, 16
        %v6874 = vrot.slane %v6872, 1
        %v6875 = vsel %vm208, %v6870, %v6874
        %v6876 = vshrl.u32 %v6858, 16
        %v6878 = vor.u32 %v6876, %v6874
        %v6880 = vshll.u32 %v6863, 16
        %v6882 = vrot.slane %v6880, 1
        %v6883 = vsel %vm208, %v6878, %v6882
        %v6886 = vrot.slane %v6857, 1
        %v6887 = vrot.slane %v6858, 1
        %v6888 = vsel %vm231, %v6886, %v6887
        %v6889 = vrot.slane %v6863, 1
        %v6890 = vsel %vm231, %v6887, %v6889
        %v6893 = vld [vmem:[%s844] sm:$0xf]
        %v6894 = vld [vmem:[%s844 + $0x4] sm:$0xf]
        %v6895 = vld [vmem:[%s844 + $0x8] sm:$0xf]
        %v6896 = vld [vmem:[%s844 + $0xc] sm:$0xf]
        %v6897 = vld [vmem:[%s844 + $0x10] sm:$0xf]
        %v6898 = vld [vmem:[%s844 + $0x14] sm:$0xf]
        %v6899 = vld [vmem:[%s844 + $0x18] sm:$0xf]
        %v6900 = vld [vmem:[%s844 + $0x1c] sm:$0xf]
        %v6901 = vld [vmem:[%s844 + $0x20] sm:$0xf]
        %v6902 = vld [vmem:[%s844 + $0x24] sm:$0xf]
        %v6903 = vld [vmem:[%s844 + $0x28] sm:$0xf]
        %v6904 = vld [vmem:[%s844 + $0x2c] sm:$0xf]
        %v6905 = vld [vmem:[%s844 + $0x30] sm:$0xf]
        %v6906 = vld [vmem:[%s844 + $0x34] sm:$0xf]
        %v6907 = vld [vmem:[%s844 + $0x38] sm:$0xf]
        %v6908 = vld [vmem:[%s844 + $0x3c] sm:$0xf]
        %v6909 = vld [vmem:[%s844 + $0x40] sm:$0xf]
        %v6910 = vld [vmem:[%s844 + $0x44] sm:$0xf]
        %v6911 = vld [vmem:[%s844 + $0x48] sm:$0xf]
        %v6912 = vld [vmem:[%s844 + $0x4c] sm:$0xf]
        %v6913 = vld [vmem:[%s844 + $0x50] sm:$0xf]
        %v6914 = vld [vmem:[%s844 + $0x54] sm:$0xf]
        %v6915 = vld [vmem:[%s844 + $0x58] sm:$0xf]
        %v6916 = vld [vmem:[%s844 + $0x5c] sm:$0xf]
        %v6917 = vld [vmem:[%s844 + $0x60] sm:$0xf]
        %v6918 = vld [vmem:[%s844 + $0x64] sm:$0xf]
        %v6919 = vld [vmem:[%s844 + $0x68] sm:$0xf]
        %v6920 = vld [vmem:[%s844 + $0x6c] sm:$0xf]
        %v6921 = vld [vmem:[%s844 + $0x70] sm:$0xf]
        %v6922 = vld [vmem:[%s844 + $0x74] sm:$0xf]
        %v6923 = vld [vmem:[%s844 + $0x78] sm:$0xf]
        %v6924 = vld [vmem:[%s844 + $0x7c] sm:$0xf]
        %v6925 = vld [vmem:[%s844 + $0x80] sm:$0xf]
        %v6926 = vld [vmem:[%s844 + $0x84] sm:$0xf]
        %v6927 = vld [vmem:[%s844 + $0x88] sm:$0xf]
        %v6928 = vld [vmem:[%s844 + $0x8c] sm:$0xf]
        %v6929 = vld [vmem:[%s844 + $0x90] sm:$0xf]
        %v6930 = vld [vmem:[%s844 + $0x94] sm:$0xf]
        %v6931 = vld [vmem:[%s844 + $0x98] sm:$0xf]
        %v6932 = vld [vmem:[%s844 + $0x9c] sm:$0xf]
        %v6933 = vld [vmem:[%s844 + $0xa0] sm:$0xf]
        %v6934 = vld [vmem:[%s844 + $0xa4] sm:$0xf]
        %v6935 = vld [vmem:[%s844 + $0xa8] sm:$0xf]
        %v6936 = vld [vmem:[%s844 + $0xac] sm:$0xf]
        %v6937 = vld [vmem:[%s844 + $0xb0] sm:$0xf]
        %v6938 = vld [vmem:[%s844 + $0xb4] sm:$0xf]
        %v6939 = vld [vmem:[%s844 + $0xb8] sm:$0xf]
        %v6940 = vld [vmem:[%s844 + $0xbc] sm:$0xf]
        %v6989 = vunpack.c.l.b16 %v6893
        %v6990 = vunpack.c.l.b16 %v6894
        %v6991 = vunpack.c.l.b16 %v6895
        %v6992 = vunpack.c.l.b16 %v6896
        %v6993 = vunpack.c.l.b16 %v6897
        %v6994 = vunpack.c.l.b16 %v6898
        %v6995 = vunpack.c.l.b16 %v6899
        %v6996 = vunpack.c.l.b16 %v6900
        %v6997 = vunpack.c.l.b16 %v6901
        %v6998 = vunpack.c.l.b16 %v6902
        %v6999 = vunpack.c.l.b16 %v6903
        %v7000 = vunpack.c.l.b16 %v6904
        %v7001 = vunpack.c.l.b16 %v6905
        %v7002 = vunpack.c.l.b16 %v6906
        %v7003 = vunpack.c.l.b16 %v6907
        %v7004 = vunpack.c.l.b16 %v6908
        %v7005 = vunpack.c.l.b16 %v6909
        %v7006 = vunpack.c.l.b16 %v6910
        %v7007 = vunpack.c.l.b16 %v6911
        %v7008 = vunpack.c.l.b16 %v6912
        %v7009 = vunpack.c.l.b16 %v6913
        %v7010 = vunpack.c.l.b16 %v6914
        %v7011 = vunpack.c.l.b16 %v6915
        %v7012 = vunpack.c.l.b16 %v6916
        %v7013 = vunpack.c.l.b16 %v6917
        %v7014 = vunpack.c.l.b16 %v6918
        %v7015 = vunpack.c.l.b16 %v6919
        %v7016 = vunpack.c.l.b16 %v6920
        %v7017 = vunpack.c.l.b16 %v6921
        %v7018 = vunpack.c.l.b16 %v6922
        %v7019 = vunpack.c.l.b16 %v6923
        %v7020 = vunpack.c.l.b16 %v6924
        %v7021 = vunpack.c.l.b16 %v6925
        %v7022 = vunpack.c.l.b16 %v6926
        %v7023 = vunpack.c.l.b16 %v6927
        %v7024 = vunpack.c.l.b16 %v6928
        %v7025 = vunpack.c.l.b16 %v6929
        %v7026 = vunpack.c.l.b16 %v6930
        %v7027 = vunpack.c.l.b16 %v6931
        %v7028 = vunpack.c.l.b16 %v6932
        %v7029 = vunpack.c.l.b16 %v6933
        %v7030 = vunpack.c.l.b16 %v6934
        %v7031 = vunpack.c.l.b16 %v6935
        %v7032 = vunpack.c.l.b16 %v6936
        %v7033 = vunpack.c.l.b16 %v6937
        %v7034 = vunpack.c.l.b16 %v6938
        %v7035 = vunpack.c.l.b16 %v6939
        %v7036 = vunpack.c.l.b16 %v6940
        %v7037 = vpack.c.b16 %v6990, %v6989
        %v7038 = vpack.c.b16 %v6992, %v6991
        %v7039 = vpack.c.b16 %v6994, %v6993
        %v7040 = vpack.c.b16 %v6996, %v6995
        %v7041 = vpack.c.b16 %v6998, %v6997
        %v7042 = vpack.c.b16 %v7000, %v6999
        %v7043 = vpack.c.b16 %v7002, %v7001
        %v7044 = vpack.c.b16 %v7004, %v7003
        %v7045 = vpack.c.b16 %v7006, %v7005
        %v7046 = vpack.c.b16 %v7008, %v7007
        %v7047 = vpack.c.b16 %v7010, %v7009
        %v7048 = vpack.c.b16 %v7012, %v7011
        %v7049 = vpack.c.b16 %v7014, %v7013
        %v7050 = vpack.c.b16 %v7016, %v7015
        %v7051 = vpack.c.b16 %v7018, %v7017
        %v7052 = vpack.c.b16 %v7020, %v7019
        %v7053 = vpack.c.b16 %v7022, %v7021
        %v7054 = vpack.c.b16 %v7024, %v7023
        %v7055 = vpack.c.b16 %v7026, %v7025
        %v7056 = vpack.c.b16 %v7028, %v7027
        %v7057 = vpack.c.b16 %v7030, %v7029
        %v7058 = vpack.c.b16 %v7032, %v7031
        %v7059 = vpack.c.b16 %v7034, %v7033
        %v7060 = vpack.c.b16 %v7036, %v7035
        %7085 = vmatpush.bf16.msra.mxu0 %v7044
        %7086 = vmatpush.bf16.msra.mxu0 %v7043
        %7087 = vmatpush.bf16.msra.mxu0 %v7042
        %7088 = vmatpush.bf16.msra.mxu0 %v7041
        %7089 = vmatpush.bf16.msra.mxu0 %v7040
        %7090 = vmatpush.bf16.msra.mxu0 %v7039
        %7091 = vmatpush.bf16.msra.mxu0 %v7038
        %7092 = vmatpush.bf16.msra.mxu0 %v7037
        %7093 = vmatmul.bf16.gmra.mxu0 %v6857
        %v7094 = vpop.f32.mrf.mxu0
        %v7095 = vadd.f32 0.0, %v7094
        %v7096 = vpop.f32.mrf.mxu0
        %v7097 = vadd.f32 0.0, %v7096
        %7098 = vmatmul.bf16.gmra.mxu0 %v6858
        %v7099 = vpop.f32.mrf.mxu0
        %v7100 = vadd.f32 0.0, %v7099
        %v7101 = vpop.f32.mrf.mxu0
        %v7102 = vadd.f32 0.0, %v7101
        %7103 = vdwg.mxu0
        %7104 = vmatpush.bf16.msra.mxu0 %v7052
        %7105 = vmatpush.bf16.msra.mxu0 %v7051
        %7106 = vmatpush.bf16.msra.mxu0 %v7050
        %7107 = vmatpush.bf16.msra.mxu0 %v7049
        %7108 = vmatpush.bf16.msra.mxu0 %v7048
        %7109 = vmatpush.bf16.msra.mxu0 %v7047
        %7110 = vmatpush.bf16.msra.mxu0 %v7046
        %7111 = vmatpush.bf16.msra.mxu0 %v7045
        %7112 = vmatmul.bf16.gmra.mxu0 %v6875
        %v7113 = vpop.f32.mrf.mxu0
        %v7114 = vadd.f32 %v7095, %v7113
        %v7115 = vpop.f32.mrf.mxu0
        %v7116 = vadd.f32 %v7097, %v7115
        %7117 = vmatmul.bf16.gmra.mxu0 %v6883
        %v7118 = vpop.f32.mrf.mxu0
        %v7119 = vadd.f32 %v7100, %v7118
        %v7120 = vpop.f32.mrf.mxu0
        %v7121 = vadd.f32 %v7102, %v7120
        %7122 = vdwg.mxu0
        %7123 = vmatpush.bf16.msra.mxu0 %v7060
        %7124 = vmatpush.bf16.msra.mxu0 %v7059
        %7125 = vmatpush.bf16.msra.mxu0 %v7058
        %7126 = vmatpush.bf16.msra.mxu0 %v7057
        %7127 = vmatpush.bf16.msra.mxu0 %v7056
        %7128 = vmatpush.bf16.msra.mxu0 %v7055
        %7129 = vmatpush.bf16.msra.mxu0 %v7054
        %7130 = vmatpush.bf16.msra.mxu0 %v7053
        %7131 = vmatmul.bf16.gmra.mxu0 %v6888
        %v7132 = vpop.f32.mrf.mxu0
        %v7133 = vadd.f32 %v7114, %v7132
        %v7134 = vpop.f32.mrf.mxu0
        %v7135 = vadd.f32 %v7116, %v7134
        %7136 = vmatmul.bf16.gmra.mxu0 %v6890
        %v7137 = vpop.f32.mrf.mxu0
        %v7138 = vadd.f32 %v7119, %v7137
        %v7139 = vpop.f32.mrf.mxu0
        %v7140 = vadd.f32 %v7121, %v7139
        %7141 = vdwg.mxu0
        %v7142 = vadd.f32 %v6831, %v7133
        %v7143 = vadd.f32 %v6833, %v7135
        %v7144 = vadd.f32 %v6836, %v7138
        %v7145 = vadd.f32 %v6838, %v7140
        %v7146 = vld [vmem:[%s2] sm:$0x1]
        %v7148 = vperm.slane %v7146, 0
        %v7150 = vadd.f32 %v7142, %v7148
        %v7151 = vadd.f32 %v7143, %v7148
        %v7152 = vadd.f32 %v7144, %v7148
        %v7153 = vadd.f32 %v7145, %v7148
        %v7154 = vxor.u32 %v7150, 2147483648
        %v7155 = vxor.u32 %v7151, 2147483648
        %v7156 = vxor.u32 %v7152, 2147483648
        %v7157 = vxor.u32 %v7153, 2147483648
        %v7158 = vmul.f32 %v7154, 1.442695
        %v7159 = vpow.pop %v7158
        %v7160 = vmul.f32 %v7155, 1.442695
        %v7161 = vpow.pop %v7160
        %v7162 = vmul.f32 %v7156, 1.442695
        %v7163 = vpow.pop %v7162
        %v7164 = vmul.f32 %v7157, 1.442695
        %v7165 = vpow.pop %v7164
        %v7166 = vadd.f32 %v7159, 1.0
        %v7167 = vadd.f32 %v7161, 1.0
        %v7168 = vadd.f32 %v7163, 1.0
        %v7169 = vadd.f32 %v7165, 1.0
        %v7170 = vrcp.pop %v7166
        %v7171 = vmul.f32 %v7166, %v7170
        %v7172 = vsub.f32 1.0, %v7171
        %v7173 = vmul.f32 %v7170, %v7172
        %v7174 = vadd.f32 %v7170, %v7173
        %vm7175 = vweird.f32 %v7166
        %vm7176 = vweird.f32 %v7170
        %vm7177 = vmor %vm7175, %vm7176
        %v7178 = vsel %vm7177, %v7170, %v7174
        %v7179 = vand.u32 2147483647, %v7166
        %vm7180 = vcmp.eq.f32.partialorder %v7179, 8.507059e+37
        %v7181 = vand.u32 %v7166, 2147483648
        %v7182 = vor.u32 1.1754944e-38, %v7181
        %v7183 = vsel %vm7180, %v7182, %v7178
        %v7184 = vmul.f32 1.0, %v7183
        %v7185 = vrcp.pop %v7167
        %v7186 = vmul.f32 %v7167, %v7185
        %v7187 = vsub.f32 1.0, %v7186
        %v7188 = vmul.f32 %v7185, %v7187
        %v7189 = vadd.f32 %v7185, %v7188
        %vm7190 = vweird.f32 %v7167
        %vm7191 = vweird.f32 %v7185
        %vm7192 = vmor %vm7190, %vm7191
        %v7193 = vsel %vm7192, %v7185, %v7189
        %v7194 = vand.u32 2147483647, %v7167
        %vm7195 = vcmp.eq.f32.partialorder %v7194, 8.507059e+37
        %v7196 = vand.u32 %v7167, 2147483648
        %v7197 = vor.u32 1.1754944e-38, %v7196
        %v7198 = vsel %vm7195, %v7197, %v7193
        %v7199 = vmul.f32 1.0, %v7198
        %v7200 = vrcp.pop %v7168
        %v7201 = vmul.f32 %v7168, %v7200
        %v7202 = vsub.f32 1.0, %v7201
        %v7203 = vmul.f32 %v7200, %v7202
        %v7204 = vadd.f32 %v7200, %v7203
        %vm7205 = vweird.f32 %v7168
        %vm7206 = vweird.f32 %v7200
        %vm7207 = vmor %vm7205, %vm7206
        %v7208 = vsel %vm7207, %v7200, %v7204
        %v7209 = vand.u32 2147483647, %v7168
        %vm7210 = vcmp.eq.f32.partialorder %v7209, 8.507059e+37
        %v7211 = vand.u32 %v7168, 2147483648
        %v7212 = vor.u32 1.1754944e-38, %v7211
        %v7213 = vsel %vm7210, %v7212, %v7208
        %v7214 = vmul.f32 1.0, %v7213
        %v7215 = vrcp.pop %v7169
        %v7216 = vmul.f32 %v7169, %v7215
        %v7217 = vsub.f32 1.0, %v7216
        %v7218 = vmul.f32 %v7215, %v7217
        %v7219 = vadd.f32 %v7215, %v7218
        %vm7220 = vweird.f32 %v7169
        %vm7221 = vweird.f32 %v7215
        %vm7222 = vmor %vm7220, %vm7221
        %v7223 = vsel %vm7222, %v7215, %v7219
        %v7224 = vand.u32 2147483647, %v7169
        %vm7225 = vcmp.eq.f32.partialorder %v7224, 8.507059e+37
        %v7226 = vand.u32 %v7169, 2147483648
        %v7227 = vor.u32 1.1754944e-38, %v7226
        %v7228 = vsel %vm7225, %v7227, %v7223
        %v7229 = vmul.f32 1.0, %v7228
        %v7230 = vmul.f32 %v7150, %v7184
        %v7231 = vmul.f32 %v7151, %v7199
        %v7232 = vmul.f32 %v7152, %v7214
        %v7233 = vmul.f32 %v7153, %v7229
        %v7234 = vpack.c.bf16 %v7230, %v7230
        %v7235 = vpack.c.bf16 %v7231, %v7231
        %v7236 = vpack.c.bf16 %v7232, %v7232
        %v7237 = vpack.c.bf16 %v7233, %v7233
        %s7238 = scalar_lea.vmem %s177, 96 [#allocation2]
        %7239 = vst [vmem:[%s7238] sm:$0xf] %v7234
        %7240 = vst [vmem:[%s7238 + $0x4] sm:$0xf] %v7235
        %7241 = vst [vmem:[%s7238 + $0x8] sm:$0xf] %v7236
        %7242 = vst [vmem:[%s7238 + $0xc] sm:$0xf] %v7237
        %s7243 = sadd.s32 %s1194, 7
        %s7244 = smul.u32 %s7243, 2
        %s7245 = smul.u32 %s7244, 5
        %s7246 = smul.addr %s7245, 4
        %s7247 = scalar_lea.vmem %s182, %s7246
        %v7248 = vld [vmem:[%s7247] sm:$0xf]
        %v7249 = vld [vmem:[%s7247 + $0x4] sm:$0xf]
        %v7250 = vld [vmem:[%s7247 + $0x8] sm:$0xf]
        %v7251 = vld [vmem:[%s7247 + $0xc] sm:$0xf]
        %v7252 = vld [vmem:[%s7247 + $0x10] sm:$0x1]
        %v7257 = vunpack.c.l.b16 %v7248
        %v7258 = vunpack.c.l.b16 %v7249
        %v7259 = vunpack.c.l.b16 %v7250
        %v7260 = vunpack.c.l.b16 %v7251
        %v7261 = vpack.c.b16 %v7258, %v7257
        %v7262 = vpack.c.b16 %v7260, %v7259
        %v7266 = vunpack.c.l.b16 %v7252
        %v7267 = vpack.c.b16 %v7266, %v7266
        %v7269 = vshrl.u32 %v7261, 16
        %v7271 = vshll.u32 %v7261, 16
        %v7273 = vrot.slane %v7271, 1
        %v7274 = vor.u32 %v7269, %v7273
        %v7276 = vshll.u32 %v7262, 16
        %v7278 = vrot.slane %v7276, 1
        %v7279 = vsel %vm208, %v7274, %v7278
        %v7280 = vshrl.u32 %v7262, 16
        %v7282 = vor.u32 %v7280, %v7278
        %v7284 = vshll.u32 %v7267, 16
        %v7286 = vrot.slane %v7284, 1
        %v7287 = vsel %vm208, %v7282, %v7286
        %v7290 = vrot.slane %v7261, 1
        %v7291 = vrot.slane %v7262, 1
        %v7292 = vsel %vm231, %v7290, %v7291
        %v7293 = vrot.slane %v7267, 1
        %v7294 = vsel %vm231, %v7291, %v7293
        %v7297 = vld [vmem:[%s1] sm:$0xf]
        %v7298 = vld [vmem:[%s1 + $0x4] sm:$0xf]
        %v7299 = vld [vmem:[%s1 + $0x8] sm:$0xf]
        %v7300 = vld [vmem:[%s1 + $0xc] sm:$0xf]
        %v7301 = vld [vmem:[%s1 + $0x10] sm:$0xf]
        %v7302 = vld [vmem:[%s1 + $0x14] sm:$0xf]
        %v7303 = vld [vmem:[%s1 + $0x18] sm:$0xf]
        %v7304 = vld [vmem:[%s1 + $0x1c] sm:$0xf]
        %v7305 = vld [vmem:[%s1 + $0x20] sm:$0xf]
        %v7306 = vld [vmem:[%s1 + $0x24] sm:$0xf]
        %v7307 = vld [vmem:[%s1 + $0x28] sm:$0xf]
        %v7308 = vld [vmem:[%s1 + $0x2c] sm:$0xf]
        %v7309 = vld [vmem:[%s1 + $0x30] sm:$0xf]
        %v7310 = vld [vmem:[%s1 + $0x34] sm:$0xf]
        %v7311 = vld [vmem:[%s1 + $0x38] sm:$0xf]
        %v7312 = vld [vmem:[%s1 + $0x3c] sm:$0xf]
        %v7313 = vld [vmem:[%s1 + $0x40] sm:$0xf]
        %v7314 = vld [vmem:[%s1 + $0x44] sm:$0xf]
        %v7315 = vld [vmem:[%s1 + $0x48] sm:$0xf]
        %v7316 = vld [vmem:[%s1 + $0x4c] sm:$0xf]
        %v7317 = vld [vmem:[%s1 + $0x50] sm:$0xf]
        %v7318 = vld [vmem:[%s1 + $0x54] sm:$0xf]
        %v7319 = vld [vmem:[%s1 + $0x58] sm:$0xf]
        %v7320 = vld [vmem:[%s1 + $0x5c] sm:$0xf]
        %v7321 = vld [vmem:[%s1 + $0x60] sm:$0xf]
        %v7322 = vld [vmem:[%s1 + $0x64] sm:$0xf]
        %v7323 = vld [vmem:[%s1 + $0x68] sm:$0xf]
        %v7324 = vld [vmem:[%s1 + $0x6c] sm:$0xf]
        %v7325 = vld [vmem:[%s1 + $0x70] sm:$0xf]
        %v7326 = vld [vmem:[%s1 + $0x74] sm:$0xf]
        %v7327 = vld [vmem:[%s1 + $0x78] sm:$0xf]
        %v7328 = vld [vmem:[%s1 + $0x7c] sm:$0xf]
        %v7329 = vld [vmem:[%s1 + $0x80] sm:$0xf]
        %v7330 = vld [vmem:[%s1 + $0x84] sm:$0xf]
        %v7331 = vld [vmem:[%s1 + $0x88] sm:$0xf]
        %v7332 = vld [vmem:[%s1 + $0x8c] sm:$0xf]
        %v7333 = vld [vmem:[%s1 + $0x90] sm:$0xf]
        %v7334 = vld [vmem:[%s1 + $0x94] sm:$0xf]
        %v7335 = vld [vmem:[%s1 + $0x98] sm:$0xf]
        %v7336 = vld [vmem:[%s1 + $0x9c] sm:$0xf]
        %v7337 = vld [vmem:[%s1 + $0xa0] sm:$0xf]
        %v7338 = vld [vmem:[%s1 + $0xa4] sm:$0xf]
        %v7339 = vld [vmem:[%s1 + $0xa8] sm:$0xf]
        %v7340 = vld [vmem:[%s1 + $0xac] sm:$0xf]
        %v7341 = vld [vmem:[%s1 + $0xb0] sm:$0xf]
        %v7342 = vld [vmem:[%s1 + $0xb4] sm:$0xf]
        %v7343 = vld [vmem:[%s1 + $0xb8] sm:$0xf]
        %v7344 = vld [vmem:[%s1 + $0xbc] sm:$0xf]
        %s7345 = sadd.s32 %s7244, 1
        %s7346 = smul.u32 %s7345, 5
        %s7347 = smul.addr %s7346, 4
        %s7348 = scalar_lea.vmem %s182, %s7347
        %v7349 = vld [vmem:[%s7348] sm:$0xf]
        %v7350 = vld [vmem:[%s7348 + $0x4] sm:$0xf]
        %v7351 = vld [vmem:[%s7348 + $0x8] sm:$0xf]
        %v7352 = vld [vmem:[%s7348 + $0xc] sm:$0xf]
        %v7353 = vld [vmem:[%s7348 + $0x10] sm:$0x1]
        %v7358 = vunpack.c.l.b16 %v7349
        %v7359 = vunpack.c.l.b16 %v7350
        %v7360 = vunpack.c.l.b16 %v7351
        %v7361 = vunpack.c.l.b16 %v7352
        %v7362 = vpack.c.b16 %v7359, %v7358
        %v7363 = vpack.c.b16 %v7361, %v7360
        %v7367 = vunpack.c.l.b16 %v7353
        %v7368 = vpack.c.b16 %v7367, %v7367
        %v7370 = vshrl.u32 %v7362, 16
        %v7372 = vshll.u32 %v7362, 16
        %v7374 = vrot.slane %v7372, 1
        %v7375 = vor.u32 %v7370, %v7374
        %v7377 = vshll.u32 %v7363, 16
        %v7379 = vrot.slane %v7377, 1
        %v7380 = vsel %vm208, %v7375, %v7379
        %v7381 = vshrl.u32 %v7363, 16
        %v7383 = vor.u32 %v7381, %v7379
        %v7385 = vshll.u32 %v7368, 16
        %v7387 = vrot.slane %v7385, 1
        %v7388 = vsel %vm208, %v7383, %v7387
        %v7391 = vrot.slane %v7362, 1
        %v7392 = vrot.slane %v7363, 1
        %v7393 = vsel %vm231, %v7391, %v7392
        %v7394 = vrot.slane %v7368, 1
        %v7395 = vsel %vm231, %v7392, %v7394
        %v7398 = vld [vmem:[%s340] sm:$0xf]
        %v7399 = vld [vmem:[%s340 + $0x4] sm:$0xf]
        %v7400 = vld [vmem:[%s340 + $0x8] sm:$0xf]
        %v7401 = vld [vmem:[%s340 + $0xc] sm:$0xf]
        %v7402 = vld [vmem:[%s340 + $0x10] sm:$0xf]
        %v7403 = vld [vmem:[%s340 + $0x14] sm:$0xf]
        %v7404 = vld [vmem:[%s340 + $0x18] sm:$0xf]
        %v7405 = vld [vmem:[%s340 + $0x1c] sm:$0xf]
        %v7406 = vld [vmem:[%s340 + $0x20] sm:$0xf]
        %v7407 = vld [vmem:[%s340 + $0x24] sm:$0xf]
        %v7408 = vld [vmem:[%s340 + $0x28] sm:$0xf]
        %v7409 = vld [vmem:[%s340 + $0x2c] sm:$0xf]
        %v7410 = vld [vmem:[%s340 + $0x30] sm:$0xf]
        %v7411 = vld [vmem:[%s340 + $0x34] sm:$0xf]
        %v7412 = vld [vmem:[%s340 + $0x38] sm:$0xf]
        %v7413 = vld [vmem:[%s340 + $0x3c] sm:$0xf]
        %v7414 = vld [vmem:[%s340 + $0x40] sm:$0xf]
        %v7415 = vld [vmem:[%s340 + $0x44] sm:$0xf]
        %v7416 = vld [vmem:[%s340 + $0x48] sm:$0xf]
        %v7417 = vld [vmem:[%s340 + $0x4c] sm:$0xf]
        %v7418 = vld [vmem:[%s340 + $0x50] sm:$0xf]
        %v7419 = vld [vmem:[%s340 + $0x54] sm:$0xf]
        %v7420 = vld [vmem:[%s340 + $0x58] sm:$0xf]
        %v7421 = vld [vmem:[%s340 + $0x5c] sm:$0xf]
        %v7422 = vld [vmem:[%s340 + $0x60] sm:$0xf]
        %v7423 = vld [vmem:[%s340 + $0x64] sm:$0xf]
        %v7424 = vld [vmem:[%s340 + $0x68] sm:$0xf]
        %v7425 = vld [vmem:[%s340 + $0x6c] sm:$0xf]
        %v7426 = vld [vmem:[%s340 + $0x70] sm:$0xf]
        %v7427 = vld [vmem:[%s340 + $0x74] sm:$0xf]
        %v7428 = vld [vmem:[%s340 + $0x78] sm:$0xf]
        %v7429 = vld [vmem:[%s340 + $0x7c] sm:$0xf]
        %v7430 = vld [vmem:[%s340 + $0x80] sm:$0xf]
        %v7431 = vld [vmem:[%s340 + $0x84] sm:$0xf]
        %v7432 = vld [vmem:[%s340 + $0x88] sm:$0xf]
        %v7433 = vld [vmem:[%s340 + $0x8c] sm:$0xf]
        %v7434 = vld [vmem:[%s340 + $0x90] sm:$0xf]
        %v7435 = vld [vmem:[%s340 + $0x94] sm:$0xf]
        %v7436 = vld [vmem:[%s340 + $0x98] sm:$0xf]
        %v7437 = vld [vmem:[%s340 + $0x9c] sm:$0xf]
        %v7438 = vld [vmem:[%s340 + $0xa0] sm:$0xf]
        %v7439 = vld [vmem:[%s340 + $0xa4] sm:$0xf]
        %v7440 = vld [vmem:[%s340 + $0xa8] sm:$0xf]
        %v7441 = vld [vmem:[%s340 + $0xac] sm:$0xf]
        %v7442 = vld [vmem:[%s340 + $0xb0] sm:$0xf]
        %v7443 = vld [vmem:[%s340 + $0xb4] sm:$0xf]
        %v7444 = vld [vmem:[%s340 + $0xb8] sm:$0xf]
        %v7445 = vld [vmem:[%s340 + $0xbc] sm:$0xf]
        %v7494 = vunpack.c.l.b16 %v7398
        %v7495 = vunpack.c.l.b16 %v7399
        %v7496 = vunpack.c.l.b16 %v7400
        %v7497 = vunpack.c.l.b16 %v7401
        %v7498 = vunpack.c.l.b16 %v7402
        %v7499 = vunpack.c.l.b16 %v7403
        %v7500 = vunpack.c.l.b16 %v7404
        %v7501 = vunpack.c.l.b16 %v7405
        %v7502 = vunpack.c.l.b16 %v7406
        %v7503 = vunpack.c.l.b16 %v7407
        %v7504 = vunpack.c.l.b16 %v7408
        %v7505 = vunpack.c.l.b16 %v7409
        %v7506 = vunpack.c.l.b16 %v7410
        %v7507 = vunpack.c.l.b16 %v7411
        %v7508 = vunpack.c.l.b16 %v7412
        %v7509 = vunpack.c.l.b16 %v7413
        %v7510 = vunpack.c.l.b16 %v7414
        %v7511 = vunpack.c.l.b16 %v7415
        %v7512 = vunpack.c.l.b16 %v7416
        %v7513 = vunpack.c.l.b16 %v7417
        %v7514 = vunpack.c.l.b16 %v7418
        %v7515 = vunpack.c.l.b16 %v7419
        %v7516 = vunpack.c.l.b16 %v7420
        %v7517 = vunpack.c.l.b16 %v7421
        %v7518 = vunpack.c.l.b16 %v7422
        %v7519 = vunpack.c.l.b16 %v7423
        %v7520 = vunpack.c.l.b16 %v7424
        %v7521 = vunpack.c.l.b16 %v7425
        %v7522 = vunpack.c.l.b16 %v7426
        %v7523 = vunpack.c.l.b16 %v7427
        %v7524 = vunpack.c.l.b16 %v7428
        %v7525 = vunpack.c.l.b16 %v7429
        %v7526 = vunpack.c.l.b16 %v7430
        %v7527 = vunpack.c.l.b16 %v7431
        %v7528 = vunpack.c.l.b16 %v7432
        %v7529 = vunpack.c.l.b16 %v7433
        %v7530 = vunpack.c.l.b16 %v7434
        %v7531 = vunpack.c.l.b16 %v7435
        %v7532 = vunpack.c.l.b16 %v7436
        %v7533 = vunpack.c.l.b16 %v7437
        %v7534 = vunpack.c.l.b16 %v7438
        %v7535 = vunpack.c.l.b16 %v7439
        %v7536 = vunpack.c.l.b16 %v7440
        %v7537 = vunpack.c.l.b16 %v7441
        %v7538 = vunpack.c.l.b16 %v7442
        %v7539 = vunpack.c.l.b16 %v7443
        %v7540 = vunpack.c.l.b16 %v7444
        %v7541 = vunpack.c.l.b16 %v7445
        %v7542 = vpack.c.b16 %v7495, %v7494
        %v7543 = vpack.c.b16 %v7497, %v7496
        %v7544 = vpack.c.b16 %v7499, %v7498
        %v7545 = vpack.c.b16 %v7501, %v7500
        %v7546 = vpack.c.b16 %v7503, %v7502
        %v7547 = vpack.c.b16 %v7505, %v7504
        %v7548 = vpack.c.b16 %v7507, %v7506
        %v7549 = vpack.c.b16 %v7509, %v7508
        %v7550 = vpack.c.b16 %v7511, %v7510
        %v7551 = vpack.c.b16 %v7513, %v7512
        %v7552 = vpack.c.b16 %v7515, %v7514
        %v7553 = vpack.c.b16 %v7517, %v7516
        %v7554 = vpack.c.b16 %v7519, %v7518
        %v7555 = vpack.c.b16 %v7521, %v7520
        %v7556 = vpack.c.b16 %v7523, %v7522
        %v7557 = vpack.c.b16 %v7525, %v7524
        %v7558 = vpack.c.b16 %v7527, %v7526
        %v7559 = vpack.c.b16 %v7529, %v7528
        %v7560 = vpack.c.b16 %v7531, %v7530
        %v7561 = vpack.c.b16 %v7533, %v7532
        %v7562 = vpack.c.b16 %v7535, %v7534
        %v7563 = vpack.c.b16 %v7537, %v7536
        %v7564 = vpack.c.b16 %v7539, %v7538
        %v7565 = vpack.c.b16 %v7541, %v7540
        %7590 = vmatpush.bf16.msra.mxu0 %v7549
        %7591 = vmatpush.bf16.msra.mxu0 %v7548
        %7592 = vmatpush.bf16.msra.mxu0 %v7547
        %7593 = vmatpush.bf16.msra.mxu0 %v7546
        %7594 = vmatpush.bf16.msra.mxu0 %v7545
        %7595 = vmatpush.bf16.msra.mxu0 %v7544
        %7596 = vmatpush.bf16.msra.mxu0 %v7543
        %7597 = vmatpush.bf16.msra.mxu0 %v7542
        %7598 = vmatmul.bf16.gmra.mxu0 %v7362
        %v7599 = vpop.f32.mrf.mxu0
        %v7600 = vadd.f32 0.0, %v7599
        %v7601 = vpop.f32.mrf.mxu0
        %v7602 = vadd.f32 0.0, %v7601
        %7603 = vmatmul.bf16.gmra.mxu0 %v7363
        %v7604 = vpop.f32.mrf.mxu0
        %v7605 = vadd.f32 0.0, %v7604
        %v7606 = vpop.f32.mrf.mxu0
        %v7607 = vadd.f32 0.0, %v7606
        %7608 = vdwg.mxu0
        %7609 = vmatpush.bf16.msra.mxu0 %v7557
        %7610 = vmatpush.bf16.msra.mxu0 %v7556
        %7611 = vmatpush.bf16.msra.mxu0 %v7555
        %7612 = vmatpush.bf16.msra.mxu0 %v7554
        %7613 = vmatpush.bf16.msra.mxu0 %v7553
        %7614 = vmatpush.bf16.msra.mxu0 %v7552
        %7615 = vmatpush.bf16.msra.mxu0 %v7551
        %7616 = vmatpush.bf16.msra.mxu0 %v7550
        %7617 = vmatmul.bf16.gmra.mxu0 %v7380
        %v7618 = vpop.f32.mrf.mxu0
        %v7619 = vadd.f32 %v7600, %v7618
        %v7620 = vpop.f32.mrf.mxu0
        %v7621 = vadd.f32 %v7602, %v7620
        %7622 = vmatmul.bf16.gmra.mxu0 %v7388
        %v7623 = vpop.f32.mrf.mxu0
        %v7624 = vadd.f32 %v7605, %v7623
        %v7625 = vpop.f32.mrf.mxu0
        %v7626 = vadd.f32 %v7607, %v7625
        %7627 = vdwg.mxu0
        %7628 = vmatpush.bf16.msra.mxu0 %v7565
        %7629 = vmatpush.bf16.msra.mxu0 %v7564
        %7630 = vmatpush.bf16.msra.mxu0 %v7563
        %7631 = vmatpush.bf16.msra.mxu0 %v7562
        %7632 = vmatpush.bf16.msra.mxu0 %v7561
        %7633 = vmatpush.bf16.msra.mxu0 %v7560
        %7634 = vmatpush.bf16.msra.mxu0 %v7559
        %7635 = vmatpush.bf16.msra.mxu0 %v7558
        %7636 = vmatmul.bf16.gmra.mxu0 %v7393
        %v7637 = vpop.f32.mrf.mxu0
        %v7638 = vadd.f32 %v7619, %v7637
        %v7639 = vpop.f32.mrf.mxu0
        %v7640 = vadd.f32 %v7621, %v7639
        %7641 = vmatmul.bf16.gmra.mxu0 %v7395
        %v7642 = vpop.f32.mrf.mxu0
        %v7643 = vadd.f32 %v7624, %v7642
        %v7644 = vpop.f32.mrf.mxu0
        %v7645 = vadd.f32 %v7626, %v7644
        %7646 = vdwg.mxu0
        %v7695 = vunpack.c.l.b16 %v7297
        %v7696 = vunpack.c.l.b16 %v7298
        %v7697 = vunpack.c.l.b16 %v7299
        %v7698 = vunpack.c.l.b16 %v7300
        %v7699 = vunpack.c.l.b16 %v7301
        %v7700 = vunpack.c.l.b16 %v7302
        %v7701 = vunpack.c.l.b16 %v7303
        %v7702 = vunpack.c.l.b16 %v7304
        %v7703 = vunpack.c.l.b16 %v7305
        %v7704 = vunpack.c.l.b16 %v7306
        %v7705 = vunpack.c.l.b16 %v7307
        %v7706 = vunpack.c.l.b16 %v7308
        %v7707 = vunpack.c.l.b16 %v7309
        %v7708 = vunpack.c.l.b16 %v7310
        %v7709 = vunpack.c.l.b16 %v7311
        %v7710 = vunpack.c.l.b16 %v7312
        %v7711 = vunpack.c.l.b16 %v7313
        %v7712 = vunpack.c.l.b16 %v7314
        %v7713 = vunpack.c.l.b16 %v7315
        %v7714 = vunpack.c.l.b16 %v7316
        %v7715 = vunpack.c.l.b16 %v7317
        %v7716 = vunpack.c.l.b16 %v7318
        %v7717 = vunpack.c.l.b16 %v7319
        %v7718 = vunpack.c.l.b16 %v7320
        %v7719 = vunpack.c.l.b16 %v7321
        %v7720 = vunpack.c.l.b16 %v7322
        %v7721 = vunpack.c.l.b16 %v7323
        %v7722 = vunpack.c.l.b16 %v7324
        %v7723 = vunpack.c.l.b16 %v7325
        %v7724 = vunpack.c.l.b16 %v7326
        %v7725 = vunpack.c.l.b16 %v7327
        %v7726 = vunpack.c.l.b16 %v7328
        %v7727 = vunpack.c.l.b16 %v7329
        %v7728 = vunpack.c.l.b16 %v7330
        %v7729 = vunpack.c.l.b16 %v7331
        %v7730 = vunpack.c.l.b16 %v7332
        %v7731 = vunpack.c.l.b16 %v7333
        %v7732 = vunpack.c.l.b16 %v7334
        %v7733 = vunpack.c.l.b16 %v7335
        %v7734 = vunpack.c.l.b16 %v7336
        %v7735 = vunpack.c.l.b16 %v7337
        %v7736 = vunpack.c.l.b16 %v7338
        %v7737 = vunpack.c.l.b16 %v7339
        %v7738 = vunpack.c.l.b16 %v7340
        %v7739 = vunpack.c.l.b16 %v7341
        %v7740 = vunpack.c.l.b16 %v7342
        %v7741 = vunpack.c.l.b16 %v7343
        %v7742 = vunpack.c.l.b16 %v7344
        %v7743 = vpack.c.b16 %v7696, %v7695
        %v7744 = vpack.c.b16 %v7698, %v7697
        %v7745 = vpack.c.b16 %v7700, %v7699
        %v7746 = vpack.c.b16 %v7702, %v7701
        %v7747 = vpack.c.b16 %v7704, %v7703
        %v7748 = vpack.c.b16 %v7706, %v7705
        %v7749 = vpack.c.b16 %v7708, %v7707
        %v7750 = vpack.c.b16 %v7710, %v7709
        %v7751 = vpack.c.b16 %v7712, %v7711
        %v7752 = vpack.c.b16 %v7714, %v7713
        %v7753 = vpack.c.b16 %v7716, %v7715
        %v7754 = vpack.c.b16 %v7718, %v7717
        %v7755 = vpack.c.b16 %v7720, %v7719
        %v7756 = vpack.c.b16 %v7722, %v7721
        %v7757 = vpack.c.b16 %v7724, %v7723
        %v7758 = vpack.c.b16 %v7726, %v7725
        %v7759 = vpack.c.b16 %v7728, %v7727
        %v7760 = vpack.c.b16 %v7730, %v7729
        %v7761 = vpack.c.b16 %v7732, %v7731
        %v7762 = vpack.c.b16 %v7734, %v7733
        %v7763 = vpack.c.b16 %v7736, %v7735
        %v7764 = vpack.c.b16 %v7738, %v7737
        %v7765 = vpack.c.b16 %v7740, %v7739
        %v7766 = vpack.c.b16 %v7742, %v7741
        %7791 = vmatpush.bf16.msra.mxu0 %v7750
        %7792 = vmatpush.bf16.msra.mxu0 %v7749
        %7793 = vmatpush.bf16.msra.mxu0 %v7748
        %7794 = vmatpush.bf16.msra.mxu0 %v7747
        %7795 = vmatpush.bf16.msra.mxu0 %v7746
        %7796 = vmatpush.bf16.msra.mxu0 %v7745
        %7797 = vmatpush.bf16.msra.mxu0 %v7744
        %7798 = vmatpush.bf16.msra.mxu0 %v7743
        %7799 = vmatmul.bf16.gmra.mxu0 %v7261
        %v7800 = vpop.f32.mrf.mxu0
        %v7801 = vadd.f32 %v7638, %v7800
        %v7802 = vpop.f32.mrf.mxu0
        %v7803 = vadd.f32 %v7640, %v7802
        %7804 = vmatmul.bf16.gmra.mxu0 %v7262
        %v7805 = vpop.f32.mrf.mxu0
        %v7806 = vadd.f32 %v7643, %v7805
        %v7807 = vpop.f32.mrf.mxu0
        %v7808 = vadd.f32 %v7645, %v7807
        %7809 = vdwg.mxu0
        %7810 = vmatpush.bf16.msra.mxu0 %v7758
        %7811 = vmatpush.bf16.msra.mxu0 %v7757
        %7812 = vmatpush.bf16.msra.mxu0 %v7756
        %7813 = vmatpush.bf16.msra.mxu0 %v7755
        %7814 = vmatpush.bf16.msra.mxu0 %v7754
        %7815 = vmatpush.bf16.msra.mxu0 %v7753
        %7816 = vmatpush.bf16.msra.mxu0 %v7752
        %7817 = vmatpush.bf16.msra.mxu0 %v7751
        %7818 = vmatmul.bf16.gmra.mxu0 %v7279
        %v7819 = vpop.f32.mrf.mxu0
        %v7820 = vadd.f32 %v7801, %v7819
        %v7821 = vpop.f32.mrf.mxu0
        %v7822 = vadd.f32 %v7803, %v7821
        %7823 = vmatmul.bf16.gmra.mxu0 %v7287
        %v7824 = vpop.f32.mrf.mxu0
        %v7825 = vadd.f32 %v7806, %v7824
        %v7826 = vpop.f32.mrf.mxu0
        %v7827 = vadd.f32 %v7808, %v7826
        %7828 = vdwg.mxu0
        %7829 = vmatpush.bf16.msra.mxu0 %v7766
        %7830 = vmatpush.bf16.msra.mxu0 %v7765
        %7831 = vmatpush.bf16.msra.mxu0 %v7764
        %7832 = vmatpush.bf16.msra.mxu0 %v7763
        %7833 = vmatpush.bf16.msra.mxu0 %v7762
        %7834 = vmatpush.bf16.msra.mxu0 %v7761
        %7835 = vmatpush.bf16.msra.mxu0 %v7760
        %7836 = vmatpush.bf16.msra.mxu0 %v7759
        %7837 = vmatmul.bf16.gmra.mxu0 %v7292
        %v7838 = vpop.f32.mrf.mxu0
        %v7839 = vadd.f32 %v7820, %v7838
        %v7840 = vpop.f32.mrf.mxu0
        %v7841 = vadd.f32 %v7822, %v7840
        %7842 = vmatmul.bf16.gmra.mxu0 %v7294
        %v7843 = vpop.f32.mrf.mxu0
        %v7844 = vadd.f32 %v7825, %v7843
        %v7845 = vpop.f32.mrf.mxu0
        %v7846 = vadd.f32 %v7827, %v7845
        %7847 = vdwg.mxu0
        %s7848 = sadd.s32 %s7244, 2
        %s7849 = smul.u32 %s7848, 5
        %s7850 = smul.addr %s7849, 4
        %s7851 = scalar_lea.vmem %s182, %s7850
        %v7852 = vld [vmem:[%s7851] sm:$0xf]
        %v7853 = vld [vmem:[%s7851 + $0x4] sm:$0xf]
        %v7854 = vld [vmem:[%s7851 + $0x8] sm:$0xf]
        %v7855 = vld [vmem:[%s7851 + $0xc] sm:$0xf]
        %v7856 = vld [vmem:[%s7851 + $0x10] sm:$0x1]
        %v7861 = vunpack.c.l.b16 %v7852
        %v7862 = vunpack.c.l.b16 %v7853
        %v7863 = vunpack.c.l.b16 %v7854
        %v7864 = vunpack.c.l.b16 %v7855
        %v7865 = vpack.c.b16 %v7862, %v7861
        %v7866 = vpack.c.b16 %v7864, %v7863
        %v7870 = vunpack.c.l.b16 %v7856
        %v7871 = vpack.c.b16 %v7870, %v7870
        %v7873 = vshrl.u32 %v7865, 16
        %v7875 = vshll.u32 %v7865, 16
        %v7877 = vrot.slane %v7875, 1
        %v7878 = vor.u32 %v7873, %v7877
        %v7880 = vshll.u32 %v7866, 16
        %v7882 = vrot.slane %v7880, 1
        %v7883 = vsel %vm208, %v7878, %v7882
        %v7884 = vshrl.u32 %v7866, 16
        %v7886 = vor.u32 %v7884, %v7882
        %v7888 = vshll.u32 %v7871, 16
        %v7890 = vrot.slane %v7888, 1
        %v7891 = vsel %vm208, %v7886, %v7890
        %v7894 = vrot.slane %v7865, 1
        %v7895 = vrot.slane %v7866, 1
        %v7896 = vsel %vm231, %v7894, %v7895
        %v7897 = vrot.slane %v7871, 1
        %v7898 = vsel %vm231, %v7895, %v7897
        %v7901 = vld [vmem:[%s844] sm:$0xf]
        %v7902 = vld [vmem:[%s844 + $0x4] sm:$0xf]
        %v7903 = vld [vmem:[%s844 + $0x8] sm:$0xf]
        %v7904 = vld [vmem:[%s844 + $0xc] sm:$0xf]
        %v7905 = vld [vmem:[%s844 + $0x10] sm:$0xf]
        %v7906 = vld [vmem:[%s844 + $0x14] sm:$0xf]
        %v7907 = vld [vmem:[%s844 + $0x18] sm:$0xf]
        %v7908 = vld [vmem:[%s844 + $0x1c] sm:$0xf]
        %v7909 = vld [vmem:[%s844 + $0x20] sm:$0xf]
        %v7910 = vld [vmem:[%s844 + $0x24] sm:$0xf]
        %v7911 = vld [vmem:[%s844 + $0x28] sm:$0xf]
        %v7912 = vld [vmem:[%s844 + $0x2c] sm:$0xf]
        %v7913 = vld [vmem:[%s844 + $0x30] sm:$0xf]
        %v7914 = vld [vmem:[%s844 + $0x34] sm:$0xf]
        %v7915 = vld [vmem:[%s844 + $0x38] sm:$0xf]
        %v7916 = vld [vmem:[%s844 + $0x3c] sm:$0xf]
        %v7917 = vld [vmem:[%s844 + $0x40] sm:$0xf]
        %v7918 = vld [vmem:[%s844 + $0x44] sm:$0xf]
        %v7919 = vld [vmem:[%s844 + $0x48] sm:$0xf]
        %v7920 = vld [vmem:[%s844 + $0x4c] sm:$0xf]
        %v7921 = vld [vmem:[%s844 + $0x50] sm:$0xf]
        %v7922 = vld [vmem:[%s844 + $0x54] sm:$0xf]
        %v7923 = vld [vmem:[%s844 + $0x58] sm:$0xf]
        %v7924 = vld [vmem:[%s844 + $0x5c] sm:$0xf]
        %v7925 = vld [vmem:[%s844 + $0x60] sm:$0xf]
        %v7926 = vld [vmem:[%s844 + $0x64] sm:$0xf]
        %v7927 = vld [vmem:[%s844 + $0x68] sm:$0xf]
        %v7928 = vld [vmem:[%s844 + $0x6c] sm:$0xf]
        %v7929 = vld [vmem:[%s844 + $0x70] sm:$0xf]
        %v7930 = vld [vmem:[%s844 + $0x74] sm:$0xf]
        %v7931 = vld [vmem:[%s844 + $0x78] sm:$0xf]
        %v7932 = vld [vmem:[%s844 + $0x7c] sm:$0xf]
        %v7933 = vld [vmem:[%s844 + $0x80] sm:$0xf]
        %v7934 = vld [vmem:[%s844 + $0x84] sm:$0xf]
        %v7935 = vld [vmem:[%s844 + $0x88] sm:$0xf]
        %v7936 = vld [vmem:[%s844 + $0x8c] sm:$0xf]
        %v7937 = vld [vmem:[%s844 + $0x90] sm:$0xf]
        %v7938 = vld [vmem:[%s844 + $0x94] sm:$0xf]
        %v7939 = vld [vmem:[%s844 + $0x98] sm:$0xf]
        %v7940 = vld [vmem:[%s844 + $0x9c] sm:$0xf]
        %v7941 = vld [vmem:[%s844 + $0xa0] sm:$0xf]
        %v7942 = vld [vmem:[%s844 + $0xa4] sm:$0xf]
        %v7943 = vld [vmem:[%s844 + $0xa8] sm:$0xf]
        %v7944 = vld [vmem:[%s844 + $0xac] sm:$0xf]
        %v7945 = vld [vmem:[%s844 + $0xb0] sm:$0xf]
        %v7946 = vld [vmem:[%s844 + $0xb4] sm:$0xf]
        %v7947 = vld [vmem:[%s844 + $0xb8] sm:$0xf]
        %v7948 = vld [vmem:[%s844 + $0xbc] sm:$0xf]
        %v7997 = vunpack.c.l.b16 %v7901
        %v7998 = vunpack.c.l.b16 %v7902
        %v7999 = vunpack.c.l.b16 %v7903
        %v8000 = vunpack.c.l.b16 %v7904
        %v8001 = vunpack.c.l.b16 %v7905
        %v8002 = vunpack.c.l.b16 %v7906
        %v8003 = vunpack.c.l.b16 %v7907
        %v8004 = vunpack.c.l.b16 %v7908
        %v8005 = vunpack.c.l.b16 %v7909
        %v8006 = vunpack.c.l.b16 %v7910
        %v8007 = vunpack.c.l.b16 %v7911
        %v8008 = vunpack.c.l.b16 %v7912
        %v8009 = vunpack.c.l.b16 %v7913
        %v8010 = vunpack.c.l.b16 %v7914
        %v8011 = vunpack.c.l.b16 %v7915
        %v8012 = vunpack.c.l.b16 %v7916
        %v8013 = vunpack.c.l.b16 %v7917
        %v8014 = vunpack.c.l.b16 %v7918
        %v8015 = vunpack.c.l.b16 %v7919
        %v8016 = vunpack.c.l.b16 %v7920
        %v8017 = vunpack.c.l.b16 %v7921
        %v8018 = vunpack.c.l.b16 %v7922
        %v8019 = vunpack.c.l.b16 %v7923
        %v8020 = vunpack.c.l.b16 %v7924
        %v8021 = vunpack.c.l.b16 %v7925
        %v8022 = vunpack.c.l.b16 %v7926
        %v8023 = vunpack.c.l.b16 %v7927
        %v8024 = vunpack.c.l.b16 %v7928
        %v8025 = vunpack.c.l.b16 %v7929
        %v8026 = vunpack.c.l.b16 %v7930
        %v8027 = vunpack.c.l.b16 %v7931
        %v8028 = vunpack.c.l.b16 %v7932
        %v8029 = vunpack.c.l.b16 %v7933
        %v8030 = vunpack.c.l.b16 %v7934
        %v8031 = vunpack.c.l.b16 %v7935
        %v8032 = vunpack.c.l.b16 %v7936
        %v8033 = vunpack.c.l.b16 %v7937
        %v8034 = vunpack.c.l.b16 %v7938
        %v8035 = vunpack.c.l.b16 %v7939
        %v8036 = vunpack.c.l.b16 %v7940
        %v8037 = vunpack.c.l.b16 %v7941
        %v8038 = vunpack.c.l.b16 %v7942
        %v8039 = vunpack.c.l.b16 %v7943
        %v8040 = vunpack.c.l.b16 %v7944
        %v8041 = vunpack.c.l.b16 %v7945
        %v8042 = vunpack.c.l.b16 %v7946
        %v8043 = vunpack.c.l.b16 %v7947
        %v8044 = vunpack.c.l.b16 %v7948
        %v8045 = vpack.c.b16 %v7998, %v7997
        %v8046 = vpack.c.b16 %v8000, %v7999
        %v8047 = vpack.c.b16 %v8002, %v8001
        %v8048 = vpack.c.b16 %v8004, %v8003
        %v8049 = vpack.c.b16 %v8006, %v8005
        %v8050 = vpack.c.b16 %v8008, %v8007
        %v8051 = vpack.c.b16 %v8010, %v8009
        %v8052 = vpack.c.b16 %v8012, %v8011
        %v8053 = vpack.c.b16 %v8014, %v8013
        %v8054 = vpack.c.b16 %v8016, %v8015
        %v8055 = vpack.c.b16 %v8018, %v8017
        %v8056 = vpack.c.b16 %v8020, %v8019
        %v8057 = vpack.c.b16 %v8022, %v8021
        %v8058 = vpack.c.b16 %v8024, %v8023
        %v8059 = vpack.c.b16 %v8026, %v8025
        %v8060 = vpack.c.b16 %v8028, %v8027
        %v8061 = vpack.c.b16 %v8030, %v8029
        %v8062 = vpack.c.b16 %v8032, %v8031
        %v8063 = vpack.c.b16 %v8034, %v8033
        %v8064 = vpack.c.b16 %v8036, %v8035
        %v8065 = vpack.c.b16 %v8038, %v8037
        %v8066 = vpack.c.b16 %v8040, %v8039
        %v8067 = vpack.c.b16 %v8042, %v8041
        %v8068 = vpack.c.b16 %v8044, %v8043
        %8093 = vmatpush.bf16.msra.mxu0 %v8052
        %8094 = vmatpush.bf16.msra.mxu0 %v8051
        %8095 = vmatpush.bf16.msra.mxu0 %v8050
        %8096 = vmatpush.bf16.msra.mxu0 %v8049
        %8097 = vmatpush.bf16.msra.mxu0 %v8048
        %8098 = vmatpush.bf16.msra.mxu0 %v8047
        %8099 = vmatpush.bf16.msra.mxu0 %v8046
        %8100 = vmatpush.bf16.msra.mxu0 %v8045
        %8101 = vmatmul.bf16.gmra.mxu0 %v7865
        %v8102 = vpop.f32.mrf.mxu0
        %v8103 = vadd.f32 0.0, %v8102
        %v8104 = vpop.f32.mrf.mxu0
        %v8105 = vadd.f32 0.0, %v8104
        %8106 = vmatmul.bf16.gmra.mxu0 %v7866
        %v8107 = vpop.f32.mrf.mxu0
        %v8108 = vadd.f32 0.0, %v8107
        %v8109 = vpop.f32.mrf.mxu0
        %v8110 = vadd.f32 0.0, %v8109
        %8111 = vdwg.mxu0
        %8112 = vmatpush.bf16.msra.mxu0 %v8060
        %8113 = vmatpush.bf16.msra.mxu0 %v8059
        %8114 = vmatpush.bf16.msra.mxu0 %v8058
        %8115 = vmatpush.bf16.msra.mxu0 %v8057
        %8116 = vmatpush.bf16.msra.mxu0 %v8056
        %8117 = vmatpush.bf16.msra.mxu0 %v8055
        %8118 = vmatpush.bf16.msra.mxu0 %v8054
        %8119 = vmatpush.bf16.msra.mxu0 %v8053
        %8120 = vmatmul.bf16.gmra.mxu0 %v7883
        %v8121 = vpop.f32.mrf.mxu0
        %v8122 = vadd.f32 %v8103, %v8121
        %v8123 = vpop.f32.mrf.mxu0
        %v8124 = vadd.f32 %v8105, %v8123
        %8125 = vmatmul.bf16.gmra.mxu0 %v7891
        %v8126 = vpop.f32.mrf.mxu0
        %v8127 = vadd.f32 %v8108, %v8126
        %v8128 = vpop.f32.mrf.mxu0
        %v8129 = vadd.f32 %v8110, %v8128
        %8130 = vdwg.mxu0
        %8131 = vmatpush.bf16.msra.mxu0 %v8068
        %8132 = vmatpush.bf16.msra.mxu0 %v8067
        %8133 = vmatpush.bf16.msra.mxu0 %v8066
        %8134 = vmatpush.bf16.msra.mxu0 %v8065
        %8135 = vmatpush.bf16.msra.mxu0 %v8064
        %8136 = vmatpush.bf16.msra.mxu0 %v8063
        %8137 = vmatpush.bf16.msra.mxu0 %v8062
        %8138 = vmatpush.bf16.msra.mxu0 %v8061
        %8139 = vmatmul.bf16.gmra.mxu0 %v7896
        %v8140 = vpop.f32.mrf.mxu0
        %v8141 = vadd.f32 %v8122, %v8140
        %v8142 = vpop.f32.mrf.mxu0
        %v8143 = vadd.f32 %v8124, %v8142
        %8144 = vmatmul.bf16.gmra.mxu0 %v7898
        %v8145 = vpop.f32.mrf.mxu0
        %v8146 = vadd.f32 %v8127, %v8145
        %v8147 = vpop.f32.mrf.mxu0
        %v8148 = vadd.f32 %v8129, %v8147
        %8149 = vdwg.mxu0
        %v8150 = vadd.f32 %v7839, %v8141
        %v8151 = vadd.f32 %v7841, %v8143
        %v8152 = vadd.f32 %v7844, %v8146
        %v8153 = vadd.f32 %v7846, %v8148
        %v8154 = vld [vmem:[%s2] sm:$0x1]
        %v8156 = vperm.slane %v8154, 0
        %v8158 = vadd.f32 %v8150, %v8156
        %v8159 = vadd.f32 %v8151, %v8156
        %v8160 = vadd.f32 %v8152, %v8156
        %v8161 = vadd.f32 %v8153, %v8156
        %v8162 = vxor.u32 %v8158, 2147483648
        %v8163 = vxor.u32 %v8159, 2147483648
        %v8164 = vxor.u32 %v8160, 2147483648
        %v8165 = vxor.u32 %v8161, 2147483648
        %v8166 = vmul.f32 %v8162, 1.442695
        %v8167 = vpow.pop %v8166
        %v8168 = vmul.f32 %v8163, 1.442695
        %v8169 = vpow.pop %v8168
        %v8170 = vmul.f32 %v8164, 1.442695
        %v8171 = vpow.pop %v8170
        %v8172 = vmul.f32 %v8165, 1.442695
        %v8173 = vpow.pop %v8172
        %v8174 = vadd.f32 %v8167, 1.0
        %v8175 = vadd.f32 %v8169, 1.0
        %v8176 = vadd.f32 %v8171, 1.0
        %v8177 = vadd.f32 %v8173, 1.0
        %v8178 = vrcp.pop %v8174
        %v8179 = vmul.f32 %v8174, %v8178
        %v8180 = vsub.f32 1.0, %v8179
        %v8181 = vmul.f32 %v8178, %v8180
        %v8182 = vadd.f32 %v8178, %v8181
        %vm8183 = vweird.f32 %v8174
        %vm8184 = vweird.f32 %v8178
        %vm8185 = vmor %vm8183, %vm8184
        %v8186 = vsel %vm8185, %v8178, %v8182
        %v8187 = vand.u32 2147483647, %v8174
        %vm8188 = vcmp.eq.f32.partialorder %v8187, 8.507059e+37
        %v8189 = vand.u32 %v8174, 2147483648
        %v8190 = vor.u32 1.1754944e-38, %v8189
        %v8191 = vsel %vm8188, %v8190, %v8186
        %v8192 = vmul.f32 1.0, %v8191
        %v8193 = vrcp.pop %v8175
        %v8194 = vmul.f32 %v8175, %v8193
        %v8195 = vsub.f32 1.0, %v8194
        %v8196 = vmul.f32 %v8193, %v8195
        %v8197 = vadd.f32 %v8193, %v8196
        %vm8198 = vweird.f32 %v8175
        %vm8199 = vweird.f32 %v8193
        %vm8200 = vmor %vm8198, %vm8199
        %v8201 = vsel %vm8200, %v8193, %v8197
        %v8202 = vand.u32 2147483647, %v8175
        %vm8203 = vcmp.eq.f32.partialorder %v8202, 8.507059e+37
        %v8204 = vand.u32 %v8175, 2147483648
        %v8205 = vor.u32 1.1754944e-38, %v8204
        %v8206 = vsel %vm8203, %v8205, %v8201
        %v8207 = vmul.f32 1.0, %v8206
        %v8208 = vrcp.pop %v8176
        %v8209 = vmul.f32 %v8176, %v8208
        %v8210 = vsub.f32 1.0, %v8209
        %v8211 = vmul.f32 %v8208, %v8210
        %v8212 = vadd.f32 %v8208, %v8211
        %vm8213 = vweird.f32 %v8176
        %vm8214 = vweird.f32 %v8208
        %vm8215 = vmor %vm8213, %vm8214
        %v8216 = vsel %vm8215, %v8208, %v8212
        %v8217 = vand.u32 2147483647, %v8176
        %vm8218 = vcmp.eq.f32.partialorder %v8217, 8.507059e+37
        %v8219 = vand.u32 %v8176, 2147483648
        %v8220 = vor.u32 1.1754944e-38, %v8219
        %v8221 = vsel %vm8218, %v8220, %v8216
        %v8222 = vmul.f32 1.0, %v8221
        %v8223 = vrcp.pop %v8177
        %v8224 = vmul.f32 %v8177, %v8223
        %v8225 = vsub.f32 1.0, %v8224
        %v8226 = vmul.f32 %v8223, %v8225
        %v8227 = vadd.f32 %v8223, %v8226
        %vm8228 = vweird.f32 %v8177
        %vm8229 = vweird.f32 %v8223
        %vm8230 = vmor %vm8228, %vm8229
        %v8231 = vsel %vm8230, %v8223, %v8227
        %v8232 = vand.u32 2147483647, %v8177
        %vm8233 = vcmp.eq.f32.partialorder %v8232, 8.507059e+37
        %v8234 = vand.u32 %v8177, 2147483648
        %v8235 = vor.u32 1.1754944e-38, %v8234
        %v8236 = vsel %vm8233, %v8235, %v8231
        %v8237 = vmul.f32 1.0, %v8236
        %v8238 = vmul.f32 %v8158, %v8192
        %v8239 = vmul.f32 %v8159, %v8207
        %v8240 = vmul.f32 %v8160, %v8222
        %v8241 = vmul.f32 %v8161, %v8237
        %v8242 = vpack.c.bf16 %v8238, %v8238
        %v8243 = vpack.c.bf16 %v8239, %v8239
        %v8244 = vpack.c.bf16 %v8240, %v8240
        %v8245 = vpack.c.bf16 %v8241, %v8241
        %s8246 = scalar_lea.vmem %s177, 112 [#allocation2]
        %8247 = vst [vmem:[%s8246] sm:$0xf] %v8242
        %8248 = vst [vmem:[%s8246 + $0x4] sm:$0xf] %v8243
        %8249 = vst [vmem:[%s8246 + $0x8] sm:$0xf] %v8244
        %8250 = vst [vmem:[%s8246 + $0xc] sm:$0xf] %v8245
        %s8251 = sand.u32 %s107, 1
        %s8252 = scalar_lea.sflag [#allocation3], %s8251
        %s8253 = sand.u32 %s107, 1
        %s8254 = smul.addr %s8253, 128
        %s8255 = scalar_lea.vmem [#allocation2], %s8254
        // Predicated region
        $region33: #{tpu_custom_call.1} parent=31 // pred_check
          %p8256 = pneg %p117
        $region34: #{tpu_custom_call.1} parent=31 // pred_check_branch
          %8258 = sbr.rel (%p8256) target = $region36
        $region35: #{tpu_custom_call.1} parent=31 // pred_region
          %s8259 = smul.u32 8, %s22
          %8261 = vsyncadd %s8252, 0
          %s8262 = smul.addr %s8259, 4
          %s8263 = smul.addr %s21, 64
          %s8264 = sadd.s32 %s8262, %s8263
          %s8265 = smul.addr %s8264, 4
          %s8266 = scalar_lea.hbm %s3, %s8265
          %s8267 = sshll.u32 %s8255, 4
          %s8268 = int_to_ptr.vmem [resolvable:$true] %s8267
          %s8269 = sshll.u32 %s8266, 4
          %s8270 = int_to_ptr.hbm [resolvable:$true] %s8269
          %8275 = dma.vmem_to_hbm [thread:$0]  %s8268, 2048, %s8270, %s8252, 64, 64, 4
        $region36: #{tpu_custom_call.1} parent=31 // pred_fallthru
          _
      $region32: #{tpu_custom_call.1} parent=5 // pred_fallthru
        _
      %p8276 = scmp.le.s32.totalorder 2, %s12
      // Predicated region
      $region37: #{tpu_custom_call.1} parent=5 // pred_check
        %p8277 = pneg %p8276
      $region38: #{tpu_custom_call.1} parent=5 // pred_check_branch
        %8279 = sbr.rel (%p8277) target = $region40
      $region39: #{tpu_custom_call.1} parent=5 // pred_region
        %s8280 = ssub.s32 %s12, 2
        // Predicated region
        $region41: #{tpu_custom_call.1} parent=39 // pred_check
          %p8281 = pneg %p123
        $region42: #{tpu_custom_call.1} parent=39 // pred_check_branch
          %8283 = sbr.rel (%p8281) target = $region44
        $region43: #{tpu_custom_call.1} parent=39 // pred_region
          %s8284 = sand.u32 %s108, 1
          %s8285 = scalar_lea.sflag [#allocation3], %s8284
          %s8286 = sand.u32 %s108, 1
          %s8287 = smul.addr %s8286, 128
          %s8288 = scalar_lea.vmem [#allocation2], %s8287
          %8290 = dma.done %s8285, 2048
        $region44: #{tpu_custom_call.1} parent=39 // pred_fallthru
          _
      $region40: #{tpu_custom_call.1} parent=5 // pred_fallthru
        _
    $region6: #{tpu_custom_call.1} parent=1 // loop_footer
      %s16 = sadd.s32 1, %s12
    $region7: #{tpu_custom_call.1} parent=1 // loop_footer_branch
      %11 = sbr.rel target = $region3
    $region8: #{tpu_custom_call.1} parent=1 // loop_exit
      _
    %8291 = vsyncpa [#allocation3], 1
    %s8292 = scalar_lea.sflag [#allocation3], 1
    %8293 = vsyncpa %s8292, 1

</llo_original>
